<compile_context>
chip_gen: v7x
topology: tpu7x:2x2x1
jax: 0.10.0
libtpu: 0.0.40
codegen_flags: <defaults>
</compile_context>

<pallas_src>
import functools
import math

import jax
import jax.numpy as jnp
from jax import lax
from jax.experimental import pallas as pl
from jax.experimental.pallas import tpu as pltpu

NEG_SLOPE = 0.2          # leaky_relu negative_slope used throughout the module
LANE = 128
PAD = 512                # pad the node dimension to a multiple of 512 (tile-friendly)
SCORE_W = 8              # scorer RHS zero-padded to 8 lanes so the dot stays on the MXU


def _leaky(x):
    return jnp.where(x >= 0, x, NEG_SLOPE * x)


def _round_up(v, m):
    return ((v + m - 1) // m) * m


def _pad_cols(w, ncols):
    return jnp.pad(w, ((0, 0), (0, ncols - w.shape[1])))


def _pick_tile(n, cap, min_tiles=1):
    """Largest multiple of 128 that divides n, is <= cap, and leaves >= min_tiles tiles."""
    cap = min(cap, max(LANE, n // max(min_tiles, 1)))
    t = max(LANE, cap - cap % LANE)
    while n % t:
        t -= LANE
    return t


@functools.lru_cache(maxsize=1)
def _hw_budget():
    """Per-generation tile / VMEM budget (v7x has 64 MiB VMEM/TC; v5e/v6e have 128 MiB)."""
    vmem_phys = 128 << 20
    try:
        vmem_phys = int(pltpu.get_tpu_info().vmem_capacity_bytes)
    except Exception:
        pass
    if vmem_phys <= (64 << 20):          # v7x-class
        return {"vmem_limit": 32 << 20, "a_buffers": 2, "tm_cap": 1024, "tk_cap": 4096}
    return {"vmem_limit": 64 << 20, "a_buffers": 3, "tm_cap": 1024, "tk_cap": 4096}


def _a_block_spec(tm, tk, buffers, total_steps):
    """A_hat BlockSpec; request deeper buffering when the grid is deep enough."""
    if buffers > 2 and total_steps >= buffers:
        try:
            return pl.BlockSpec((tm, tk), lambda i, k: (i, k),
                                pipeline_mode=pl.Buffered(buffers))
        except TypeError:
            pass
    return pl.BlockSpec((tm, tk), lambda i, k: (i, k))


def _vmem():
    return pl.BlockSpec(memory_space=pltpu.MemorySpace.VMEM)


# ----------------------------- kernel 1: RHS prep -----------------------------
# rhs = (dinv_col * (X @ W)).astype(bf16)   — the column-scaled conv RHS for the A pass.

def _rhs_prep_kernel(x_ref, w_ref, dinv_ref, rhs_ref):
    xw = jnp.dot(x_ref[...], w_ref[...], preferred_element_type=jnp.float32)
    rhs_ref[...] = (dinv_ref[...] * xw).astype(rhs_ref.dtype)


def rhs_prep(x_pad, w, dinv, budget):
    npad, fin = x_pad.shape
    hidden = w.shape[1]
    tm = _pick_tile(npad, 512)
    return pl.pallas_call(
        _rhs_prep_kernel,
        out_shape=jax.ShapeDtypeStruct((npad, hidden), jnp.bfloat16),
        grid_spec=pltpu.PrefetchScalarGridSpec(
            num_scalar_prefetch=0,
            grid=(npad // tm,),
            in_specs=[pl.BlockSpec((tm, fin), lambda i: (i, 0)),
                      pl.BlockSpec((fin, hidden), lambda i: (0, 0)),
                      pl.BlockSpec((tm, 1), lambda i: (i, 0))],
            out_specs=pl.BlockSpec((tm, hidden), lambda i: (i, 0)),
        ),
        compiler_params=pltpu.CompilerParams(
            dimension_semantics=("parallel",),
            vmem_limit_bytes=budget["vmem_limit"]),
    )(x_pad, w, dinv)


# ---------------- kernel 2: fused GCNConv pass (+ scorer projections) ----------------
# Streams bf16 A_hat once; accumulates A_hat @ rhs in an f32 VMEM scratch; the epilogue
# applies the dinv row scaling, bias, leaky_relu and also emits the scorer's per-node
# projections so the scorer's A pass only needs a narrow bf16 RHS:
#   srhs[:, 0]  = conv @ w_rel              (bf16, zero-padded to SCORE_W lanes)
#   xterm[:, 0] = b_rel + conv @ (w_root - w_rel)

def _conv_pass_kernel(a_ref, rhs_ref, dinv_ref, bias_ref, wrel_ref, wdiff_ref, brel_ref,
                      out_x_ref, out_srhs_ref, out_xterm_ref, acc_ref):
    k = pl.program_id(1)

    @pl.when(k == 0)
    def _():
        acc_ref[...] = jnp.zeros_like(acc_ref)

    acc_ref[...] += jnp.dot(a_ref[...], rhs_ref[...],
                            preferred_element_type=jnp.float32)

    @pl.when(k == pl.num_programs(1) - 1)
    def _():
        conv = _leaky(acc_ref[...] * dinv_ref[...] + bias_ref[...])      # (tm, H) f32
        out_x_ref[...] = conv.astype(out_x_ref.dtype)                     # bf16 writeback
        out_srhs_ref[...] = jnp.dot(conv, wrel_ref[...],
                                    preferred_element_type=jnp.float32
                                    ).astype(out_srhs_ref.dtype)          # (tm, 8) bf16
        out_xterm_ref[...] = (jnp.dot(conv, wdiff_ref[...],
                                      preferred_element_type=jnp.float32)
                              + brel_ref[...])                            # (tm, 1) f32


def gcn_conv_pass(a_bf, rhs_bf, dinv, bias, wrel, wdiff, brel, budget):
    npad = a_bf.shape[0]
    hidden = rhs_bf.shape[1]
    tm = _pick_tile(npad, budget["tm_cap"], min_tiles=2)   # >=2 row tiles for 2-TC chips
    tk = _pick_tile(npad, budget["tk_cap"])
    grid = (npad // tm, npad // tk)
    a_spec = _a_block_spec(tm, tk, budget["a_buffers"], grid[0] * grid[1])
    return pl.pallas_call(
        _conv_pass_kernel,
        out_shape=(jax.ShapeDtypeStruct((npad, hidden), jnp.bfloat16),
                   jax.ShapeDtypeStruct((npad, SCORE_W), jnp.bfloat16),
                   jax.ShapeDtypeStruct((npad, 1), jnp.float32)),
        grid_spec=pltpu.PrefetchScalarGridSpec(
            num_scalar_prefetch=0,
            grid=grid,
            in_specs=[
                a_spec,                                               # A_hat (bf16)
                pl.BlockSpec((tk, hidden), lambda i, k: (k, 0)),      # dinv*(X@W) (bf16)
                pl.BlockSpec((tm, 1), lambda i, k: (i, 0)),           # dinv rows
                pl.BlockSpec((1, hidden), lambda i, k: (0, 0)),       # conv bias
                pl.BlockSpec((hidden, SCORE_W), lambda i, k: (0, 0)), # [w_rel | 0...]
                pl.BlockSpec((hidden, 1), lambda i, k: (0, 0)),       # w_root - w_rel
                pl.BlockSpec((1, 1), lambda i, k: (0, 0)),            # b_rel
            ],
            out_specs=(pl.BlockSpec((tm, hidden), lambda i, k: (i, 0)),
                       pl.BlockSpec((tm, SCORE_W), lambda i, k: (i, 0)),
                       pl.BlockSpec((tm, 1), lambda i, k: (i, 0))),
            scratch_shapes=[pltpu.VMEM((tm, hidden), jnp.float32)],
        ),
        compiler_params=pltpu.CompilerParams(
            dimension_semantics=("parallel", "arbitrary"),
            vmem_limit_bytes=budget["vmem_limit"]),
    )(a_bf, rhs_bf, dinv, bias, wrel, wdiff, brel)


# ---------------- kernel 3: SAGPooling scorer pass ----------------
# score = tanh(A_hat @ (x1@w_rel) + (b_rel + x1@w_root - x1@w_rel))
#       = tanh((A x1) w_rel + x1 w_root + b_rel)     (self-loop correction folded in)

def _score_pass_kernel(a_ref, srhs_ref, xterm_ref, out_ref, acc_ref):
    k = pl.program_id(1)

    @pl.when(k == 0)
    def _():
        acc_ref[...] = jnp.zeros_like(acc_ref)

    acc_ref[...] += jnp.dot(a_ref[...], srhs_ref[...],
                            preferred_element_type=jnp.float32)

    @pl.when(k == pl.num_programs(1) - 1)
    def _():
        out_ref[...] = jnp.tanh(acc_ref[...][:, :1] + xterm_ref[...])


def score_pass(a_bf, srhs_bf, xterm, budget):
    npad = a_bf.shape[0]
    tm = _pick_tile(npad, budget["tm_cap"], min_tiles=2)
    tk = _pick_tile(npad, budget["tk_cap"])
    grid = (npad // tm, npad // tk)
    a_spec = _a_block_spec(tm, tk, budget["a_buffers"], grid[0] * grid[1])
    return pl.pallas_call(
        _score_pass_kernel,
        out_shape=jax.ShapeDtypeStruct((npad, 1), jnp.float32),
        grid_spec=pltpu.PrefetchScalarGridSpec(
            num_scalar_prefetch=0,
            grid=grid,
            in_specs=[a_spec,                                           # A_hat (bf16)
                      pl.BlockSpec((tk, SCORE_W), lambda i, k: (k, 0)), # x1@w_rel (bf16)
                      pl.BlockSpec((tm, 1), lambda i, k: (i, 0))],      # xterm (f32)
            out_specs=pl.BlockSpec((tm, 1), lambda i, k: (i, 0)),
            scratch_shapes=[pltpu.VMEM((tm, SCORE_W), jnp.float32)],
        ),
        compiler_params=pltpu.CompilerParams(
            dimension_semantics=("parallel", "arbitrary"),
            vmem_limit_bytes=budget["vmem_limit"]),
    )(a_bf, srhs_bf, xterm)


# ---------------- kernel 4: global-branch closed form + all three 2-layer heads ----------------

def _heads_kernel(xp_ref, xl_ref, g1_ref, g2_ref,
                  wg1_ref, bg1_ref, wg2_ref, bg2_ref,
                  l1w_ref, l1b_ref, l2w_ref, l2b_ref,
                  ll1w_ref, ll1b_ref, ll2w_ref, ll2b_ref,
                  gl1w_ref, gl1b_ref, gl2w_ref, gl2b_ref,
                  out_ref, outl_ref, outg_ref, *, hidden):
    f32 = jnp.float32
    b = xp_ref.shape[0]

    # global branch: closed form of GCNConv on the virtual-node graph.
    # graph 0's virtual node aggregates scale * sum(rows) (scale folded into g*_ref);
    # all other graphs' virtual nodes only see their (zero) self feature -> leaky(bias).
    v1 = _leaky(jnp.dot(g1_ref[...], wg1_ref[...], preferred_element_type=f32) + bg1_ref[...])
    v2 = _leaky(jnp.dot(g2_ref[...], wg2_ref[...], preferred_element_type=f32) + bg2_ref[...])
    r1 = _leaky(bg1_ref[...])
    r2 = _leaky(bg2_ref[...])
    ridx = lax.broadcasted_iota(jnp.int32, (b, hidden), 0)
    xg1 = jnp.where(ridx == 0, v1, r1)            # (B, H)
    xg2 = jnp.where(ridx == 0, v2, r2)            # (B, H)

    def mlp(h, w1, b1, w2, b2):
        h = _leaky(jnp.dot(h, w1, preferred_element_type=f32) + b1)
        return jnp.dot(h, w2, preferred_element_type=f32) + b2

    out_ref[...] = mlp(xp_ref[...], l1w_ref[...], l1b_ref[...], l2w_ref[...], l2b_ref[...])
    outl_ref[...] = mlp(xl_ref[...], ll1w_ref[...], ll1b_ref[...], ll2w_ref[...], ll2b_ref[...])

    hg = _leaky(jnp.dot(xg1, gl1w_ref[:hidden, :], preferred_element_type=f32)
                + jnp.dot(xg2, gl1w_ref[hidden:, :], preferred_element_type=f32)
                + gl1b_ref[...])
    outg_ref[...] = jnp.dot(hg, gl2w_ref[...], preferred_element_type=f32) + gl2b_ref[...]


def run_heads(x_pooled, x_local, gsum1, gsum2, params, batch_size, hidden, budget):
    args = [
        x_pooled, x_local, gsum1, gsum2,
        params["global_conv1_w"], params["global_conv1_b"].reshape(1, -1),
        params["global_conv2_w"], params["global_conv2_b"].reshape(1, -1),
        params["lin1_w"], params["lin1_b"].reshape(1, -1),
        params["lin2_w"], params["lin2_b"].reshape(1, -1),
        params["local_lin1_w"], params["local_lin1_b"].reshape(1, -1),
        params["local_lin2_w"], params["local_lin2_b"].reshape(1, -1),
        params["global_lin1_w"], params["global_lin1_b"].reshape(1, -1),
        params["global_lin2_w"], params["global_lin2_b"].reshape(1, -1),
    ]
    out_sds = jax.ShapeDtypeStruct((batch_size, 2), jnp.float32)
    return pl.pallas_call(
        functools.partial(_heads_kernel, hidden=hidden),
        out_shape=(out_sds, out_sds, out_sds),
        in_specs=[_vmem() for _ in args],
        out_specs=(_vmem(), _vmem(), _vmem()),
        compiler_params=pltpu.CompilerParams(vmem_limit_bytes=budget["vmem_limit"]),
    )(*args)


# ----------------------------- parameters -----------------------------

def init_params(key, input_dim, hidden=32):
    def lin_init(k, fan_in, fan_out):
        k1, k2 = jax.random.split(k)
        w = jax.random.normal(k1, (fan_in, fan_out), jnp.float32) / jnp.sqrt(float(fan_in))
        b = jax.random.normal(k2, (fan_out,), jnp.float32) * 0.05
        return w, b

    keys = jax.random.split(key, 14)
    p = {}
    p["local_conv1_w"], p["local_conv1_b"] = lin_init(keys[0], input_dim, hidden)
    p["local_conv2_w"], p["local_conv2_b"] = lin_init(keys[1], hidden, hidden)
    p["global_conv1_w"], p["global_conv1_b"] = lin_init(keys[2], hidden, hidden)
    p["global_conv2_w"], p["global_conv2_b"] = lin_init(keys[3], hidden, hidden)
    p["pool1_w_rel"], p["pool1_b_rel"] = lin_init(keys[4], hidden, 1)
    p["pool1_w_root"], _ = lin_init(keys[5], hidden, 1)
    p["pool2_w_rel"], p["pool2_b_rel"] = lin_init(keys[6], hidden, 1)
    p["pool2_w_root"], _ = lin_init(keys[7], hidden, 1)
    p["lin1_w"], p["lin1_b"] = lin_init(keys[8], hidden, 8)
    p["lin2_w"], p["lin2_b"] = lin_init(keys[9], 8, 2)
    p["local_lin1_w"], p["local_lin1_b"] = lin_init(keys[10], 2 * hidden, 8)
    p["local_lin2_w"], p["local_lin2_b"] = lin_init(keys[11], 8, 2)
    p["global_lin1_w"], p["global_lin1_b"] = lin_init(keys[12], 2 * hidden, 8)
    p["global_lin2_w"], p["global_lin2_b"] = lin_init(keys[13], 8, 2)
    return p


# ----------------------------- forward pass -----------------------------

@functools.partial(jax.jit, static_argnames=("batch_size", "pool"))
def view_gnn_forward(params, x, edge_index, *, batch_size, pool="mean"):
    n = x.shape[0]
    hidden = params["local_conv1_w"].shape[1]
    src, tgt = edge_index[0], edge_index[1]
    budget = _hw_budget()

    # ============ layer 1: GCNConv + fused SAGPooling scorer projections ============
    npad = _round_up(n, PAD)
    # dense A_hat = A + I built directly in bf16 (integer edge counts are exact in bf16);
    # padded rows/cols are all-zero so they never contaminate real rows.
    a1 = jnp.zeros((npad, npad), jnp.bfloat16)
    a1 = a1.at[tgt, src].add(1.0)
    a1 = a1.at[jnp.arange(n), jnp.arange(n)].add(1.0)
    deg1 = (jnp.zeros((npad,), jnp.float32).at[tgt].add(1.0)
            + (jnp.arange(npad) < n).astype(jnp.float32))       # in-degree + self-loop
    dinv1 = jnp.where(deg1 > 0, lax.rsqrt(deg1), 0.0).reshape(npad, 1)

    x_pad = jnp.zeros((npad, x.shape[1]), x.dtype).at[:n].set(x)
    rhs1 = rhs_prep(x_pad, params["local_conv1_w"], dinv1, budget)

    wrel1 = _pad_cols(params["pool1_w_rel"], SCORE_W)
    wdiff1 = params["pool1_w_root"] - params["pool1_w_rel"]
    brel1 = params["pool1_b_rel"].reshape(1, 1)
    x1_pad, srhs1, xterm1 = gcn_conv_pass(a1, rhs1, dinv1,
                                          params["local_conv1_b"].reshape(1, -1),
                                          wrel1, wdiff1, brel1, budget)
    x1 = x1_pad[:n]                                              # bf16
    score1 = score_pass(a1, srhs1, xterm1, budget)[:n, 0]

    # per-graph readouts: cheap O(N*h) reductions, left to XLA
    x_local1 = jnp.max(x1.reshape(batch_size, -1, hidden), axis=1)
    n_per1 = n // batch_size
    scale1 = batch_size / math.sqrt(n_per1 * batch_size + 1.0)
    gsum1 = scale1 * jnp.sum(x1[:n_per1].astype(jnp.float32), axis=0, keepdims=True)

    # ============ SAGPooling 1 (batch defaults to zeros -> global top-k) ============
    # TODO(synk): argsort tie-breaking may differ from torch.topk for exactly-tied scores.
    k1 = math.ceil(0.5 * n)
    perm1 = jnp.argsort(-score1)[:k1]
    xp1 = x1[perm1].astype(jnp.float32) * score1[perm1][:, None]
    k1pad = _round_up(k1, PAD)
    # bf16 double gather: (A+I) restricted to kept nodes == A_kept + I
    a2 = jnp.zeros((k1pad, k1pad), jnp.bfloat16).at[:k1, :k1].set(a1[perm1][:, perm1])
    deg2 = jnp.sum(a2, axis=1, dtype=jnp.float32)
    dinv2 = jnp.where(deg2 > 0, lax.rsqrt(deg2), 0.0).reshape(k1pad, 1)

    # ============ layer 2 ============
    xp1_pad = jnp.zeros((k1pad, hidden), jnp.float32).at[:k1].set(xp1)
    rhs2 = rhs_prep(xp1_pad, params["local_conv2_w"], dinv2, budget)
    wrel2 = _pad_cols(params["pool2_w_rel"], SCORE_W)
    wdiff2 = params["pool2_w_root"] - params["pool2_w_rel"]
    brel2 = params["pool2_b_rel"].reshape(1, 1)
    x2_pad, srhs2, xterm2 = gcn_conv_pass(a2, rhs2, dinv2,
                                          params["local_conv2_b"].reshape(1, -1),
                                          wrel2, wdiff2, brel2, budget)
    x2 = x2_pad[:k1]                                             # bf16
    score2 = score_pass(a2, srhs2, xterm2, budget)[:k1, 0]

    x_local2 = jnp.max(x2.reshape(batch_size, -1, hidden), axis=1)
    n_per2 = k1 // batch_size
    scale2 = batch_size / math.sqrt(n_per2 * batch_size + 1.0)
    gsum2 = scale2 * jnp.sum(x2[:n_per2].astype(jnp.float32), axis=0, keepdims=True)

    # ============ SAGPooling 2 + readout ============
    k2 = math.ceil(0.5 * k1)
    perm2 = jnp.argsort(-score2)[:k2]
    xp2 = x2[perm2].astype(jnp.float32) * score2[perm2][:, None]
    xb = xp2.reshape(batch_size, -1, hidden)
    if pool == "max":
        x_pooled = jnp.max(xb, axis=1)
    elif pool == "sum":
        x_pooled = jnp.sum(xb, axis=1)
    else:
        x_pooled = jnp.mean(xb, axis=1)

    x_local = jnp.concatenate([x_local1, x_local2], axis=1).astype(jnp.float32)

    # TODO(synk): F.dropout(p=0.5) is identity here (eval mode); no Pallas RNG needed.
    # TODO(synk): optional v5e/v6e-only variant could keep bf16 A_hat VMEM-resident across
    #             the conv and score passes (single pallas_call) for graphs up to ~6K nodes.
    out, out_local, out_global = run_heads(x_pooled, x_local, gsum1, gsum2,
                                           params, batch_size, hidden, budget)

    selected_nodes = jnp.ones((10,), jnp.float32)   # mirrors the reference placeholder
    return out, out_local, out_global, selected_nodes


if __name__ == "__main__":
    key = jax.random.PRNGKey(0)
    k_x, k_p = jax.random.split(key)

    batch_size, nodes_per_graph, input_dim, hidden = 2, 8, 16, 32
    num_nodes = batch_size * nodes_per_graph

    # node features
    x = jax.random.normal(k_x, (num_nodes, input_dim), jnp.float32)

    # ring graph per example, both directions (PyG convention: row0=src, row1=tgt)
    edges = []
    for g in range(batch_size):
        off = g * nodes_per_graph
        for i in range(nodes_per_graph):
            j = (i + 1) % nodes_per_graph
            edges.append((off + i, off + j))
            edges.append((off + j, off + i))
    edge_index = jnp.array(edges, dtype=jnp.int32).T   # (2, 32)

    params = init_params(k_p, input_dim, hidden)

    outs = view_gnn_forward(params, x, edge_index, batch_size=batch_size, pool="mean")
    jax.block_until_ready(outs)

    out, out_local, out_global, selected = outs
    assert out.shape == (batch_size, 2)
    assert out_local.shape == (batch_size, 2)
    assert out_global.shape == (batch_size, 2)
    assert selected.shape == (10,)
    print("KERNEL_OK")
</pallas_src>

<mosaic_0001>
module attributes {stable_mosaic.version = 11 : i64} {
  func.func private @main(%arg0: i32) attributes {dimension_semantics = [#tpu.dimension_semantics<core_parallel>], iteration_bounds = array<i64: 2>, tpu.core_type = #tpu.core_type<sc_scalar_subcore>, window_params = []} {
    return
  }
}

module attributes {stable_mosaic.version = 11 : i64} {
  func.func private @main(%arg0: i32) attributes {dimension_semantics = [#tpu.dimension_semantics<core_parallel>], iteration_bounds = array<i64: 2>, tpu.core_type = #tpu.core_type<sc_scalar_subcore>, window_params = []} {
    return
  }
}

module attributes {stable_mosaic.version = 11 : i64} {
  func.func @_rhs_prep_kernel(%arg0: i32, %arg1: memref<512x16xf32, #tpu.memory_space<vmem>>, %arg2: memref<16x32xf32, #tpu.memory_space<vmem>>, %arg3: memref<512x1xf32, #tpu.memory_space<vmem>>, %arg4: memref<512x32xbf16, #tpu.memory_space<vmem>>) attributes {dimension_semantics = [#tpu.dimension_semantics<parallel>], iteration_bounds = array<i64: 1>, scalar_prefetch = 0 : i64, scratch_operands = 0 : i64, tpu.core_type = #tpu.core_type<tc>, window_params = [{transform_indices = @transform_0, window_bounds = array<i64: 512, 16>}, {pipeline_mode = #tpu.pipeline_mode<synchronous>, transform_indices = @transform_1, window_bounds = array<i64: 16, 32>}, {transform_indices = @transform_2, window_bounds = array<i64: 512, 1>}, {transform_indices = @transform_3, window_bounds = array<i64: 512, 32>}]} {
    %c0 = arith.constant 0 : index
    %c0_0 = arith.constant 0 : index
    %0 = vector.load %arg1[%c0, %c0_0] : memref<512x16xf32, #tpu.memory_space<vmem>>, vector<512x16xf32>
    %c0_1 = arith.constant 0 : index
    %c0_2 = arith.constant 0 : index
    %1 = vector.load %arg2[%c0_1, %c0_2] : memref<16x32xf32, #tpu.memory_space<vmem>>, vector<16x32xf32>
    %cst = arith.constant dense<0.000000e+00> : vector<512x32xf32>
    %2 = tpu.matmul %0, %1, %cst {dimension_numbers = #tpu.dot_dimension_numbers<[1], [0], [0], [1], [0, 0, 1, 1], [], []>} : vector<512x16xf32>, vector<16x32xf32>, vector<512x32xf32> -> vector<512x32xf32>
    %c0_3 = arith.constant 0 : index
    %c0_4 = arith.constant 0 : index
    %3 = vector.load %arg3[%c0_3, %c0_4] : memref<512x1xf32, #tpu.memory_space<vmem>>, vector<512x1xf32>
    %4 = vector.broadcast %3 : vector<512x1xf32> to vector<512x32xf32>
    %5 = arith.mulf %4, %2 : vector<512x32xf32>
    %6 = arith.truncf %5 : vector<512x32xf32> to vector<512x32xbf16>
    %c0_5 = arith.constant 0 : index
    %c0_6 = arith.constant 0 : index
    %7 = vector.load %arg4[%c0_5, %c0_6] : memref<512x32xbf16, #tpu.memory_space<vmem>>, vector<512x32xbf16>
    tpu.vector_store %arg4[%c0_5, %c0_6], %6 {strides = array<i32>} : memref<512x32xbf16, #tpu.memory_space<vmem>>, vector<512x32xbf16>,
    return
  }
  func.func @transform_0(%arg0: i32) -> (i32, i32) {
    %c0_i32 = arith.constant 0 : i32
    %c0_i32_0 = arith.constant 0 : i32
    return %arg0, %c0_i32 : i32, i32
  }
  func.func @transform_1(%arg0: i32) -> (i32, i32) {
    %c0_i32 = arith.constant 0 : i32
    %c0_i32_0 = arith.constant 0 : i32
    %c0_i32_1 = arith.constant 0 : i32
    return %c0_i32, %c0_i32_0 : i32, i32
  }
  func.func @transform_2(%arg0: i32) -> (i32, i32) {
    %c0_i32 = arith.constant 0 : i32
    %c0_i32_0 = arith.constant 0 : i32
    return %arg0, %c0_i32 : i32, i32
  }
  func.func @transform_3(%arg0: i32) -> (i32, i32) {
    %c0_i32 = arith.constant 0 : i32
    %c0_i32_0 = arith.constant 0 : i32
    return %arg0, %c0_i32 : i32, i32
  }
}

module attributes {stable_mosaic.version = 11 : i64} {
  func.func @_conv_pass_kernel(%arg0: i32, %arg1: i32, %arg2: memref<256x512xbf16, #tpu.memory_space<vmem>>, %arg3: memref<512x32xbf16, #tpu.memory_space<vmem>>, %arg4: memref<256x1xf32, #tpu.memory_space<vmem>>, %arg5: memref<1x32xf32, #tpu.memory_space<vmem>>, %arg6: memref<32x8xf32, #tpu.memory_space<vmem>>, %arg7: memref<32x1xf32, #tpu.memory_space<vmem>>, %arg8: memref<1x1xf32, #tpu.memory_space<vmem>>, %arg9: memref<256x32xbf16, #tpu.memory_space<vmem>>, %arg10: memref<256x8xbf16, #tpu.memory_space<vmem>>, %arg11: memref<256x1xf32, #tpu.memory_space<vmem>>, %arg12: memref<256x32xf32, #tpu.memory_space<vmem>>) attributes {dimension_semantics = [#tpu.dimension_semantics<parallel>, #tpu.dimension_semantics<arbitrary>], iteration_bounds = array<i64: 2, 1>, scalar_prefetch = 0 : i64, scratch_operands = 1 : i64, tpu.core_type = #tpu.core_type<tc>, window_params = [{transform_indices = @transform_0, window_bounds = array<i64: 256, 512>}, {transform_indices = @transform_1, window_bounds = array<i64: 512, 32>}, {transform_indices = @transform_2, window_bounds = array<i64: 256, 1>}, {pipeline_mode = #tpu.pipeline_mode<synchronous>, transform_indices = @transform_3, window_bounds = array<i64: 1, 32>}, {pipeline_mode = #tpu.pipeline_mode<synchronous>, transform_indices = @transform_4, window_bounds = array<i64: 32, 8>}, {pipeline_mode = #tpu.pipeline_mode<synchronous>, transform_indices = @transform_5, window_bounds = array<i64: 32, 1>}, {pipeline_mode = #tpu.pipeline_mode<synchronous>, transform_indices = @transform_6, window_bounds = array<i64: 1, 1>}, {transform_indices = @transform_7, window_bounds = array<i64: 256, 32>}, {transform_indices = @transform_8, window_bounds = array<i64: 256, 8>}, {transform_indices = @transform_9, window_bounds = array<i64: 256, 1>}]} {
    %c0_i32 = arith.constant 0 : i32
    %0 = arith.cmpi eq, %arg1, %c0_i32 : i32
    %1 = arith.extui %0 : i1 to i32
    %c0_i32_0 = arith.constant 0 : i32
    %2 = arith.cmpi ne, %1, %c0_i32_0 : i32
    scf.if %2 {
      %cst_10 = arith.constant 0.000000e+00 : f32
      %12 = vector.broadcast %cst_10 : f32 to vector<256x32xf32>
      %c0_11 = arith.constant 0 : index
      %c0_12 = arith.constant 0 : index
      %13 = vector.load %arg12[%c0_11, %c0_12] : memref<256x32xf32, #tpu.memory_space<vmem>>, vector<256x32xf32>
      tpu.vector_store %arg12[%c0_11, %c0_12], %12 {strides = array<i32>} : memref<256x32xf32, #tpu.memory_space<vmem>>, vector<256x32xf32>,
    } else {
    }
    %c0 = arith.constant 0 : index
    %c0_1 = arith.constant 0 : index
    %3 = vector.load %arg12[%c0, %c0_1] : memref<256x32xf32, #tpu.memory_space<vmem>>, vector<256x32xf32>
    %c0_2 = arith.constant 0 : index
    %c0_3 = arith.constant 0 : index
    %4 = vector.load %arg2[%c0_2, %c0_3] : memref<256x512xbf16, #tpu.memory_space<vmem>>, vector<256x512xbf16>
    %c0_4 = arith.constant 0 : index
    %c0_5 = arith.constant 0 : index
    %5 = vector.load %arg3[%c0_4, %c0_5] : memref<512x32xbf16, #tpu.memory_space<vmem>>, vector<512x32xbf16>
    %cst = arith.constant dense<0.000000e+00> : vector<256x32xf32>
    %6 = tpu.matmul %4, %5, %cst {dimension_numbers = #tpu.dot_dimension_numbers<[1], [0], [0], [1], [0, 0, 1, 1], [], []>} : vector<256x512xbf16>, vector<512x32xbf16>, vector<256x32xf32> -> vector<256x32xf32>
    %7 = arith.addf %3, %6 : vector<256x32xf32>
    %c0_6 = arith.constant 0 : index
    %c0_7 = arith.constant 0 : index
    %8 = vector.load %arg12[%c0_6, %c0_7] : memref<256x32xf32, #tpu.memory_space<vmem>>, vector<256x32xf32>
    tpu.vector_store %arg12[%c0_6, %c0_7], %7 {strides = array<i32>} : memref<256x32xf32, #tpu.memory_space<vmem>>, vector<256x32xf32>,
    %c0_i32_8 = arith.constant 0 : i32
    %9 = arith.cmpi eq, %arg1, %c0_i32_8 : i32
    %10 = arith.extui %9 : i1 to i32
    %c0_i32_9 = arith.constant 0 : i32
    %11 = arith.cmpi ne, %10, %c0_i32_9 : i32
    scf.if %11 {
      %c0_10 = arith.constant 0 : index
      %c0_11 = arith.constant 0 : index
      %12 = vector.load %arg12[%c0_10, %c0_11] : memref<256x32xf32, #tpu.memory_space<vmem>>, vector<256x32xf32>
      %c0_12 = arith.constant 0 : index
      %c0_13 = arith.constant 0 : index
      %13 = vector.load %arg4[%c0_12, %c0_13] : memref<256x1xf32, #tpu.memory_space<vmem>>, vector<256x1xf32>
      %14 = vector.broadcast %13 : vector<256x1xf32> to vector<256x32xf32>
      %15 = arith.mulf %12, %14 : vector<256x32xf32>
      %c0_14 = arith.constant 0 : index
      %c0_15 = arith.constant 0 : index
      %16 = vector.load %arg5[%c0_14, %c0_15] : memref<1x32xf32, #tpu.memory_space<vmem>>, vector<1x32xf32>
      %17 = vector.broadcast %16 : vector<1x32xf32> to vector<256x32xf32>
      %18 = arith.addf %15, %17 : vector<256x32xf32>
      %cst_16 = arith.constant 0.000000e+00 : f32
      %19 = vector.broadcast %cst_16 : f32 to vector<256x32xf32>
      %20 = arith.cmpf oge, %18, %19 : vector<256x32xf32>
      %cst_17 = arith.constant 2.000000e-01 : f32
      %21 = vector.broadcast %cst_17 : f32 to vector<256x32xf32>
      %22 = arith.mulf %21, %18 : vector<256x32xf32>
      %23 = arith.select %20, %18, %22 : vector<256x32xi1>, vector<256x32xf32>
      %24 = arith.truncf %23 : vector<256x32xf32> to vector<256x32xbf16>
      %c0_18 = arith.constant 0 : index
      %c0_19 = arith.constant 0 : index
      %25 = vector.load %arg9[%c0_18, %c0_19] : memref<256x32xbf16, #tpu.memory_space<vmem>>, vector<256x32xbf16>
      tpu.vector_store %arg9[%c0_18, %c0_19], %24 {strides = array<i32>} : memref<256x32xbf16, #tpu.memory_space<vmem>>, vector<256x32xbf16>,
      %c0_20 = arith.constant 0 : index
      %c0_21 = arith.constant 0 : index
      %26 = vector.load %arg6[%c0_20, %c0_21] : memref<32x8xf32, #tpu.memory_space<vmem>>, vector<32x8xf32>
      %cst_22 = arith.constant dense<0.000000e+00> : vector<256x8xf32>
      %27 = tpu.matmul %23, %26, %cst_22 {dimension_numbers = #tpu.dot_dimension_numbers<[1], [0], [0], [1], [0, 0, 1, 1], [], []>} : vector<256x32xf32>, vector<32x8xf32>, vector<256x8xf32> -> vector<256x8xf32>
      %28 = arith.truncf %27 : vector<256x8xf32> to vector<256x8xbf16>
      %c0_23 = arith.constant 0 : index
      %c0_24 = arith.constant 0 : index
      %29 = vector.load %arg10[%c0_23, %c0_24] : memref<256x8xbf16, #tpu.memory_space<vmem>>, vector<256x8xbf16>
      tpu.vector_store %arg10[%c0_23, %c0_24], %28 {strides = array<i32>} : memref<256x8xbf16, #tpu.memory_space<vmem>>, vector<256x8xbf16>,
      %c0_25 = arith.constant 0 : index
      %c0_26 = arith.constant 0 : index
      %30 = vector.load %arg7[%c0_25, %c0_26] : memref<32x1xf32, #tpu.memory_space<vmem>>, vector<32x1xf32>
      %cst_27 = arith.constant dense<0.000000e+00> : vector<256x1xf32>
      %31 = tpu.matmul %23, %30, %cst_27 {dimension_numbers = #tpu.dot_dimension_numbers<[1], [0], [0], [1], [0, 0, 1, 1], [], []>} : vector<256x32xf32>, vector<32x1xf32>, vector<256x1xf32> -> vector<256x1xf32>
      %c0_28 = arith.constant 0 : index
      %c0_29 = arith.constant 0 : index
      %32 = vector.load %arg8[%c0_28, %c0_29] : memref<1x1xf32, #tpu.memory_space<vmem>>, vector<1x1xf32>
      %33 = vector.broadcast %32 : vector<1x1xf32> to vector<256x1xf32>
      %34 = arith.addf %31, %33 : vector<256x1xf32>
      %c0_30 = arith.constant 0 : index
      %c0_31 = arith.constant 0 : index
      %35 = vector.load %arg11[%c0_30, %c0_31] : memref<256x1xf32, #tpu.memory_space<vmem>>, vector<256x1xf32>
      tpu.vector_store %arg11[%c0_30, %c0_31], %34 {strides = array<i32>} : memref<256x1xf32, #tpu.memory_space<vmem>>, vector<256x1xf32>,
    } else {
    }
    return
  }
  func.func @transform_0(%arg0: i32, %arg1: i32) -> (i32, i32) {
    %c0_i32 = arith.constant 0 : i32
    return %arg0, %arg1 : i32, i32
  }
  func.func @transform_1(%arg0: i32, %arg1: i32) -> (i32, i32) {
    %c0_i32 = arith.constant 0 : i32
    %c0_i32_0 = arith.constant 0 : i32
    return %arg1, %c0_i32 : i32, i32
  }
  func.func @transform_2(%arg0: i32, %arg1: i32) -> (i32, i32) {
    %c0_i32 = arith.constant 0 : i32
    %c0_i32_0 = arith.constant 0 : i32
    return %arg0, %c0_i32 : i32, i32
  }
  func.func @transform_3(%arg0: i32, %arg1: i32) -> (i32, i32) {
    %c0_i32 = arith.constant 0 : i32
    %c0_i32_0 = arith.constant 0 : i32
    %c0_i32_1 = arith.constant 0 : i32
    return %c0_i32, %c0_i32_0 : i32, i32
  }
  func.func @transform_4(%arg0: i32, %arg1: i32) -> (i32, i32) {
    %c0_i32 = arith.constant 0 : i32
    %c0_i32_0 = arith.constant 0 : i32
    %c0_i32_1 = arith.constant 0 : i32
    return %c0_i32, %c0_i32_0 : i32, i32
  }
  func.func @transform_5(%arg0: i32, %arg1: i32) -> (i32, i32) {
    %c0_i32 = arith.constant 0 : i32
    %c0_i32_0 = arith.constant 0 : i32
    %c0_i32_1 = arith.constant 0 : i32
    return %c0_i32, %c0_i32_0 : i32, i32
  }
  func.func @transform_6(%arg0: i32, %arg1: i32) -> (i32, i32) {
    %c0_i32 = arith.constant 0 : i32
    %c0_i32_0 = arith.constant 0 : i32
    %c0_i32_1 = arith.constant 0 : i32
    return %c0_i32, %c0_i32_0 : i32, i32
  }
  func.func @transform_7(%arg0: i32, %arg1: i32) -> (i32, i32) {
    %c0_i32 = arith.constant 0 : i32
    %c0_i32_0 = arith.constant 0 : i32
    return %arg0, %c0_i32 : i32, i32
  }
  func.func @transform_8(%arg0: i32, %arg1: i32) -> (i32, i32) {
    %c0_i32 = arith.constant 0 : i32
    %c0_i32_0 = arith.constant 0 : i32
    return %arg0, %c0_i32 : i32, i32
  }
  func.func @transform_9(%arg0: i32, %arg1: i32) -> (i32, i32) {
    %c0_i32 = arith.constant 0 : i32
    %c0_i32_0 = arith.constant 0 : i32
    return %arg0, %c0_i32 : i32, i32
  }
}

module attributes {stable_mosaic.version = 11 : i64} {
  func.func @_score_pass_kernel(%arg0: i32, %arg1: i32, %arg2: memref<256x512xbf16, #tpu.memory_space<vmem>>, %arg3: memref<512x8xbf16, #tpu.memory_space<vmem>>, %arg4: memref<256x1xf32, #tpu.memory_space<vmem>>, %arg5: memref<256x1xf32, #tpu.memory_space<vmem>>, %arg6: memref<256x8xf32, #tpu.memory_space<vmem>>) attributes {dimension_semantics = [#tpu.dimension_semantics<parallel>, #tpu.dimension_semantics<arbitrary>], iteration_bounds = array<i64: 2, 1>, scalar_prefetch = 0 : i64, scratch_operands = 1 : i64, tpu.core_type = #tpu.core_type<tc>, window_params = [{transform_indices = @transform_0, window_bounds = array<i64: 256, 512>}, {transform_indices = @transform_1, window_bounds = array<i64: 512, 8>}, {transform_indices = @transform_2, window_bounds = array<i64: 256, 1>}, {transform_indices = @transform_3, window_bounds = array<i64: 256, 1>}]} {
    %c0_i32 = arith.constant 0 : i32
    %0 = arith.cmpi eq, %arg1, %c0_i32 : i32
    %1 = arith.extui %0 : i1 to i32
    %c0_i32_0 = arith.constant 0 : i32
    %2 = arith.cmpi ne, %1, %c0_i32_0 : i32
    scf.if %2 {
      %cst_10 = arith.constant 0.000000e+00 : f32
      %12 = vector.broadcast %cst_10 : f32 to vector<256x8xf32>
      %c0_11 = arith.constant 0 : index
      %c0_12 = arith.constant 0 : index
      %13 = vector.load %arg6[%c0_11, %c0_12] : memref<256x8xf32, #tpu.memory_space<vmem>>, vector<256x8xf32>
      tpu.vector_store %arg6[%c0_11, %c0_12], %12 {strides = array<i32>} : memref<256x8xf32, #tpu.memory_space<vmem>>, vector<256x8xf32>,
    } else {
    }
    %c0 = arith.constant 0 : index
    %c0_1 = arith.constant 0 : index
    %3 = vector.load %arg6[%c0, %c0_1] : memref<256x8xf32, #tpu.memory_space<vmem>>, vector<256x8xf32>
    %c0_2 = arith.constant 0 : index
    %c0_3 = arith.constant 0 : index
    %4 = vector.load %arg2[%c0_2, %c0_3] : memref<256x512xbf16, #tpu.memory_space<vmem>>, vector<256x512xbf16>
    %c0_4 = arith.constant 0 : index
    %c0_5 = arith.constant 0 : index
    %5 = vector.load %arg3[%c0_4, %c0_5] : memref<512x8xbf16, #tpu.memory_space<vmem>>, vector<512x8xbf16>
    %cst = arith.constant dense<0.000000e+00> : vector<256x8xf32>
    %6 = tpu.matmul %4, %5, %cst {dimension_numbers = #tpu.dot_dimension_numbers<[1], [0], [0], [1], [0, 0, 1, 1], [], []>} : vector<256x512xbf16>, vector<512x8xbf16>, vector<256x8xf32> -> vector<256x8xf32>
    %7 = arith.addf %3, %6 : vector<256x8xf32>
    %c0_6 = arith.constant 0 : index
    %c0_7 = arith.constant 0 : index
    %8 = vector.load %arg6[%c0_6, %c0_7] : memref<256x8xf32, #tpu.memory_space<vmem>>, vector<256x8xf32>
    tpu.vector_store %arg6[%c0_6, %c0_7], %7 {strides = array<i32>} : memref<256x8xf32, #tpu.memory_space<vmem>>, vector<256x8xf32>,
    %c0_i32_8 = arith.constant 0 : i32
    %9 = arith.cmpi eq, %arg1, %c0_i32_8 : i32
    %10 = arith.extui %9 : i1 to i32
    %c0_i32_9 = arith.constant 0 : i32
    %11 = arith.cmpi ne, %10, %c0_i32_9 : i32
    scf.if %11 {
      %c0_10 = arith.constant 0 : index
      %c0_11 = arith.constant 0 : index
      %12 = vector.load %arg6[%c0_10, %c0_11] : memref<256x8xf32, #tpu.memory_space<vmem>>, vector<256x8xf32>
      %13 = vector.extract_strided_slice %12 {offsets = [0, 0], sizes = [256, 1], strides = [1, 1]} : vector<256x8xf32> to vector<256x1xf32>
      %c0_12 = arith.constant 0 : index
      %c0_13 = arith.constant 0 : index
      %14 = vector.load %arg4[%c0_12, %c0_13] : memref<256x1xf32, #tpu.memory_space<vmem>>, vector<256x1xf32>
      %15 = arith.addf %13, %14 : vector<256x1xf32>
      %16 = math.tanh %15 : vector<256x1xf32>
      %c0_14 = arith.constant 0 : index
      %c0_15 = arith.constant 0 : index
      %17 = vector.load %arg5[%c0_14, %c0_15] : memref<256x1xf32, #tpu.memory_space<vmem>>, vector<256x1xf32>
      tpu.vector_store %arg5[%c0_14, %c0_15], %16 {strides = array<i32>} : memref<256x1xf32, #tpu.memory_space<vmem>>, vector<256x1xf32>,
    } else {
    }
    return
  }
  func.func @transform_0(%arg0: i32, %arg1: i32) -> (i32, i32) {
    %c0_i32 = arith.constant 0 : i32
    return %arg0, %arg1 : i32, i32
  }
  func.func @transform_1(%arg0: i32, %arg1: i32) -> (i32, i32) {
    %c0_i32 = arith.constant 0 : i32
    %c0_i32_0 = arith.constant 0 : i32
    return %arg1, %c0_i32 : i32, i32
  }
  func.func @transform_2(%arg0: i32, %arg1: i32) -> (i32, i32) {
    %c0_i32 = arith.constant 0 : i32
    %c0_i32_0 = arith.constant 0 : i32
    return %arg0, %c0_i32 : i32, i32
  }
  func.func @transform_3(%arg0: i32, %arg1: i32) -> (i32, i32) {
    %c0_i32 = arith.constant 0 : i32
    %c0_i32_0 = arith.constant 0 : i32
    return %arg0, %c0_i32 : i32, i32
  }
}

module attributes {stable_mosaic.version = 11 : i64} {
  func.func @_rhs_prep_kernel(%arg0: i32, %arg1: memref<512x32xf32, #tpu.memory_space<vmem>>, %arg2: memref<32x32xf32, #tpu.memory_space<vmem>>, %arg3: memref<512x1xf32, #tpu.memory_space<vmem>>, %arg4: memref<512x32xbf16, #tpu.memory_space<vmem>>) attributes {dimension_semantics = [#tpu.dimension_semantics<parallel>], iteration_bounds = array<i64: 1>, scalar_prefetch = 0 : i64, scratch_operands = 0 : i64, tpu.core_type = #tpu.core_type<tc>, window_params = [{transform_indices = @transform_0, window_bounds = array<i64: 512, 32>}, {pipeline_mode = #tpu.pipeline_mode<synchronous>, transform_indices = @transform_1, window_bounds = array<i64: 32, 32>}, {transform_indices = @transform_2, window_bounds = array<i64: 512, 1>}, {transform_indices = @transform_3, window_bounds = array<i64: 512, 32>}]} {
    %c0 = arith.constant 0 : index
    %c0_0 = arith.constant 0 : index
    %0 = vector.load %arg1[%c0, %c0_0] : memref<512x32xf32, #tpu.memory_space<vmem>>, vector<512x32xf32>
    %c0_1 = arith.constant 0 : index
    %c0_2 = arith.constant 0 : index
    %1 = vector.load %arg2[%c0_1, %c0_2] : memref<32x32xf32, #tpu.memory_space<vmem>>, vector<32x32xf32>
    %cst = arith.constant dense<0.000000e+00> : vector<512x32xf32>
    %2 = tpu.matmul %0, %1, %cst {dimension_numbers = #tpu.dot_dimension_numbers<[1], [0], [0], [1], [0, 0, 1, 1], [], []>} : vector<512x32xf32>, vector<32x32xf32>, vector<512x32xf32> -> vector<512x32xf32>
    %c0_3 = arith.constant 0 : index
    %c0_4 = arith.constant 0 : index
    %3 = vector.load %arg3[%c0_3, %c0_4] : memref<512x1xf32, #tpu.memory_space<vmem>>, vector<512x1xf32>
    %4 = vector.broadcast %3 : vector<512x1xf32> to vector<512x32xf32>
    %5 = arith.mulf %4, %2 : vector<512x32xf32>
    %6 = arith.truncf %5 : vector<512x32xf32> to vector<512x32xbf16>
    %c0_5 = arith.constant 0 : index
    %c0_6 = arith.constant 0 : index
    %7 = vector.load %arg4[%c0_5, %c0_6] : memref<512x32xbf16, #tpu.memory_space<vmem>>, vector<512x32xbf16>
    tpu.vector_store %arg4[%c0_5, %c0_6], %6 {strides = array<i32>} : memref<512x32xbf16, #tpu.memory_space<vmem>>, vector<512x32xbf16>,
    return
  }
  func.func @transform_0(%arg0: i32) -> (i32, i32) {
    %c0_i32 = arith.constant 0 : i32
    %c0_i32_0 = arith.constant 0 : i32
    return %arg0, %c0_i32 : i32, i32
  }
  func.func @transform_1(%arg0: i32) -> (i32, i32) {
    %c0_i32 = arith.constant 0 : i32
    %c0_i32_0 = arith.constant 0 : i32
    %c0_i32_1 = arith.constant 0 : i32
    return %c0_i32, %c0_i32_0 : i32, i32
  }
  func.func @transform_2(%arg0: i32) -> (i32, i32) {
    %c0_i32 = arith.constant 0 : i32
    %c0_i32_0 = arith.constant 0 : i32
    return %arg0, %c0_i32 : i32, i32
  }
  func.func @transform_3(%arg0: i32) -> (i32, i32) {
    %c0_i32 = arith.constant 0 : i32
    %c0_i32_0 = arith.constant 0 : i32
    return %arg0, %c0_i32 : i32, i32
  }
}

module attributes {stable_mosaic.version = 11 : i64} {
  func.func @_heads_kernel(%arg0: memref<2x32xf32, #tpu.memory_space<vmem>>, %arg1: memref<2x64xf32, #tpu.memory_space<vmem>>, %arg2: memref<1x32xf32, #tpu.memory_space<vmem>>, %arg3: memref<1x32xf32, #tpu.memory_space<vmem>>, %arg4: memref<32x32xf32, #tpu.memory_space<vmem>>, %arg5: memref<1x32xf32, #tpu.memory_space<vmem>>, %arg6: memref<32x32xf32, #tpu.memory_space<vmem>>, %arg7: memref<1x32xf32, #tpu.memory_space<vmem>>, %arg8: memref<32x8xf32, #tpu.memory_space<vmem>>, %arg9: memref<1x8xf32, #tpu.memory_space<vmem>>, %arg10: memref<8x2xf32, #tpu.memory_space<vmem>>, %arg11: memref<1x2xf32, #tpu.memory_space<vmem>>, %arg12: memref<64x8xf32, #tpu.memory_space<vmem>>, %arg13: memref<1x8xf32, #tpu.memory_space<vmem>>, %arg14: memref<8x2xf32, #tpu.memory_space<vmem>>, %arg15: memref<1x2xf32, #tpu.memory_space<vmem>>, %arg16: memref<64x8xf32, #tpu.memory_space<vmem>>, %arg17: memref<1x8xf32, #tpu.memory_space<vmem>>, %arg18: memref<8x2xf32, #tpu.memory_space<vmem>>, %arg19: memref<1x2xf32, #tpu.memory_space<vmem>>, %arg20: memref<2x2xf32, #tpu.memory_space<vmem>>, %arg21: memref<2x2xf32, #tpu.memory_space<vmem>>, %arg22: memref<2x2xf32, #tpu.memory_space<vmem>>) attributes {dimension_semantics = [], scalar_prefetch = 0 : i64, scratch_operands = 0 : i64, tpu.core_type = #tpu.core_type<tc>} {
    %c0 = arith.constant 0 : index
    %c0_0 = arith.constant 0 : index
    %0 = vector.load %arg2[%c0, %c0_0] : memref<1x32xf32, #tpu.memory_space<vmem>>, vector<1x32xf32>
    %c0_1 = arith.constant 0 : index
    %c0_2 = arith.constant 0 : index
    %1 = vector.load %arg4[%c0_1, %c0_2] : memref<32x32xf32, #tpu.memory_space<vmem>>, vector<32x32xf32>
    %cst = arith.constant dense<0.000000e+00> : vector<1x32xf32>
    %2 = tpu.matmul %0, %1, %cst {dimension_numbers = #tpu.dot_dimension_numbers<[1], [0], [0], [1], [0, 0, 1, 1], [], []>} : vector<1x32xf32>, vector<32x32xf32>, vector<1x32xf32> -> vector<1x32xf32>
    %c0_3 = arith.constant 0 : index
    %c0_4 = arith.constant 0 : index
    %3 = vector.load %arg5[%c0_3, %c0_4] : memref<1x32xf32, #tpu.memory_space<vmem>>, vector<1x32xf32>
    %4 = arith.addf %2, %3 : vector<1x32xf32>
    %cst_5 = arith.constant 0.000000e+00 : f32
    %5 = vector.broadcast %cst_5 : f32 to vector<1x32xf32>
    %6 = arith.cmpf oge, %4, %5 : vector<1x32xf32>
    %cst_6 = arith.constant 2.000000e-01 : f32
    %7 = vector.broadcast %cst_6 : f32 to vector<1x32xf32>
    %8 = arith.mulf %7, %4 : vector<1x32xf32>
    %9 = arith.select %6, %4, %8 : vector<1x32xi1>, vector<1x32xf32>
    %c0_7 = arith.constant 0 : index
    %c0_8 = arith.constant 0 : index
    %10 = vector.load %arg3[%c0_7, %c0_8] : memref<1x32xf32, #tpu.memory_space<vmem>>, vector<1x32xf32>
    %c0_9 = arith.constant 0 : index
    %c0_10 = arith.constant 0 : index
    %11 = vector.load %arg6[%c0_9, %c0_10] : memref<32x32xf32, #tpu.memory_space<vmem>>, vector<32x32xf32>
    %cst_11 = arith.constant dense<0.000000e+00> : vector<1x32xf32>
    %12 = tpu.matmul %10, %11, %cst_11 {dimension_numbers = #tpu.dot_dimension_numbers<[1], [0], [0], [1], [0, 0, 1, 1], [], []>} : vector<1x32xf32>, vector<32x32xf32>, vector<1x32xf32> -> vector<1x32xf32>
    %c0_12 = arith.constant 0 : index
    %c0_13 = arith.constant 0 : index
    %13 = vector.load %arg7[%c0_12, %c0_13] : memref<1x32xf32, #tpu.memory_space<vmem>>, vector<1x32xf32>
    %14 = arith.addf %12, %13 : vector<1x32xf32>
    %cst_14 = arith.constant 0.000000e+00 : f32
    %15 = vector.broadcast %cst_14 : f32 to vector<1x32xf32>
    %16 = arith.cmpf oge, %14, %15 : vector<1x32xf32>
    %cst_15 = arith.constant 2.000000e-01 : f32
    %17 = vector.broadcast %cst_15 : f32 to vector<1x32xf32>
    %18 = arith.mulf %17, %14 : vector<1x32xf32>
    %19 = arith.select %16, %14, %18 : vector<1x32xi1>, vector<1x32xf32>
    %c0_16 = arith.constant 0 : index
    %c0_17 = arith.constant 0 : index
    %20 = vector.load %arg5[%c0_16, %c0_17] : memref<1x32xf32, #tpu.memory_space<vmem>>, vector<1x32xf32>
    %cst_18 = arith.constant 0.000000e+00 : f32
    %21 = vector.broadcast %cst_18 : f32 to vector<1x32xf32>
    %22 = arith.cmpf oge, %20, %21 : vector<1x32xf32>
    %cst_19 = arith.constant 2.000000e-01 : f32
    %23 = vector.broadcast %cst_19 : f32 to vector<1x32xf32>
    %24 = arith.mulf %23, %20 : vector<1x32xf32>
    %25 = arith.select %22, %20, %24 : vector<1x32xi1>, vector<1x32xf32>
    %c0_20 = arith.constant 0 : index
    %c0_21 = arith.constant 0 : index
    %26 = vector.load %arg7[%c0_20, %c0_21] : memref<1x32xf32, #tpu.memory_space<vmem>>, vector<1x32xf32>
    %cst_22 = arith.constant 0.000000e+00 : f32
    %27 = vector.broadcast %cst_22 : f32 to vector<1x32xf32>
    %28 = arith.cmpf oge, %26, %27 : vector<1x32xf32>
    %cst_23 = arith.constant 2.000000e-01 : f32
    %29 = vector.broadcast %cst_23 : f32 to vector<1x32xf32>
    %30 = arith.mulf %29, %26 : vector<1x32xf32>
    %31 = arith.select %28, %26, %30 : vector<1x32xi1>, vector<1x32xf32>
    %32 = tpu.iota {dimensions = array<i32: 0>} : vector<2x32xi32>
    %c0_i32 = arith.constant 0 : i32
    %33 = vector.broadcast %c0_i32 : i32 to vector<2x32xi32>
    %34 = arith.cmpi eq, %32, %33 : vector<2x32xi32>
    %35 = vector.shape_cast %9 : vector<1x32xf32> to vector<1x32xf32>
    %36 = vector.broadcast %35 : vector<1x32xf32> to vector<2x32xf32>
    %37 = vector.shape_cast %25 : vector<1x32xf32> to vector<1x32xf32>
    %38 = vector.broadcast %37 : vector<1x32xf32> to vector<2x32xf32>
    %39 = arith.select %34, %36, %38 : vector<2x32xi1>, vector<2x32xf32>
    %c0_i32_24 = arith.constant 0 : i32
    %40 = vector.broadcast %c0_i32_24 : i32 to vector<2x32xi32>
    %41 = arith.cmpi eq, %32, %40 : vector<2x32xi32>
    %42 = vector.shape_cast %19 : vector<1x32xf32> to vector<1x32xf32>
    %43 = vector.broadcast %42 : vector<1x32xf32> to vector<2x32xf32>
    %44 = vector.shape_cast %31 : vector<1x32xf32> to vector<1x32xf32>
    %45 = vector.broadcast %44 : vector<1x32xf32> to vector<2x32xf32>
    %46 = arith.select %41, %43, %45 : vector<2x32xi1>, vector<2x32xf32>
    %c0_25 = arith.constant 0 : index
    %c0_26 = arith.constant 0 : index
    %47 = vector.load %arg0[%c0_25, %c0_26] : memref<2x32xf32, #tpu.memory_space<vmem>>, vector<2x32xf32>
    %c0_27 = arith.constant 0 : index
    %c0_28 = arith.constant 0 : index
    %48 = vector.load %arg8[%c0_27, %c0_28] : memref<32x8xf32, #tpu.memory_space<vmem>>, vector<32x8xf32>
    %c0_29 = arith.constant 0 : index
    %c0_30 = arith.constant 0 : index
    %49 = vector.load %arg9[%c0_29, %c0_30] : memref<1x8xf32, #tpu.memory_space<vmem>>, vector<1x8xf32>
    %c0_31 = arith.constant 0 : index
    %c0_32 = arith.constant 0 : index
    %50 = vector.load %arg10[%c0_31, %c0_32] : memref<8x2xf32, #tpu.memory_space<vmem>>, vector<8x2xf32>
    %c0_33 = arith.constant 0 : index
    %c0_34 = arith.constant 0 : index
    %51 = vector.load %arg11[%c0_33, %c0_34] : memref<1x2xf32, #tpu.memory_space<vmem>>, vector<1x2xf32>
    %cst_35 = arith.constant dense<0.000000e+00> : vector<2x8xf32>
    %52 = tpu.matmul %47, %48, %cst_35 {dimension_numbers = #tpu.dot_dimension_numbers<[1], [0], [0], [1], [0, 0, 1, 1], [], []>} : vector<2x32xf32>, vector<32x8xf32>, vector<2x8xf32> -> vector<2x8xf32>
    %53 = vector.broadcast %49 : vector<1x8xf32> to vector<2x8xf32>
    %54 = arith.addf %52, %53 : vector<2x8xf32>
    %cst_36 = arith.constant 0.000000e+00 : f32
    %55 = vector.broadcast %cst_36 : f32 to vector<2x8xf32>
    %56 = arith.cmpf oge, %54, %55 : vector<2x8xf32>
    %cst_37 = arith.constant 2.000000e-01 : f32
    %57 = vector.broadcast %cst_37 : f32 to vector<2x8xf32>
    %58 = arith.mulf %57, %54 : vector<2x8xf32>
    %59 = arith.select %56, %54, %58 : vector<2x8xi1>, vector<2x8xf32>
    %cst_38 = arith.constant dense<0.000000e+00> : vector<2x2xf32>
    %60 = tpu.matmul %59, %50, %cst_38 {dimension_numbers = #tpu.dot_dimension_numbers<[1], [0], [0], [1], [0, 0, 1, 1], [], []>} : vector<2x8xf32>, vector<8x2xf32>, vector<2x2xf32> -> vector<2x2xf32>
    %61 = vector.broadcast %51 : vector<1x2xf32> to vector<2x2xf32>
    %62 = arith.addf %60, %61 : vector<2x2xf32>
    %c0_39 = arith.constant 0 : index
    %c0_40 = arith.constant 0 : index
    %63 = vector.load %arg20[%c0_39, %c0_40] : memref<2x2xf32, #tpu.memory_space<vmem>>, vector<2x2xf32>
    tpu.vector_store %arg20[%c0_39, %c0_40], %62 {strides = array<i32>} : memref<2x2xf32, #tpu.memory_space<vmem>>, vector<2x2xf32>,
    %c0_41 = arith.constant 0 : index
    %c0_42 = arith.constant 0 : index
    %64 = vector.load %arg1[%c0_41, %c0_42] : memref<2x64xf32, #tpu.memory_space<vmem>>, vector<2x64xf32>
    %c0_43 = arith.constant 0 : index
    %c0_44 = arith.constant 0 : index
    %65 = vector.load %arg12[%c0_43, %c0_44] : memref<64x8xf32, #tpu.memory_space<vmem>>, vector<64x8xf32>
    %c0_45 = arith.constant 0 : index
    %c0_46 = arith.constant 0 : index
    %66 = vector.load %arg13[%c0_45, %c0_46] : memref<1x8xf32, #tpu.memory_space<vmem>>, vector<1x8xf32>
    %c0_47 = arith.constant 0 : index
    %c0_48 = arith.constant 0 : index
    %67 = vector.load %arg14[%c0_47, %c0_48] : memref<8x2xf32, #tpu.memory_space<vmem>>, vector<8x2xf32>
    %c0_49 = arith.constant 0 : index
    %c0_50 = arith.constant 0 : index
    %68 = vector.load %arg15[%c0_49, %c0_50] : memref<1x2xf32, #tpu.memory_space<vmem>>, vector<1x2xf32>
    %cst_51 = arith.constant dense<0.000000e+00> : vector<2x8xf32>
    %69 = tpu.matmul %64, %65, %cst_51 {dimension_numbers = #tpu.dot_dimension_numbers<[1], [0], [0], [1], [0, 0, 1, 1], [], []>} : vector<2x64xf32>, vector<64x8xf32>, vector<2x8xf32> -> vector<2x8xf32>
    %70 = vector.broadcast %66 : vector<1x8xf32> to vector<2x8xf32>
    %71 = arith.addf %69, %70 : vector<2x8xf32>
    %cst_52 = arith.constant 0.000000e+00 : f32
    %72 = vector.broadcast %cst_52 : f32 to vector<2x8xf32>
    %73 = arith.cmpf oge, %71, %72 : vector<2x8xf32>
    %cst_53 = arith.constant 2.000000e-01 : f32
    %74 = vector.broadcast %cst_53 : f32 to vector<2x8xf32>
    %75 = arith.mulf %74, %71 : vector<2x8xf32>
    %76 = arith.select %73, %71, %75 : vector<2x8xi1>, vector<2x8xf32>
    %cst_54 = arith.constant dense<0.000000e+00> : vector<2x2xf32>
    %77 = tpu.matmul %76, %67, %cst_54 {dimension_numbers = #tpu.dot_dimension_numbers<[1], [0], [0], [1], [0, 0, 1, 1], [], []>} : vector<2x8xf32>, vector<8x2xf32>, vector<2x2xf32> -> vector<2x2xf32>
    %78 = vector.broadcast %68 : vector<1x2xf32> to vector<2x2xf32>
    %79 = arith.addf %77, %78 : vector<2x2xf32>
    %c0_55 = arith.constant 0 : index
    %c0_56 = arith.constant 0 : index
    %80 = vector.load %arg21[%c0_55, %c0_56] : memref<2x2xf32, #tpu.memory_space<vmem>>, vector<2x2xf32>
    tpu.vector_store %arg21[%c0_55, %c0_56], %79 {strides = array<i32>} : memref<2x2xf32, #tpu.memory_space<vmem>>, vector<2x2xf32>,
    %c0_57 = arith.constant 0 : index
    %c0_58 = arith.constant 0 : index
    %81 = vector.load %arg16[%c0_57, %c0_58] : memref<64x8xf32, #tpu.memory_space<vmem>>, vector<32x8xf32>
    %cst_59 = arith.constant dense<0.000000e+00> : vector<2x8xf32>
    %82 = tpu.matmul %39, %81, %cst_59 {dimension_numbers = #tpu.dot_dimension_numbers<[1], [0], [0], [1], [0, 0, 1, 1], [], []>} : vector<2x32xf32>, vector<32x8xf32>, vector<2x8xf32> -> vector<2x8xf32>
    %c32 = arith.constant 32 : index
    %c0_60 = arith.constant 0 : index
    %83 = vector.load %arg16[%c32, %c0_60] : memref<64x8xf32, #tpu.memory_space<vmem>>, vector<32x8xf32>
    %cst_61 = arith.constant dense<0.000000e+00> : vector<2x8xf32>
    %84 = tpu.matmul %46, %83, %cst_61 {dimension_numbers = #tpu.dot_dimension_numbers<[1], [0], [0], [1], [0, 0, 1, 1], [], []>} : vector<2x32xf32>, vector<32x8xf32>, vector<2x8xf32> -> vector<2x8xf32>
    %85 = arith.addf %82, %84 : vector<2x8xf32>
    %c0_62 = arith.constant 0 : index
    %c0_63 = arith.constant 0 : index
    %86 = vector.load %arg17[%c0_62, %c0_63] : memref<1x8xf32, #tpu.memory_space<vmem>>, vector<1x8xf32>
    %87 = vector.broadcast %86 : vector<1x8xf32> to vector<2x8xf32>
    %88 = arith.addf %85, %87 : vector<2x8xf32>
    %cst_64 = arith.constant 0.000000e+00 : f32
    %89 = vector.broadcast %cst_64 : f32 to vector<2x8xf32>
    %90 = arith.cmpf oge, %88, %89 : vector<2x8xf32>
    %cst_65 = arith.constant 2.000000e-01 : f32
    %91 = vector.broadcast %cst_65 : f32 to vector<2x8xf32>
    %92 = arith.mulf %91, %88 : vector<2x8xf32>
    %93 = arith.select %90, %88, %92 : vector<2x8xi1>, vector<2x8xf32>
    %c0_66 = arith.constant 0 : index
    %c0_67 = arith.constant 0 : index
    %94 = vector.load %arg18[%c0_66, %c0_67] : memref<8x2xf32, #tpu.memory_space<vmem>>, vector<8x2xf32>
    %cst_68 = arith.constant dense<0.000000e+00> : vector<2x2xf32>
    %95 = tpu.matmul %93, %94, %cst_68 {dimension_numbers = #tpu.dot_dimension_numbers<[1], [0], [0], [1], [0, 0, 1, 1], [], []>} : vector<2x8xf32>, vector<8x2xf32>, vector<2x2xf32> -> vector<2x2xf32>
    %c0_69 = arith.constant 0 : index
    %c0_70 = arith.constant 0 : index
    %96 = vector.load %arg19[%c0_69, %c0_70] : memref<1x2xf32, #tpu.memory_space<vmem>>, vector<1x2xf32>
    %97 = vector.broadcast %96 : vector<1x2xf32> to vector<2x2xf32>
    %98 = arith.addf %95, %97 : vector<2x2xf32>
    %c0_71 = arith.constant 0 : index
    %c0_72 = arith.constant 0 : index
    %99 = vector.load %arg22[%c0_71, %c0_72] : memref<2x2xf32, #tpu.memory_space<vmem>>, vector<2x2xf32>
    tpu.vector_store %arg22[%c0_71, %c0_72], %98 {strides = array<i32>} : memref<2x2xf32, #tpu.memory_space<vmem>>, vector<2x2xf32>,
    return
  }
}

</mosaic_0001>

<llo_original>
// kernel: sub.2
$region0: #{sub.2}
  #allocation0 [shape = 's32[1]{0}', space=sflag, size = 0x4, scoped, tag = 'scoped memory for sub.2']
  %s0 = inlined_call_operand.vmem [shape: f32[32,1], index: 0, kind: input, shape index: {}]
  %s1 = inlined_call_operand.vmem [shape: f32[32,1], index: 1, kind: input, shape index: {}]
  %s2 = inlined_call_operand.vmem [shape: f32[32,1], index: 2, kind: output, shape index: {}]
  %v3 = vld [vmem:[%s0] sm:$0x1]
  %v4 = vld [vmem:[%s1] sm:$0x1]
  %5 = xla_tuple %v3, %v4
  %6 = xla_tuple %5
  %v7 = vsub.f32 %v3, %v4
  %8 = xla_tuple %v7
  %9 = vst [vmem:[%s2] sm:$0x1] %v7

// kernel: neg.2
$region0: #{neg.2}
  #allocation0 [shape = 's32[1]{0}', space=sflag, size = 0x4, scoped, tag = 'scoped memory for neg.2']
  %s0 = inlined_call_operand.vmem [shape: f32[16], index: 0, kind: input, shape index: {}]
  %s1 = inlined_call_operand.vmem [shape: f32[16], index: 1, kind: output, shape index: {}]
  %v2 = vld [vmem:[%s0] sm:$0x1]
  %3 = xla_tuple %v2
  %4 = xla_tuple %3
  %v5 = vxor.u32 %v2, 2147483648
  %6 = xla_tuple %v5
  %7 = vst [vmem:[%s1] sm:$0x1] %v5

// kernel: view_gnn_forward.7
$region0: #{view_gnn_forward.7}
  #allocation0 [shape = 'u32[]', space=smem, size = 0x4, offset = 0x4, fixed_abs, tag = 'smem constant byte address 0x4 - core index']
  #allocation1 [shape = 'u32[144,128]{1,0:T(1,128)}', space=vmem, size = 0x12000, scoped, tag = 'internal scratch']
  %s0 = inlined_call_operand.hbm [shape: f32[512,16], index: 0, kind: input, shape index: {}]
  %s1 = inlined_call_operand.hbm [shape: f32[16,32], index: 1, kind: input, shape index: {}]
  %s2 = inlined_call_operand.hbm [shape: f32[512,1], index: 2, kind: input, shape index: {}]
  %s3 = inlined_call_operand.hbm [shape: bf16[512,32], index: 3, kind: output, shape index: {}]
  %s4 = sld [smem:[#allocation0]]
  $region34: #{view_gnn_forward.7} parent=0
    _
  %s6 = ssub.s32 1, %s4
  %s7 = scalar_select 0, %s6, %s4
  $region1: #{view_gnn_forward.7} parent=0
    #allocation2 [shape = 'u8[262144]{0}', space=vmem, size = 0x40000, scoped, tag = 'input window, operand 0, single buffered']
    #allocation3 [shape = 's32[1]{0}', space=sflag, size = 0x4, scoped, tag = 'scoped memory for view_gnn_forward.7']
    #allocation4 [shape = 's32[1]{0}', space=sflag, size = 0x4, scoped, tag = 'scoped memory for view_gnn_forward.7']
    #allocation5 [shape = 'u8[8192]{0}', space=vmem, size = 0x2000, scoped, tag = 'input window, operand 1, single buffered']
    #allocation6 [shape = 's32[1]{0}', space=sflag, size = 0x4, scoped, tag = 'scoped memory for view_gnn_forward.7']
    #allocation7 [shape = 'u8[262144]{0}', space=vmem, size = 0x40000, scoped, tag = 'input window, operand 2, single buffered']
    #allocation8 [shape = 'u8[131072]{0}', space=vmem, size = 0x20000, scoped, tag = 'output window, operand 0, single buffered']
    %8 = vsyncpa [#allocation3], 0
    %9 = vsyncpa [#allocation6], 0
    %10 = vsyncpa [#allocation4], 0
    // Predicated region
    $region2: #{view_gnn_forward.7} parent=1 // pred_check
      _
    $region3: #{view_gnn_forward.7} parent=1 // pred_check_branch
      %12 = sbr.rel (0) target = $region5
    $region4: #{view_gnn_forward.7} parent=1 // pred_region
      %s14 = ssub.s32 8192, 8192
      %15 = vsyncadd [#allocation3], %s14
      %s16 = sshll.u32 [#allocation2], 4
      %s17 = int_to_ptr.vmem [resolvable:$true] %s16
      %22 = dma.hbm_to_vmem [thread:$0]  %s0, 8192, %s17, [#allocation3], 128, 128, 8
    $region5: #{view_gnn_forward.7} parent=1 // pred_fallthru
      _
    // Predicated region
    $region6: #{view_gnn_forward.7} parent=1 // pred_check
      _
    $region7: #{view_gnn_forward.7} parent=1 // pred_check_branch
      %24 = sbr.rel (0) target = $region9
    $region8: #{view_gnn_forward.7} parent=1 // pred_region
      %s26 = ssub.s32 256, 256
      %27 = vsyncadd [#allocation6], %s26
      %s28 = sshll.u32 [#allocation5], 4
      %s29 = int_to_ptr.vmem [resolvable:$true] %s28
      %34 = dma.hbm_to_vmem [thread:$0]  %s1, 256, %s29, [#allocation6], 128, 128, 8
    $region9: #{view_gnn_forward.7} parent=1 // pred_fallthru
      _
    // Predicated region
    $region10: #{view_gnn_forward.7} parent=1 // pred_check
      _
    $region11: #{view_gnn_forward.7} parent=1 // pred_check_branch
      %36 = sbr.rel (0) target = $region13
    $region12: #{view_gnn_forward.7} parent=1 // pred_region
      %s38 = ssub.s32 8192, 8192
      %39 = vsyncadd [#allocation6], %s38
      %s40 = sshll.u32 [#allocation7], 4
      %s41 = int_to_ptr.vmem [resolvable:$true] %s40
      %46 = dma.hbm_to_vmem [thread:$0]  %s2, 8192, %s41, [#allocation6], 128, 128, 8
    $region13: #{view_gnn_forward.7} parent=1 // pred_fallthru
      _
    // Predicated region
    $region14: #{view_gnn_forward.7} parent=1 // pred_check
      _
    $region15: #{view_gnn_forward.7} parent=1 // pred_check_branch
      %48 = sbr.rel (0) target = $region17
    $region16: #{view_gnn_forward.7} parent=1 // pred_region
      %49 = dma.done [#allocation3], 8192
    $region17: #{view_gnn_forward.7} parent=1 // pred_fallthru
      _
    // Predicated region
    $region18: #{view_gnn_forward.7} parent=1 // pred_check
      _
    $region19: #{view_gnn_forward.7} parent=1 // pred_check_branch
      %51 = sbr.rel (0) target = $region21
    $region20: #{view_gnn_forward.7} parent=1 // pred_region
      %52 = dma.done [#allocation6], 256
    $region21: #{view_gnn_forward.7} parent=1 // pred_fallthru
      _
    // Predicated region
    $region22: #{view_gnn_forward.7} parent=1 // pred_check
      _
    $region23: #{view_gnn_forward.7} parent=1 // pred_check_branch
      %54 = sbr.rel (0) target = $region25
    $region24: #{view_gnn_forward.7} parent=1 // pred_region
      %55 = dma.done [#allocation6], 8192
    $region25: #{view_gnn_forward.7} parent=1 // pred_fallthru
      _
    %v56 = vld [vmem:[#allocation2] sm:$0xff]
    %v57 = vld [vmem:[#allocation2 + $0x8] sm:$0xff]
    %v58 = vld [vmem:[#allocation2 + $0x10] sm:$0xff]
    %v59 = vld [vmem:[#allocation2 + $0x18] sm:$0xff]
    %v60 = vld [vmem:[#allocation2 + $0x20] sm:$0xff]
    %v61 = vld [vmem:[#allocation2 + $0x28] sm:$0xff]
    %v62 = vld [vmem:[#allocation2 + $0x30] sm:$0xff]
    %v63 = vld [vmem:[#allocation2 + $0x38] sm:$0xff]
    %v64 = vld [vmem:[#allocation2 + $0x40] sm:$0xff]
    %v65 = vld [vmem:[#allocation2 + $0x48] sm:$0xff]
    %v66 = vld [vmem:[#allocation2 + $0x50] sm:$0xff]
    %v67 = vld [vmem:[#allocation2 + $0x58] sm:$0xff]
    %v68 = vld [vmem:[#allocation2 + $0x60] sm:$0xff]
    %v69 = vld [vmem:[#allocation2 + $0x68] sm:$0xff]
    %v70 = vld [vmem:[#allocation2 + $0x70] sm:$0xff]
    %v71 = vld [vmem:[#allocation2 + $0x78] sm:$0xff]
    %v72 = vld [vmem:[#allocation2 + $0x80] sm:$0xff]
    %v73 = vld [vmem:[#allocation2 + $0x88] sm:$0xff]
    %v74 = vld [vmem:[#allocation2 + $0x90] sm:$0xff]
    %v75 = vld [vmem:[#allocation2 + $0x98] sm:$0xff]
    %v76 = vld [vmem:[#allocation2 + $0xa0] sm:$0xff]
    %v77 = vld [vmem:[#allocation2 + $0xa8] sm:$0xff]
    %v78 = vld [vmem:[#allocation2 + $0xb0] sm:$0xff]
    %v79 = vld [vmem:[#allocation2 + $0xb8] sm:$0xff]
    %v80 = vld [vmem:[#allocation2 + $0xc0] sm:$0xff]
    %v81 = vld [vmem:[#allocation2 + $0xc8] sm:$0xff]
    %v82 = vld [vmem:[#allocation2 + $0xd0] sm:$0xff]
    %v83 = vld [vmem:[#allocation2 + $0xd8] sm:$0xff]
    %v84 = vld [vmem:[#allocation2 + $0xe0] sm:$0xff]
    %v85 = vld [vmem:[#allocation2 + $0xe8] sm:$0xff]
    %v86 = vld [vmem:[#allocation2 + $0xf0] sm:$0xff]
    %v87 = vld [vmem:[#allocation2 + $0xf8] sm:$0xff]
    %v88 = vld [vmem:[#allocation2 + $0x100] sm:$0xff]
    %v89 = vld [vmem:[#allocation2 + $0x108] sm:$0xff]
    %v90 = vld [vmem:[#allocation2 + $0x110] sm:$0xff]
    %v91 = vld [vmem:[#allocation2 + $0x118] sm:$0xff]
    %v92 = vld [vmem:[#allocation2 + $0x120] sm:$0xff]
    %v93 = vld [vmem:[#allocation2 + $0x128] sm:$0xff]
    %v94 = vld [vmem:[#allocation2 + $0x130] sm:$0xff]
    %v95 = vld [vmem:[#allocation2 + $0x138] sm:$0xff]
    %v96 = vld [vmem:[#allocation2 + $0x140] sm:$0xff]
    %v97 = vld [vmem:[#allocation2 + $0x148] sm:$0xff]
    %v98 = vld [vmem:[#allocation2 + $0x150] sm:$0xff]
    %v99 = vld [vmem:[#allocation2 + $0x158] sm:$0xff]
    %v100 = vld [vmem:[#allocation2 + $0x160] sm:$0xff]
    %v101 = vld [vmem:[#allocation2 + $0x168] sm:$0xff]
    %v102 = vld [vmem:[#allocation2 + $0x170] sm:$0xff]
    %v103 = vld [vmem:[#allocation2 + $0x178] sm:$0xff]
    %v104 = vld [vmem:[#allocation2 + $0x180] sm:$0xff]
    %v105 = vld [vmem:[#allocation2 + $0x188] sm:$0xff]
    %v106 = vld [vmem:[#allocation2 + $0x190] sm:$0xff]
    %v107 = vld [vmem:[#allocation2 + $0x198] sm:$0xff]
    %v108 = vld [vmem:[#allocation2 + $0x1a0] sm:$0xff]
    %v109 = vld [vmem:[#allocation2 + $0x1a8] sm:$0xff]
    %v110 = vld [vmem:[#allocation2 + $0x1b0] sm:$0xff]
    %v111 = vld [vmem:[#allocation2 + $0x1b8] sm:$0xff]
    %v112 = vld [vmem:[#allocation2 + $0x1c0] sm:$0xff]
    %v113 = vld [vmem:[#allocation2 + $0x1c8] sm:$0xff]
    %v114 = vld [vmem:[#allocation2 + $0x1d0] sm:$0xff]
    %v115 = vld [vmem:[#allocation2 + $0x1d8] sm:$0xff]
    %v116 = vld [vmem:[#allocation2 + $0x1e0] sm:$0xff]
    %v117 = vld [vmem:[#allocation2 + $0x1e8] sm:$0xff]
    %v118 = vld [vmem:[#allocation2 + $0x1f0] sm:$0xff]
    %v119 = vld [vmem:[#allocation2 + $0x1f8] sm:$0xff]
    %v120 = vld [vmem:[#allocation5] sm:$0xff]
    %v121 = vld [vmem:[#allocation5 + $0x8] sm:$0xff]
    %vm122 = vcmask 130048
    %v124 = vsel %vm122, %v56, 0
    %v127 = vsel %vm122, %v57, 0
    %v130 = vsel %vm122, %v58, 0
    %v133 = vsel %vm122, %v59, 0
    %v136 = vsel %vm122, %v60, 0
    %v139 = vsel %vm122, %v61, 0
    %v142 = vsel %vm122, %v62, 0
    %v145 = vsel %vm122, %v63, 0
    %v148 = vsel %vm122, %v64, 0
    %v151 = vsel %vm122, %v65, 0
    %v154 = vsel %vm122, %v66, 0
    %v157 = vsel %vm122, %v67, 0
    %v160 = vsel %vm122, %v68, 0
    %v163 = vsel %vm122, %v69, 0
    %v166 = vsel %vm122, %v70, 0
    %v169 = vsel %vm122, %v71, 0
    %v172 = vsel %vm122, %v72, 0
    %v175 = vsel %vm122, %v73, 0
    %v178 = vsel %vm122, %v74, 0
    %v181 = vsel %vm122, %v75, 0
    %v184 = vsel %vm122, %v76, 0
    %v187 = vsel %vm122, %v77, 0
    %v190 = vsel %vm122, %v78, 0
    %v193 = vsel %vm122, %v79, 0
    %v196 = vsel %vm122, %v80, 0
    %v199 = vsel %vm122, %v81, 0
    %v202 = vsel %vm122, %v82, 0
    %v205 = vsel %vm122, %v83, 0
    %v208 = vsel %vm122, %v84, 0
    %v211 = vsel %vm122, %v85, 0
    %v214 = vsel %vm122, %v86, 0
    %v217 = vsel %vm122, %v87, 0
    %v220 = vsel %vm122, %v88, 0
    %v223 = vsel %vm122, %v89, 0
    %v226 = vsel %vm122, %v90, 0
    %v229 = vsel %vm122, %v91, 0
    %v232 = vsel %vm122, %v92, 0
    %v235 = vsel %vm122, %v93, 0
    %v238 = vsel %vm122, %v94, 0
    %v241 = vsel %vm122, %v95, 0
    %v244 = vsel %vm122, %v96, 0
    %v247 = vsel %vm122, %v97, 0
    %v250 = vsel %vm122, %v98, 0
    %v253 = vsel %vm122, %v99, 0
    %v256 = vsel %vm122, %v100, 0
    %v259 = vsel %vm122, %v101, 0
    %v262 = vsel %vm122, %v102, 0
    %v265 = vsel %vm122, %v103, 0
    %v268 = vsel %vm122, %v104, 0
    %v271 = vsel %vm122, %v105, 0
    %v274 = vsel %vm122, %v106, 0
    %v277 = vsel %vm122, %v107, 0
    %v280 = vsel %vm122, %v108, 0
    %v283 = vsel %vm122, %v109, 0
    %v286 = vsel %vm122, %v110, 0
    %v289 = vsel %vm122, %v111, 0
    %v292 = vsel %vm122, %v112, 0
    %v295 = vsel %vm122, %v113, 0
    %v298 = vsel %vm122, %v114, 0
    %v301 = vsel %vm122, %v115, 0
    %v304 = vsel %vm122, %v116, 0
    %v307 = vsel %vm122, %v117, 0
    %v310 = vsel %vm122, %v118, 0
    %v313 = vsel %vm122, %v119, 0
    %315 = vmatprep.subr.mxu0 0.0
    %316 = vmatpush1.msra.mxu0 %v120
    %317 = vmatprep.subr.mxu0 0.0
    %318 = vmatpush1.msra.mxu0 %v121
    %319 = vmatprep.subr.mxu0 0.0
    %320 = vmatpush1.msra.mxu0 0.0
    %321 = vmatprep.subr.mxu0 0.0
    %322 = vmatpush1.msra.mxu0 0.0
    %323 = vmatprep.subr.mxu0 0.0
    %324 = vmatpush1.msra.mxu0 0.0
    %325 = vmatprep.subr.mxu0 0.0
    %326 = vmatpush1.msra.mxu0 0.0
    %327 = vmatprep.subr.mxu0 0.0
    %328 = vmatpush1.msra.mxu0 0.0
    %329 = vmatprep.subr.mxu0 0.0
    %330 = vmatpush1.msra.mxu0 0.0
    %331 = vmatprep.subr.mxu0 0.0
    %332 = vmatpush1.msra.mxu0 0.0
    %333 = vmatprep.subr.mxu0 0.0
    %334 = vmatpush1.msra.mxu0 0.0
    %335 = vmatprep.subr.mxu0 0.0
    %336 = vmatpush1.msra.mxu0 0.0
    %337 = vmatprep.subr.mxu0 0.0
    %338 = vmatpush1.msra.mxu0 0.0
    %339 = vmatprep.subr.mxu0 0.0
    %340 = vmatpush1.msra.mxu0 0.0
    %341 = vmatprep.subr.mxu0 0.0
    %342 = vmatpush1.msra.mxu0 0.0
    %343 = vmatprep.subr.mxu0 0.0
    %344 = vmatpush1.msra.mxu0 0.0
    %345 = vmatprep.subr.mxu0 0.0
    %346 = vmatpush1.msra.mxu0 0.0
    %347 = vmatprep.subr.mxu0 0.0
    %348 = vmatpush1.msra.mxu0 0.0
    %349 = vmatprep.subr.mxu0 0.0
    %350 = vmatpush1.msra.mxu0 0.0
    %351 = vmatprep.subr.mxu0 0.0
    %352 = vmatpush1.msra.mxu0 0.0
    %353 = vmatprep.subr.mxu0 0.0
    %354 = vmatpush1.msra.mxu0 0.0
    %355 = vmatprep.subr.mxu0 0.0
    %356 = vmatpush1.msra.mxu0 0.0
    %357 = vmatprep.subr.mxu0 0.0
    %358 = vmatpush1.msra.mxu0 0.0
    %359 = vmatprep.subr.mxu0 0.0
    %360 = vmatpush1.msra.mxu0 0.0
    %361 = vmatprep.subr.mxu0 0.0
    %362 = vmatpush1.msra.mxu0 0.0
    %363 = vmatprep.subr.mxu0 0.0
    %364 = vmatpush1.msra.mxu0 0.0
    %365 = vmatprep.subr.mxu0 0.0
    %366 = vmatpush1.msra.mxu0 0.0
    %367 = vmatprep.subr.mxu0 0.0
    %368 = vmatpush1.msra.mxu0 0.0
    %369 = vmatprep.subr.mxu0 0.0
    %370 = vmatpush1.msra.mxu0 0.0
    %371 = vmatprep.subr.mxu0 0.0
    %372 = vmatpush1.msra.mxu0 0.0
    %373 = vmatprep.subr.mxu0 0.0
    %374 = vmatpush1.msra.mxu0 0.0
    %375 = vmatprep.subr.mxu0 0.0
    %376 = vmatpush1.msra.mxu0 0.0
    %377 = vmatprep.subr.mxu0 0.0
    %378 = vmatpush1.msra.mxu0 0.0
    %379 = vmatprep.mubr.f32.mxu0 0.0
    %380 = vmatmul.mubr.f32.gmra.mrb[0].mxu0 %v124
    %v381 = vpop.f32.mrb[0].mxu0
    %v382 = vadd.f32 0.0, %v381
    %v383 = vpop.f32.mrb[0].mxu0
    %384 = vmatprep.mubr.f32.mxu0 0.0
    %385 = vmatmul.mubr.f32.gmra.mrb[0].mxu0 %v127
    %v386 = vpop.f32.mrb[0].mxu0
    %v387 = vadd.f32 0.0, %v386
    %v388 = vpop.f32.mrb[0].mxu0
    %389 = vmatprep.mubr.f32.mxu0 0.0
    %390 = vmatmul.mubr.f32.gmra.mrb[0].mxu0 %v130
    %v391 = vpop.f32.mrb[0].mxu0
    %v392 = vadd.f32 0.0, %v391
    %v393 = vpop.f32.mrb[0].mxu0
    %394 = vmatprep.mubr.f32.mxu0 0.0
    %395 = vmatmul.mubr.f32.gmra.mrb[0].mxu0 %v133
    %v396 = vpop.f32.mrb[0].mxu0
    %v397 = vadd.f32 0.0, %v396
    %v398 = vpop.f32.mrb[0].mxu0
    %399 = vmatprep.mubr.f32.mxu0 0.0
    %400 = vmatmul.mubr.f32.gmra.mrb[0].mxu0 %v136
    %v401 = vpop.f32.mrb[0].mxu0
    %v402 = vadd.f32 0.0, %v401
    %v403 = vpop.f32.mrb[0].mxu0
    %404 = vmatprep.mubr.f32.mxu0 0.0
    %405 = vmatmul.mubr.f32.gmra.mrb[0].mxu0 %v139
    %v406 = vpop.f32.mrb[0].mxu0
    %v407 = vadd.f32 0.0, %v406
    %v408 = vpop.f32.mrb[0].mxu0
    %409 = vmatprep.mubr.f32.mxu0 0.0
    %410 = vmatmul.mubr.f32.gmra.mrb[0].mxu0 %v142
    %v411 = vpop.f32.mrb[0].mxu0
    %v412 = vadd.f32 0.0, %v411
    %v413 = vpop.f32.mrb[0].mxu0
    %414 = vmatprep.mubr.f32.mxu0 0.0
    %415 = vmatmul.mubr.f32.gmra.mrb[0].mxu0 %v145
    %v416 = vpop.f32.mrb[0].mxu0
    %v417 = vadd.f32 0.0, %v416
    %v418 = vpop.f32.mrb[0].mxu0
    %419 = vmatprep.mubr.f32.mxu0 0.0
    %420 = vmatmul.mubr.f32.gmra.mrb[0].mxu0 %v148
    %v421 = vpop.f32.mrb[0].mxu0
    %v422 = vadd.f32 0.0, %v421
    %v423 = vpop.f32.mrb[0].mxu0
    %424 = vmatprep.mubr.f32.mxu0 0.0
    %425 = vmatmul.mubr.f32.gmra.mrb[0].mxu0 %v151
    %v426 = vpop.f32.mrb[0].mxu0
    %v427 = vadd.f32 0.0, %v426
    %v428 = vpop.f32.mrb[0].mxu0
    %429 = vmatprep.mubr.f32.mxu0 0.0
    %430 = vmatmul.mubr.f32.gmra.mrb[0].mxu0 %v154
    %v431 = vpop.f32.mrb[0].mxu0
    %v432 = vadd.f32 0.0, %v431
    %v433 = vpop.f32.mrb[0].mxu0
    %434 = vmatprep.mubr.f32.mxu0 0.0
    %435 = vmatmul.mubr.f32.gmra.mrb[0].mxu0 %v157
    %v436 = vpop.f32.mrb[0].mxu0
    %v437 = vadd.f32 0.0, %v436
    %v438 = vpop.f32.mrb[0].mxu0
    %439 = vmatprep.mubr.f32.mxu0 0.0
    %440 = vmatmul.mubr.f32.gmra.mrb[0].mxu0 %v160
    %v441 = vpop.f32.mrb[0].mxu0
    %v442 = vadd.f32 0.0, %v441
    %v443 = vpop.f32.mrb[0].mxu0
    %444 = vmatprep.mubr.f32.mxu0 0.0
    %445 = vmatmul.mubr.f32.gmra.mrb[0].mxu0 %v163
    %v446 = vpop.f32.mrb[0].mxu0
    %v447 = vadd.f32 0.0, %v446
    %v448 = vpop.f32.mrb[0].mxu0
    %449 = vmatprep.mubr.f32.mxu0 0.0
    %450 = vmatmul.mubr.f32.gmra.mrb[0].mxu0 %v166
    %v451 = vpop.f32.mrb[0].mxu0
    %v452 = vadd.f32 0.0, %v451
    %v453 = vpop.f32.mrb[0].mxu0
    %454 = vmatprep.mubr.f32.mxu0 0.0
    %455 = vmatmul.mubr.f32.gmra.mrb[0].mxu0 %v169
    %v456 = vpop.f32.mrb[0].mxu0
    %v457 = vadd.f32 0.0, %v456
    %v458 = vpop.f32.mrb[0].mxu0
    %459 = vmatprep.mubr.f32.mxu0 0.0
    %460 = vmatmul.mubr.f32.gmra.mrb[0].mxu0 %v172
    %v461 = vpop.f32.mrb[0].mxu0
    %v462 = vadd.f32 0.0, %v461
    %v463 = vpop.f32.mrb[0].mxu0
    %464 = vmatprep.mubr.f32.mxu0 0.0
    %465 = vmatmul.mubr.f32.gmra.mrb[0].mxu0 %v175
    %v466 = vpop.f32.mrb[0].mxu0
    %v467 = vadd.f32 0.0, %v466
    %v468 = vpop.f32.mrb[0].mxu0
    %469 = vmatprep.mubr.f32.mxu0 0.0
    %470 = vmatmul.mubr.f32.gmra.mrb[0].mxu0 %v178
    %v471 = vpop.f32.mrb[0].mxu0
    %v472 = vadd.f32 0.0, %v471
    %v473 = vpop.f32.mrb[0].mxu0
    %474 = vmatprep.mubr.f32.mxu0 0.0
    %475 = vmatmul.mubr.f32.gmra.mrb[0].mxu0 %v181
    %v476 = vpop.f32.mrb[0].mxu0
    %v477 = vadd.f32 0.0, %v476
    %v478 = vpop.f32.mrb[0].mxu0
    %479 = vmatprep.mubr.f32.mxu0 0.0
    %480 = vmatmul.mubr.f32.gmra.mrb[0].mxu0 %v184
    %v481 = vpop.f32.mrb[0].mxu0
    %v482 = vadd.f32 0.0, %v481
    %v483 = vpop.f32.mrb[0].mxu0
    %484 = vmatprep.mubr.f32.mxu0 0.0
    %485 = vmatmul.mubr.f32.gmra.mrb[0].mxu0 %v187
    %v486 = vpop.f32.mrb[0].mxu0
    %v487 = vadd.f32 0.0, %v486
    %v488 = vpop.f32.mrb[0].mxu0
    %489 = vmatprep.mubr.f32.mxu0 0.0
    %490 = vmatmul.mubr.f32.gmra.mrb[0].mxu0 %v190
    %v491 = vpop.f32.mrb[0].mxu0
    %v492 = vadd.f32 0.0, %v491
    %v493 = vpop.f32.mrb[0].mxu0
    %494 = vmatprep.mubr.f32.mxu0 0.0
    %495 = vmatmul.mubr.f32.gmra.mrb[0].mxu0 %v193
    %v496 = vpop.f32.mrb[0].mxu0
    %v497 = vadd.f32 0.0, %v496
    %v498 = vpop.f32.mrb[0].mxu0
    %499 = vmatprep.mubr.f32.mxu0 0.0
    %500 = vmatmul.mubr.f32.gmra.mrb[0].mxu0 %v196
    %v501 = vpop.f32.mrb[0].mxu0
    %v502 = vadd.f32 0.0, %v501
    %v503 = vpop.f32.mrb[0].mxu0
    %504 = vmatprep.mubr.f32.mxu0 0.0
    %505 = vmatmul.mubr.f32.gmra.mrb[0].mxu0 %v199
    %v506 = vpop.f32.mrb[0].mxu0
    %v507 = vadd.f32 0.0, %v506
    %v508 = vpop.f32.mrb[0].mxu0
    %509 = vmatprep.mubr.f32.mxu0 0.0
    %510 = vmatmul.mubr.f32.gmra.mrb[0].mxu0 %v202
    %v511 = vpop.f32.mrb[0].mxu0
    %v512 = vadd.f32 0.0, %v511
    %v513 = vpop.f32.mrb[0].mxu0
    %514 = vmatprep.mubr.f32.mxu0 0.0
    %515 = vmatmul.mubr.f32.gmra.mrb[0].mxu0 %v205
    %v516 = vpop.f32.mrb[0].mxu0
    %v517 = vadd.f32 0.0, %v516
    %v518 = vpop.f32.mrb[0].mxu0
    %519 = vmatprep.mubr.f32.mxu0 0.0
    %520 = vmatmul.mubr.f32.gmra.mrb[0].mxu0 %v208
    %v521 = vpop.f32.mrb[0].mxu0
    %v522 = vadd.f32 0.0, %v521
    %v523 = vpop.f32.mrb[0].mxu0
    %524 = vmatprep.mubr.f32.mxu0 0.0
    %525 = vmatmul.mubr.f32.gmra.mrb[0].mxu0 %v211
    %v526 = vpop.f32.mrb[0].mxu0
    %v527 = vadd.f32 0.0, %v526
    %v528 = vpop.f32.mrb[0].mxu0
    %529 = vmatprep.mubr.f32.mxu0 0.0
    %530 = vmatmul.mubr.f32.gmra.mrb[0].mxu0 %v214
    %v531 = vpop.f32.mrb[0].mxu0
    %v532 = vadd.f32 0.0, %v531
    %v533 = vpop.f32.mrb[0].mxu0
    %534 = vmatprep.mubr.f32.mxu0 0.0
    %535 = vmatmul.mubr.f32.gmra.mrb[0].mxu0 %v217
    %v536 = vpop.f32.mrb[0].mxu0
    %v537 = vadd.f32 0.0, %v536
    %v538 = vpop.f32.mrb[0].mxu0
    %539 = vmatprep.mubr.f32.mxu0 0.0
    %540 = vmatmul.mubr.f32.gmra.mrb[0].mxu0 %v220
    %v541 = vpop.f32.mrb[0].mxu0
    %v542 = vadd.f32 0.0, %v541
    %v543 = vpop.f32.mrb[0].mxu0
    %544 = vmatprep.mubr.f32.mxu0 0.0
    %545 = vmatmul.mubr.f32.gmra.mrb[0].mxu0 %v223
    %v546 = vpop.f32.mrb[0].mxu0
    %v547 = vadd.f32 0.0, %v546
    %v548 = vpop.f32.mrb[0].mxu0
    %549 = vmatprep.mubr.f32.mxu0 0.0
    %550 = vmatmul.mubr.f32.gmra.mrb[0].mxu0 %v226
    %v551 = vpop.f32.mrb[0].mxu0
    %v552 = vadd.f32 0.0, %v551
    %v553 = vpop.f32.mrb[0].mxu0
    %554 = vmatprep.mubr.f32.mxu0 0.0
    %555 = vmatmul.mubr.f32.gmra.mrb[0].mxu0 %v229
    %v556 = vpop.f32.mrb[0].mxu0
    %v557 = vadd.f32 0.0, %v556
    %v558 = vpop.f32.mrb[0].mxu0
    %559 = vmatprep.mubr.f32.mxu0 0.0
    %560 = vmatmul.mubr.f32.gmra.mrb[0].mxu0 %v232
    %v561 = vpop.f32.mrb[0].mxu0
    %v562 = vadd.f32 0.0, %v561
    %v563 = vpop.f32.mrb[0].mxu0
    %564 = vmatprep.mubr.f32.mxu0 0.0
    %565 = vmatmul.mubr.f32.gmra.mrb[0].mxu0 %v235
    %v566 = vpop.f32.mrb[0].mxu0
    %v567 = vadd.f32 0.0, %v566
    %v568 = vpop.f32.mrb[0].mxu0
    %569 = vmatprep.mubr.f32.mxu0 0.0
    %570 = vmatmul.mubr.f32.gmra.mrb[0].mxu0 %v238
    %v571 = vpop.f32.mrb[0].mxu0
    %v572 = vadd.f32 0.0, %v571
    %v573 = vpop.f32.mrb[0].mxu0
    %574 = vmatprep.mubr.f32.mxu0 0.0
    %575 = vmatmul.mubr.f32.gmra.mrb[0].mxu0 %v241
    %v576 = vpop.f32.mrb[0].mxu0
    %v577 = vadd.f32 0.0, %v576
    %v578 = vpop.f32.mrb[0].mxu0
    %579 = vmatprep.mubr.f32.mxu0 0.0
    %580 = vmatmul.mubr.f32.gmra.mrb[0].mxu0 %v244
    %v581 = vpop.f32.mrb[0].mxu0
    %v582 = vadd.f32 0.0, %v581
    %v583 = vpop.f32.mrb[0].mxu0
    %584 = vmatprep.mubr.f32.mxu0 0.0
    %585 = vmatmul.mubr.f32.gmra.mrb[0].mxu0 %v247
    %v586 = vpop.f32.mrb[0].mxu0
    %v587 = vadd.f32 0.0, %v586
    %v588 = vpop.f32.mrb[0].mxu0
    %589 = vmatprep.mubr.f32.mxu0 0.0
    %590 = vmatmul.mubr.f32.gmra.mrb[0].mxu0 %v250
    %v591 = vpop.f32.mrb[0].mxu0
    %v592 = vadd.f32 0.0, %v591
    %v593 = vpop.f32.mrb[0].mxu0
    %594 = vmatprep.mubr.f32.mxu0 0.0
    %595 = vmatmul.mubr.f32.gmra.mrb[0].mxu0 %v253
    %v596 = vpop.f32.mrb[0].mxu0
    %v597 = vadd.f32 0.0, %v596
    %v598 = vpop.f32.mrb[0].mxu0
    %599 = vmatprep.mubr.f32.mxu0 0.0
    %600 = vmatmul.mubr.f32.gmra.mrb[0].mxu0 %v256
    %v601 = vpop.f32.mrb[0].mxu0
    %v602 = vadd.f32 0.0, %v601
    %v603 = vpop.f32.mrb[0].mxu0
    %604 = vmatprep.mubr.f32.mxu0 0.0
    %605 = vmatmul.mubr.f32.gmra.mrb[0].mxu0 %v259
    %v606 = vpop.f32.mrb[0].mxu0
    %v607 = vadd.f32 0.0, %v606
    %v608 = vpop.f32.mrb[0].mxu0
    %609 = vmatprep.mubr.f32.mxu0 0.0
    %610 = vmatmul.mubr.f32.gmra.mrb[0].mxu0 %v262
    %v611 = vpop.f32.mrb[0].mxu0
    %v612 = vadd.f32 0.0, %v611
    %v613 = vpop.f32.mrb[0].mxu0
    %614 = vmatprep.mubr.f32.mxu0 0.0
    %615 = vmatmul.mubr.f32.gmra.mrb[0].mxu0 %v265
    %v616 = vpop.f32.mrb[0].mxu0
    %v617 = vadd.f32 0.0, %v616
    %v618 = vpop.f32.mrb[0].mxu0
    %619 = vmatprep.mubr.f32.mxu0 0.0
    %620 = vmatmul.mubr.f32.gmra.mrb[0].mxu0 %v268
    %v621 = vpop.f32.mrb[0].mxu0
    %v622 = vadd.f32 0.0, %v621
    %v623 = vpop.f32.mrb[0].mxu0
    %624 = vmatprep.mubr.f32.mxu0 0.0
    %625 = vmatmul.mubr.f32.gmra.mrb[0].mxu0 %v271
    %v626 = vpop.f32.mrb[0].mxu0
    %v627 = vadd.f32 0.0, %v626
    %v628 = vpop.f32.mrb[0].mxu0
    %629 = vmatprep.mubr.f32.mxu0 0.0
    %630 = vmatmul.mubr.f32.gmra.mrb[0].mxu0 %v274
    %v631 = vpop.f32.mrb[0].mxu0
    %v632 = vadd.f32 0.0, %v631
    %v633 = vpop.f32.mrb[0].mxu0
    %634 = vmatprep.mubr.f32.mxu0 0.0
    %635 = vmatmul.mubr.f32.gmra.mrb[0].mxu0 %v277
    %v636 = vpop.f32.mrb[0].mxu0
    %v637 = vadd.f32 0.0, %v636
    %v638 = vpop.f32.mrb[0].mxu0
    %639 = vmatprep.mubr.f32.mxu0 0.0
    %640 = vmatmul.mubr.f32.gmra.mrb[0].mxu0 %v280
    %v641 = vpop.f32.mrb[0].mxu0
    %v642 = vadd.f32 0.0, %v641
    %v643 = vpop.f32.mrb[0].mxu0
    %644 = vmatprep.mubr.f32.mxu0 0.0
    %645 = vmatmul.mubr.f32.gmra.mrb[0].mxu0 %v283
    %v646 = vpop.f32.mrb[0].mxu0
    %v647 = vadd.f32 0.0, %v646
    %v648 = vpop.f32.mrb[0].mxu0
    %649 = vmatprep.mubr.f32.mxu0 0.0
    %650 = vmatmul.mubr.f32.gmra.mrb[0].mxu0 %v286
    %v651 = vpop.f32.mrb[0].mxu0
    %v652 = vadd.f32 0.0, %v651
    %v653 = vpop.f32.mrb[0].mxu0
    %654 = vmatprep.mubr.f32.mxu0 0.0
    %655 = vmatmul.mubr.f32.gmra.mrb[0].mxu0 %v289
    %v656 = vpop.f32.mrb[0].mxu0
    %v657 = vadd.f32 0.0, %v656
    %v658 = vpop.f32.mrb[0].mxu0
    %659 = vmatprep.mubr.f32.mxu0 0.0
    %660 = vmatmul.mubr.f32.gmra.mrb[0].mxu0 %v292
    %v661 = vpop.f32.mrb[0].mxu0
    %v662 = vadd.f32 0.0, %v661
    %v663 = vpop.f32.mrb[0].mxu0
    %664 = vmatprep.mubr.f32.mxu0 0.0
    %665 = vmatmul.mubr.f32.gmra.mrb[0].mxu0 %v295
    %v666 = vpop.f32.mrb[0].mxu0
    %v667 = vadd.f32 0.0, %v666
    %v668 = vpop.f32.mrb[0].mxu0
    %669 = vmatprep.mubr.f32.mxu0 0.0
    %670 = vmatmul.mubr.f32.gmra.mrb[0].mxu0 %v298
    %v671 = vpop.f32.mrb[0].mxu0
    %v672 = vadd.f32 0.0, %v671
    %v673 = vpop.f32.mrb[0].mxu0
    %674 = vmatprep.mubr.f32.mxu0 0.0
    %675 = vmatmul.mubr.f32.gmra.mrb[0].mxu0 %v301
    %v676 = vpop.f32.mrb[0].mxu0
    %v677 = vadd.f32 0.0, %v676
    %v678 = vpop.f32.mrb[0].mxu0
    %679 = vmatprep.mubr.f32.mxu0 0.0
    %680 = vmatmul.mubr.f32.gmra.mrb[0].mxu0 %v304
    %v681 = vpop.f32.mrb[0].mxu0
    %v682 = vadd.f32 0.0, %v681
    %v683 = vpop.f32.mrb[0].mxu0
    %684 = vmatprep.mubr.f32.mxu0 0.0
    %685 = vmatmul.mubr.f32.gmra.mrb[0].mxu0 %v307
    %v686 = vpop.f32.mrb[0].mxu0
    %v687 = vadd.f32 0.0, %v686
    %v688 = vpop.f32.mrb[0].mxu0
    %689 = vmatprep.mubr.f32.mxu0 0.0
    %690 = vmatmul.mubr.f32.gmra.mrb[0].mxu0 %v310
    %v691 = vpop.f32.mrb[0].mxu0
    %v692 = vadd.f32 0.0, %v691
    %v693 = vpop.f32.mrb[0].mxu0
    %694 = vmatprep.mubr.f32.mxu0 0.0
    %695 = vmatmul.mubr.f32.gmra.mrb[0].mxu0 %v313
    %v696 = vpop.f32.mrb[0].mxu0
    %v697 = vadd.f32 0.0, %v696
    %v698 = vpop.f32.mrb[0].mxu0
    %699 = vdwg.mxu0
    %v700 = vld [vmem:[#allocation7] sm:$0xff]
    %v701 = vld [vmem:[#allocation7 + $0x8] sm:$0xff]
    %v702 = vld [vmem:[#allocation7 + $0x10] sm:$0xff]
    %v703 = vld [vmem:[#allocation7 + $0x18] sm:$0xff]
    %v704 = vld [vmem:[#allocation7 + $0x20] sm:$0xff]
    %v705 = vld [vmem:[#allocation7 + $0x28] sm:$0xff]
    %v706 = vld [vmem:[#allocation7 + $0x30] sm:$0xff]
    %v707 = vld [vmem:[#allocation7 + $0x38] sm:$0xff]
    %v708 = vld [vmem:[#allocation7 + $0x40] sm:$0xff]
    %v709 = vld [vmem:[#allocation7 + $0x48] sm:$0xff]
    %v710 = vld [vmem:[#allocation7 + $0x50] sm:$0xff]
    %v711 = vld [vmem:[#allocation7 + $0x58] sm:$0xff]
    %v712 = vld [vmem:[#allocation7 + $0x60] sm:$0xff]
    %v713 = vld [vmem:[#allocation7 + $0x68] sm:$0xff]
    %v714 = vld [vmem:[#allocation7 + $0x70] sm:$0xff]
    %v715 = vld [vmem:[#allocation7 + $0x78] sm:$0xff]
    %v716 = vld [vmem:[#allocation7 + $0x80] sm:$0xff]
    %v717 = vld [vmem:[#allocation7 + $0x88] sm:$0xff]
    %v718 = vld [vmem:[#allocation7 + $0x90] sm:$0xff]
    %v719 = vld [vmem:[#allocation7 + $0x98] sm:$0xff]
    %v720 = vld [vmem:[#allocation7 + $0xa0] sm:$0xff]
    %v721 = vld [vmem:[#allocation7 + $0xa8] sm:$0xff]
    %v722 = vld [vmem:[#allocation7 + $0xb0] sm:$0xff]
    %v723 = vld [vmem:[#allocation7 + $0xb8] sm:$0xff]
    %v724 = vld [vmem:[#allocation7 + $0xc0] sm:$0xff]
    %v725 = vld [vmem:[#allocation7 + $0xc8] sm:$0xff]
    %v726 = vld [vmem:[#allocation7 + $0xd0] sm:$0xff]
    %v727 = vld [vmem:[#allocation7 + $0xd8] sm:$0xff]
    %v728 = vld [vmem:[#allocation7 + $0xe0] sm:$0xff]
    %v729 = vld [vmem:[#allocation7 + $0xe8] sm:$0xff]
    %v730 = vld [vmem:[#allocation7 + $0xf0] sm:$0xff]
    %v731 = vld [vmem:[#allocation7 + $0xf8] sm:$0xff]
    %v732 = vld [vmem:[#allocation7 + $0x100] sm:$0xff]
    %v733 = vld [vmem:[#allocation7 + $0x108] sm:$0xff]
    %v734 = vld [vmem:[#allocation7 + $0x110] sm:$0xff]
    %v735 = vld [vmem:[#allocation7 + $0x118] sm:$0xff]
    %v736 = vld [vmem:[#allocation7 + $0x120] sm:$0xff]
    %v737 = vld [vmem:[#allocation7 + $0x128] sm:$0xff]
    %v738 = vld [vmem:[#allocation7 + $0x130] sm:$0xff]
    %v739 = vld [vmem:[#allocation7 + $0x138] sm:$0xff]
    %v740 = vld [vmem:[#allocation7 + $0x140] sm:$0xff]
    %v741 = vld [vmem:[#allocation7 + $0x148] sm:$0xff]
    %v742 = vld [vmem:[#allocation7 + $0x150] sm:$0xff]
    %v743 = vld [vmem:[#allocation7 + $0x158] sm:$0xff]
    %v744 = vld [vmem:[#allocation7 + $0x160] sm:$0xff]
    %v745 = vld [vmem:[#allocation7 + $0x168] sm:$0xff]
    %v746 = vld [vmem:[#allocation7 + $0x170] sm:$0xff]
    %v747 = vld [vmem:[#allocation7 + $0x178] sm:$0xff]
    %v748 = vld [vmem:[#allocation7 + $0x180] sm:$0xff]
    %v749 = vld [vmem:[#allocation7 + $0x188] sm:$0xff]
    %v750 = vld [vmem:[#allocation7 + $0x190] sm:$0xff]
    %v751 = vld [vmem:[#allocation7 + $0x198] sm:$0xff]
    %v752 = vld [vmem:[#allocation7 + $0x1a0] sm:$0xff]
    %v753 = vld [vmem:[#allocation7 + $0x1a8] sm:$0xff]
    %v754 = vld [vmem:[#allocation7 + $0x1b0] sm:$0xff]
    %v755 = vld [vmem:[#allocation7 + $0x1b8] sm:$0xff]
    %v756 = vld [vmem:[#allocation7 + $0x1c0] sm:$0xff]
    %v757 = vld [vmem:[#allocation7 + $0x1c8] sm:$0xff]
    %v758 = vld [vmem:[#allocation7 + $0x1d0] sm:$0xff]
    %v759 = vld [vmem:[#allocation7 + $0x1d8] sm:$0xff]
    %v760 = vld [vmem:[#allocation7 + $0x1e0] sm:$0xff]
    %v761 = vld [vmem:[#allocation7 + $0x1e8] sm:$0xff]
    %v762 = vld [vmem:[#allocation7 + $0x1f0] sm:$0xff]
    %v763 = vld [vmem:[#allocation7 + $0x1f8] sm:$0xff]
    %765 = vset.pattern.permute.xlu0 0
    %766 = vperm.xlu0 %765, %v700
    %v767 = vpop.permute.xlu0 %766
    %770 = vset.pattern.permute.xlu0 0
    %771 = vperm.xlu0 %770, %v701
    %v772 = vpop.permute.xlu0 %771
    %775 = vset.pattern.permute.xlu0 0
    %776 = vperm.xlu0 %775, %v702
    %v777 = vpop.permute.xlu0 %776
    %780 = vset.pattern.permute.xlu0 0
    %781 = vperm.xlu0 %780, %v703
    %v782 = vpop.permute.xlu0 %781
    %785 = vset.pattern.permute.xlu0 0
    %786 = vperm.xlu0 %785, %v704
    %v787 = vpop.permute.xlu0 %786
    %790 = vset.pattern.permute.xlu0 0
    %791 = vperm.xlu0 %790, %v705
    %v792 = vpop.permute.xlu0 %791
    %795 = vset.pattern.permute.xlu0 0
    %796 = vperm.xlu0 %795, %v706
    %v797 = vpop.permute.xlu0 %796
    %800 = vset.pattern.permute.xlu0 0
    %801 = vperm.xlu0 %800, %v707
    %v802 = vpop.permute.xlu0 %801
    %805 = vset.pattern.permute.xlu0 0
    %806 = vperm.xlu0 %805, %v708
    %v807 = vpop.permute.xlu0 %806
    %810 = vset.pattern.permute.xlu0 0
    %811 = vperm.xlu0 %810, %v709
    %v812 = vpop.permute.xlu0 %811
    %815 = vset.pattern.permute.xlu0 0
    %816 = vperm.xlu0 %815, %v710
    %v817 = vpop.permute.xlu0 %816
    %820 = vset.pattern.permute.xlu0 0
    %821 = vperm.xlu0 %820, %v711
    %v822 = vpop.permute.xlu0 %821
    %825 = vset.pattern.permute.xlu0 0
    %826 = vperm.xlu0 %825, %v712
    %v827 = vpop.permute.xlu0 %826
    %830 = vset.pattern.permute.xlu0 0
    %831 = vperm.xlu0 %830, %v713
    %v832 = vpop.permute.xlu0 %831
    %835 = vset.pattern.permute.xlu0 0
    %836 = vperm.xlu0 %835, %v714
    %v837 = vpop.permute.xlu0 %836
    %840 = vset.pattern.permute.xlu0 0
    %841 = vperm.xlu0 %840, %v715
    %v842 = vpop.permute.xlu0 %841
    %845 = vset.pattern.permute.xlu0 0
    %846 = vperm.xlu0 %845, %v716
    %v847 = vpop.permute.xlu0 %846
    %850 = vset.pattern.permute.xlu0 0
    %851 = vperm.xlu0 %850, %v717
    %v852 = vpop.permute.xlu0 %851
    %855 = vset.pattern.permute.xlu0 0
    %856 = vperm.xlu0 %855, %v718
    %v857 = vpop.permute.xlu0 %856
    %860 = vset.pattern.permute.xlu0 0
    %861 = vperm.xlu0 %860, %v719
    %v862 = vpop.permute.xlu0 %861
    %865 = vset.pattern.permute.xlu0 0
    %866 = vperm.xlu0 %865, %v720
    %v867 = vpop.permute.xlu0 %866
    %870 = vset.pattern.permute.xlu0 0
    %871 = vperm.xlu0 %870, %v721
    %v872 = vpop.permute.xlu0 %871
    %875 = vset.pattern.permute.xlu0 0
    %876 = vperm.xlu0 %875, %v722
    %v877 = vpop.permute.xlu0 %876
    %880 = vset.pattern.permute.xlu0 0
    %881 = vperm.xlu0 %880, %v723
    %v882 = vpop.permute.xlu0 %881
    %885 = vset.pattern.permute.xlu0 0
    %886 = vperm.xlu0 %885, %v724
    %v887 = vpop.permute.xlu0 %886
    %890 = vset.pattern.permute.xlu0 0
    %891 = vperm.xlu0 %890, %v725
    %v892 = vpop.permute.xlu0 %891
    %895 = vset.pattern.permute.xlu0 0
    %896 = vperm.xlu0 %895, %v726
    %v897 = vpop.permute.xlu0 %896
    %900 = vset.pattern.permute.xlu0 0
    %901 = vperm.xlu0 %900, %v727
    %v902 = vpop.permute.xlu0 %901
    %905 = vset.pattern.permute.xlu0 0
    %906 = vperm.xlu0 %905, %v728
    %v907 = vpop.permute.xlu0 %906
    %910 = vset.pattern.permute.xlu0 0
    %911 = vperm.xlu0 %910, %v729
    %v912 = vpop.permute.xlu0 %911
    %915 = vset.pattern.permute.xlu0 0
    %916 = vperm.xlu0 %915, %v730
    %v917 = vpop.permute.xlu0 %916
    %920 = vset.pattern.permute.xlu0 0
    %921 = vperm.xlu0 %920, %v731
    %v922 = vpop.permute.xlu0 %921
    %925 = vset.pattern.permute.xlu0 0
    %926 = vperm.xlu0 %925, %v732
    %v927 = vpop.permute.xlu0 %926
    %930 = vset.pattern.permute.xlu0 0
    %931 = vperm.xlu0 %930, %v733
    %v932 = vpop.permute.xlu0 %931
    %935 = vset.pattern.permute.xlu0 0
    %936 = vperm.xlu0 %935, %v734
    %v937 = vpop.permute.xlu0 %936
    %940 = vset.pattern.permute.xlu0 0
    %941 = vperm.xlu0 %940, %v735
    %v942 = vpop.permute.xlu0 %941
    %945 = vset.pattern.permute.xlu0 0
    %946 = vperm.xlu0 %945, %v736
    %v947 = vpop.permute.xlu0 %946
    %950 = vset.pattern.permute.xlu0 0
    %951 = vperm.xlu0 %950, %v737
    %v952 = vpop.permute.xlu0 %951
    %955 = vset.pattern.permute.xlu0 0
    %956 = vperm.xlu0 %955, %v738
    %v957 = vpop.permute.xlu0 %956
    %960 = vset.pattern.permute.xlu0 0
    %961 = vperm.xlu0 %960, %v739
    %v962 = vpop.permute.xlu0 %961
    %965 = vset.pattern.permute.xlu0 0
    %966 = vperm.xlu0 %965, %v740
    %v967 = vpop.permute.xlu0 %966
    %970 = vset.pattern.permute.xlu0 0
    %971 = vperm.xlu0 %970, %v741
    %v972 = vpop.permute.xlu0 %971
    %975 = vset.pattern.permute.xlu0 0
    %976 = vperm.xlu0 %975, %v742
    %v977 = vpop.permute.xlu0 %976
    %980 = vset.pattern.permute.xlu0 0
    %981 = vperm.xlu0 %980, %v743
    %v982 = vpop.permute.xlu0 %981
    %985 = vset.pattern.permute.xlu0 0
    %986 = vperm.xlu0 %985, %v744
    %v987 = vpop.permute.xlu0 %986
    %990 = vset.pattern.permute.xlu0 0
    %991 = vperm.xlu0 %990, %v745
    %v992 = vpop.permute.xlu0 %991
    %995 = vset.pattern.permute.xlu0 0
    %996 = vperm.xlu0 %995, %v746
    %v997 = vpop.permute.xlu0 %996
    %1000 = vset.pattern.permute.xlu0 0
    %1001 = vperm.xlu0 %1000, %v747
    %v1002 = vpop.permute.xlu0 %1001
    %1005 = vset.pattern.permute.xlu0 0
    %1006 = vperm.xlu0 %1005, %v748
    %v1007 = vpop.permute.xlu0 %1006
    %1010 = vset.pattern.permute.xlu0 0
    %1011 = vperm.xlu0 %1010, %v749
    %v1012 = vpop.permute.xlu0 %1011
    %1015 = vset.pattern.permute.xlu0 0
    %1016 = vperm.xlu0 %1015, %v750
    %v1017 = vpop.permute.xlu0 %1016
    %1020 = vset.pattern.permute.xlu0 0
    %1021 = vperm.xlu0 %1020, %v751
    %v1022 = vpop.permute.xlu0 %1021
    %1025 = vset.pattern.permute.xlu0 0
    %1026 = vperm.xlu0 %1025, %v752
    %v1027 = vpop.permute.xlu0 %1026
    %1030 = vset.pattern.permute.xlu0 0
    %1031 = vperm.xlu0 %1030, %v753
    %v1032 = vpop.permute.xlu0 %1031
    %1035 = vset.pattern.permute.xlu0 0
    %1036 = vperm.xlu0 %1035, %v754
    %v1037 = vpop.permute.xlu0 %1036
    %1040 = vset.pattern.permute.xlu0 0
    %1041 = vperm.xlu0 %1040, %v755
    %v1042 = vpop.permute.xlu0 %1041
    %1045 = vset.pattern.permute.xlu0 0
    %1046 = vperm.xlu0 %1045, %v756
    %v1047 = vpop.permute.xlu0 %1046
    %1050 = vset.pattern.permute.xlu0 0
    %1051 = vperm.xlu0 %1050, %v757
    %v1052 = vpop.permute.xlu0 %1051
    %1055 = vset.pattern.permute.xlu0 0
    %1056 = vperm.xlu0 %1055, %v758
    %v1057 = vpop.permute.xlu0 %1056
    %1060 = vset.pattern.permute.xlu0 0
    %1061 = vperm.xlu0 %1060, %v759
    %v1062 = vpop.permute.xlu0 %1061
    %1065 = vset.pattern.permute.xlu0 0
    %1066 = vperm.xlu0 %1065, %v760
    %v1067 = vpop.permute.xlu0 %1066
    %1070 = vset.pattern.permute.xlu0 0
    %1071 = vperm.xlu0 %1070, %v761
    %v1072 = vpop.permute.xlu0 %1071
    %1075 = vset.pattern.permute.xlu0 0
    %1076 = vperm.xlu0 %1075, %v762
    %v1077 = vpop.permute.xlu0 %1076
    %1080 = vset.pattern.permute.xlu0 0
    %1081 = vperm.xlu0 %1080, %v763
    %v1082 = vpop.permute.xlu0 %1081
    %v1084 = vmul.f32 %v767, %v382
    %v1085 = vmul.f32 %v772, %v387
    %v1086 = vmul.f32 %v777, %v392
    %v1087 = vmul.f32 %v782, %v397
    %v1088 = vmul.f32 %v787, %v402
    %v1089 = vmul.f32 %v792, %v407
    %v1090 = vmul.f32 %v797, %v412
    %v1091 = vmul.f32 %v802, %v417
    %v1092 = vmul.f32 %v807, %v422
    %v1093 = vmul.f32 %v812, %v427
    %v1094 = vmul.f32 %v817, %v432
    %v1095 = vmul.f32 %v822, %v437
    %v1096 = vmul.f32 %v827, %v442
    %v1097 = vmul.f32 %v832, %v447
    %v1098 = vmul.f32 %v837, %v452
    %v1099 = vmul.f32 %v842, %v457
    %v1100 = vmul.f32 %v847, %v462
    %v1101 = vmul.f32 %v852, %v467
    %v1102 = vmul.f32 %v857, %v472
    %v1103 = vmul.f32 %v862, %v477
    %v1104 = vmul.f32 %v867, %v482
    %v1105 = vmul.f32 %v872, %v487
    %v1106 = vmul.f32 %v877, %v492
    %v1107 = vmul.f32 %v882, %v497
    %v1108 = vmul.f32 %v887, %v502
    %v1109 = vmul.f32 %v892, %v507
    %v1110 = vmul.f32 %v897, %v512
    %v1111 = vmul.f32 %v902, %v517
    %v1112 = vmul.f32 %v907, %v522
    %v1113 = vmul.f32 %v912, %v527
    %v1114 = vmul.f32 %v917, %v532
    %v1115 = vmul.f32 %v922, %v537
    %v1116 = vmul.f32 %v927, %v542
    %v1117 = vmul.f32 %v932, %v547
    %v1118 = vmul.f32 %v937, %v552
    %v1119 = vmul.f32 %v942, %v557
    %v1120 = vmul.f32 %v947, %v562
    %v1121 = vmul.f32 %v952, %v567
    %v1122 = vmul.f32 %v957, %v572
    %v1123 = vmul.f32 %v962, %v577
    %v1124 = vmul.f32 %v967, %v582
    %v1125 = vmul.f32 %v972, %v587
    %v1126 = vmul.f32 %v977, %v592
    %v1127 = vmul.f32 %v982, %v597
    %v1128 = vmul.f32 %v987, %v602
    %v1129 = vmul.f32 %v992, %v607
    %v1130 = vmul.f32 %v997, %v612
    %v1131 = vmul.f32 %v1002, %v617
    %v1132 = vmul.f32 %v1007, %v622
    %v1133 = vmul.f32 %v1012, %v627
    %v1134 = vmul.f32 %v1017, %v632
    %v1135 = vmul.f32 %v1022, %v637
    %v1136 = vmul.f32 %v1027, %v642
    %v1137 = vmul.f32 %v1032, %v647
    %v1138 = vmul.f32 %v1037, %v652
    %v1139 = vmul.f32 %v1042, %v657
    %v1140 = vmul.f32 %v1047, %v662
    %v1141 = vmul.f32 %v1052, %v667
    %v1142 = vmul.f32 %v1057, %v672
    %v1143 = vmul.f32 %v1062, %v677
    %v1144 = vmul.f32 %v1067, %v682
    %v1145 = vmul.f32 %v1072, %v687
    %v1146 = vmul.f32 %v1077, %v692
    %v1147 = vmul.f32 %v1082, %v697
    %v1148 = vpack.c.bf16 %v1085, %v1084
    %v1149 = vpack.c.bf16 %v1087, %v1086
    %v1150 = vpack.c.bf16 %v1089, %v1088
    %v1151 = vpack.c.bf16 %v1091, %v1090
    %v1152 = vpack.c.bf16 %v1093, %v1092
    %v1153 = vpack.c.bf16 %v1095, %v1094
    %v1154 = vpack.c.bf16 %v1097, %v1096
    %v1155 = vpack.c.bf16 %v1099, %v1098
    %v1156 = vpack.c.bf16 %v1101, %v1100
    %v1157 = vpack.c.bf16 %v1103, %v1102
    %v1158 = vpack.c.bf16 %v1105, %v1104
    %v1159 = vpack.c.bf16 %v1107, %v1106
    %v1160 = vpack.c.bf16 %v1109, %v1108
    %v1161 = vpack.c.bf16 %v1111, %v1110
    %v1162 = vpack.c.bf16 %v1113, %v1112
    %v1163 = vpack.c.bf16 %v1115, %v1114
    %v1164 = vpack.c.bf16 %v1117, %v1116
    %v1165 = vpack.c.bf16 %v1119, %v1118
    %v1166 = vpack.c.bf16 %v1121, %v1120
    %v1167 = vpack.c.bf16 %v1123, %v1122
    %v1168 = vpack.c.bf16 %v1125, %v1124
    %v1169 = vpack.c.bf16 %v1127, %v1126
    %v1170 = vpack.c.bf16 %v1129, %v1128
    %v1171 = vpack.c.bf16 %v1131, %v1130
    %v1172 = vpack.c.bf16 %v1133, %v1132
    %v1173 = vpack.c.bf16 %v1135, %v1134
    %v1174 = vpack.c.bf16 %v1137, %v1136
    %v1175 = vpack.c.bf16 %v1139, %v1138
    %v1176 = vpack.c.bf16 %v1141, %v1140
    %v1177 = vpack.c.bf16 %v1143, %v1142
    %v1178 = vpack.c.bf16 %v1145, %v1144
    %v1179 = vpack.c.bf16 %v1147, %v1146
    %v1212 = vunpack.c.l.b16 %v1148
    %v1213 = vunpack.c.h.b16 %v1148
    %v1214 = vunpack.c.l.b16 %v1149
    %v1215 = vunpack.c.h.b16 %v1149
    %v1216 = vunpack.c.l.b16 %v1150
    %v1217 = vunpack.c.h.b16 %v1150
    %v1218 = vunpack.c.l.b16 %v1151
    %v1219 = vunpack.c.h.b16 %v1151
    %v1220 = vunpack.c.l.b16 %v1152
    %v1221 = vunpack.c.h.b16 %v1152
    %v1222 = vunpack.c.l.b16 %v1153
    %v1223 = vunpack.c.h.b16 %v1153
    %v1224 = vunpack.c.l.b16 %v1154
    %v1225 = vunpack.c.h.b16 %v1154
    %v1226 = vunpack.c.l.b16 %v1155
    %v1227 = vunpack.c.h.b16 %v1155
    %v1228 = vunpack.c.l.b16 %v1156
    %v1229 = vunpack.c.h.b16 %v1156
    %v1230 = vunpack.c.l.b16 %v1157
    %v1231 = vunpack.c.h.b16 %v1157
    %v1232 = vunpack.c.l.b16 %v1158
    %v1233 = vunpack.c.h.b16 %v1158
    %v1234 = vunpack.c.l.b16 %v1159
    %v1235 = vunpack.c.h.b16 %v1159
    %v1236 = vunpack.c.l.b16 %v1160
    %v1237 = vunpack.c.h.b16 %v1160
    %v1238 = vunpack.c.l.b16 %v1161
    %v1239 = vunpack.c.h.b16 %v1161
    %v1240 = vunpack.c.l.b16 %v1162
    %v1241 = vunpack.c.h.b16 %v1162
    %v1242 = vunpack.c.l.b16 %v1163
    %v1243 = vunpack.c.h.b16 %v1163
    %v1244 = vunpack.c.l.b16 %v1164
    %v1245 = vunpack.c.h.b16 %v1164
    %v1246 = vunpack.c.l.b16 %v1165
    %v1247 = vunpack.c.h.b16 %v1165
    %v1248 = vunpack.c.l.b16 %v1166
    %v1249 = vunpack.c.h.b16 %v1166
    %v1250 = vunpack.c.l.b16 %v1167
    %v1251 = vunpack.c.h.b16 %v1167
    %v1252 = vunpack.c.l.b16 %v1168
    %v1253 = vunpack.c.h.b16 %v1168
    %v1254 = vunpack.c.l.b16 %v1169
    %v1255 = vunpack.c.h.b16 %v1169
    %v1256 = vunpack.c.l.b16 %v1170
    %v1257 = vunpack.c.h.b16 %v1170
    %v1258 = vunpack.c.l.b16 %v1171
    %v1259 = vunpack.c.h.b16 %v1171
    %v1260 = vunpack.c.l.b16 %v1172
    %v1261 = vunpack.c.h.b16 %v1172
    %v1262 = vunpack.c.l.b16 %v1173
    %v1263 = vunpack.c.h.b16 %v1173
    %v1264 = vunpack.c.l.b16 %v1174
    %v1265 = vunpack.c.h.b16 %v1174
    %v1266 = vunpack.c.l.b16 %v1175
    %v1267 = vunpack.c.h.b16 %v1175
    %v1268 = vunpack.c.l.b16 %v1176
    %v1269 = vunpack.c.h.b16 %v1176
    %v1270 = vunpack.c.l.b16 %v1177
    %v1271 = vunpack.c.h.b16 %v1177
    %v1272 = vunpack.c.l.b16 %v1178
    %v1273 = vunpack.c.h.b16 %v1178
    %v1274 = vunpack.c.l.b16 %v1179
    %v1275 = vunpack.c.h.b16 %v1179
    %v1276 = vpack.c.b16 %v1212, %v1212
    %v1277 = vpack.c.b16 %v1213, %v1213
    %v1278 = vpack.c.b16 %v1214, %v1214
    %v1279 = vpack.c.b16 %v1215, %v1215
    %v1280 = vpack.c.b16 %v1216, %v1216
    %v1281 = vpack.c.b16 %v1217, %v1217
    %v1282 = vpack.c.b16 %v1218, %v1218
    %v1283 = vpack.c.b16 %v1219, %v1219
    %v1284 = vpack.c.b16 %v1220, %v1220
    %v1285 = vpack.c.b16 %v1221, %v1221
    %v1286 = vpack.c.b16 %v1222, %v1222
    %v1287 = vpack.c.b16 %v1223, %v1223
    %v1288 = vpack.c.b16 %v1224, %v1224
    %v1289 = vpack.c.b16 %v1225, %v1225
    %v1290 = vpack.c.b16 %v1226, %v1226
    %v1291 = vpack.c.b16 %v1227, %v1227
    %v1292 = vpack.c.b16 %v1228, %v1228
    %v1293 = vpack.c.b16 %v1229, %v1229
    %v1294 = vpack.c.b16 %v1230, %v1230
    %v1295 = vpack.c.b16 %v1231, %v1231
    %v1296 = vpack.c.b16 %v1232, %v1232
    %v1297 = vpack.c.b16 %v1233, %v1233
    %v1298 = vpack.c.b16 %v1234, %v1234
    %v1299 = vpack.c.b16 %v1235, %v1235
    %v1300 = vpack.c.b16 %v1236, %v1236
    %v1301 = vpack.c.b16 %v1237, %v1237
    %v1302 = vpack.c.b16 %v1238, %v1238
    %v1303 = vpack.c.b16 %v1239, %v1239
    %v1304 = vpack.c.b16 %v1240, %v1240
    %v1305 = vpack.c.b16 %v1241, %v1241
    %v1306 = vpack.c.b16 %v1242, %v1242
    %v1307 = vpack.c.b16 %v1243, %v1243
    %v1308 = vpack.c.b16 %v1244, %v1244
    %v1309 = vpack.c.b16 %v1245, %v1245
    %v1310 = vpack.c.b16 %v1246, %v1246
    %v1311 = vpack.c.b16 %v1247, %v1247
    %v1312 = vpack.c.b16 %v1248, %v1248
    %v1313 = vpack.c.b16 %v1249, %v1249
    %v1314 = vpack.c.b16 %v1250, %v1250
    %v1315 = vpack.c.b16 %v1251, %v1251
    %v1316 = vpack.c.b16 %v1252, %v1252
    %v1317 = vpack.c.b16 %v1253, %v1253
    %v1318 = vpack.c.b16 %v1254, %v1254
    %v1319 = vpack.c.b16 %v1255, %v1255
    %v1320 = vpack.c.b16 %v1256, %v1256
    %v1321 = vpack.c.b16 %v1257, %v1257
    %v1322 = vpack.c.b16 %v1258, %v1258
    %v1323 = vpack.c.b16 %v1259, %v1259
    %v1324 = vpack.c.b16 %v1260, %v1260
    %v1325 = vpack.c.b16 %v1261, %v1261
    %v1326 = vpack.c.b16 %v1262, %v1262
    %v1327 = vpack.c.b16 %v1263, %v1263
    %v1328 = vpack.c.b16 %v1264, %v1264
    %v1329 = vpack.c.b16 %v1265, %v1265
    %v1330 = vpack.c.b16 %v1266, %v1266
    %v1331 = vpack.c.b16 %v1267, %v1267
    %v1332 = vpack.c.b16 %v1268, %v1268
    %v1333 = vpack.c.b16 %v1269, %v1269
    %v1334 = vpack.c.b16 %v1270, %v1270
    %v1335 = vpack.c.b16 %v1271, %v1271
    %v1336 = vpack.c.b16 %v1272, %v1272
    %v1337 = vpack.c.b16 %v1273, %v1273
    %v1338 = vpack.c.b16 %v1274, %v1274
    %v1339 = vpack.c.b16 %v1275, %v1275
    %vm1404 = vcmask 257024
    %1405 = vst.msk [vmem:[#allocation8] sm:$0xf] %vm1404, %v1276
    %1406 = vst.msk [vmem:[#allocation8 + $0x4] sm:$0xf] %vm1404, %v1277
    %1407 = vst.msk [vmem:[#allocation8 + $0x8] sm:$0xf] %vm1404, %v1278
    %1408 = vst.msk [vmem:[#allocation8 + $0xc] sm:$0xf] %vm1404, %v1279
    %1409 = vst.msk [vmem:[#allocation8 + $0x10] sm:$0xf] %vm1404, %v1280
    %1410 = vst.msk [vmem:[#allocation8 + $0x14] sm:$0xf] %vm1404, %v1281
    %1411 = vst.msk [vmem:[#allocation8 + $0x18] sm:$0xf] %vm1404, %v1282
    %1412 = vst.msk [vmem:[#allocation8 + $0x1c] sm:$0xf] %vm1404, %v1283
    %1413 = vst.msk [vmem:[#allocation8 + $0x20] sm:$0xf] %vm1404, %v1284
    %1414 = vst.msk [vmem:[#allocation8 + $0x24] sm:$0xf] %vm1404, %v1285
    %1415 = vst.msk [vmem:[#allocation8 + $0x28] sm:$0xf] %vm1404, %v1286
    %1416 = vst.msk [vmem:[#allocation8 + $0x2c] sm:$0xf] %vm1404, %v1287
    %1417 = vst.msk [vmem:[#allocation8 + $0x30] sm:$0xf] %vm1404, %v1288
    %1418 = vst.msk [vmem:[#allocation8 + $0x34] sm:$0xf] %vm1404, %v1289
    %1419 = vst.msk [vmem:[#allocation8 + $0x38] sm:$0xf] %vm1404, %v1290
    %1420 = vst.msk [vmem:[#allocation8 + $0x3c] sm:$0xf] %vm1404, %v1291
    %1421 = vst.msk [vmem:[#allocation8 + $0x40] sm:$0xf] %vm1404, %v1292
    %1422 = vst.msk [vmem:[#allocation8 + $0x44] sm:$0xf] %vm1404, %v1293
    %1423 = vst.msk [vmem:[#allocation8 + $0x48] sm:$0xf] %vm1404, %v1294
    %1424 = vst.msk [vmem:[#allocation8 + $0x4c] sm:$0xf] %vm1404, %v1295
    %1425 = vst.msk [vmem:[#allocation8 + $0x50] sm:$0xf] %vm1404, %v1296
    %1426 = vst.msk [vmem:[#allocation8 + $0x54] sm:$0xf] %vm1404, %v1297
    %1427 = vst.msk [vmem:[#allocation8 + $0x58] sm:$0xf] %vm1404, %v1298
    %1428 = vst.msk [vmem:[#allocation8 + $0x5c] sm:$0xf] %vm1404, %v1299
    %1429 = vst.msk [vmem:[#allocation8 + $0x60] sm:$0xf] %vm1404, %v1300
    %1430 = vst.msk [vmem:[#allocation8 + $0x64] sm:$0xf] %vm1404, %v1301
    %1431 = vst.msk [vmem:[#allocation8 + $0x68] sm:$0xf] %vm1404, %v1302
    %1432 = vst.msk [vmem:[#allocation8 + $0x6c] sm:$0xf] %vm1404, %v1303
    %1433 = vst.msk [vmem:[#allocation8 + $0x70] sm:$0xf] %vm1404, %v1304
    %1434 = vst.msk [vmem:[#allocation8 + $0x74] sm:$0xf] %vm1404, %v1305
    %1435 = vst.msk [vmem:[#allocation8 + $0x78] sm:$0xf] %vm1404, %v1306
    %1436 = vst.msk [vmem:[#allocation8 + $0x7c] sm:$0xf] %vm1404, %v1307
    %1437 = vst.msk [vmem:[#allocation8 + $0x80] sm:$0xf] %vm1404, %v1308
    %1438 = vst.msk [vmem:[#allocation8 + $0x84] sm:$0xf] %vm1404, %v1309
    %1439 = vst.msk [vmem:[#allocation8 + $0x88] sm:$0xf] %vm1404, %v1310
    %1440 = vst.msk [vmem:[#allocation8 + $0x8c] sm:$0xf] %vm1404, %v1311
    %1441 = vst.msk [vmem:[#allocation8 + $0x90] sm:$0xf] %vm1404, %v1312
    %1442 = vst.msk [vmem:[#allocation8 + $0x94] sm:$0xf] %vm1404, %v1313
    %1443 = vst.msk [vmem:[#allocation8 + $0x98] sm:$0xf] %vm1404, %v1314
    %1444 = vst.msk [vmem:[#allocation8 + $0x9c] sm:$0xf] %vm1404, %v1315
    %1445 = vst.msk [vmem:[#allocation8 + $0xa0] sm:$0xf] %vm1404, %v1316
    %1446 = vst.msk [vmem:[#allocation8 + $0xa4] sm:$0xf] %vm1404, %v1317
    %1447 = vst.msk [vmem:[#allocation8 + $0xa8] sm:$0xf] %vm1404, %v1318
    %1448 = vst.msk [vmem:[#allocation8 + $0xac] sm:$0xf] %vm1404, %v1319
    %1449 = vst.msk [vmem:[#allocation8 + $0xb0] sm:$0xf] %vm1404, %v1320
    %1450 = vst.msk [vmem:[#allocation8 + $0xb4] sm:$0xf] %vm1404, %v1321
    %1451 = vst.msk [vmem:[#allocation8 + $0xb8] sm:$0xf] %vm1404, %v1322
    %1452 = vst.msk [vmem:[#allocation8 + $0xbc] sm:$0xf] %vm1404, %v1323
    %1453 = vst.msk [vmem:[#allocation8 + $0xc0] sm:$0xf] %vm1404, %v1324
    %1454 = vst.msk [vmem:[#allocation8 + $0xc4] sm:$0xf] %vm1404, %v1325
    %1455 = vst.msk [vmem:[#allocation8 + $0xc8] sm:$0xf] %vm1404, %v1326
    %1456 = vst.msk [vmem:[#allocation8 + $0xcc] sm:$0xf] %vm1404, %v1327
    %1457 = vst.msk [vmem:[#allocation8 + $0xd0] sm:$0xf] %vm1404, %v1328
    %1458 = vst.msk [vmem:[#allocation8 + $0xd4] sm:$0xf] %vm1404, %v1329
    %1459 = vst.msk [vmem:[#allocation8 + $0xd8] sm:$0xf] %vm1404, %v1330
    %1460 = vst.msk [vmem:[#allocation8 + $0xdc] sm:$0xf] %vm1404, %v1331
    %1461 = vst.msk [vmem:[#allocation8 + $0xe0] sm:$0xf] %vm1404, %v1332
    %1462 = vst.msk [vmem:[#allocation8 + $0xe4] sm:$0xf] %vm1404, %v1333
    %1463 = vst.msk [vmem:[#allocation8 + $0xe8] sm:$0xf] %vm1404, %v1334
    %1464 = vst.msk [vmem:[#allocation8 + $0xec] sm:$0xf] %vm1404, %v1335
    %1465 = vst.msk [vmem:[#allocation8 + $0xf0] sm:$0xf] %vm1404, %v1336
    %1466 = vst.msk [vmem:[#allocation8 + $0xf4] sm:$0xf] %vm1404, %v1337
    %1467 = vst.msk [vmem:[#allocation8 + $0xf8] sm:$0xf] %vm1404, %v1338
    %1468 = vst.msk [vmem:[#allocation8 + $0xfc] sm:$0xf] %vm1404, %v1339
    // Predicated region
    $region26: #{view_gnn_forward.7} parent=1 // pred_check
      _
    $region27: #{view_gnn_forward.7} parent=1 // pred_check_branch
      %1470 = sbr.rel (0) target = $region29
    $region28: #{view_gnn_forward.7} parent=1 // pred_region
      %s1472 = ssub.s32 4096, 4096
      %1473 = vsyncadd [#allocation4], %s1472
      %s1474 = sshll.u32 [#allocation8], 4
      %s1475 = int_to_ptr.vmem [resolvable:$true] %s1474
      %1480 = dma.vmem_to_hbm [thread:$0]  %s1475, 4096, %s3, [#allocation4], 64, 64, 4
    $region29: #{view_gnn_forward.7} parent=1 // pred_fallthru
      _
    // Predicated region
    $region30: #{view_gnn_forward.7} parent=1 // pred_check
      _
    $region31: #{view_gnn_forward.7} parent=1 // pred_check_branch
      %1482 = sbr.rel (0) target = $region33
    $region32: #{view_gnn_forward.7} parent=1 // pred_region
      %1483 = dma.done [#allocation4], 4096
    $region33: #{view_gnn_forward.7} parent=1 // pred_fallthru
      _
    %1484 = vsyncpa [#allocation3], 1
    %1485 = vsyncpa [#allocation6], 1
    %1486 = vsyncpa [#allocation4], 1

// kernel: view_gnn_forward.8
$region0: #{view_gnn_forward.8}
  #allocation0 [shape = 'u32[]', space=smem, size = 0x4, offset = 0x4, fixed_abs, tag = 'smem constant byte address 0x4 - core index']
  #allocation1 [shape = 'u32[144,128]{1,0:T(1,128)}', space=vmem, size = 0x12000, scoped, tag = 'internal scratch']
  #allocation2 [shape = 'f32[256,32]{1,0:T(8,128)}', space=vmem, size = 0x20000, scoped, tag = 'scratch operand']
  #allocation3 [shape = 'f32[1,1]{1,0:T(1,128)S(1)}', space=vmem, size = 0x200, scoped, tag = 'scoped memory for view_gnn_forward.8']
  %s0 = inlined_call_operand.hbm [shape: bf16[512,512], index: 0, kind: input, shape index: {}]
  %s1 = inlined_call_operand.hbm [shape: bf16[512,32], index: 1, kind: input, shape index: {}]
  %s2 = inlined_call_operand.hbm [shape: f32[512,1], index: 2, kind: input, shape index: {}]
  %s3 = inlined_call_operand.hbm [shape: f32[1,32], index: 3, kind: input, shape index: {}]
  %s4 = inlined_call_operand.hbm [shape: f32[32,8], index: 4, kind: input, shape index: {}]
  %s5 = inlined_call_operand.hbm [shape: f32[32,1], index: 5, kind: input, shape index: {}]
  %s6 = inlined_call_operand.<no memory space> [shape: f32[1,1], index: 6, kind: input, shape index: {}]
  %s7 = inlined_call_operand.hbm [shape: bf16[512,32], index: 7, kind: output, shape index: {0}]
  %s8 = inlined_call_operand.hbm [shape: bf16[512,8], index: 8, kind: output, shape index: {1}]
  %s9 = inlined_call_operand.hbm [shape: f32[512,1], index: 9, kind: output, shape index: {2}]
  %10 = xla_tuple %s7, %s8, %s9
  %s11 = sld [smem:[#allocation0]]
  $region109: #{view_gnn_forward.8} parent=0
    _
  %s13 = ssub.s32 1, %s11
  %s14 = scalar_select 0, %s13, %s11
  %v15 = vstv %s6
  %16 = vst [vmem:[#allocation3] sm:$0x1] %v15
  $region1: #{view_gnn_forward.8} parent=0
    #allocation4 [shape = 'u8[524288]{0}', space=vmem, size = 0x80000, scoped, tag = 'input window, operand 0']
    #allocation5 [shape = 's32[2]{0}', space=sflag, size = 0x8, scoped, tag = 'scoped memory for view_gnn_forward.8']
    #allocation6 [shape = 's32[2]{0}', space=sflag, size = 0x8, scoped, tag = 'scoped memory for view_gnn_forward.8']
    #allocation7 [shape = 'u8[131072]{0}', space=vmem, size = 0x20000, scoped, tag = 'input window, operand 1, single buffered']
    #allocation8 [shape = 's32[1]{0}', space=sflag, size = 0x4, scoped, tag = 'scoped memory for view_gnn_forward.8']
    #allocation9 [shape = 'u8[262144]{0}', space=vmem, size = 0x40000, scoped, tag = 'input window, operand 2']
    #allocation10 [shape = 'u8[512]{0}', space=vmem, size = 0x400, scoped, tag = 'input window, operand 3, single buffered']
    #allocation11 [shape = 'u8[16384]{0}', space=vmem, size = 0x4000, scoped, tag = 'input window, operand 4, single buffered']
    #allocation12 [shape = 's32[1]{0}', space=sflag, size = 0x4, scoped, tag = 'scoped memory for view_gnn_forward.8']
    #allocation13 [shape = 'u8[16384]{0}', space=vmem, size = 0x4000, scoped, tag = 'input window, operand 5, single buffered']
    #allocation14 [shape = 'u8[131072]{0}', space=vmem, size = 0x20000, scoped, tag = 'output window, operand 0']
    #allocation15 [shape = 'u8[131072]{0}', space=vmem, size = 0x20000, scoped, tag = 'output window, operand 1']
    #allocation16 [shape = 's32[2]{0}', space=sflag, size = 0x8, scoped, tag = 'scoped memory for view_gnn_forward.8']
    #allocation17 [shape = 'u8[262144]{0}', space=vmem, size = 0x40000, scoped, tag = 'output window, operand 2']
    %17 = vsyncpa [#allocation5], 0
    %s18 = scalar_lea.sflag [#allocation5], 1
    %19 = vsyncpa %s18, 0
    %20 = vsyncpa [#allocation8], 0
    %21 = vsyncpa [#allocation12], 0
    %22 = vsyncpa [#allocation6], 0
    %s23 = scalar_lea.sflag [#allocation6], 1
    %24 = vsyncpa %s23, 0
    %25 = vsyncpa [#allocation16], 0
    %s26 = scalar_lea.sflag [#allocation16], 1
    %27 = vsyncpa %s26, 0
    loop: start=0, step=1, limit=4
    $region2: #{view_gnn_forward.8} parent=1 // loop_pre_header
      _
    $region3: #{view_gnn_forward.8} parent=1 // loop_header
      %s29 = sphi 0, %s33
      %p30 = scmp.ge.s32.totalorder %s29, 4
      %s36 = sphi 0, %s48
      %s37 = sphi 0, %s44
      %s38 = sphi 0, %s36
      %s39 = sphi 0, %s37
      %s40 = sphi 0, %s38
      %s41 = sphi 0, %s39
      %s53 = sphi 0, %s55
      %s56 = sphi 0, %s53
      %s57 = sphi 0, %s56
      %s73 = sphi 0, %s57
      %s79 = sphi 0, %s81
      %s82 = sphi 0, %s79
      %s83 = sphi 0, %s82
      %s99 = sphi 0, %s83
      %s105 = sphi 0, %s107
      %s108 = sphi 0, %s105
      %s109 = sphi 0, %s108
      %s125 = sphi 0, %s109
      %s129 = sphi 0, %s129
      %s131 = sphi 0, %s129
      %s132 = sphi 0, %s131
      %s146 = sphi 0, %s132
      %s150 = sphi 0, %s150
      %s152 = sphi 0, %s150
      %s153 = sphi 0, %s152
      %s167 = sphi 0, %s153
      %s171 = sphi 0, %s171
      %s173 = sphi 0, %s171
      %s174 = sphi 0, %s173
      %s188 = sphi 0, %s174
      %s192 = sphi 0, %s192
      %s194 = sphi 0, %s192
      %s195 = sphi 0, %s194
      %s209 = sphi 0, %s195
      %s215 = sphi 0, %s217
      %s218 = sphi 0, %s215
      %s219 = sphi 0, %s218
      %s235 = sphi 0, %s219
      %s241 = sphi 0, %s243
      %s244 = sphi 0, %s241
      %s245 = sphi 0, %s244
      %s261 = sphi 0, %s245
      %s267 = sphi 0, %s269
      %s270 = sphi 0, %s267
      %s271 = sphi 0, %s270
      %s287 = sphi 0, %s271
    $region4: #{view_gnn_forward.8} parent=1 // loop_header_branch
      %32 = sbr.rel (%p30) target = $region8
    $region5: #{view_gnn_forward.8} parent=1 // loop_body
      %s34 = ssub.s32 %s29, 1
      %s35 = ssub.s32 %s29, 2
      %s42 = sadd.s32 1, %s37
      %p43 = scmp.ge.s32.totalorder %s42, 1
      %s44 = scalar_select %p43, 0, %s42
      %s45 = sadd.s32 1, %s36
      %s46 = scalar_select %p43, %s45, %s36
      %p47 = scmp.ge.s32.totalorder %s46, 2
      %s48 = scalar_select %p47, 0, %s46
      %s49 = ssub.s32 %s36, %s48
      %s50 = ssub.s32 %s37, %s44
      %s51 = sor.u32 %s49, %s50
      %p52 = scmp.eq.s32.totalorder %s51, 0
      %s54 = sadd.s32 %s53, 1
      %s55 = scalar_select %p52, %s53, %s54
      %p58 = pneg %p52
      %p59 = scmp.eq.s32.totalorder %s29, 1
      %p60 = por %p58, %p59
      %p61 = scmp.ne.s32.totalorder %s53, %s56
      %p62 = scmp.eq.s32.totalorder %s29, 0
      %p63 = por %p61, %p62
      %p64 = scmp.ne.s32.totalorder %s53, %s56
      %p65 = scmp.eq.s32.totalorder %s34, 1
      %p66 = por %p64, %p65
      %p67 = scmp.ne.s32.totalorder %s56, %s57
      %p68 = scmp.eq.s32.totalorder %s34, 0
      %p69 = por %p67, %p68
      %p70 = scmp.ne.s32.totalorder %s56, %s57
      %p71 = scmp.eq.s32.totalorder %s35, 1
      %p72 = por %p70, %p71
      %p74 = scmp.ne.s32.totalorder %s57, %s73
      %p75 = scmp.eq.s32.totalorder %s35, 0
      %p76 = por %p74, %p75
      %s77 = ssub.s32 %s37, %s44
      %p78 = scmp.eq.s32.totalorder %s77, 0
      %s80 = sadd.s32 %s79, 1
      %s81 = scalar_select %p78, %s79, %s80
      %p84 = pneg %p78
      %p85 = scmp.eq.s32.totalorder %s29, 1
      %p86 = por %p84, %p85
      %p87 = scmp.ne.s32.totalorder %s79, %s82
      %p88 = scmp.eq.s32.totalorder %s29, 0
      %p89 = por %p87, %p88
      %p90 = scmp.ne.s32.totalorder %s79, %s82
      %p91 = scmp.eq.s32.totalorder %s34, 1
      %p92 = por %p90, %p91
      %p93 = scmp.ne.s32.totalorder %s82, %s83
      %p94 = scmp.eq.s32.totalorder %s34, 0
      %p95 = por %p93, %p94
      %p96 = scmp.ne.s32.totalorder %s82, %s83
      %p97 = scmp.eq.s32.totalorder %s35, 1
      %p98 = por %p96, %p97
      %p100 = scmp.ne.s32.totalorder %s83, %s99
      %p101 = scmp.eq.s32.totalorder %s35, 0
      %p102 = por %p100, %p101
      %s103 = ssub.s32 %s36, %s48
      %p104 = scmp.eq.s32.totalorder %s103, 0
      %s106 = sadd.s32 %s105, 1
      %s107 = scalar_select %p104, %s105, %s106
      %p110 = pneg %p104
      %p111 = scmp.eq.s32.totalorder %s29, 1
      %p112 = por %p110, %p111
      %p113 = scmp.ne.s32.totalorder %s105, %s108
      %p114 = scmp.eq.s32.totalorder %s29, 0
      %p115 = por %p113, %p114
      %p116 = scmp.ne.s32.totalorder %s105, %s108
      %p117 = scmp.eq.s32.totalorder %s34, 1
      %p118 = por %p116, %p117
      %p119 = scmp.ne.s32.totalorder %s108, %s109
      %p120 = scmp.eq.s32.totalorder %s34, 0
      %p121 = por %p119, %p120
      %p122 = scmp.ne.s32.totalorder %s108, %s109
      %p123 = scmp.eq.s32.totalorder %s35, 1
      %p124 = por %p122, %p123
      %p126 = scmp.ne.s32.totalorder %s109, %s125
      %p127 = scmp.eq.s32.totalorder %s35, 0
      %p128 = por %p126, %p127
      %s130 = sadd.s32 %s129, 1
      %p133 = scmp.eq.s32.totalorder %s29, 1
      %p134 = scmp.ne.s32.totalorder %s129, %s131
      %p135 = scmp.eq.s32.totalorder %s29, 0
      %p136 = por %p134, %p135
      %p137 = scmp.ne.s32.totalorder %s129, %s131
      %p138 = scmp.eq.s32.totalorder %s34, 1
      %p139 = por %p137, %p138
      %p140 = scmp.ne.s32.totalorder %s131, %s132
      %p141 = scmp.eq.s32.totalorder %s34, 0
      %p142 = por %p140, %p141
      %p143 = scmp.ne.s32.totalorder %s131, %s132
      %p144 = scmp.eq.s32.totalorder %s35, 1
      %p145 = por %p143, %p144
      %p147 = scmp.ne.s32.totalorder %s132, %s146
      %p148 = scmp.eq.s32.totalorder %s35, 0
      %p149 = por %p147, %p148
      %s151 = sadd.s32 %s150, 1
      %p154 = scmp.eq.s32.totalorder %s29, 1
      %p155 = scmp.ne.s32.totalorder %s150, %s152
      %p156 = scmp.eq.s32.totalorder %s29, 0
      %p157 = por %p155, %p156
      %p158 = scmp.ne.s32.totalorder %s150, %s152
      %p159 = scmp.eq.s32.totalorder %s34, 1
      %p160 = por %p158, %p159
      %p161 = scmp.ne.s32.totalorder %s152, %s153
      %p162 = scmp.eq.s32.totalorder %s34, 0
      %p163 = por %p161, %p162
      %p164 = scmp.ne.s32.totalorder %s152, %s153
      %p165 = scmp.eq.s32.totalorder %s35, 1
      %p166 = por %p164, %p165
      %p168 = scmp.ne.s32.totalorder %s153, %s167
      %p169 = scmp.eq.s32.totalorder %s35, 0
      %p170 = por %p168, %p169
      %s172 = sadd.s32 %s171, 1
      %p175 = scmp.eq.s32.totalorder %s29, 1
      %p176 = scmp.ne.s32.totalorder %s171, %s173
      %p177 = scmp.eq.s32.totalorder %s29, 0
      %p178 = por %p176, %p177
      %p179 = scmp.ne.s32.totalorder %s171, %s173
      %p180 = scmp.eq.s32.totalorder %s34, 1
      %p181 = por %p179, %p180
      %p182 = scmp.ne.s32.totalorder %s173, %s174
      %p183 = scmp.eq.s32.totalorder %s34, 0
      %p184 = por %p182, %p183
      %p185 = scmp.ne.s32.totalorder %s173, %s174
      %p186 = scmp.eq.s32.totalorder %s35, 1
      %p187 = por %p185, %p186
      %p189 = scmp.ne.s32.totalorder %s174, %s188
      %p190 = scmp.eq.s32.totalorder %s35, 0
      %p191 = por %p189, %p190
      %s193 = sadd.s32 %s192, 1
      %p196 = scmp.eq.s32.totalorder %s29, 1
      %p197 = scmp.ne.s32.totalorder %s192, %s194
      %p198 = scmp.eq.s32.totalorder %s29, 0
      %p199 = por %p197, %p198
      %p200 = scmp.ne.s32.totalorder %s192, %s194
      %p201 = scmp.eq.s32.totalorder %s34, 1
      %p202 = por %p200, %p201
      %p203 = scmp.ne.s32.totalorder %s194, %s195
      %p204 = scmp.eq.s32.totalorder %s34, 0
      %p205 = por %p203, %p204
      %p206 = scmp.ne.s32.totalorder %s194, %s195
      %p207 = scmp.eq.s32.totalorder %s35, 1
      %p208 = por %p206, %p207
      %p210 = scmp.ne.s32.totalorder %s195, %s209
      %p211 = scmp.eq.s32.totalorder %s35, 0
      %p212 = por %p210, %p211
      %s213 = ssub.s32 %s36, %s48
      %p214 = scmp.eq.s32.totalorder %s213, 0
      %s216 = sadd.s32 %s215, 1
      %s217 = scalar_select %p214, %s215, %s216
      %p220 = pneg %p214
      %p221 = scmp.eq.s32.totalorder %s29, 1
      %p222 = por %p220, %p221
      %p223 = scmp.ne.s32.totalorder %s215, %s218
      %p224 = scmp.eq.s32.totalorder %s29, 0
      %p225 = por %p223, %p224
      %p226 = scmp.ne.s32.totalorder %s215, %s218
      %p227 = scmp.eq.s32.totalorder %s34, 1
      %p228 = por %p226, %p227
      %p229 = scmp.ne.s32.totalorder %s218, %s219
      %p230 = scmp.eq.s32.totalorder %s34, 0
      %p231 = por %p229, %p230
      %p232 = scmp.ne.s32.totalorder %s218, %s219
      %p233 = scmp.eq.s32.totalorder %s35, 1
      %p234 = por %p232, %p233
      %p236 = scmp.ne.s32.totalorder %s219, %s235
      %p237 = scmp.eq.s32.totalorder %s35, 0
      %p238 = por %p236, %p237
      %s239 = ssub.s32 %s36, %s48
      %p240 = scmp.eq.s32.totalorder %s239, 0
      %s242 = sadd.s32 %s241, 1
      %s243 = scalar_select %p240, %s241, %s242
      %p246 = pneg %p240
      %p247 = scmp.eq.s32.totalorder %s29, 1
      %p248 = por %p246, %p247
      %p249 = scmp.ne.s32.totalorder %s241, %s244
      %p250 = scmp.eq.s32.totalorder %s29, 0
      %p251 = por %p249, %p250
      %p252 = scmp.ne.s32.totalorder %s241, %s244
      %p253 = scmp.eq.s32.totalorder %s34, 1
      %p254 = por %p252, %p253
      %p255 = scmp.ne.s32.totalorder %s244, %s245
      %p256 = scmp.eq.s32.totalorder %s34, 0
      %p257 = por %p255, %p256
      %p258 = scmp.ne.s32.totalorder %s244, %s245
      %p259 = scmp.eq.s32.totalorder %s35, 1
      %p260 = por %p258, %p259
      %p262 = scmp.ne.s32.totalorder %s245, %s261
      %p263 = scmp.eq.s32.totalorder %s35, 0
      %p264 = por %p262, %p263
      %s265 = ssub.s32 %s36, %s48
      %p266 = scmp.eq.s32.totalorder %s265, 0
      %s268 = sadd.s32 %s267, 1
      %s269 = scalar_select %p266, %s267, %s268
      %p272 = pneg %p266
      %p273 = scmp.eq.s32.totalorder %s29, 1
      %p274 = por %p272, %p273
      %p275 = scmp.ne.s32.totalorder %s267, %s270
      %p276 = scmp.eq.s32.totalorder %s29, 0
      %p277 = por %p275, %p276
      %p278 = scmp.ne.s32.totalorder %s267, %s270
      %p279 = scmp.eq.s32.totalorder %s34, 1
      %p280 = por %p278, %p279
      %p281 = scmp.ne.s32.totalorder %s270, %s271
      %p282 = scmp.eq.s32.totalorder %s34, 0
      %p283 = por %p281, %p282
      %p284 = scmp.ne.s32.totalorder %s270, %s271
      %p285 = scmp.eq.s32.totalorder %s35, 1
      %p286 = por %p284, %p285
      %p288 = scmp.ne.s32.totalorder %s271, %s287
      %p289 = scmp.eq.s32.totalorder %s35, 0
      %p290 = por %p288, %p289
      %p291 = scmp.le.s32.totalorder 1, %s29
      %p292 = scmp.lt.s32.totalorder %s29, 3
      %p293 = pnand %p291, %p292
      %p294 = pneg %p293
      // Predicated region
      $region9: #{view_gnn_forward.8} parent=5 // pred_check
        _
      $region10: #{view_gnn_forward.8} parent=5 // pred_check_branch
        %296 = sbr.rel (%p293) target = $region12
      $region11: #{view_gnn_forward.8} parent=5 // pred_region
        %s297 = ssub.s32 %s29, 1
        // Predicated region
        $region13: #{view_gnn_forward.8} parent=11 // pred_check
          %p298 = pneg %p95
        $region14: #{view_gnn_forward.8} parent=11 // pred_check_branch
          %300 = sbr.rel (%p298) target = $region16
        $region15: #{view_gnn_forward.8} parent=11 // pred_region
          %s301 = smul.u32 64, %s39
          %s303 = ssub.s32 4096, 4096
          %304 = vsyncadd [#allocation8], %s303
          %s305 = smul.addr %s301, 64
          %s306 = scalar_lea.hbm %s1, %s305
          %s307 = sshll.u32 [#allocation7], 4
          %s308 = int_to_ptr.vmem [resolvable:$true] %s307
          %313 = dma.hbm_to_vmem [thread:$0]  %s306, 4096, %s308, [#allocation8], 64, 64, 4
        $region16: #{view_gnn_forward.8} parent=11 // pred_fallthru
          _
        // Predicated region
        $region17: #{view_gnn_forward.8} parent=11 // pred_check
          %p314 = pneg %p142
        $region18: #{view_gnn_forward.8} parent=11 // pred_check_branch
          %316 = sbr.rel (%p314) target = $region20
        $region19: #{view_gnn_forward.8} parent=11 // pred_region
          %s318 = ssub.s32 16, 16
          %319 = vsyncadd [#allocation8], %s318
          %s321 = sshll.u32 [#allocation10], 4
          %s322 = int_to_ptr.vmem [resolvable:$true] %s321
          %324 = dma.hbm_to_vmem [thread:$0]  %s3, 16, %s322, [#allocation8]
        $region20: #{view_gnn_forward.8} parent=11 // pred_fallthru
          _
        // Predicated region
        $region21: #{view_gnn_forward.8} parent=11 // pred_check
          %p325 = pneg %p163
        $region22: #{view_gnn_forward.8} parent=11 // pred_check_branch
          %327 = sbr.rel (%p325) target = $region24
        $region23: #{view_gnn_forward.8} parent=11 // pred_region
          %s329 = ssub.s32 512, 512
          %330 = vsyncadd [#allocation12], %s329
          %s331 = sshll.u32 [#allocation11], 4
          %s332 = int_to_ptr.vmem [resolvable:$true] %s331
          %337 = dma.hbm_to_vmem [thread:$0]  %s4, 512, %s332, [#allocation12], 128, 128, 8
        $region24: #{view_gnn_forward.8} parent=11 // pred_fallthru
          _
        // Predicated region
        $region25: #{view_gnn_forward.8} parent=11 // pred_check
          %p338 = pneg %p184
        $region26: #{view_gnn_forward.8} parent=11 // pred_check_branch
          %340 = sbr.rel (%p338) target = $region28
        $region27: #{view_gnn_forward.8} parent=11 // pred_region
          %s342 = ssub.s32 512, 512
          %343 = vsyncadd [#allocation12], %s342
          %s344 = sshll.u32 [#allocation13], 4
          %s345 = int_to_ptr.vmem [resolvable:$true] %s344
          %350 = dma.hbm_to_vmem [thread:$0]  %s5, 512, %s345, [#allocation12], 128, 128, 8
        $region28: #{view_gnn_forward.8} parent=11 // pred_fallthru
          _
        // Predicated region
        $region29: #{view_gnn_forward.8} parent=11 // pred_check
          %p351 = pneg %p205
        $region30: #{view_gnn_forward.8} parent=11 // pred_check_branch
          %353 = sbr.rel (%p351) target = $region32
        $region31: #{view_gnn_forward.8} parent=11 // pred_region
          _
        $region32: #{view_gnn_forward.8} parent=11 // pred_fallthru
          _
      $region12: #{view_gnn_forward.8} parent=5 // pred_fallthru
        _
      %p354 = scmp.lt.s32.totalorder %s29, 2
      // Predicated region
      $region33: #{view_gnn_forward.8} parent=5 // pred_check
        %p355 = pneg %p354
      $region34: #{view_gnn_forward.8} parent=5 // pred_check_branch
        %357 = sbr.rel (%p355) target = $region36
      $region35: #{view_gnn_forward.8} parent=5 // pred_region
        // Predicated region
        $region37: #{view_gnn_forward.8} parent=35 // pred_check
          %p358 = pneg %p63
        $region38: #{view_gnn_forward.8} parent=35 // pred_check_branch
          %360 = sbr.rel (%p358) target = $region40
        $region39: #{view_gnn_forward.8} parent=35 // pred_region
          %s361 = sand.u32 %s29, 1
          %s362 = scalar_lea.sflag [#allocation5], %s361
          %s363 = sand.u32 %s53, 1
          %s364 = smul.addr %s363, 512
          %s365 = scalar_lea.vmem [#allocation4], %s364
          %s366 = smul.u32 32, %s36
          %s367 = smul.u32 4, %s37
          %s369 = ssub.s32 8192, 8192
          %370 = vsyncadd %s362, %s369
          %s371 = smul.addr %s366, 4
          %s372 = sadd.s32 %s367, %s371
          %s373 = smul.addr %s372, 64
          %s374 = scalar_lea.hbm %s0, %s373
          %s375 = sshll.u32 %s365, 4
          %s376 = int_to_ptr.vmem [resolvable:$true] %s375
          %381 = dma.hbm_to_vmem [thread:$0]  %s374, 8192, %s376, %s362, 256, 256, 16
        $region40: #{view_gnn_forward.8} parent=35 // pred_fallthru
          _
        // Predicated region
        $region41: #{view_gnn_forward.8} parent=35 // pred_check
          %p382 = pneg %p115
        $region42: #{view_gnn_forward.8} parent=35 // pred_check_branch
          %384 = sbr.rel (%p382) target = $region44
        $region43: #{view_gnn_forward.8} parent=35 // pred_region
          %s385 = sand.u32 %s29, 1
          %s386 = scalar_lea.sflag [#allocation5], %s385
          %s387 = sand.u32 %s105, 1
          %s388 = smul.addr %s387, 256
          %s389 = scalar_lea.vmem [#allocation9], %s388
          %s390 = smul.u32 32, %s36
          %s392 = ssub.s32 4096, 4096
          %393 = vsyncadd %s386, %s392
          %s394 = smul.addr %s390, 128
          %s395 = scalar_lea.hbm %s2, %s394
          %s396 = sshll.u32 %s389, 4
          %s397 = int_to_ptr.vmem [resolvable:$true] %s396
          %402 = dma.hbm_to_vmem [thread:$0]  %s395, 4096, %s397, %s386, 128, 128, 8
        $region44: #{view_gnn_forward.8} parent=35 // pred_fallthru
          _
      $region36: #{view_gnn_forward.8} parent=5 // pred_fallthru
        _
      %p403 = scmp.le.s32.totalorder 1, %s29
      %p404 = scmp.lt.s32.totalorder %s29, 3
      %p405 = pnand %p403, %p404
      %p406 = pneg %p405
      // Predicated region
      $region45: #{view_gnn_forward.8} parent=5 // pred_check
        _
      $region46: #{view_gnn_forward.8} parent=5 // pred_check_branch
        %408 = sbr.rel (%p405) target = $region48
      $region47: #{view_gnn_forward.8} parent=5 // pred_region
        %s409 = ssub.s32 %s29, 1
        %s410 = sand.u32 %s34, 1
        %s411 = scalar_lea.sflag [#allocation5], %s410
        %s412 = sand.u32 %s56, 1
        %s413 = smul.addr %s412, 512
        %s414 = scalar_lea.vmem [#allocation4], %s413
        // Predicated region
        $region49: #{view_gnn_forward.8} parent=47 // pred_check
          %p415 = pneg %p69
        $region50: #{view_gnn_forward.8} parent=47 // pred_check_branch
          %417 = sbr.rel (%p415) target = $region52
        $region51: #{view_gnn_forward.8} parent=47 // pred_region
          %418 = dma.done %s411, 8192
        $region52: #{view_gnn_forward.8} parent=47 // pred_fallthru
          _
        // Predicated region
        $region53: #{view_gnn_forward.8} parent=47 // pred_check
          %p419 = pneg %p95
        $region54: #{view_gnn_forward.8} parent=47 // pred_check_branch
          %421 = sbr.rel (%p419) target = $region56
        $region55: #{view_gnn_forward.8} parent=47 // pred_region
          %422 = dma.done [#allocation8], 4096
        $region56: #{view_gnn_forward.8} parent=47 // pred_fallthru
          _
        %s423 = sand.u32 %s34, 1
        %s424 = scalar_lea.sflag [#allocation5], %s423
        %s425 = sand.u32 %s108, 1
        %s426 = smul.addr %s425, 256
        %s427 = scalar_lea.vmem [#allocation9], %s426
        // Predicated region
        $region57: #{view_gnn_forward.8} parent=47 // pred_check
          %p428 = pneg %p121
        $region58: #{view_gnn_forward.8} parent=47 // pred_check_branch
          %430 = sbr.rel (%p428) target = $region60
        $region59: #{view_gnn_forward.8} parent=47 // pred_region
          %431 = dma.done %s424, 4096
        $region60: #{view_gnn_forward.8} parent=47 // pred_fallthru
          _
        // Predicated region
        $region61: #{view_gnn_forward.8} parent=47 // pred_check
          %p432 = pneg %p142
        $region62: #{view_gnn_forward.8} parent=47 // pred_check_branch
          %434 = sbr.rel (%p432) target = $region64
        $region63: #{view_gnn_forward.8} parent=47 // pred_region
          %435 = dma.done [#allocation8], 16
        $region64: #{view_gnn_forward.8} parent=47 // pred_fallthru
          _
        // Predicated region
        $region65: #{view_gnn_forward.8} parent=47 // pred_check
          %p436 = pneg %p163
        $region66: #{view_gnn_forward.8} parent=47 // pred_check_branch
          %438 = sbr.rel (%p436) target = $region68
        $region67: #{view_gnn_forward.8} parent=47 // pred_region
          %439 = dma.done [#allocation12], 512
        $region68: #{view_gnn_forward.8} parent=47 // pred_fallthru
          _
        // Predicated region
        $region69: #{view_gnn_forward.8} parent=47 // pred_check
          %p440 = pneg %p184
        $region70: #{view_gnn_forward.8} parent=47 // pred_check_branch
          %442 = sbr.rel (%p440) target = $region72
        $region71: #{view_gnn_forward.8} parent=47 // pred_region
          %443 = dma.done [#allocation12], 512
        $region72: #{view_gnn_forward.8} parent=47 // pred_fallthru
          _
        %s444 = sand.u32 %s34, 1
        %s445 = scalar_lea.sflag [#allocation5], %s444
        %s446 = sand.u32 %s56, 1
        %s447 = smul.addr %s446, 512
        %s448 = scalar_lea.vmem [#allocation4], %s447
        %p449 = pneg %p69
        %p450 = pneg %p66
        %p451 = pneg %p95
        %p452 = pneg %p92
        %s453 = sand.u32 %s34, 1
        %s454 = scalar_lea.sflag [#allocation5], %s453
        %s455 = sand.u32 %s108, 1
        %s456 = smul.addr %s455, 256
        %s457 = scalar_lea.vmem [#allocation9], %s456
        %p458 = pneg %p121
        %p459 = pneg %p118
        %p460 = pneg %p142
        %p461 = pneg %p139
        %p462 = pneg %p163
        %p463 = pneg %p160
        %p464 = pneg %p184
        %p465 = pneg %p181
        %p466 = pneg %p205
        %p467 = pneg %p202
        %p468 = pneg %p231
        %p469 = pneg %p228
        %s470 = sand.u32 %s218, 1
        %s471 = scalar_lea.sflag [#allocation6], %s470
        %s472 = sand.u32 %s218, 1
        %s473 = smul.addr %s472, 128
        %s474 = scalar_lea.vmem [#allocation14], %s473
        %p475 = pneg %p257
        %p476 = pneg %p254
        %s477 = sand.u32 %s34, 1
        %s478 = scalar_lea.sflag [#allocation16], %s477
        %s479 = sand.u32 %s244, 1
        %s480 = smul.addr %s479, 128
        %s481 = scalar_lea.vmem [#allocation15], %s480
        %p482 = pneg %p283
        %p483 = pneg %p280
        %s484 = sand.u32 %s34, 1
        %s485 = scalar_lea.sflag [#allocation16], %s484
        %s486 = sand.u32 %s270, 1
        %s487 = smul.addr %s486, 256
        %s488 = scalar_lea.vmem [#allocation17], %s487
        %s489 = smul.u32 32, %s38
        %s490 = smul.u32 4, %s39
        %s491 = smul.u32 64, %s39
        %s492 = smul.u32 32, %s38
        %s493 = smul.u32 32, %s38
        %s494 = smul.u32 32, %s38
        %s495 = smul.u32 32, %s38
        %p497 = scmp.eq.s32.totalorder %s39, 0
        // Predicated region
        $region73: #{view_gnn_forward.8} parent=47 // pred_check
          %p498 = pneg %p497
        $region74: #{view_gnn_forward.8} parent=47 // pred_check_branch
          %500 = sbr.rel (%p498) target = $region76
        $region75: #{view_gnn_forward.8} parent=47 // pred_region
          %vm501 = vcmask 261120
          %502 = vst.msk [vmem:[#allocation2] sm:$0xff] %vm501, 0.0
          %503 = vst.msk [vmem:[#allocation2 + $0x8] sm:$0xff] %vm501, 0.0
          %504 = vst.msk [vmem:[#allocation2 + $0x10] sm:$0xff] %vm501, 0.0
          %505 = vst.msk [vmem:[#allocation2 + $0x18] sm:$0xff] %vm501, 0.0
          %506 = vst.msk [vmem:[#allocation2 + $0x20] sm:$0xff] %vm501, 0.0
          %507 = vst.msk [vmem:[#allocation2 + $0x28] sm:$0xff] %vm501, 0.0
          %508 = vst.msk [vmem:[#allocation2 + $0x30] sm:$0xff] %vm501, 0.0
          %509 = vst.msk [vmem:[#allocation2 + $0x38] sm:$0xff] %vm501, 0.0
          %510 = vst.msk [vmem:[#allocation2 + $0x40] sm:$0xff] %vm501, 0.0
          %511 = vst.msk [vmem:[#allocation2 + $0x48] sm:$0xff] %vm501, 0.0
          %512 = vst.msk [vmem:[#allocation2 + $0x50] sm:$0xff] %vm501, 0.0
          %513 = vst.msk [vmem:[#allocation2 + $0x58] sm:$0xff] %vm501, 0.0
          %514 = vst.msk [vmem:[#allocation2 + $0x60] sm:$0xff] %vm501, 0.0
          %515 = vst.msk [vmem:[#allocation2 + $0x68] sm:$0xff] %vm501, 0.0
          %516 = vst.msk [vmem:[#allocation2 + $0x70] sm:$0xff] %vm501, 0.0
          %517 = vst.msk [vmem:[#allocation2 + $0x78] sm:$0xff] %vm501, 0.0
          %518 = vst.msk [vmem:[#allocation2 + $0x80] sm:$0xff] %vm501, 0.0
          %519 = vst.msk [vmem:[#allocation2 + $0x88] sm:$0xff] %vm501, 0.0
          %520 = vst.msk [vmem:[#allocation2 + $0x90] sm:$0xff] %vm501, 0.0
          %521 = vst.msk [vmem:[#allocation2 + $0x98] sm:$0xff] %vm501, 0.0
          %522 = vst.msk [vmem:[#allocation2 + $0xa0] sm:$0xff] %vm501, 0.0
          %523 = vst.msk [vmem:[#allocation2 + $0xa8] sm:$0xff] %vm501, 0.0
          %524 = vst.msk [vmem:[#allocation2 + $0xb0] sm:$0xff] %vm501, 0.0
          %525 = vst.msk [vmem:[#allocation2 + $0xb8] sm:$0xff] %vm501, 0.0
          %526 = vst.msk [vmem:[#allocation2 + $0xc0] sm:$0xff] %vm501, 0.0
          %527 = vst.msk [vmem:[#allocation2 + $0xc8] sm:$0xff] %vm501, 0.0
          %528 = vst.msk [vmem:[#allocation2 + $0xd0] sm:$0xff] %vm501, 0.0
          %529 = vst.msk [vmem:[#allocation2 + $0xd8] sm:$0xff] %vm501, 0.0
          %530 = vst.msk [vmem:[#allocation2 + $0xe0] sm:$0xff] %vm501, 0.0
          %531 = vst.msk [vmem:[#allocation2 + $0xe8] sm:$0xff] %vm501, 0.0
          %532 = vst.msk [vmem:[#allocation2 + $0xf0] sm:$0xff] %vm501, 0.0
          %533 = vst.msk [vmem:[#allocation2 + $0xf8] sm:$0xff] %vm501, 0.0
        $region76: #{view_gnn_forward.8} parent=47 // pred_fallthru
          _
        %v534 = vld [vmem:[#allocation2] sm:$0xff]
        %v535 = vld [vmem:[#allocation2 + $0x8] sm:$0xff]
        %v536 = vld [vmem:[#allocation2 + $0x10] sm:$0xff]
        %v537 = vld [vmem:[#allocation2 + $0x18] sm:$0xff]
        %v538 = vld [vmem:[#allocation2 + $0x20] sm:$0xff]
        %v539 = vld [vmem:[#allocation2 + $0x28] sm:$0xff]
        %v540 = vld [vmem:[#allocation2 + $0x30] sm:$0xff]
        %v541 = vld [vmem:[#allocation2 + $0x38] sm:$0xff]
        %v542 = vld [vmem:[#allocation2 + $0x40] sm:$0xff]
        %v543 = vld [vmem:[#allocation2 + $0x48] sm:$0xff]
        %v544 = vld [vmem:[#allocation2 + $0x50] sm:$0xff]
        %v545 = vld [vmem:[#allocation2 + $0x58] sm:$0xff]
        %v546 = vld [vmem:[#allocation2 + $0x60] sm:$0xff]
        %v547 = vld [vmem:[#allocation2 + $0x68] sm:$0xff]
        %v548 = vld [vmem:[#allocation2 + $0x70] sm:$0xff]
        %v549 = vld [vmem:[#allocation2 + $0x78] sm:$0xff]
        %v550 = vld [vmem:[#allocation2 + $0x80] sm:$0xff]
        %v551 = vld [vmem:[#allocation2 + $0x88] sm:$0xff]
        %v552 = vld [vmem:[#allocation2 + $0x90] sm:$0xff]
        %v553 = vld [vmem:[#allocation2 + $0x98] sm:$0xff]
        %v554 = vld [vmem:[#allocation2 + $0xa0] sm:$0xff]
        %v555 = vld [vmem:[#allocation2 + $0xa8] sm:$0xff]
        %v556 = vld [vmem:[#allocation2 + $0xb0] sm:$0xff]
        %v557 = vld [vmem:[#allocation2 + $0xb8] sm:$0xff]
        %v558 = vld [vmem:[#allocation2 + $0xc0] sm:$0xff]
        %v559 = vld [vmem:[#allocation2 + $0xc8] sm:$0xff]
        %v560 = vld [vmem:[#allocation2 + $0xd0] sm:$0xff]
        %v561 = vld [vmem:[#allocation2 + $0xd8] sm:$0xff]
        %v562 = vld [vmem:[#allocation2 + $0xe0] sm:$0xff]
        %v563 = vld [vmem:[#allocation2 + $0xe8] sm:$0xff]
        %v564 = vld [vmem:[#allocation2 + $0xf0] sm:$0xff]
        %v565 = vld [vmem:[#allocation2 + $0xf8] sm:$0xff]
        %v566 = vld [vmem:[%s414] sm:$0xff]
        %v567 = vld [vmem:[%s414 + $0x8] sm:$0xff]
        %v568 = vld [vmem:[%s414 + $0x10] sm:$0xff]
        %v569 = vld [vmem:[%s414 + $0x18] sm:$0xff]
        %v570 = vld [vmem:[%s414 + $0x20] sm:$0xff]
        %v571 = vld [vmem:[%s414 + $0x28] sm:$0xff]
        %v572 = vld [vmem:[%s414 + $0x30] sm:$0xff]
        %v573 = vld [vmem:[%s414 + $0x38] sm:$0xff]
        %v574 = vld [vmem:[%s414 + $0x40] sm:$0xff]
        %v575 = vld [vmem:[%s414 + $0x48] sm:$0xff]
        %v576 = vld [vmem:[%s414 + $0x50] sm:$0xff]
        %v577 = vld [vmem:[%s414 + $0x58] sm:$0xff]
        %v578 = vld [vmem:[%s414 + $0x60] sm:$0xff]
        %v579 = vld [vmem:[%s414 + $0x68] sm:$0xff]
        %v580 = vld [vmem:[%s414 + $0x70] sm:$0xff]
        %v581 = vld [vmem:[%s414 + $0x78] sm:$0xff]
        %v582 = vld [vmem:[%s414 + $0x80] sm:$0xff]
        %v583 = vld [vmem:[%s414 + $0x88] sm:$0xff]
        %v584 = vld [vmem:[%s414 + $0x90] sm:$0xff]
        %v585 = vld [vmem:[%s414 + $0x98] sm:$0xff]
        %v586 = vld [vmem:[%s414 + $0xa0] sm:$0xff]
        %v587 = vld [vmem:[%s414 + $0xa8] sm:$0xff]
        %v588 = vld [vmem:[%s414 + $0xb0] sm:$0xff]
        %v589 = vld [vmem:[%s414 + $0xb8] sm:$0xff]
        %v590 = vld [vmem:[%s414 + $0xc0] sm:$0xff]
        %v591 = vld [vmem:[%s414 + $0xc8] sm:$0xff]
        %v592 = vld [vmem:[%s414 + $0xd0] sm:$0xff]
        %v593 = vld [vmem:[%s414 + $0xd8] sm:$0xff]
        %v594 = vld [vmem:[%s414 + $0xe0] sm:$0xff]
        %v595 = vld [vmem:[%s414 + $0xe8] sm:$0xff]
        %v596 = vld [vmem:[%s414 + $0xf0] sm:$0xff]
        %v597 = vld [vmem:[%s414 + $0xf8] sm:$0xff]
        %v598 = vld [vmem:[%s414 + $0x100] sm:$0xff]
        %v599 = vld [vmem:[%s414 + $0x108] sm:$0xff]
        %v600 = vld [vmem:[%s414 + $0x110] sm:$0xff]
        %v601 = vld [vmem:[%s414 + $0x118] sm:$0xff]
        %v602 = vld [vmem:[%s414 + $0x120] sm:$0xff]
        %v603 = vld [vmem:[%s414 + $0x128] sm:$0xff]
        %v604 = vld [vmem:[%s414 + $0x130] sm:$0xff]
        %v605 = vld [vmem:[%s414 + $0x138] sm:$0xff]
        %v606 = vld [vmem:[%s414 + $0x140] sm:$0xff]
        %v607 = vld [vmem:[%s414 + $0x148] sm:$0xff]
        %v608 = vld [vmem:[%s414 + $0x150] sm:$0xff]
        %v609 = vld [vmem:[%s414 + $0x158] sm:$0xff]
        %v610 = vld [vmem:[%s414 + $0x160] sm:$0xff]
        %v611 = vld [vmem:[%s414 + $0x168] sm:$0xff]
        %v612 = vld [vmem:[%s414 + $0x170] sm:$0xff]
        %v613 = vld [vmem:[%s414 + $0x178] sm:$0xff]
        %v614 = vld [vmem:[%s414 + $0x180] sm:$0xff]
        %v615 = vld [vmem:[%s414 + $0x188] sm:$0xff]
        %v616 = vld [vmem:[%s414 + $0x190] sm:$0xff]
        %v617 = vld [vmem:[%s414 + $0x198] sm:$0xff]
        %v618 = vld [vmem:[%s414 + $0x1a0] sm:$0xff]
        %v619 = vld [vmem:[%s414 + $0x1a8] sm:$0xff]
        %v620 = vld [vmem:[%s414 + $0x1b0] sm:$0xff]
        %v621 = vld [vmem:[%s414 + $0x1b8] sm:$0xff]
        %v622 = vld [vmem:[%s414 + $0x1c0] sm:$0xff]
        %v623 = vld [vmem:[%s414 + $0x1c8] sm:$0xff]
        %v624 = vld [vmem:[%s414 + $0x1d0] sm:$0xff]
        %v625 = vld [vmem:[%s414 + $0x1d8] sm:$0xff]
        %v626 = vld [vmem:[%s414 + $0x1e0] sm:$0xff]
        %v627 = vld [vmem:[%s414 + $0x1e8] sm:$0xff]
        %v628 = vld [vmem:[%s414 + $0x1f0] sm:$0xff]
        %v629 = vld [vmem:[%s414 + $0x1f8] sm:$0xff]
        %v630 = vld [vmem:[#allocation7] sm:$0xf]
        %v631 = vld [vmem:[#allocation7 + $0x4] sm:$0xf]
        %v632 = vld [vmem:[#allocation7 + $0x8] sm:$0xf]
        %v633 = vld [vmem:[#allocation7 + $0xc] sm:$0xf]
        %v634 = vld [vmem:[#allocation7 + $0x10] sm:$0xf]
        %v635 = vld [vmem:[#allocation7 + $0x14] sm:$0xf]
        %v636 = vld [vmem:[#allocation7 + $0x18] sm:$0xf]
        %v637 = vld [vmem:[#allocation7 + $0x1c] sm:$0xf]
        %v638 = vld [vmem:[#allocation7 + $0x20] sm:$0xf]
        %v639 = vld [vmem:[#allocation7 + $0x24] sm:$0xf]
        %v640 = vld [vmem:[#allocation7 + $0x28] sm:$0xf]
        %v641 = vld [vmem:[#allocation7 + $0x2c] sm:$0xf]
        %v642 = vld [vmem:[#allocation7 + $0x30] sm:$0xf]
        %v643 = vld [vmem:[#allocation7 + $0x34] sm:$0xf]
        %v644 = vld [vmem:[#allocation7 + $0x38] sm:$0xf]
        %v645 = vld [vmem:[#allocation7 + $0x3c] sm:$0xf]
        %v646 = vld [vmem:[#allocation7 + $0x40] sm:$0xf]
        %v647 = vld [vmem:[#allocation7 + $0x44] sm:$0xf]
        %v648 = vld [vmem:[#allocation7 + $0x48] sm:$0xf]
        %v649 = vld [vmem:[#allocation7 + $0x4c] sm:$0xf]
        %v650 = vld [vmem:[#allocation7 + $0x50] sm:$0xf]
        %v651 = vld [vmem:[#allocation7 + $0x54] sm:$0xf]
        %v652 = vld [vmem:[#allocation7 + $0x58] sm:$0xf]
        %v653 = vld [vmem:[#allocation7 + $0x5c] sm:$0xf]
        %v654 = vld [vmem:[#allocation7 + $0x60] sm:$0xf]
        %v655 = vld [vmem:[#allocation7 + $0x64] sm:$0xf]
        %v656 = vld [vmem:[#allocation7 + $0x68] sm:$0xf]
        %v657 = vld [vmem:[#allocation7 + $0x6c] sm:$0xf]
        %v658 = vld [vmem:[#allocation7 + $0x70] sm:$0xf]
        %v659 = vld [vmem:[#allocation7 + $0x74] sm:$0xf]
        %v660 = vld [vmem:[#allocation7 + $0x78] sm:$0xf]
        %v661 = vld [vmem:[#allocation7 + $0x7c] sm:$0xf]
        %v662 = vld [vmem:[#allocation7 + $0x80] sm:$0xf]
        %v663 = vld [vmem:[#allocation7 + $0x84] sm:$0xf]
        %v664 = vld [vmem:[#allocation7 + $0x88] sm:$0xf]
        %v665 = vld [vmem:[#allocation7 + $0x8c] sm:$0xf]
        %v666 = vld [vmem:[#allocation7 + $0x90] sm:$0xf]
        %v667 = vld [vmem:[#allocation7 + $0x94] sm:$0xf]
        %v668 = vld [vmem:[#allocation7 + $0x98] sm:$0xf]
        %v669 = vld [vmem:[#allocation7 + $0x9c] sm:$0xf]
        %v670 = vld [vmem:[#allocation7 + $0xa0] sm:$0xf]
        %v671 = vld [vmem:[#allocation7 + $0xa4] sm:$0xf]
        %v672 = vld [vmem:[#allocation7 + $0xa8] sm:$0xf]
        %v673 = vld [vmem:[#allocation7 + $0xac] sm:$0xf]
        %v674 = vld [vmem:[#allocation7 + $0xb0] sm:$0xf]
        %v675 = vld [vmem:[#allocation7 + $0xb4] sm:$0xf]
        %v676 = vld [vmem:[#allocation7 + $0xb8] sm:$0xf]
        %v677 = vld [vmem:[#allocation7 + $0xbc] sm:$0xf]
        %v678 = vld [vmem:[#allocation7 + $0xc0] sm:$0xf]
        %v679 = vld [vmem:[#allocation7 + $0xc4] sm:$0xf]
        %v680 = vld [vmem:[#allocation7 + $0xc8] sm:$0xf]
        %v681 = vld [vmem:[#allocation7 + $0xcc] sm:$0xf]
        %v682 = vld [vmem:[#allocation7 + $0xd0] sm:$0xf]
        %v683 = vld [vmem:[#allocation7 + $0xd4] sm:$0xf]
        %v684 = vld [vmem:[#allocation7 + $0xd8] sm:$0xf]
        %v685 = vld [vmem:[#allocation7 + $0xdc] sm:$0xf]
        %v686 = vld [vmem:[#allocation7 + $0xe0] sm:$0xf]
        %v687 = vld [vmem:[#allocation7 + $0xe4] sm:$0xf]
        %v688 = vld [vmem:[#allocation7 + $0xe8] sm:$0xf]
        %v689 = vld [vmem:[#allocation7 + $0xec] sm:$0xf]
        %v690 = vld [vmem:[#allocation7 + $0xf0] sm:$0xf]
        %v691 = vld [vmem:[#allocation7 + $0xf4] sm:$0xf]
        %v692 = vld [vmem:[#allocation7 + $0xf8] sm:$0xf]
        %v693 = vld [vmem:[#allocation7 + $0xfc] sm:$0xf]
        %v758 = vunpack.c.l.b16 %v566
        %v759 = vunpack.c.h.b16 %v566
        %v760 = vunpack.c.l.b16 %v567
        %v761 = vunpack.c.h.b16 %v567
        %v762 = vunpack.c.l.b16 %v568
        %v763 = vunpack.c.h.b16 %v568
        %v764 = vunpack.c.l.b16 %v569
        %v765 = vunpack.c.h.b16 %v569
        %v766 = vunpack.c.l.b16 %v570
        %v767 = vunpack.c.h.b16 %v570
        %v768 = vunpack.c.l.b16 %v571
        %v769 = vunpack.c.h.b16 %v571
        %v770 = vunpack.c.l.b16 %v572
        %v771 = vunpack.c.h.b16 %v572
        %v772 = vunpack.c.l.b16 %v573
        %v773 = vunpack.c.h.b16 %v573
        %v774 = vunpack.c.l.b16 %v574
        %v775 = vunpack.c.h.b16 %v574
        %v776 = vunpack.c.l.b16 %v575
        %v777 = vunpack.c.h.b16 %v575
        %v778 = vunpack.c.l.b16 %v576
        %v779 = vunpack.c.h.b16 %v576
        %v780 = vunpack.c.l.b16 %v577
        %v781 = vunpack.c.h.b16 %v577
        %v782 = vunpack.c.l.b16 %v578
        %v783 = vunpack.c.h.b16 %v578
        %v784 = vunpack.c.l.b16 %v579
        %v785 = vunpack.c.h.b16 %v579
        %v786 = vunpack.c.l.b16 %v580
        %v787 = vunpack.c.h.b16 %v580
        %v788 = vunpack.c.l.b16 %v581
        %v789 = vunpack.c.h.b16 %v581
        %v790 = vunpack.c.l.b16 %v582
        %v791 = vunpack.c.h.b16 %v582
        %v792 = vunpack.c.l.b16 %v583
        %v793 = vunpack.c.h.b16 %v583
        %v794 = vunpack.c.l.b16 %v584
        %v795 = vunpack.c.h.b16 %v584
        %v796 = vunpack.c.l.b16 %v585
        %v797 = vunpack.c.h.b16 %v585
        %v798 = vunpack.c.l.b16 %v586
        %v799 = vunpack.c.h.b16 %v586
        %v800 = vunpack.c.l.b16 %v587
        %v801 = vunpack.c.h.b16 %v587
        %v802 = vunpack.c.l.b16 %v588
        %v803 = vunpack.c.h.b16 %v588
        %v804 = vunpack.c.l.b16 %v589
        %v805 = vunpack.c.h.b16 %v589
        %v806 = vunpack.c.l.b16 %v590
        %v807 = vunpack.c.h.b16 %v590
        %v808 = vunpack.c.l.b16 %v591
        %v809 = vunpack.c.h.b16 %v591
        %v810 = vunpack.c.l.b16 %v592
        %v811 = vunpack.c.h.b16 %v592
        %v812 = vunpack.c.l.b16 %v593
        %v813 = vunpack.c.h.b16 %v593
        %v814 = vunpack.c.l.b16 %v594
        %v815 = vunpack.c.h.b16 %v594
        %v816 = vunpack.c.l.b16 %v595
        %v817 = vunpack.c.h.b16 %v595
        %v818 = vunpack.c.l.b16 %v596
        %v819 = vunpack.c.h.b16 %v596
        %v820 = vunpack.c.l.b16 %v597
        %v821 = vunpack.c.h.b16 %v597
        %v822 = vunpack.c.l.b16 %v598
        %v823 = vunpack.c.h.b16 %v598
        %v824 = vunpack.c.l.b16 %v599
        %v825 = vunpack.c.h.b16 %v599
        %v826 = vunpack.c.l.b16 %v600
        %v827 = vunpack.c.h.b16 %v600
        %v828 = vunpack.c.l.b16 %v601
        %v829 = vunpack.c.h.b16 %v601
        %v830 = vunpack.c.l.b16 %v602
        %v831 = vunpack.c.h.b16 %v602
        %v832 = vunpack.c.l.b16 %v603
        %v833 = vunpack.c.h.b16 %v603
        %v834 = vunpack.c.l.b16 %v604
        %v835 = vunpack.c.h.b16 %v604
        %v836 = vunpack.c.l.b16 %v605
        %v837 = vunpack.c.h.b16 %v605
        %v838 = vunpack.c.l.b16 %v606
        %v839 = vunpack.c.h.b16 %v606
        %v840 = vunpack.c.l.b16 %v607
        %v841 = vunpack.c.h.b16 %v607
        %v842 = vunpack.c.l.b16 %v608
        %v843 = vunpack.c.h.b16 %v608
        %v844 = vunpack.c.l.b16 %v609
        %v845 = vunpack.c.h.b16 %v609
        %v846 = vunpack.c.l.b16 %v610
        %v847 = vunpack.c.h.b16 %v610
        %v848 = vunpack.c.l.b16 %v611
        %v849 = vunpack.c.h.b16 %v611
        %v850 = vunpack.c.l.b16 %v612
        %v851 = vunpack.c.h.b16 %v612
        %v852 = vunpack.c.l.b16 %v613
        %v853 = vunpack.c.h.b16 %v613
        %v854 = vunpack.c.l.b16 %v614
        %v855 = vunpack.c.h.b16 %v614
        %v856 = vunpack.c.l.b16 %v615
        %v857 = vunpack.c.h.b16 %v615
        %v858 = vunpack.c.l.b16 %v616
        %v859 = vunpack.c.h.b16 %v616
        %v860 = vunpack.c.l.b16 %v617
        %v861 = vunpack.c.h.b16 %v617
        %v862 = vunpack.c.l.b16 %v618
        %v863 = vunpack.c.h.b16 %v618
        %v864 = vunpack.c.l.b16 %v619
        %v865 = vunpack.c.h.b16 %v619
        %v866 = vunpack.c.l.b16 %v620
        %v867 = vunpack.c.h.b16 %v620
        %v868 = vunpack.c.l.b16 %v621
        %v869 = vunpack.c.h.b16 %v621
        %v870 = vunpack.c.l.b16 %v622
        %v871 = vunpack.c.h.b16 %v622
        %v872 = vunpack.c.l.b16 %v623
        %v873 = vunpack.c.h.b16 %v623
        %v874 = vunpack.c.l.b16 %v624
        %v875 = vunpack.c.h.b16 %v624
        %v876 = vunpack.c.l.b16 %v625
        %v877 = vunpack.c.h.b16 %v625
        %v878 = vunpack.c.l.b16 %v626
        %v879 = vunpack.c.h.b16 %v626
        %v880 = vunpack.c.l.b16 %v627
        %v881 = vunpack.c.h.b16 %v627
        %v882 = vunpack.c.l.b16 %v628
        %v883 = vunpack.c.h.b16 %v628
        %v884 = vunpack.c.l.b16 %v629
        %v885 = vunpack.c.h.b16 %v629
        %v886 = vpack.c.b16 %v762, %v758
        %v887 = vpack.c.b16 %v763, %v759
        %v888 = vpack.c.b16 %v764, %v760
        %v889 = vpack.c.b16 %v765, %v761
        %v890 = vpack.c.b16 %v770, %v766
        %v891 = vpack.c.b16 %v771, %v767
        %v892 = vpack.c.b16 %v772, %v768
        %v893 = vpack.c.b16 %v773, %v769
        %v894 = vpack.c.b16 %v778, %v774
        %v895 = vpack.c.b16 %v779, %v775
        %v896 = vpack.c.b16 %v780, %v776
        %v897 = vpack.c.b16 %v781, %v777
        %v898 = vpack.c.b16 %v786, %v782
        %v899 = vpack.c.b16 %v787, %v783
        %v900 = vpack.c.b16 %v788, %v784
        %v901 = vpack.c.b16 %v789, %v785
        %v902 = vpack.c.b16 %v794, %v790
        %v903 = vpack.c.b16 %v795, %v791
        %v904 = vpack.c.b16 %v796, %v792
        %v905 = vpack.c.b16 %v797, %v793
        %v906 = vpack.c.b16 %v802, %v798
        %v907 = vpack.c.b16 %v803, %v799
        %v908 = vpack.c.b16 %v804, %v800
        %v909 = vpack.c.b16 %v805, %v801
        %v910 = vpack.c.b16 %v810, %v806
        %v911 = vpack.c.b16 %v811, %v807
        %v912 = vpack.c.b16 %v812, %v808
        %v913 = vpack.c.b16 %v813, %v809
        %v914 = vpack.c.b16 %v818, %v814
        %v915 = vpack.c.b16 %v819, %v815
        %v916 = vpack.c.b16 %v820, %v816
        %v917 = vpack.c.b16 %v821, %v817
        %v918 = vpack.c.b16 %v826, %v822
        %v919 = vpack.c.b16 %v827, %v823
        %v920 = vpack.c.b16 %v828, %v824
        %v921 = vpack.c.b16 %v829, %v825
        %v922 = vpack.c.b16 %v834, %v830
        %v923 = vpack.c.b16 %v835, %v831
        %v924 = vpack.c.b16 %v836, %v832
        %v925 = vpack.c.b16 %v837, %v833
        %v926 = vpack.c.b16 %v842, %v838
        %v927 = vpack.c.b16 %v843, %v839
        %v928 = vpack.c.b16 %v844, %v840
        %v929 = vpack.c.b16 %v845, %v841
        %v930 = vpack.c.b16 %v850, %v846
        %v931 = vpack.c.b16 %v851, %v847
        %v932 = vpack.c.b16 %v852, %v848
        %v933 = vpack.c.b16 %v853, %v849
        %v934 = vpack.c.b16 %v858, %v854
        %v935 = vpack.c.b16 %v859, %v855
        %v936 = vpack.c.b16 %v860, %v856
        %v937 = vpack.c.b16 %v861, %v857
        %v938 = vpack.c.b16 %v866, %v862
        %v939 = vpack.c.b16 %v867, %v863
        %v940 = vpack.c.b16 %v868, %v864
        %v941 = vpack.c.b16 %v869, %v865
        %v942 = vpack.c.b16 %v874, %v870
        %v943 = vpack.c.b16 %v875, %v871
        %v944 = vpack.c.b16 %v876, %v872
        %v945 = vpack.c.b16 %v877, %v873
        %v946 = vpack.c.b16 %v882, %v878
        %v947 = vpack.c.b16 %v883, %v879
        %v948 = vpack.c.b16 %v884, %v880
        %v949 = vpack.c.b16 %v885, %v881
        %v1078 = vunpack.c.l.b16 %v630
        %v1079 = vunpack.c.l.b16 %v631
        %v1080 = vunpack.c.l.b16 %v632
        %v1081 = vunpack.c.l.b16 %v633
        %v1082 = vunpack.c.l.b16 %v634
        %v1083 = vunpack.c.l.b16 %v635
        %v1084 = vunpack.c.l.b16 %v636
        %v1085 = vunpack.c.l.b16 %v637
        %v1086 = vunpack.c.l.b16 %v638
        %v1087 = vunpack.c.l.b16 %v639
        %v1088 = vunpack.c.l.b16 %v640
        %v1089 = vunpack.c.l.b16 %v641
        %v1090 = vunpack.c.l.b16 %v642
        %v1091 = vunpack.c.l.b16 %v643
        %v1092 = vunpack.c.l.b16 %v644
        %v1093 = vunpack.c.l.b16 %v645
        %v1094 = vunpack.c.l.b16 %v646
        %v1095 = vunpack.c.l.b16 %v647
        %v1096 = vunpack.c.l.b16 %v648
        %v1097 = vunpack.c.l.b16 %v649
        %v1098 = vunpack.c.l.b16 %v650
        %v1099 = vunpack.c.l.b16 %v651
        %v1100 = vunpack.c.l.b16 %v652
        %v1101 = vunpack.c.l.b16 %v653
        %v1102 = vunpack.c.l.b16 %v654
        %v1103 = vunpack.c.l.b16 %v655
        %v1104 = vunpack.c.l.b16 %v656
        %v1105 = vunpack.c.l.b16 %v657
        %v1106 = vunpack.c.l.b16 %v658
        %v1107 = vunpack.c.l.b16 %v659
        %v1108 = vunpack.c.l.b16 %v660
        %v1109 = vunpack.c.l.b16 %v661
        %v1110 = vunpack.c.l.b16 %v662
        %v1111 = vunpack.c.l.b16 %v663
        %v1112 = vunpack.c.l.b16 %v664
        %v1113 = vunpack.c.l.b16 %v665
        %v1114 = vunpack.c.l.b16 %v666
        %v1115 = vunpack.c.l.b16 %v667
        %v1116 = vunpack.c.l.b16 %v668
        %v1117 = vunpack.c.l.b16 %v669
        %v1118 = vunpack.c.l.b16 %v670
        %v1119 = vunpack.c.l.b16 %v671
        %v1120 = vunpack.c.l.b16 %v672
        %v1121 = vunpack.c.l.b16 %v673
        %v1122 = vunpack.c.l.b16 %v674
        %v1123 = vunpack.c.l.b16 %v675
        %v1124 = vunpack.c.l.b16 %v676
        %v1125 = vunpack.c.l.b16 %v677
        %v1126 = vunpack.c.l.b16 %v678
        %v1127 = vunpack.c.l.b16 %v679
        %v1128 = vunpack.c.l.b16 %v680
        %v1129 = vunpack.c.l.b16 %v681
        %v1130 = vunpack.c.l.b16 %v682
        %v1131 = vunpack.c.l.b16 %v683
        %v1132 = vunpack.c.l.b16 %v684
        %v1133 = vunpack.c.l.b16 %v685
        %v1134 = vunpack.c.l.b16 %v686
        %v1135 = vunpack.c.l.b16 %v687
        %v1136 = vunpack.c.l.b16 %v688
        %v1137 = vunpack.c.l.b16 %v689
        %v1138 = vunpack.c.l.b16 %v690
        %v1139 = vunpack.c.l.b16 %v691
        %v1140 = vunpack.c.l.b16 %v692
        %v1141 = vunpack.c.l.b16 %v693
        %v1142 = vpack.c.b16 %v1079, %v1078
        %v1143 = vpack.c.b16 %v1081, %v1080
        %v1144 = vpack.c.b16 %v1083, %v1082
        %v1145 = vpack.c.b16 %v1085, %v1084
        %v1146 = vpack.c.b16 %v1087, %v1086
        %v1147 = vpack.c.b16 %v1089, %v1088
        %v1148 = vpack.c.b16 %v1091, %v1090
        %v1149 = vpack.c.b16 %v1093, %v1092
        %v1150 = vpack.c.b16 %v1095, %v1094
        %v1151 = vpack.c.b16 %v1097, %v1096
        %v1152 = vpack.c.b16 %v1099, %v1098
        %v1153 = vpack.c.b16 %v1101, %v1100
        %v1154 = vpack.c.b16 %v1103, %v1102
        %v1155 = vpack.c.b16 %v1105, %v1104
        %v1156 = vpack.c.b16 %v1107, %v1106
        %v1157 = vpack.c.b16 %v1109, %v1108
        %v1158 = vpack.c.b16 %v1111, %v1110
        %v1159 = vpack.c.b16 %v1113, %v1112
        %v1160 = vpack.c.b16 %v1115, %v1114
        %v1161 = vpack.c.b16 %v1117, %v1116
        %v1162 = vpack.c.b16 %v1119, %v1118
        %v1163 = vpack.c.b16 %v1121, %v1120
        %v1164 = vpack.c.b16 %v1123, %v1122
        %v1165 = vpack.c.b16 %v1125, %v1124
        %v1166 = vpack.c.b16 %v1127, %v1126
        %v1167 = vpack.c.b16 %v1129, %v1128
        %v1168 = vpack.c.b16 %v1131, %v1130
        %v1169 = vpack.c.b16 %v1133, %v1132
        %v1170 = vpack.c.b16 %v1135, %v1134
        %v1171 = vpack.c.b16 %v1137, %v1136
        %v1172 = vpack.c.b16 %v1139, %v1138
        %v1173 = vpack.c.b16 %v1141, %v1140
        %1206 = vmatprep.subr.bf16.mxu0 0
        %1207 = vmatpush1.bf16.msra.mxu0 %v1142
        %1208 = vmatprep.subr.bf16.mxu0 0
        %1209 = vmatpush1.bf16.msra.mxu0 %v1143
        %1210 = vmatprep.subr.bf16.mxu0 0
        %1211 = vmatpush1.bf16.msra.mxu0 %v1144
        %1212 = vmatprep.subr.bf16.mxu0 0
        %1213 = vmatpush1.bf16.msra.mxu0 %v1145
        %1214 = vmatprep.subr.bf16.mxu0 0
        %1215 = vmatpush1.bf16.msra.mxu0 %v1146
        %1216 = vmatprep.subr.bf16.mxu0 0
        %1217 = vmatpush1.bf16.msra.mxu0 %v1147
        %1218 = vmatprep.subr.bf16.mxu0 0
        %1219 = vmatpush1.bf16.msra.mxu0 %v1148
        %1220 = vmatprep.subr.bf16.mxu0 0
        %1221 = vmatpush1.bf16.msra.mxu0 %v1149
        %1222 = vmatprep.subr.bf16.mxu0 0
        %1223 = vmatpush1.bf16.msra.mxu0 %v1150
        %1224 = vmatprep.subr.bf16.mxu0 0
        %1225 = vmatpush1.bf16.msra.mxu0 %v1151
        %1226 = vmatprep.subr.bf16.mxu0 0
        %1227 = vmatpush1.bf16.msra.mxu0 %v1152
        %1228 = vmatprep.subr.bf16.mxu0 0
        %1229 = vmatpush1.bf16.msra.mxu0 %v1153
        %1230 = vmatprep.subr.bf16.mxu0 0
        %1231 = vmatpush1.bf16.msra.mxu0 %v1154
        %1232 = vmatprep.subr.bf16.mxu0 0
        %1233 = vmatpush1.bf16.msra.mxu0 %v1155
        %1234 = vmatprep.subr.bf16.mxu0 0
        %1235 = vmatpush1.bf16.msra.mxu0 %v1156
        %1236 = vmatprep.subr.bf16.mxu0 0
        %1237 = vmatpush1.bf16.msra.mxu0 %v1157
        %1238 = vmatprep.mubr.bf16.mxu0 %v887
        %1239 = vmatmul.mubr.bf16.gmra.mrb[0].mxu0 %v886
        %v1240 = vpop.f32.mrb[0].mxu0
        %v1241 = vadd.f32 0.0, %v1240
        %v1242 = vpop.f32.mrb[0].mxu0
        %v1243 = vpop.f32.mrb[0].mxu0
        %v1244 = vadd.f32 0.0, %v1243
        %v1245 = vpop.f32.mrb[0].mxu0
        %1246 = vmatprep.mubr.bf16.mxu0 %v891
        %1247 = vmatmul.mubr.bf16.gmra.mrb[0].mxu0 %v890
        %v1248 = vpop.f32.mrb[0].mxu0
        %v1249 = vadd.f32 0.0, %v1248
        %v1250 = vpop.f32.mrb[0].mxu0
        %v1251 = vpop.f32.mrb[0].mxu0
        %v1252 = vadd.f32 0.0, %v1251
        %v1253 = vpop.f32.mrb[0].mxu0
        %1254 = vmatprep.mubr.bf16.mxu0 %v895
        %1255 = vmatmul.mubr.bf16.gmra.mrb[0].mxu0 %v894
        %v1256 = vpop.f32.mrb[0].mxu0
        %v1257 = vadd.f32 0.0, %v1256
        %v1258 = vpop.f32.mrb[0].mxu0
        %v1259 = vpop.f32.mrb[0].mxu0
        %v1260 = vadd.f32 0.0, %v1259
        %v1261 = vpop.f32.mrb[0].mxu0
        %1262 = vmatprep.mubr.bf16.mxu0 %v899
        %1263 = vmatmul.mubr.bf16.gmra.mrb[0].mxu0 %v898
        %v1264 = vpop.f32.mrb[0].mxu0
        %v1265 = vadd.f32 0.0, %v1264
        %v1266 = vpop.f32.mrb[0].mxu0
        %v1267 = vpop.f32.mrb[0].mxu0
        %v1268 = vadd.f32 0.0, %v1267
        %v1269 = vpop.f32.mrb[0].mxu0
        %1270 = vmatprep.mubr.bf16.mxu0 %v903
        %1271 = vmatmul.mubr.bf16.gmra.mrb[0].mxu0 %v902
        %v1272 = vpop.f32.mrb[0].mxu0
        %v1273 = vadd.f32 0.0, %v1272
        %v1274 = vpop.f32.mrb[0].mxu0
        %v1275 = vpop.f32.mrb[0].mxu0
        %v1276 = vadd.f32 0.0, %v1275
        %v1277 = vpop.f32.mrb[0].mxu0
        %1278 = vmatprep.mubr.bf16.mxu0 %v907
        %1279 = vmatmul.mubr.bf16.gmra.mrb[0].mxu0 %v906
        %v1280 = vpop.f32.mrb[0].mxu0
        %v1281 = vadd.f32 0.0, %v1280
        %v1282 = vpop.f32.mrb[0].mxu0
        %v1283 = vpop.f32.mrb[0].mxu0
        %v1284 = vadd.f32 0.0, %v1283
        %v1285 = vpop.f32.mrb[0].mxu0
        %1286 = vmatprep.mubr.bf16.mxu0 %v911
        %1287 = vmatmul.mubr.bf16.gmra.mrb[0].mxu0 %v910
        %v1288 = vpop.f32.mrb[0].mxu0
        %v1289 = vadd.f32 0.0, %v1288
        %v1290 = vpop.f32.mrb[0].mxu0
        %v1291 = vpop.f32.mrb[0].mxu0
        %v1292 = vadd.f32 0.0, %v1291
        %v1293 = vpop.f32.mrb[0].mxu0
        %1294 = vmatprep.mubr.bf16.mxu0 %v915
        %1295 = vmatmul.mubr.bf16.gmra.mrb[0].mxu0 %v914
        %v1296 = vpop.f32.mrb[0].mxu0
        %v1297 = vadd.f32 0.0, %v1296
        %v1298 = vpop.f32.mrb[0].mxu0
        %v1299 = vpop.f32.mrb[0].mxu0
        %v1300 = vadd.f32 0.0, %v1299
        %v1301 = vpop.f32.mrb[0].mxu0
        %1302 = vmatprep.mubr.bf16.mxu0 %v919
        %1303 = vmatmul.mubr.bf16.gmra.mrb[0].mxu0 %v918
        %v1304 = vpop.f32.mrb[0].mxu0
        %v1305 = vadd.f32 0.0, %v1304
        %v1306 = vpop.f32.mrb[0].mxu0
        %v1307 = vpop.f32.mrb[0].mxu0
        %v1308 = vadd.f32 0.0, %v1307
        %v1309 = vpop.f32.mrb[0].mxu0
        %1310 = vmatprep.mubr.bf16.mxu0 %v923
        %1311 = vmatmul.mubr.bf16.gmra.mrb[0].mxu0 %v922
        %v1312 = vpop.f32.mrb[0].mxu0
        %v1313 = vadd.f32 0.0, %v1312
        %v1314 = vpop.f32.mrb[0].mxu0
        %v1315 = vpop.f32.mrb[0].mxu0
        %v1316 = vadd.f32 0.0, %v1315
        %v1317 = vpop.f32.mrb[0].mxu0
        %1318 = vmatprep.mubr.bf16.mxu0 %v927
        %1319 = vmatmul.mubr.bf16.gmra.mrb[0].mxu0 %v926
        %v1320 = vpop.f32.mrb[0].mxu0
        %v1321 = vadd.f32 0.0, %v1320
        %v1322 = vpop.f32.mrb[0].mxu0
        %v1323 = vpop.f32.mrb[0].mxu0
        %v1324 = vadd.f32 0.0, %v1323
        %v1325 = vpop.f32.mrb[0].mxu0
        %1326 = vmatprep.mubr.bf16.mxu0 %v931
        %1327 = vmatmul.mubr.bf16.gmra.mrb[0].mxu0 %v930
        %v1328 = vpop.f32.mrb[0].mxu0
        %v1329 = vadd.f32 0.0, %v1328
        %v1330 = vpop.f32.mrb[0].mxu0
        %v1331 = vpop.f32.mrb[0].mxu0
        %v1332 = vadd.f32 0.0, %v1331
        %v1333 = vpop.f32.mrb[0].mxu0
        %1334 = vmatprep.mubr.bf16.mxu0 %v935
        %1335 = vmatmul.mubr.bf16.gmra.mrb[0].mxu0 %v934
        %v1336 = vpop.f32.mrb[0].mxu0
        %v1337 = vadd.f32 0.0, %v1336
        %v1338 = vpop.f32.mrb[0].mxu0
        %v1339 = vpop.f32.mrb[0].mxu0
        %v1340 = vadd.f32 0.0, %v1339
        %v1341 = vpop.f32.mrb[0].mxu0
        %1342 = vmatprep.mubr.bf16.mxu0 %v939
        %1343 = vmatmul.mubr.bf16.gmra.mrb[0].mxu0 %v938
        %v1344 = vpop.f32.mrb[0].mxu0
        %v1345 = vadd.f32 0.0, %v1344
        %v1346 = vpop.f32.mrb[0].mxu0
        %v1347 = vpop.f32.mrb[0].mxu0
        %v1348 = vadd.f32 0.0, %v1347
        %v1349 = vpop.f32.mrb[0].mxu0
        %1350 = vmatprep.mubr.bf16.mxu0 %v943
        %1351 = vmatmul.mubr.bf16.gmra.mrb[0].mxu0 %v942
        %v1352 = vpop.f32.mrb[0].mxu0
        %v1353 = vadd.f32 0.0, %v1352
        %v1354 = vpop.f32.mrb[0].mxu0
        %v1355 = vpop.f32.mrb[0].mxu0
        %v1356 = vadd.f32 0.0, %v1355
        %v1357 = vpop.f32.mrb[0].mxu0
        %1358 = vmatprep.mubr.bf16.mxu0 %v947
        %1359 = vmatmul.mubr.bf16.gmra.mrb[0].mxu0 %v946
        %v1360 = vpop.f32.mrb[0].mxu0
        %v1361 = vadd.f32 0.0, %v1360
        %v1362 = vpop.f32.mrb[0].mxu0
        %v1363 = vpop.f32.mrb[0].mxu0
        %v1364 = vadd.f32 0.0, %v1363
        %v1365 = vpop.f32.mrb[0].mxu0
        %1366 = vdwg.mxu0
        %1367 = vmatprep.subr.bf16.mxu0 0
        %1368 = vmatpush1.bf16.msra.mxu0 %v1158
        %1369 = vmatprep.subr.bf16.mxu0 0
        %1370 = vmatpush1.bf16.msra.mxu0 %v1159
        %1371 = vmatprep.subr.bf16.mxu0 0
        %1372 = vmatpush1.bf16.msra.mxu0 %v1160
        %1373 = vmatprep.subr.bf16.mxu0 0
        %1374 = vmatpush1.bf16.msra.mxu0 %v1161
        %1375 = vmatprep.subr.bf16.mxu0 0
        %1376 = vmatpush1.bf16.msra.mxu0 %v1162
        %1377 = vmatprep.subr.bf16.mxu0 0
        %1378 = vmatpush1.bf16.msra.mxu0 %v1163
        %1379 = vmatprep.subr.bf16.mxu0 0
        %1380 = vmatpush1.bf16.msra.mxu0 %v1164
        %1381 = vmatprep.subr.bf16.mxu0 0
        %1382 = vmatpush1.bf16.msra.mxu0 %v1165
        %1383 = vmatprep.subr.bf16.mxu0 0
        %1384 = vmatpush1.bf16.msra.mxu0 %v1166
        %1385 = vmatprep.subr.bf16.mxu0 0
        %1386 = vmatpush1.bf16.msra.mxu0 %v1167
        %1387 = vmatprep.subr.bf16.mxu0 0
        %1388 = vmatpush1.bf16.msra.mxu0 %v1168
        %1389 = vmatprep.subr.bf16.mxu0 0
        %1390 = vmatpush1.bf16.msra.mxu0 %v1169
        %1391 = vmatprep.subr.bf16.mxu0 0
        %1392 = vmatpush1.bf16.msra.mxu0 %v1170
        %1393 = vmatprep.subr.bf16.mxu0 0
        %1394 = vmatpush1.bf16.msra.mxu0 %v1171
        %1395 = vmatprep.subr.bf16.mxu0 0
        %1396 = vmatpush1.bf16.msra.mxu0 %v1172
        %1397 = vmatprep.subr.bf16.mxu0 0
        %1398 = vmatpush1.bf16.msra.mxu0 %v1173
        %1399 = vmatprep.mubr.bf16.mxu0 %v889
        %1400 = vmatmul.mubr.bf16.gmra.mrb[0].mxu0 %v888
        %v1401 = vpop.f32.mrb[0].mxu0
        %v1402 = vadd.f32 %v1241, %v1401
        %v1403 = vpop.f32.mrb[0].mxu0
        %v1404 = vpop.f32.mrb[0].mxu0
        %v1405 = vadd.f32 %v1244, %v1404
        %v1406 = vpop.f32.mrb[0].mxu0
        %1407 = vmatprep.mubr.bf16.mxu0 %v893
        %1408 = vmatmul.mubr.bf16.gmra.mrb[0].mxu0 %v892
        %v1409 = vpop.f32.mrb[0].mxu0
        %v1410 = vadd.f32 %v1249, %v1409
        %v1411 = vpop.f32.mrb[0].mxu0
        %v1412 = vpop.f32.mrb[0].mxu0
        %v1413 = vadd.f32 %v1252, %v1412
        %v1414 = vpop.f32.mrb[0].mxu0
        %1415 = vmatprep.mubr.bf16.mxu0 %v897
        %1416 = vmatmul.mubr.bf16.gmra.mrb[0].mxu0 %v896
        %v1417 = vpop.f32.mrb[0].mxu0
        %v1418 = vadd.f32 %v1257, %v1417
        %v1419 = vpop.f32.mrb[0].mxu0
        %v1420 = vpop.f32.mrb[0].mxu0
        %v1421 = vadd.f32 %v1260, %v1420
        %v1422 = vpop.f32.mrb[0].mxu0
        %1423 = vmatprep.mubr.bf16.mxu0 %v901
        %1424 = vmatmul.mubr.bf16.gmra.mrb[0].mxu0 %v900
        %v1425 = vpop.f32.mrb[0].mxu0
        %v1426 = vadd.f32 %v1265, %v1425
        %v1427 = vpop.f32.mrb[0].mxu0
        %v1428 = vpop.f32.mrb[0].mxu0
        %v1429 = vadd.f32 %v1268, %v1428
        %v1430 = vpop.f32.mrb[0].mxu0
        %1431 = vmatprep.mubr.bf16.mxu0 %v905
        %1432 = vmatmul.mubr.bf16.gmra.mrb[0].mxu0 %v904
        %v1433 = vpop.f32.mrb[0].mxu0
        %v1434 = vadd.f32 %v1273, %v1433
        %v1435 = vpop.f32.mrb[0].mxu0
        %v1436 = vpop.f32.mrb[0].mxu0
        %v1437 = vadd.f32 %v1276, %v1436
        %v1438 = vpop.f32.mrb[0].mxu0
        %1439 = vmatprep.mubr.bf16.mxu0 %v909
        %1440 = vmatmul.mubr.bf16.gmra.mrb[0].mxu0 %v908
        %v1441 = vpop.f32.mrb[0].mxu0
        %v1442 = vadd.f32 %v1281, %v1441
        %v1443 = vpop.f32.mrb[0].mxu0
        %v1444 = vpop.f32.mrb[0].mxu0
        %v1445 = vadd.f32 %v1284, %v1444
        %v1446 = vpop.f32.mrb[0].mxu0
        %1447 = vmatprep.mubr.bf16.mxu0 %v913
        %1448 = vmatmul.mubr.bf16.gmra.mrb[0].mxu0 %v912
        %v1449 = vpop.f32.mrb[0].mxu0
        %v1450 = vadd.f32 %v1289, %v1449
        %v1451 = vpop.f32.mrb[0].mxu0
        %v1452 = vpop.f32.mrb[0].mxu0
        %v1453 = vadd.f32 %v1292, %v1452
        %v1454 = vpop.f32.mrb[0].mxu0
        %1455 = vmatprep.mubr.bf16.mxu0 %v917
        %1456 = vmatmul.mubr.bf16.gmra.mrb[0].mxu0 %v916
        %v1457 = vpop.f32.mrb[0].mxu0
        %v1458 = vadd.f32 %v1297, %v1457
        %v1459 = vpop.f32.mrb[0].mxu0
        %v1460 = vpop.f32.mrb[0].mxu0
        %v1461 = vadd.f32 %v1300, %v1460
        %v1462 = vpop.f32.mrb[0].mxu0
        %1463 = vmatprep.mubr.bf16.mxu0 %v921
        %1464 = vmatmul.mubr.bf16.gmra.mrb[0].mxu0 %v920
        %v1465 = vpop.f32.mrb[0].mxu0
        %v1466 = vadd.f32 %v1305, %v1465
        %v1467 = vpop.f32.mrb[0].mxu0
        %v1468 = vpop.f32.mrb[0].mxu0
        %v1469 = vadd.f32 %v1308, %v1468
        %v1470 = vpop.f32.mrb[0].mxu0
        %1471 = vmatprep.mubr.bf16.mxu0 %v925
        %1472 = vmatmul.mubr.bf16.gmra.mrb[0].mxu0 %v924
        %v1473 = vpop.f32.mrb[0].mxu0
        %v1474 = vadd.f32 %v1313, %v1473
        %v1475 = vpop.f32.mrb[0].mxu0
        %v1476 = vpop.f32.mrb[0].mxu0
        %v1477 = vadd.f32 %v1316, %v1476
        %v1478 = vpop.f32.mrb[0].mxu0
        %1479 = vmatprep.mubr.bf16.mxu0 %v929
        %1480 = vmatmul.mubr.bf16.gmra.mrb[0].mxu0 %v928
        %v1481 = vpop.f32.mrb[0].mxu0
        %v1482 = vadd.f32 %v1321, %v1481
        %v1483 = vpop.f32.mrb[0].mxu0
        %v1484 = vpop.f32.mrb[0].mxu0
        %v1485 = vadd.f32 %v1324, %v1484
        %v1486 = vpop.f32.mrb[0].mxu0
        %1487 = vmatprep.mubr.bf16.mxu0 %v933
        %1488 = vmatmul.mubr.bf16.gmra.mrb[0].mxu0 %v932
        %v1489 = vpop.f32.mrb[0].mxu0
        %v1490 = vadd.f32 %v1329, %v1489
        %v1491 = vpop.f32.mrb[0].mxu0
        %v1492 = vpop.f32.mrb[0].mxu0
        %v1493 = vadd.f32 %v1332, %v1492
        %v1494 = vpop.f32.mrb[0].mxu0
        %1495 = vmatprep.mubr.bf16.mxu0 %v937
        %1496 = vmatmul.mubr.bf16.gmra.mrb[0].mxu0 %v936
        %v1497 = vpop.f32.mrb[0].mxu0
        %v1498 = vadd.f32 %v1337, %v1497
        %v1499 = vpop.f32.mrb[0].mxu0
        %v1500 = vpop.f32.mrb[0].mxu0
        %v1501 = vadd.f32 %v1340, %v1500
        %v1502 = vpop.f32.mrb[0].mxu0
        %1503 = vmatprep.mubr.bf16.mxu0 %v941
        %1504 = vmatmul.mubr.bf16.gmra.mrb[0].mxu0 %v940
        %v1505 = vpop.f32.mrb[0].mxu0
        %v1506 = vadd.f32 %v1345, %v1505
        %v1507 = vpop.f32.mrb[0].mxu0
        %v1508 = vpop.f32.mrb[0].mxu0
        %v1509 = vadd.f32 %v1348, %v1508
        %v1510 = vpop.f32.mrb[0].mxu0
        %1511 = vmatprep.mubr.bf16.mxu0 %v945
        %1512 = vmatmul.mubr.bf16.gmra.mrb[0].mxu0 %v944
        %v1513 = vpop.f32.mrb[0].mxu0
        %v1514 = vadd.f32 %v1353, %v1513
        %v1515 = vpop.f32.mrb[0].mxu0
        %v1516 = vpop.f32.mrb[0].mxu0
        %v1517 = vadd.f32 %v1356, %v1516
        %v1518 = vpop.f32.mrb[0].mxu0
        %1519 = vmatprep.mubr.bf16.mxu0 %v949
        %1520 = vmatmul.mubr.bf16.gmra.mrb[0].mxu0 %v948
        %v1521 = vpop.f32.mrb[0].mxu0
        %v1522 = vadd.f32 %v1361, %v1521
        %v1523 = vpop.f32.mrb[0].mxu0
        %v1524 = vpop.f32.mrb[0].mxu0
        %v1525 = vadd.f32 %v1364, %v1524
        %v1526 = vpop.f32.mrb[0].mxu0
        %1527 = vdwg.mxu0
        %v1528 = vadd.f32 %v534, %v1402
        %v1529 = vadd.f32 %v535, %v1405
        %v1530 = vadd.f32 %v536, %v1410
        %v1531 = vadd.f32 %v537, %v1413
        %v1532 = vadd.f32 %v538, %v1418
        %v1533 = vadd.f32 %v539, %v1421
        %v1534 = vadd.f32 %v540, %v1426
        %v1535 = vadd.f32 %v541, %v1429
        %v1536 = vadd.f32 %v542, %v1434
        %v1537 = vadd.f32 %v543, %v1437
        %v1538 = vadd.f32 %v544, %v1442
        %v1539 = vadd.f32 %v545, %v1445
        %v1540 = vadd.f32 %v546, %v1450
        %v1541 = vadd.f32 %v547, %v1453
        %v1542 = vadd.f32 %v548, %v1458
        %v1543 = vadd.f32 %v549, %v1461
        %v1544 = vadd.f32 %v550, %v1466
        %v1545 = vadd.f32 %v551, %v1469
        %v1546 = vadd.f32 %v552, %v1474
        %v1547 = vadd.f32 %v553, %v1477
        %v1548 = vadd.f32 %v554, %v1482
        %v1549 = vadd.f32 %v555, %v1485
        %v1550 = vadd.f32 %v556, %v1490
        %v1551 = vadd.f32 %v557, %v1493
        %v1552 = vadd.f32 %v558, %v1498
        %v1553 = vadd.f32 %v559, %v1501
        %v1554 = vadd.f32 %v560, %v1506
        %v1555 = vadd.f32 %v561, %v1509
        %v1556 = vadd.f32 %v562, %v1514
        %v1557 = vadd.f32 %v563, %v1517
        %v1558 = vadd.f32 %v564, %v1522
        %v1559 = vadd.f32 %v565, %v1525
        %vm1560 = vcmask 261120
        %1561 = vst.msk [vmem:[#allocation2] sm:$0xff] %vm1560, %v1528
        %1562 = vst.msk [vmem:[#allocation2 + $0x8] sm:$0xff] %vm1560, %v1529
        %1563 = vst.msk [vmem:[#allocation2 + $0x10] sm:$0xff] %vm1560, %v1530
        %1564 = vst.msk [vmem:[#allocation2 + $0x18] sm:$0xff] %vm1560, %v1531
        %1565 = vst.msk [vmem:[#allocation2 + $0x20] sm:$0xff] %vm1560, %v1532
        %1566 = vst.msk [vmem:[#allocation2 + $0x28] sm:$0xff] %vm1560, %v1533
        %1567 = vst.msk [vmem:[#allocation2 + $0x30] sm:$0xff] %vm1560, %v1534
        %1568 = vst.msk [vmem:[#allocation2 + $0x38] sm:$0xff] %vm1560, %v1535
        %1569 = vst.msk [vmem:[#allocation2 + $0x40] sm:$0xff] %vm1560, %v1536
        %1570 = vst.msk [vmem:[#allocation2 + $0x48] sm:$0xff] %vm1560, %v1537
        %1571 = vst.msk [vmem:[#allocation2 + $0x50] sm:$0xff] %vm1560, %v1538
        %1572 = vst.msk [vmem:[#allocation2 + $0x58] sm:$0xff] %vm1560, %v1539
        %1573 = vst.msk [vmem:[#allocation2 + $0x60] sm:$0xff] %vm1560, %v1540
        %1574 = vst.msk [vmem:[#allocation2 + $0x68] sm:$0xff] %vm1560, %v1541
        %1575 = vst.msk [vmem:[#allocation2 + $0x70] sm:$0xff] %vm1560, %v1542
        %1576 = vst.msk [vmem:[#allocation2 + $0x78] sm:$0xff] %vm1560, %v1543
        %1577 = vst.msk [vmem:[#allocation2 + $0x80] sm:$0xff] %vm1560, %v1544
        %1578 = vst.msk [vmem:[#allocation2 + $0x88] sm:$0xff] %vm1560, %v1545
        %1579 = vst.msk [vmem:[#allocation2 + $0x90] sm:$0xff] %vm1560, %v1546
        %1580 = vst.msk [vmem:[#allocation2 + $0x98] sm:$0xff] %vm1560, %v1547
        %1581 = vst.msk [vmem:[#allocation2 + $0xa0] sm:$0xff] %vm1560, %v1548
        %1582 = vst.msk [vmem:[#allocation2 + $0xa8] sm:$0xff] %vm1560, %v1549
        %1583 = vst.msk [vmem:[#allocation2 + $0xb0] sm:$0xff] %vm1560, %v1550
        %1584 = vst.msk [vmem:[#allocation2 + $0xb8] sm:$0xff] %vm1560, %v1551
        %1585 = vst.msk [vmem:[#allocation2 + $0xc0] sm:$0xff] %vm1560, %v1552
        %1586 = vst.msk [vmem:[#allocation2 + $0xc8] sm:$0xff] %vm1560, %v1553
        %1587 = vst.msk [vmem:[#allocation2 + $0xd0] sm:$0xff] %vm1560, %v1554
        %1588 = vst.msk [vmem:[#allocation2 + $0xd8] sm:$0xff] %vm1560, %v1555
        %1589 = vst.msk [vmem:[#allocation2 + $0xe0] sm:$0xff] %vm1560, %v1556
        %1590 = vst.msk [vmem:[#allocation2 + $0xe8] sm:$0xff] %vm1560, %v1557
        %1591 = vst.msk [vmem:[#allocation2 + $0xf0] sm:$0xff] %vm1560, %v1558
        %1592 = vst.msk [vmem:[#allocation2 + $0xf8] sm:$0xff] %vm1560, %v1559
        // Predicated region
        $region77: #{view_gnn_forward.8} parent=47 // pred_check
          %p1593 = pneg %p497
        $region78: #{view_gnn_forward.8} parent=47 // pred_check_branch
          %1595 = sbr.rel (%p1593) target = $region80
        $region79: #{view_gnn_forward.8} parent=47 // pred_region
          %v1596 = vld [vmem:[#allocation2] sm:$0xff]
          %v1597 = vld [vmem:[#allocation2 + $0x8] sm:$0xff]
          %v1598 = vld [vmem:[#allocation2 + $0x10] sm:$0xff]
          %v1599 = vld [vmem:[#allocation2 + $0x18] sm:$0xff]
          %v1600 = vld [vmem:[#allocation2 + $0x20] sm:$0xff]
          %v1601 = vld [vmem:[#allocation2 + $0x28] sm:$0xff]
          %v1602 = vld [vmem:[#allocation2 + $0x30] sm:$0xff]
          %v1603 = vld [vmem:[#allocation2 + $0x38] sm:$0xff]
          %v1604 = vld [vmem:[#allocation2 + $0x40] sm:$0xff]
          %v1605 = vld [vmem:[#allocation2 + $0x48] sm:$0xff]
          %v1606 = vld [vmem:[#allocation2 + $0x50] sm:$0xff]
          %v1607 = vld [vmem:[#allocation2 + $0x58] sm:$0xff]
          %v1608 = vld [vmem:[#allocation2 + $0x60] sm:$0xff]
          %v1609 = vld [vmem:[#allocation2 + $0x68] sm:$0xff]
          %v1610 = vld [vmem:[#allocation2 + $0x70] sm:$0xff]
          %v1611 = vld [vmem:[#allocation2 + $0x78] sm:$0xff]
          %v1612 = vld [vmem:[#allocation2 + $0x80] sm:$0xff]
          %v1613 = vld [vmem:[#allocation2 + $0x88] sm:$0xff]
          %v1614 = vld [vmem:[#allocation2 + $0x90] sm:$0xff]
          %v1615 = vld [vmem:[#allocation2 + $0x98] sm:$0xff]
          %v1616 = vld [vmem:[#allocation2 + $0xa0] sm:$0xff]
          %v1617 = vld [vmem:[#allocation2 + $0xa8] sm:$0xff]
          %v1618 = vld [vmem:[#allocation2 + $0xb0] sm:$0xff]
          %v1619 = vld [vmem:[#allocation2 + $0xb8] sm:$0xff]
          %v1620 = vld [vmem:[#allocation2 + $0xc0] sm:$0xff]
          %v1621 = vld [vmem:[#allocation2 + $0xc8] sm:$0xff]
          %v1622 = vld [vmem:[#allocation2 + $0xd0] sm:$0xff]
          %v1623 = vld [vmem:[#allocation2 + $0xd8] sm:$0xff]
          %v1624 = vld [vmem:[#allocation2 + $0xe0] sm:$0xff]
          %v1625 = vld [vmem:[#allocation2 + $0xe8] sm:$0xff]
          %v1626 = vld [vmem:[#allocation2 + $0xf0] sm:$0xff]
          %v1627 = vld [vmem:[#allocation2 + $0xf8] sm:$0xff]
          %v1628 = vld [vmem:[%s427] sm:$0xff]
          %v1629 = vld [vmem:[%s427 + $0x8] sm:$0xff]
          %v1630 = vld [vmem:[%s427 + $0x10] sm:$0xff]
          %v1631 = vld [vmem:[%s427 + $0x18] sm:$0xff]
          %v1632 = vld [vmem:[%s427 + $0x20] sm:$0xff]
          %v1633 = vld [vmem:[%s427 + $0x28] sm:$0xff]
          %v1634 = vld [vmem:[%s427 + $0x30] sm:$0xff]
          %v1635 = vld [vmem:[%s427 + $0x38] sm:$0xff]
          %v1636 = vld [vmem:[%s427 + $0x40] sm:$0xff]
          %v1637 = vld [vmem:[%s427 + $0x48] sm:$0xff]
          %v1638 = vld [vmem:[%s427 + $0x50] sm:$0xff]
          %v1639 = vld [vmem:[%s427 + $0x58] sm:$0xff]
          %v1640 = vld [vmem:[%s427 + $0x60] sm:$0xff]
          %v1641 = vld [vmem:[%s427 + $0x68] sm:$0xff]
          %v1642 = vld [vmem:[%s427 + $0x70] sm:$0xff]
          %v1643 = vld [vmem:[%s427 + $0x78] sm:$0xff]
          %v1644 = vld [vmem:[%s427 + $0x80] sm:$0xff]
          %v1645 = vld [vmem:[%s427 + $0x88] sm:$0xff]
          %v1646 = vld [vmem:[%s427 + $0x90] sm:$0xff]
          %v1647 = vld [vmem:[%s427 + $0x98] sm:$0xff]
          %v1648 = vld [vmem:[%s427 + $0xa0] sm:$0xff]
          %v1649 = vld [vmem:[%s427 + $0xa8] sm:$0xff]
          %v1650 = vld [vmem:[%s427 + $0xb0] sm:$0xff]
          %v1651 = vld [vmem:[%s427 + $0xb8] sm:$0xff]
          %v1652 = vld [vmem:[%s427 + $0xc0] sm:$0xff]
          %v1653 = vld [vmem:[%s427 + $0xc8] sm:$0xff]
          %v1654 = vld [vmem:[%s427 + $0xd0] sm:$0xff]
          %v1655 = vld [vmem:[%s427 + $0xd8] sm:$0xff]
          %v1656 = vld [vmem:[%s427 + $0xe0] sm:$0xff]
          %v1657 = vld [vmem:[%s427 + $0xe8] sm:$0xff]
          %v1658 = vld [vmem:[%s427 + $0xf0] sm:$0xff]
          %v1659 = vld [vmem:[%s427 + $0xf8] sm:$0xff]
          %1661 = vset.pattern.permute.xlu0 0
          %1662 = vperm.xlu0 %1661, %v1628
          %v1663 = vpop.permute.xlu0 %1662
          %1666 = vset.pattern.permute.xlu0 0
          %1667 = vperm.xlu0 %1666, %v1629
          %v1668 = vpop.permute.xlu0 %1667
          %1671 = vset.pattern.permute.xlu0 0
          %1672 = vperm.xlu0 %1671, %v1630
          %v1673 = vpop.permute.xlu0 %1672
          %1676 = vset.pattern.permute.xlu0 0
          %1677 = vperm.xlu0 %1676, %v1631
          %v1678 = vpop.permute.xlu0 %1677
          %1681 = vset.pattern.permute.xlu0 0
          %1682 = vperm.xlu0 %1681, %v1632
          %v1683 = vpop.permute.xlu0 %1682
          %1686 = vset.pattern.permute.xlu0 0
          %1687 = vperm.xlu0 %1686, %v1633
          %v1688 = vpop.permute.xlu0 %1687
          %1691 = vset.pattern.permute.xlu0 0
          %1692 = vperm.xlu0 %1691, %v1634
          %v1693 = vpop.permute.xlu0 %1692
          %1696 = vset.pattern.permute.xlu0 0
          %1697 = vperm.xlu0 %1696, %v1635
          %v1698 = vpop.permute.xlu0 %1697
          %1701 = vset.pattern.permute.xlu0 0
          %1702 = vperm.xlu0 %1701, %v1636
          %v1703 = vpop.permute.xlu0 %1702
          %1706 = vset.pattern.permute.xlu0 0
          %1707 = vperm.xlu0 %1706, %v1637
          %v1708 = vpop.permute.xlu0 %1707
          %1711 = vset.pattern.permute.xlu0 0
          %1712 = vperm.xlu0 %1711, %v1638
          %v1713 = vpop.permute.xlu0 %1712
          %1716 = vset.pattern.permute.xlu0 0
          %1717 = vperm.xlu0 %1716, %v1639
          %v1718 = vpop.permute.xlu0 %1717
          %1721 = vset.pattern.permute.xlu0 0
          %1722 = vperm.xlu0 %1721, %v1640
          %v1723 = vpop.permute.xlu0 %1722
          %1726 = vset.pattern.permute.xlu0 0
          %1727 = vperm.xlu0 %1726, %v1641
          %v1728 = vpop.permute.xlu0 %1727
          %1731 = vset.pattern.permute.xlu0 0
          %1732 = vperm.xlu0 %1731, %v1642
          %v1733 = vpop.permute.xlu0 %1732
          %1736 = vset.pattern.permute.xlu0 0
          %1737 = vperm.xlu0 %1736, %v1643
          %v1738 = vpop.permute.xlu0 %1737
          %1741 = vset.pattern.permute.xlu0 0
          %1742 = vperm.xlu0 %1741, %v1644
          %v1743 = vpop.permute.xlu0 %1742
          %1746 = vset.pattern.permute.xlu0 0
          %1747 = vperm.xlu0 %1746, %v1645
          %v1748 = vpop.permute.xlu0 %1747
          %1751 = vset.pattern.permute.xlu0 0
          %1752 = vperm.xlu0 %1751, %v1646
          %v1753 = vpop.permute.xlu0 %1752
          %1756 = vset.pattern.permute.xlu0 0
          %1757 = vperm.xlu0 %1756, %v1647
          %v1758 = vpop.permute.xlu0 %1757
          %1761 = vset.pattern.permute.xlu0 0
          %1762 = vperm.xlu0 %1761, %v1648
          %v1763 = vpop.permute.xlu0 %1762
          %1766 = vset.pattern.permute.xlu0 0
          %1767 = vperm.xlu0 %1766, %v1649
          %v1768 = vpop.permute.xlu0 %1767
          %1771 = vset.pattern.permute.xlu0 0
          %1772 = vperm.xlu0 %1771, %v1650
          %v1773 = vpop.permute.xlu0 %1772
          %1776 = vset.pattern.permute.xlu0 0
          %1777 = vperm.xlu0 %1776, %v1651
          %v1778 = vpop.permute.xlu0 %1777
          %1781 = vset.pattern.permute.xlu0 0
          %1782 = vperm.xlu0 %1781, %v1652
          %v1783 = vpop.permute.xlu0 %1782
          %1786 = vset.pattern.permute.xlu0 0
          %1787 = vperm.xlu0 %1786, %v1653
          %v1788 = vpop.permute.xlu0 %1787
          %1791 = vset.pattern.permute.xlu0 0
          %1792 = vperm.xlu0 %1791, %v1654
          %v1793 = vpop.permute.xlu0 %1792
          %1796 = vset.pattern.permute.xlu0 0
          %1797 = vperm.xlu0 %1796, %v1655
          %v1798 = vpop.permute.xlu0 %1797
          %1801 = vset.pattern.permute.xlu0 0
          %1802 = vperm.xlu0 %1801, %v1656
          %v1803 = vpop.permute.xlu0 %1802
          %1806 = vset.pattern.permute.xlu0 0
          %1807 = vperm.xlu0 %1806, %v1657
          %v1808 = vpop.permute.xlu0 %1807
          %1811 = vset.pattern.permute.xlu0 0
          %1812 = vperm.xlu0 %1811, %v1658
          %v1813 = vpop.permute.xlu0 %1812
          %1816 = vset.pattern.permute.xlu0 0
          %1817 = vperm.xlu0 %1816, %v1659
          %v1818 = vpop.permute.xlu0 %1817
          %v1820 = vmul.f32 %v1596, %v1663
          %v1821 = vmul.f32 %v1597, %v1668
          %v1822 = vmul.f32 %v1598, %v1673
          %v1823 = vmul.f32 %v1599, %v1678
          %v1824 = vmul.f32 %v1600, %v1683
          %v1825 = vmul.f32 %v1601, %v1688
          %v1826 = vmul.f32 %v1602, %v1693
          %v1827 = vmul.f32 %v1603, %v1698
          %v1828 = vmul.f32 %v1604, %v1703
          %v1829 = vmul.f32 %v1605, %v1708
          %v1830 = vmul.f32 %v1606, %v1713
          %v1831 = vmul.f32 %v1607, %v1718
          %v1832 = vmul.f32 %v1608, %v1723
          %v1833 = vmul.f32 %v1609, %v1728
          %v1834 = vmul.f32 %v1610, %v1733
          %v1835 = vmul.f32 %v1611, %v1738
          %v1836 = vmul.f32 %v1612, %v1743
          %v1837 = vmul.f32 %v1613, %v1748
          %v1838 = vmul.f32 %v1614, %v1753
          %v1839 = vmul.f32 %v1615, %v1758
          %v1840 = vmul.f32 %v1616, %v1763
          %v1841 = vmul.f32 %v1617, %v1768
          %v1842 = vmul.f32 %v1618, %v1773
          %v1843 = vmul.f32 %v1619, %v1778
          %v1844 = vmul.f32 %v1620, %v1783
          %v1845 = vmul.f32 %v1621, %v1788
          %v1846 = vmul.f32 %v1622, %v1793
          %v1847 = vmul.f32 %v1623, %v1798
          %v1848 = vmul.f32 %v1624, %v1803
          %v1849 = vmul.f32 %v1625, %v1808
          %v1850 = vmul.f32 %v1626, %v1813
          %v1851 = vmul.f32 %v1627, %v1818
          %v1852 = vld [vmem:[#allocation10] sm:$0x1]
          %v1854 = vlaneseq
          %v1855 = vshrl.u32 %v1854, 7
          %v1856 = vsub.s32 0, %v1855
          %v1857 = vrot.slane %v1852, %v1856
          %v1859 = vadd.f32 %v1820, %v1857
          %v1860 = vadd.f32 %v1821, %v1857
          %v1861 = vadd.f32 %v1822, %v1857
          %v1862 = vadd.f32 %v1823, %v1857
          %v1863 = vadd.f32 %v1824, %v1857
          %v1864 = vadd.f32 %v1825, %v1857
          %v1865 = vadd.f32 %v1826, %v1857
          %v1866 = vadd.f32 %v1827, %v1857
          %v1867 = vadd.f32 %v1828, %v1857
          %v1868 = vadd.f32 %v1829, %v1857
          %v1869 = vadd.f32 %v1830, %v1857
          %v1870 = vadd.f32 %v1831, %v1857
          %v1871 = vadd.f32 %v1832, %v1857
          %v1872 = vadd.f32 %v1833, %v1857
          %v1873 = vadd.f32 %v1834, %v1857
          %v1874 = vadd.f32 %v1835, %v1857
          %v1875 = vadd.f32 %v1836, %v1857
          %v1876 = vadd.f32 %v1837, %v1857
          %v1877 = vadd.f32 %v1838, %v1857
          %v1878 = vadd.f32 %v1839, %v1857
          %v1879 = vadd.f32 %v1840, %v1857
          %v1880 = vadd.f32 %v1841, %v1857
          %v1881 = vadd.f32 %v1842, %v1857
          %v1882 = vadd.f32 %v1843, %v1857
          %v1883 = vadd.f32 %v1844, %v1857
          %v1884 = vadd.f32 %v1845, %v1857
          %v1885 = vadd.f32 %v1846, %v1857
          %v1886 = vadd.f32 %v1847, %v1857
          %v1887 = vadd.f32 %v1848, %v1857
          %v1888 = vadd.f32 %v1849, %v1857
          %v1889 = vadd.f32 %v1850, %v1857
          %v1890 = vadd.f32 %v1851, %v1857
          %vm1891 = vcmp.ge.f32.partialorder %v1859, 0.0
          %vm1892 = vcmp.ge.f32.partialorder %v1860, 0.0
          %vm1893 = vcmp.ge.f32.partialorder %v1861, 0.0
          %vm1894 = vcmp.ge.f32.partialorder %v1862, 0.0
          %vm1895 = vcmp.ge.f32.partialorder %v1863, 0.0
          %vm1896 = vcmp.ge.f32.partialorder %v1864, 0.0
          %vm1897 = vcmp.ge.f32.partialorder %v1865, 0.0
          %vm1898 = vcmp.ge.f32.partialorder %v1866, 0.0
          %vm1899 = vcmp.ge.f32.partialorder %v1867, 0.0
          %vm1900 = vcmp.ge.f32.partialorder %v1868, 0.0
          %vm1901 = vcmp.ge.f32.partialorder %v1869, 0.0
          %vm1902 = vcmp.ge.f32.partialorder %v1870, 0.0
          %vm1903 = vcmp.ge.f32.partialorder %v1871, 0.0
          %vm1904 = vcmp.ge.f32.partialorder %v1872, 0.0
          %vm1905 = vcmp.ge.f32.partialorder %v1873, 0.0
          %vm1906 = vcmp.ge.f32.partialorder %v1874, 0.0
          %vm1907 = vcmp.ge.f32.partialorder %v1875, 0.0
          %vm1908 = vcmp.ge.f32.partialorder %v1876, 0.0
          %vm1909 = vcmp.ge.f32.partialorder %v1877, 0.0
          %vm1910 = vcmp.ge.f32.partialorder %v1878, 0.0
          %vm1911 = vcmp.ge.f32.partialorder %v1879, 0.0
          %vm1912 = vcmp.ge.f32.partialorder %v1880, 0.0
          %vm1913 = vcmp.ge.f32.partialorder %v1881, 0.0
          %vm1914 = vcmp.ge.f32.partialorder %v1882, 0.0
          %vm1915 = vcmp.ge.f32.partialorder %v1883, 0.0
          %vm1916 = vcmp.ge.f32.partialorder %v1884, 0.0
          %vm1917 = vcmp.ge.f32.partialorder %v1885, 0.0
          %vm1918 = vcmp.ge.f32.partialorder %v1886, 0.0
          %vm1919 = vcmp.ge.f32.partialorder %v1887, 0.0
          %vm1920 = vcmp.ge.f32.partialorder %v1888, 0.0
          %vm1921 = vcmp.ge.f32.partialorder %v1889, 0.0
          %vm1922 = vcmp.ge.f32.partialorder %v1890, 0.0
          %v1923 = vmul.f32 %v1859, 0.2
          %v1924 = vmul.f32 %v1860, 0.2
          %v1925 = vmul.f32 %v1861, 0.2
          %v1926 = vmul.f32 %v1862, 0.2
          %v1927 = vmul.f32 %v1863, 0.2
          %v1928 = vmul.f32 %v1864, 0.2
          %v1929 = vmul.f32 %v1865, 0.2
          %v1930 = vmul.f32 %v1866, 0.2
          %v1931 = vmul.f32 %v1867, 0.2
          %v1932 = vmul.f32 %v1868, 0.2
          %v1933 = vmul.f32 %v1869, 0.2
          %v1934 = vmul.f32 %v1870, 0.2
          %v1935 = vmul.f32 %v1871, 0.2
          %v1936 = vmul.f32 %v1872, 0.2
          %v1937 = vmul.f32 %v1873, 0.2
          %v1938 = vmul.f32 %v1874, 0.2
          %v1939 = vmul.f32 %v1875, 0.2
          %v1940 = vmul.f32 %v1876, 0.2
          %v1941 = vmul.f32 %v1877, 0.2
          %v1942 = vmul.f32 %v1878, 0.2
          %v1943 = vmul.f32 %v1879, 0.2
          %v1944 = vmul.f32 %v1880, 0.2
          %v1945 = vmul.f32 %v1881, 0.2
          %v1946 = vmul.f32 %v1882, 0.2
          %v1947 = vmul.f32 %v1883, 0.2
          %v1948 = vmul.f32 %v1884, 0.2
          %v1949 = vmul.f32 %v1885, 0.2
          %v1950 = vmul.f32 %v1886, 0.2
          %v1951 = vmul.f32 %v1887, 0.2
          %v1952 = vmul.f32 %v1888, 0.2
          %v1953 = vmul.f32 %v1889, 0.2
          %v1954 = vmul.f32 %v1890, 0.2
          %v1955 = vsel %vm1891, %v1859, %v1923
          %v1956 = vsel %vm1892, %v1860, %v1924
          %v1957 = vsel %vm1893, %v1861, %v1925
          %v1958 = vsel %vm1894, %v1862, %v1926
          %v1959 = vsel %vm1895, %v1863, %v1927
          %v1960 = vsel %vm1896, %v1864, %v1928
          %v1961 = vsel %vm1897, %v1865, %v1929
          %v1962 = vsel %vm1898, %v1866, %v1930
          %v1963 = vsel %vm1899, %v1867, %v1931
          %v1964 = vsel %vm1900, %v1868, %v1932
          %v1965 = vsel %vm1901, %v1869, %v1933
          %v1966 = vsel %vm1902, %v1870, %v1934
          %v1967 = vsel %vm1903, %v1871, %v1935
          %v1968 = vsel %vm1904, %v1872, %v1936
          %v1969 = vsel %vm1905, %v1873, %v1937
          %v1970 = vsel %vm1906, %v1874, %v1938
          %v1971 = vsel %vm1907, %v1875, %v1939
          %v1972 = vsel %vm1908, %v1876, %v1940
          %v1973 = vsel %vm1909, %v1877, %v1941
          %v1974 = vsel %vm1910, %v1878, %v1942
          %v1975 = vsel %vm1911, %v1879, %v1943
          %v1976 = vsel %vm1912, %v1880, %v1944
          %v1977 = vsel %vm1913, %v1881, %v1945
          %v1978 = vsel %vm1914, %v1882, %v1946
          %v1979 = vsel %vm1915, %v1883, %v1947
          %v1980 = vsel %vm1916, %v1884, %v1948
          %v1981 = vsel %vm1917, %v1885, %v1949
          %v1982 = vsel %vm1918, %v1886, %v1950
          %v1983 = vsel %vm1919, %v1887, %v1951
          %v1984 = vsel %vm1920, %v1888, %v1952
          %v1985 = vsel %vm1921, %v1889, %v1953
          %v1986 = vsel %vm1922, %v1890, %v1954
          %v1987 = vpack.c.bf16 %v1956, %v1955
          %v1988 = vpack.c.bf16 %v1958, %v1957
          %v1989 = vpack.c.bf16 %v1960, %v1959
          %v1990 = vpack.c.bf16 %v1962, %v1961
          %v1991 = vpack.c.bf16 %v1964, %v1963
          %v1992 = vpack.c.bf16 %v1966, %v1965
          %v1993 = vpack.c.bf16 %v1968, %v1967
          %v1994 = vpack.c.bf16 %v1970, %v1969
          %v1995 = vpack.c.bf16 %v1972, %v1971
          %v1996 = vpack.c.bf16 %v1974, %v1973
          %v1997 = vpack.c.bf16 %v1976, %v1975
          %v1998 = vpack.c.bf16 %v1978, %v1977
          %v1999 = vpack.c.bf16 %v1980, %v1979
          %v2000 = vpack.c.bf16 %v1982, %v1981
          %v2001 = vpack.c.bf16 %v1984, %v1983
          %v2002 = vpack.c.bf16 %v1986, %v1985
          %v2019 = vunpack.c.l.b16 %v1987
          %v2020 = vunpack.c.h.b16 %v1987
          %v2021 = vunpack.c.l.b16 %v1988
          %v2022 = vunpack.c.h.b16 %v1988
          %v2023 = vunpack.c.l.b16 %v1989
          %v2024 = vunpack.c.h.b16 %v1989
          %v2025 = vunpack.c.l.b16 %v1990
          %v2026 = vunpack.c.h.b16 %v1990
          %v2027 = vunpack.c.l.b16 %v1991
          %v2028 = vunpack.c.h.b16 %v1991
          %v2029 = vunpack.c.l.b16 %v1992
          %v2030 = vunpack.c.h.b16 %v1992
          %v2031 = vunpack.c.l.b16 %v1993
          %v2032 = vunpack.c.h.b16 %v1993
          %v2033 = vunpack.c.l.b16 %v1994
          %v2034 = vunpack.c.h.b16 %v1994
          %v2035 = vunpack.c.l.b16 %v1995
          %v2036 = vunpack.c.h.b16 %v1995
          %v2037 = vunpack.c.l.b16 %v1996
          %v2038 = vunpack.c.h.b16 %v1996
          %v2039 = vunpack.c.l.b16 %v1997
          %v2040 = vunpack.c.h.b16 %v1997
          %v2041 = vunpack.c.l.b16 %v1998
          %v2042 = vunpack.c.h.b16 %v1998
          %v2043 = vunpack.c.l.b16 %v1999
          %v2044 = vunpack.c.h.b16 %v1999
          %v2045 = vunpack.c.l.b16 %v2000
          %v2046 = vunpack.c.h.b16 %v2000
          %v2047 = vunpack.c.l.b16 %v2001
          %v2048 = vunpack.c.h.b16 %v2001
          %v2049 = vunpack.c.l.b16 %v2002
          %v2050 = vunpack.c.h.b16 %v2002
          %v2051 = vpack.c.b16 %v2019, %v2019
          %v2052 = vpack.c.b16 %v2020, %v2020
          %v2053 = vpack.c.b16 %v2021, %v2021
          %v2054 = vpack.c.b16 %v2022, %v2022
          %v2055 = vpack.c.b16 %v2023, %v2023
          %v2056 = vpack.c.b16 %v2024, %v2024
          %v2057 = vpack.c.b16 %v2025, %v2025
          %v2058 = vpack.c.b16 %v2026, %v2026
          %v2059 = vpack.c.b16 %v2027, %v2027
          %v2060 = vpack.c.b16 %v2028, %v2028
          %v2061 = vpack.c.b16 %v2029, %v2029
          %v2062 = vpack.c.b16 %v2030, %v2030
          %v2063 = vpack.c.b16 %v2031, %v2031
          %v2064 = vpack.c.b16 %v2032, %v2032
          %v2065 = vpack.c.b16 %v2033, %v2033
          %v2066 = vpack.c.b16 %v2034, %v2034
          %v2067 = vpack.c.b16 %v2035, %v2035
          %v2068 = vpack.c.b16 %v2036, %v2036
          %v2069 = vpack.c.b16 %v2037, %v2037
          %v2070 = vpack.c.b16 %v2038, %v2038
          %v2071 = vpack.c.b16 %v2039, %v2039
          %v2072 = vpack.c.b16 %v2040, %v2040
          %v2073 = vpack.c.b16 %v2041, %v2041
          %v2074 = vpack.c.b16 %v2042, %v2042
          %v2075 = vpack.c.b16 %v2043, %v2043
          %v2076 = vpack.c.b16 %v2044, %v2044
          %v2077 = vpack.c.b16 %v2045, %v2045
          %v2078 = vpack.c.b16 %v2046, %v2046
          %v2079 = vpack.c.b16 %v2047, %v2047
          %v2080 = vpack.c.b16 %v2048, %v2048
          %v2081 = vpack.c.b16 %v2049, %v2049
          %v2082 = vpack.c.b16 %v2050, %v2050
          %vm2115 = vcmask 257024
          %2116 = vst.msk [vmem:[%s474] sm:$0xf] %vm2115, %v2051
          %2117 = vst.msk [vmem:[%s474 + $0x4] sm:$0xf] %vm2115, %v2052
          %2118 = vst.msk [vmem:[%s474 + $0x8] sm:$0xf] %vm2115, %v2053
          %2119 = vst.msk [vmem:[%s474 + $0xc] sm:$0xf] %vm2115, %v2054
          %2120 = vst.msk [vmem:[%s474 + $0x10] sm:$0xf] %vm2115, %v2055
          %2121 = vst.msk [vmem:[%s474 + $0x14] sm:$0xf] %vm2115, %v2056
          %2122 = vst.msk [vmem:[%s474 + $0x18] sm:$0xf] %vm2115, %v2057
          %2123 = vst.msk [vmem:[%s474 + $0x1c] sm:$0xf] %vm2115, %v2058
          %2124 = vst.msk [vmem:[%s474 + $0x20] sm:$0xf] %vm2115, %v2059
          %2125 = vst.msk [vmem:[%s474 + $0x24] sm:$0xf] %vm2115, %v2060
          %2126 = vst.msk [vmem:[%s474 + $0x28] sm:$0xf] %vm2115, %v2061
          %2127 = vst.msk [vmem:[%s474 + $0x2c] sm:$0xf] %vm2115, %v2062
          %2128 = vst.msk [vmem:[%s474 + $0x30] sm:$0xf] %vm2115, %v2063
          %2129 = vst.msk [vmem:[%s474 + $0x34] sm:$0xf] %vm2115, %v2064
          %2130 = vst.msk [vmem:[%s474 + $0x38] sm:$0xf] %vm2115, %v2065
          %2131 = vst.msk [vmem:[%s474 + $0x3c] sm:$0xf] %vm2115, %v2066
          %2132 = vst.msk [vmem:[%s474 + $0x40] sm:$0xf] %vm2115, %v2067
          %2133 = vst.msk [vmem:[%s474 + $0x44] sm:$0xf] %vm2115, %v2068
          %2134 = vst.msk [vmem:[%s474 + $0x48] sm:$0xf] %vm2115, %v2069
          %2135 = vst.msk [vmem:[%s474 + $0x4c] sm:$0xf] %vm2115, %v2070
          %2136 = vst.msk [vmem:[%s474 + $0x50] sm:$0xf] %vm2115, %v2071
          %2137 = vst.msk [vmem:[%s474 + $0x54] sm:$0xf] %vm2115, %v2072
          %2138 = vst.msk [vmem:[%s474 + $0x58] sm:$0xf] %vm2115, %v2073
          %2139 = vst.msk [vmem:[%s474 + $0x5c] sm:$0xf] %vm2115, %v2074
          %2140 = vst.msk [vmem:[%s474 + $0x60] sm:$0xf] %vm2115, %v2075
          %2141 = vst.msk [vmem:[%s474 + $0x64] sm:$0xf] %vm2115, %v2076
          %2142 = vst.msk [vmem:[%s474 + $0x68] sm:$0xf] %vm2115, %v2077
          %2143 = vst.msk [vmem:[%s474 + $0x6c] sm:$0xf] %vm2115, %v2078
          %2144 = vst.msk [vmem:[%s474 + $0x70] sm:$0xf] %vm2115, %v2079
          %2145 = vst.msk [vmem:[%s474 + $0x74] sm:$0xf] %vm2115, %v2080
          %2146 = vst.msk [vmem:[%s474 + $0x78] sm:$0xf] %vm2115, %v2081
          %2147 = vst.msk [vmem:[%s474 + $0x7c] sm:$0xf] %vm2115, %v2082
          %v2148 = vld [vmem:[#allocation11] sm:$0xff]
          %v2149 = vld [vmem:[#allocation11 + $0x8] sm:$0xff]
          %v2150 = vld [vmem:[#allocation11 + $0x10] sm:$0xff]
          %v2151 = vld [vmem:[#allocation11 + $0x18] sm:$0xff]
          %v2153 = vsel %vm1560, %v1955, 0
          %v2156 = vsel %vm1560, %v1956, 0
          %v2159 = vsel %vm1560, %v1957, 0
          %v2162 = vsel %vm1560, %v1958, 0
          %v2165 = vsel %vm1560, %v1959, 0
          %v2168 = vsel %vm1560, %v1960, 0
          %v2171 = vsel %vm1560, %v1961, 0
          %v2174 = vsel %vm1560, %v1962, 0
          %v2177 = vsel %vm1560, %v1963, 0
          %v2180 = vsel %vm1560, %v1964, 0
          %v2183 = vsel %vm1560, %v1965, 0
          %v2186 = vsel %vm1560, %v1966, 0
          %v2189 = vsel %vm1560, %v1967, 0
          %v2192 = vsel %vm1560, %v1968, 0
          %v2195 = vsel %vm1560, %v1969, 0
          %v2198 = vsel %vm1560, %v1970, 0
          %v2201 = vsel %vm1560, %v1971, 0
          %v2204 = vsel %vm1560, %v1972, 0
          %v2207 = vsel %vm1560, %v1973, 0
          %v2210 = vsel %vm1560, %v1974, 0
          %v2213 = vsel %vm1560, %v1975, 0
          %v2216 = vsel %vm1560, %v1976, 0
          %v2219 = vsel %vm1560, %v1977, 0
          %v2222 = vsel %vm1560, %v1978, 0
          %v2225 = vsel %vm1560, %v1979, 0
          %v2228 = vsel %vm1560, %v1980, 0
          %v2231 = vsel %vm1560, %v1981, 0
          %v2234 = vsel %vm1560, %v1982, 0
          %v2237 = vsel %vm1560, %v1983, 0
          %v2240 = vsel %vm1560, %v1984, 0
          %v2243 = vsel %vm1560, %v1985, 0
          %v2246 = vsel %vm1560, %v1986, 0
          %2248 = vmatprep.subr.mxu0 0.0
          %2249 = vmatpush1.msra.mxu0 %v2148
          %2250 = vmatprep.subr.mxu0 0.0
          %2251 = vmatpush1.msra.mxu0 %v2149
          %2252 = vmatprep.subr.mxu0 0.0
          %2253 = vmatpush1.msra.mxu0 %v2150
          %2254 = vmatprep.subr.mxu0 0.0
          %2255 = vmatpush1.msra.mxu0 %v2151
          %2256 = vmatprep.subr.mxu0 0.0
          %2257 = vmatpush1.msra.mxu0 0.0
          %2258 = vmatprep.subr.mxu0 0.0
          %2259 = vmatpush1.msra.mxu0 0.0
          %2260 = vmatprep.subr.mxu0 0.0
          %2261 = vmatpush1.msra.mxu0 0.0
          %2262 = vmatprep.subr.mxu0 0.0
          %2263 = vmatpush1.msra.mxu0 0.0
          %2264 = vmatprep.subr.mxu0 0.0
          %2265 = vmatpush1.msra.mxu0 0.0
          %2266 = vmatprep.subr.mxu0 0.0
          %2267 = vmatpush1.msra.mxu0 0.0
          %2268 = vmatprep.subr.mxu0 0.0
          %2269 = vmatpush1.msra.mxu0 0.0
          %2270 = vmatprep.subr.mxu0 0.0
          %2271 = vmatpush1.msra.mxu0 0.0
          %2272 = vmatprep.subr.mxu0 0.0
          %2273 = vmatpush1.msra.mxu0 0.0
          %2274 = vmatprep.subr.mxu0 0.0
          %2275 = vmatpush1.msra.mxu0 0.0
          %2276 = vmatprep.subr.mxu0 0.0
          %2277 = vmatpush1.msra.mxu0 0.0
          %2278 = vmatprep.subr.mxu0 0.0
          %2279 = vmatpush1.msra.mxu0 0.0
          %2280 = vmatprep.subr.mxu0 0.0
          %2281 = vmatpush1.msra.mxu0 0.0
          %2282 = vmatprep.subr.mxu0 0.0
          %2283 = vmatpush1.msra.mxu0 0.0
          %2284 = vmatprep.subr.mxu0 0.0
          %2285 = vmatpush1.msra.mxu0 0.0
          %2286 = vmatprep.subr.mxu0 0.0
          %2287 = vmatpush1.msra.mxu0 0.0
          %2288 = vmatprep.subr.mxu0 0.0
          %2289 = vmatpush1.msra.mxu0 0.0
          %2290 = vmatprep.subr.mxu0 0.0
          %2291 = vmatpush1.msra.mxu0 0.0
          %2292 = vmatprep.subr.mxu0 0.0
          %2293 = vmatpush1.msra.mxu0 0.0
          %2294 = vmatprep.subr.mxu0 0.0
          %2295 = vmatpush1.msra.mxu0 0.0
          %2296 = vmatprep.subr.mxu0 0.0
          %2297 = vmatpush1.msra.mxu0 0.0
          %2298 = vmatprep.subr.mxu0 0.0
          %2299 = vmatpush1.msra.mxu0 0.0
          %2300 = vmatprep.subr.mxu0 0.0
          %2301 = vmatpush1.msra.mxu0 0.0
          %2302 = vmatprep.subr.mxu0 0.0
          %2303 = vmatpush1.msra.mxu0 0.0
          %2304 = vmatprep.subr.mxu0 0.0
          %2305 = vmatpush1.msra.mxu0 0.0
          %2306 = vmatprep.subr.mxu0 0.0
          %2307 = vmatpush1.msra.mxu0 0.0
          %2308 = vmatprep.subr.mxu0 0.0
          %2309 = vmatpush1.msra.mxu0 0.0
          %2310 = vmatprep.subr.mxu0 0.0
          %2311 = vmatpush1.msra.mxu0 0.0
          %2312 = vmatprep.mubr.f32.mxu0 0.0
          %2313 = vmatmul.mubr.f32.gmra.mrb[0].mxu0 %v2153
          %v2314 = vpop.f32.mrb[0].mxu0
          %v2315 = vadd.f32 0.0, %v2314
          %v2316 = vpop.f32.mrb[0].mxu0
          %2317 = vmatprep.mubr.f32.mxu0 0.0
          %2318 = vmatmul.mubr.f32.gmra.mrb[0].mxu0 %v2156
          %v2319 = vpop.f32.mrb[0].mxu0
          %v2320 = vadd.f32 0.0, %v2319
          %v2321 = vpop.f32.mrb[0].mxu0
          %2322 = vmatprep.mubr.f32.mxu0 0.0
          %2323 = vmatmul.mubr.f32.gmra.mrb[0].mxu0 %v2159
          %v2324 = vpop.f32.mrb[0].mxu0
          %v2325 = vadd.f32 0.0, %v2324
          %v2326 = vpop.f32.mrb[0].mxu0
          %2327 = vmatprep.mubr.f32.mxu0 0.0
          %2328 = vmatmul.mubr.f32.gmra.mrb[0].mxu0 %v2162
          %v2329 = vpop.f32.mrb[0].mxu0
          %v2330 = vadd.f32 0.0, %v2329
          %v2331 = vpop.f32.mrb[0].mxu0
          %2332 = vmatprep.mubr.f32.mxu0 0.0
          %2333 = vmatmul.mubr.f32.gmra.mrb[0].mxu0 %v2165
          %v2334 = vpop.f32.mrb[0].mxu0
          %v2335 = vadd.f32 0.0, %v2334
          %v2336 = vpop.f32.mrb[0].mxu0
          %2337 = vmatprep.mubr.f32.mxu0 0.0
          %2338 = vmatmul.mubr.f32.gmra.mrb[0].mxu0 %v2168
          %v2339 = vpop.f32.mrb[0].mxu0
          %v2340 = vadd.f32 0.0, %v2339
          %v2341 = vpop.f32.mrb[0].mxu0
          %2342 = vmatprep.mubr.f32.mxu0 0.0
          %2343 = vmatmul.mubr.f32.gmra.mrb[0].mxu0 %v2171
          %v2344 = vpop.f32.mrb[0].mxu0
          %v2345 = vadd.f32 0.0, %v2344
          %v2346 = vpop.f32.mrb[0].mxu0
          %2347 = vmatprep.mubr.f32.mxu0 0.0
          %2348 = vmatmul.mubr.f32.gmra.mrb[0].mxu0 %v2174
          %v2349 = vpop.f32.mrb[0].mxu0
          %v2350 = vadd.f32 0.0, %v2349
          %v2351 = vpop.f32.mrb[0].mxu0
          %2352 = vmatprep.mubr.f32.mxu0 0.0
          %2353 = vmatmul.mubr.f32.gmra.mrb[0].mxu0 %v2177
          %v2354 = vpop.f32.mrb[0].mxu0
          %v2355 = vadd.f32 0.0, %v2354
          %v2356 = vpop.f32.mrb[0].mxu0
          %2357 = vmatprep.mubr.f32.mxu0 0.0
          %2358 = vmatmul.mubr.f32.gmra.mrb[0].mxu0 %v2180
          %v2359 = vpop.f32.mrb[0].mxu0
          %v2360 = vadd.f32 0.0, %v2359
          %v2361 = vpop.f32.mrb[0].mxu0
          %2362 = vmatprep.mubr.f32.mxu0 0.0
          %2363 = vmatmul.mubr.f32.gmra.mrb[0].mxu0 %v2183
          %v2364 = vpop.f32.mrb[0].mxu0
          %v2365 = vadd.f32 0.0, %v2364
          %v2366 = vpop.f32.mrb[0].mxu0
          %2367 = vmatprep.mubr.f32.mxu0 0.0
          %2368 = vmatmul.mubr.f32.gmra.mrb[0].mxu0 %v2186
          %v2369 = vpop.f32.mrb[0].mxu0
          %v2370 = vadd.f32 0.0, %v2369
          %v2371 = vpop.f32.mrb[0].mxu0
          %2372 = vmatprep.mubr.f32.mxu0 0.0
          %2373 = vmatmul.mubr.f32.gmra.mrb[0].mxu0 %v2189
          %v2374 = vpop.f32.mrb[0].mxu0
          %v2375 = vadd.f32 0.0, %v2374
          %v2376 = vpop.f32.mrb[0].mxu0
          %2377 = vmatprep.mubr.f32.mxu0 0.0
          %2378 = vmatmul.mubr.f32.gmra.mrb[0].mxu0 %v2192
          %v2379 = vpop.f32.mrb[0].mxu0
          %v2380 = vadd.f32 0.0, %v2379
          %v2381 = vpop.f32.mrb[0].mxu0
          %2382 = vmatprep.mubr.f32.mxu0 0.0
          %2383 = vmatmul.mubr.f32.gmra.mrb[0].mxu0 %v2195
          %v2384 = vpop.f32.mrb[0].mxu0
          %v2385 = vadd.f32 0.0, %v2384
          %v2386 = vpop.f32.mrb[0].mxu0
          %2387 = vmatprep.mubr.f32.mxu0 0.0
          %2388 = vmatmul.mubr.f32.gmra.mrb[0].mxu0 %v2198
          %v2389 = vpop.f32.mrb[0].mxu0
          %v2390 = vadd.f32 0.0, %v2389
          %v2391 = vpop.f32.mrb[0].mxu0
          %2392 = vmatprep.mubr.f32.mxu0 0.0
          %2393 = vmatmul.mubr.f32.gmra.mrb[0].mxu0 %v2201
          %v2394 = vpop.f32.mrb[0].mxu0
          %v2395 = vadd.f32 0.0, %v2394
          %v2396 = vpop.f32.mrb[0].mxu0
          %2397 = vmatprep.mubr.f32.mxu0 0.0
          %2398 = vmatmul.mubr.f32.gmra.mrb[0].mxu0 %v2204
          %v2399 = vpop.f32.mrb[0].mxu0
          %v2400 = vadd.f32 0.0, %v2399
          %v2401 = vpop.f32.mrb[0].mxu0
          %2402 = vmatprep.mubr.f32.mxu0 0.0
          %2403 = vmatmul.mubr.f32.gmra.mrb[0].mxu0 %v2207
          %v2404 = vpop.f32.mrb[0].mxu0
          %v2405 = vadd.f32 0.0, %v2404
          %v2406 = vpop.f32.mrb[0].mxu0
          %2407 = vmatprep.mubr.f32.mxu0 0.0
          %2408 = vmatmul.mubr.f32.gmra.mrb[0].mxu0 %v2210
          %v2409 = vpop.f32.mrb[0].mxu0
          %v2410 = vadd.f32 0.0, %v2409
          %v2411 = vpop.f32.mrb[0].mxu0
          %2412 = vmatprep.mubr.f32.mxu0 0.0
          %2413 = vmatmul.mubr.f32.gmra.mrb[0].mxu0 %v2213
          %v2414 = vpop.f32.mrb[0].mxu0
          %v2415 = vadd.f32 0.0, %v2414
          %v2416 = vpop.f32.mrb[0].mxu0
          %2417 = vmatprep.mubr.f32.mxu0 0.0
          %2418 = vmatmul.mubr.f32.gmra.mrb[0].mxu0 %v2216
          %v2419 = vpop.f32.mrb[0].mxu0
          %v2420 = vadd.f32 0.0, %v2419
          %v2421 = vpop.f32.mrb[0].mxu0
          %2422 = vmatprep.mubr.f32.mxu0 0.0
          %2423 = vmatmul.mubr.f32.gmra.mrb[0].mxu0 %v2219
          %v2424 = vpop.f32.mrb[0].mxu0
          %v2425 = vadd.f32 0.0, %v2424
          %v2426 = vpop.f32.mrb[0].mxu0
          %2427 = vmatprep.mubr.f32.mxu0 0.0
          %2428 = vmatmul.mubr.f32.gmra.mrb[0].mxu0 %v2222
          %v2429 = vpop.f32.mrb[0].mxu0
          %v2430 = vadd.f32 0.0, %v2429
          %v2431 = vpop.f32.mrb[0].mxu0
          %2432 = vmatprep.mubr.f32.mxu0 0.0
          %2433 = vmatmul.mubr.f32.gmra.mrb[0].mxu0 %v2225
          %v2434 = vpop.f32.mrb[0].mxu0
          %v2435 = vadd.f32 0.0, %v2434
          %v2436 = vpop.f32.mrb[0].mxu0
          %2437 = vmatprep.mubr.f32.mxu0 0.0
          %2438 = vmatmul.mubr.f32.gmra.mrb[0].mxu0 %v2228
          %v2439 = vpop.f32.mrb[0].mxu0
          %v2440 = vadd.f32 0.0, %v2439
          %v2441 = vpop.f32.mrb[0].mxu0
          %2442 = vmatprep.mubr.f32.mxu0 0.0
          %2443 = vmatmul.mubr.f32.gmra.mrb[0].mxu0 %v2231
          %v2444 = vpop.f32.mrb[0].mxu0
          %v2445 = vadd.f32 0.0, %v2444
          %v2446 = vpop.f32.mrb[0].mxu0
          %2447 = vmatprep.mubr.f32.mxu0 0.0
          %2448 = vmatmul.mubr.f32.gmra.mrb[0].mxu0 %v2234
          %v2449 = vpop.f32.mrb[0].mxu0
          %v2450 = vadd.f32 0.0, %v2449
          %v2451 = vpop.f32.mrb[0].mxu0
          %2452 = vmatprep.mubr.f32.mxu0 0.0
          %2453 = vmatmul.mubr.f32.gmra.mrb[0].mxu0 %v2237
          %v2454 = vpop.f32.mrb[0].mxu0
          %v2455 = vadd.f32 0.0, %v2454
          %v2456 = vpop.f32.mrb[0].mxu0
          %2457 = vmatprep.mubr.f32.mxu0 0.0
          %2458 = vmatmul.mubr.f32.gmra.mrb[0].mxu0 %v2240
          %v2459 = vpop.f32.mrb[0].mxu0
          %v2460 = vadd.f32 0.0, %v2459
          %v2461 = vpop.f32.mrb[0].mxu0
          %2462 = vmatprep.mubr.f32.mxu0 0.0
          %2463 = vmatmul.mubr.f32.gmra.mrb[0].mxu0 %v2243
          %v2464 = vpop.f32.mrb[0].mxu0
          %v2465 = vadd.f32 0.0, %v2464
          %v2466 = vpop.f32.mrb[0].mxu0
          %2467 = vmatprep.mubr.f32.mxu0 0.0
          %2468 = vmatmul.mubr.f32.gmra.mrb[0].mxu0 %v2246
          %v2469 = vpop.f32.mrb[0].mxu0
          %v2470 = vadd.f32 0.0, %v2469
          %v2471 = vpop.f32.mrb[0].mxu0
          %2472 = vdwg.mxu0
          %v2473 = vpack.c.bf16 %v2320, %v2315
          %v2474 = vpack.c.bf16 %v2330, %v2325
          %v2475 = vpack.c.bf16 %v2340, %v2335
          %v2476 = vpack.c.bf16 %v2350, %v2345
          %v2477 = vpack.c.bf16 %v2360, %v2355
          %v2478 = vpack.c.bf16 %v2370, %v2365
          %v2479 = vpack.c.bf16 %v2380, %v2375
          %v2480 = vpack.c.bf16 %v2390, %v2385
          %v2481 = vpack.c.bf16 %v2400, %v2395
          %v2482 = vpack.c.bf16 %v2410, %v2405
          %v2483 = vpack.c.bf16 %v2420, %v2415
          %v2484 = vpack.c.bf16 %v2430, %v2425
          %v2485 = vpack.c.bf16 %v2440, %v2435
          %v2486 = vpack.c.bf16 %v2450, %v2445
          %v2487 = vpack.c.bf16 %v2460, %v2455
          %v2488 = vpack.c.bf16 %v2470, %v2465
          %v2505 = vunpack.c.l.b16 %v2473
          %v2506 = vunpack.c.h.b16 %v2473
          %v2507 = vunpack.c.l.b16 %v2474
          %v2508 = vunpack.c.h.b16 %v2474
          %v2509 = vunpack.c.l.b16 %v2475
          %v2510 = vunpack.c.h.b16 %v2475
          %v2511 = vunpack.c.l.b16 %v2476
          %v2512 = vunpack.c.h.b16 %v2476
          %v2513 = vunpack.c.l.b16 %v2477
          %v2514 = vunpack.c.h.b16 %v2477
          %v2515 = vunpack.c.l.b16 %v2478
          %v2516 = vunpack.c.h.b16 %v2478
          %v2517 = vunpack.c.l.b16 %v2479
          %v2518 = vunpack.c.h.b16 %v2479
          %v2519 = vunpack.c.l.b16 %v2480
          %v2520 = vunpack.c.h.b16 %v2480
          %v2521 = vunpack.c.l.b16 %v2481
          %v2522 = vunpack.c.h.b16 %v2481
          %v2523 = vunpack.c.l.b16 %v2482
          %v2524 = vunpack.c.h.b16 %v2482
          %v2525 = vunpack.c.l.b16 %v2483
          %v2526 = vunpack.c.h.b16 %v2483
          %v2527 = vunpack.c.l.b16 %v2484
          %v2528 = vunpack.c.h.b16 %v2484
          %v2529 = vunpack.c.l.b16 %v2485
          %v2530 = vunpack.c.h.b16 %v2485
          %v2531 = vunpack.c.l.b16 %v2486
          %v2532 = vunpack.c.h.b16 %v2486
          %v2533 = vunpack.c.l.b16 %v2487
          %v2534 = vunpack.c.h.b16 %v2487
          %v2535 = vunpack.c.l.b16 %v2488
          %v2536 = vunpack.c.h.b16 %v2488
          %v2537 = vpack.c.b16 %v2505, %v2505
          %v2538 = vpack.c.b16 %v2506, %v2506
          %v2539 = vpack.c.b16 %v2507, %v2507
          %v2540 = vpack.c.b16 %v2508, %v2508
          %v2541 = vpack.c.b16 %v2509, %v2509
          %v2542 = vpack.c.b16 %v2510, %v2510
          %v2543 = vpack.c.b16 %v2511, %v2511
          %v2544 = vpack.c.b16 %v2512, %v2512
          %v2545 = vpack.c.b16 %v2513, %v2513
          %v2546 = vpack.c.b16 %v2514, %v2514
          %v2547 = vpack.c.b16 %v2515, %v2515
          %v2548 = vpack.c.b16 %v2516, %v2516
          %v2549 = vpack.c.b16 %v2517, %v2517
          %v2550 = vpack.c.b16 %v2518, %v2518
          %v2551 = vpack.c.b16 %v2519, %v2519
          %v2552 = vpack.c.b16 %v2520, %v2520
          %v2553 = vpack.c.b16 %v2521, %v2521
          %v2554 = vpack.c.b16 %v2522, %v2522
          %v2555 = vpack.c.b16 %v2523, %v2523
          %v2556 = vpack.c.b16 %v2524, %v2524
          %v2557 = vpack.c.b16 %v2525, %v2525
          %v2558 = vpack.c.b16 %v2526, %v2526
          %v2559 = vpack.c.b16 %v2527, %v2527
          %v2560 = vpack.c.b16 %v2528, %v2528
          %v2561 = vpack.c.b16 %v2529, %v2529
          %v2562 = vpack.c.b16 %v2530, %v2530
          %v2563 = vpack.c.b16 %v2531, %v2531
          %v2564 = vpack.c.b16 %v2532, %v2532
          %v2565 = vpack.c.b16 %v2533, %v2533
          %v2566 = vpack.c.b16 %v2534, %v2534
          %v2567 = vpack.c.b16 %v2535, %v2535
          %v2568 = vpack.c.b16 %v2536, %v2536
          %vm2601 = vcmask 60416
          %2602 = vst.msk [vmem:[%s481] sm:$0xf] %vm2601, %v2537
          %2603 = vst.msk [vmem:[%s481 + $0x4] sm:$0xf] %vm2601, %v2538
          %2604 = vst.msk [vmem:[%s481 + $0x8] sm:$0xf] %vm2601, %v2539
          %2605 = vst.msk [vmem:[%s481 + $0xc] sm:$0xf] %vm2601, %v2540
          %2606 = vst.msk [vmem:[%s481 + $0x10] sm:$0xf] %vm2601, %v2541
          %2607 = vst.msk [vmem:[%s481 + $0x14] sm:$0xf] %vm2601, %v2542
          %2608 = vst.msk [vmem:[%s481 + $0x18] sm:$0xf] %vm2601, %v2543
          %2609 = vst.msk [vmem:[%s481 + $0x1c] sm:$0xf] %vm2601, %v2544
          %2610 = vst.msk [vmem:[%s481 + $0x20] sm:$0xf] %vm2601, %v2545
          %2611 = vst.msk [vmem:[%s481 + $0x24] sm:$0xf] %vm2601, %v2546
          %2612 = vst.msk [vmem:[%s481 + $0x28] sm:$0xf] %vm2601, %v2547
          %2613 = vst.msk [vmem:[%s481 + $0x2c] sm:$0xf] %vm2601, %v2548
          %2614 = vst.msk [vmem:[%s481 + $0x30] sm:$0xf] %vm2601, %v2549
          %2615 = vst.msk [vmem:[%s481 + $0x34] sm:$0xf] %vm2601, %v2550
          %2616 = vst.msk [vmem:[%s481 + $0x38] sm:$0xf] %vm2601, %v2551
          %2617 = vst.msk [vmem:[%s481 + $0x3c] sm:$0xf] %vm2601, %v2552
          %2618 = vst.msk [vmem:[%s481 + $0x40] sm:$0xf] %vm2601, %v2553
          %2619 = vst.msk [vmem:[%s481 + $0x44] sm:$0xf] %vm2601, %v2554
          %2620 = vst.msk [vmem:[%s481 + $0x48] sm:$0xf] %vm2601, %v2555
          %2621 = vst.msk [vmem:[%s481 + $0x4c] sm:$0xf] %vm2601, %v2556
          %2622 = vst.msk [vmem:[%s481 + $0x50] sm:$0xf] %vm2601, %v2557
          %2623 = vst.msk [vmem:[%s481 + $0x54] sm:$0xf] %vm2601, %v2558
          %2624 = vst.msk [vmem:[%s481 + $0x58] sm:$0xf] %vm2601, %v2559
          %2625 = vst.msk [vmem:[%s481 + $0x5c] sm:$0xf] %vm2601, %v2560
          %2626 = vst.msk [vmem:[%s481 + $0x60] sm:$0xf] %vm2601, %v2561
          %2627 = vst.msk [vmem:[%s481 + $0x64] sm:$0xf] %vm2601, %v2562
          %2628 = vst.msk [vmem:[%s481 + $0x68] sm:$0xf] %vm2601, %v2563
          %2629 = vst.msk [vmem:[%s481 + $0x6c] sm:$0xf] %vm2601, %v2564
          %2630 = vst.msk [vmem:[%s481 + $0x70] sm:$0xf] %vm2601, %v2565
          %2631 = vst.msk [vmem:[%s481 + $0x74] sm:$0xf] %vm2601, %v2566
          %2632 = vst.msk [vmem:[%s481 + $0x78] sm:$0xf] %vm2601, %v2567
          %2633 = vst.msk [vmem:[%s481 + $0x7c] sm:$0xf] %vm2601, %v2568
          %v2634 = vld [vmem:[#allocation13] sm:$0xff]
          %v2635 = vld [vmem:[#allocation13 + $0x8] sm:$0xff]
          %v2636 = vld [vmem:[#allocation13 + $0x10] sm:$0xff]
          %v2637 = vld [vmem:[#allocation13 + $0x18] sm:$0xff]
          %v2638 = vld [vmem:[#allocation3] sm:$0x1]
          %v2640 = vlaneseq
          %v2641 = vshrl.u32 %v2640, 7
          %v2642 = vsub.s32 0, %v2641
          %v2643 = vrot.slane %v2638, %v2642
          %2645 = vmatprep.subr.mxu0 0.0
          %2646 = vmatpush1.msra.mxu0 %v2634
          %2647 = vmatprep.subr.mxu0 0.0
          %2648 = vmatpush1.msra.mxu0 %v2635
          %2649 = vmatprep.subr.mxu0 0.0
          %2650 = vmatpush1.msra.mxu0 %v2636
          %2651 = vmatprep.subr.mxu0 0.0
          %2652 = vmatpush1.msra.mxu0 %v2637
          %2653 = vmatprep.subr.mxu0 0.0
          %2654 = vmatpush1.msra.mxu0 0.0
          %2655 = vmatprep.subr.mxu0 0.0
          %2656 = vmatpush1.msra.mxu0 0.0
          %2657 = vmatprep.subr.mxu0 0.0
          %2658 = vmatpush1.msra.mxu0 0.0
          %2659 = vmatprep.subr.mxu0 0.0
          %2660 = vmatpush1.msra.mxu0 0.0
          %2661 = vmatprep.subr.mxu0 0.0
          %2662 = vmatpush1.msra.mxu0 0.0
          %2663 = vmatprep.subr.mxu0 0.0
          %2664 = vmatpush1.msra.mxu0 0.0
          %2665 = vmatprep.subr.mxu0 0.0
          %2666 = vmatpush1.msra.mxu0 0.0
          %2667 = vmatprep.subr.mxu0 0.0
          %2668 = vmatpush1.msra.mxu0 0.0
          %2669 = vmatprep.subr.mxu0 0.0
          %2670 = vmatpush1.msra.mxu0 0.0
          %2671 = vmatprep.subr.mxu0 0.0
          %2672 = vmatpush1.msra.mxu0 0.0
          %2673 = vmatprep.subr.mxu0 0.0
          %2674 = vmatpush1.msra.mxu0 0.0
          %2675 = vmatprep.subr.mxu0 0.0
          %2676 = vmatpush1.msra.mxu0 0.0
          %2677 = vmatprep.subr.mxu0 0.0
          %2678 = vmatpush1.msra.mxu0 0.0
          %2679 = vmatprep.subr.mxu0 0.0
          %2680 = vmatpush1.msra.mxu0 0.0
          %2681 = vmatprep.subr.mxu0 0.0
          %2682 = vmatpush1.msra.mxu0 0.0
          %2683 = vmatprep.subr.mxu0 0.0
          %2684 = vmatpush1.msra.mxu0 0.0
          %2685 = vmatprep.subr.mxu0 0.0
          %2686 = vmatpush1.msra.mxu0 0.0
          %2687 = vmatprep.subr.mxu0 0.0
          %2688 = vmatpush1.msra.mxu0 0.0
          %2689 = vmatprep.subr.mxu0 0.0
          %2690 = vmatpush1.msra.mxu0 0.0
          %2691 = vmatprep.subr.mxu0 0.0
          %2692 = vmatpush1.msra.mxu0 0.0
          %2693 = vmatprep.subr.mxu0 0.0
          %2694 = vmatpush1.msra.mxu0 0.0
          %2695 = vmatprep.subr.mxu0 0.0
          %2696 = vmatpush1.msra.mxu0 0.0
          %2697 = vmatprep.subr.mxu0 0.0
          %2698 = vmatpush1.msra.mxu0 0.0
          %2699 = vmatprep.subr.mxu0 0.0
          %2700 = vmatpush1.msra.mxu0 0.0
          %2701 = vmatprep.subr.mxu0 0.0
          %2702 = vmatpush1.msra.mxu0 0.0
          %2703 = vmatprep.subr.mxu0 0.0
          %2704 = vmatpush1.msra.mxu0 0.0
          %2705 = vmatprep.subr.mxu0 0.0
          %2706 = vmatpush1.msra.mxu0 0.0
          %2707 = vmatprep.subr.mxu0 0.0
          %2708 = vmatpush1.msra.mxu0 0.0
          %2709 = vmatprep.mubr.f32.mxu0 0.0
          %2710 = vmatmul.mubr.f32.gmra.mrb[0].mxu0 %v2153
          %v2711 = vpop.f32.mrb[0].mxu0
          %v2712 = vadd.f32 %v2643, %v2711
          %v2713 = vpop.f32.mrb[0].mxu0
          %2714 = vmatprep.mubr.f32.mxu0 0.0
          %2715 = vmatmul.mubr.f32.gmra.mrb[0].mxu0 %v2156
          %v2716 = vpop.f32.mrb[0].mxu0
          %v2717 = vadd.f32 %v2643, %v2716
          %v2718 = vpop.f32.mrb[0].mxu0
          %2719 = vmatprep.mubr.f32.mxu0 0.0
          %2720 = vmatmul.mubr.f32.gmra.mrb[0].mxu0 %v2159
          %v2721 = vpop.f32.mrb[0].mxu0
          %v2722 = vadd.f32 %v2643, %v2721
          %v2723 = vpop.f32.mrb[0].mxu0
          %2724 = vmatprep.mubr.f32.mxu0 0.0
          %2725 = vmatmul.mubr.f32.gmra.mrb[0].mxu0 %v2162
          %v2726 = vpop.f32.mrb[0].mxu0
          %v2727 = vadd.f32 %v2643, %v2726
          %v2728 = vpop.f32.mrb[0].mxu0
          %2729 = vmatprep.mubr.f32.mxu0 0.0
          %2730 = vmatmul.mubr.f32.gmra.mrb[0].mxu0 %v2165
          %v2731 = vpop.f32.mrb[0].mxu0
          %v2732 = vadd.f32 %v2643, %v2731
          %v2733 = vpop.f32.mrb[0].mxu0
          %2734 = vmatprep.mubr.f32.mxu0 0.0
          %2735 = vmatmul.mubr.f32.gmra.mrb[0].mxu0 %v2168
          %v2736 = vpop.f32.mrb[0].mxu0
          %v2737 = vadd.f32 %v2643, %v2736
          %v2738 = vpop.f32.mrb[0].mxu0
          %2739 = vmatprep.mubr.f32.mxu0 0.0
          %2740 = vmatmul.mubr.f32.gmra.mrb[0].mxu0 %v2171
          %v2741 = vpop.f32.mrb[0].mxu0
          %v2742 = vadd.f32 %v2643, %v2741
          %v2743 = vpop.f32.mrb[0].mxu0
          %2744 = vmatprep.mubr.f32.mxu0 0.0
          %2745 = vmatmul.mubr.f32.gmra.mrb[0].mxu0 %v2174
          %v2746 = vpop.f32.mrb[0].mxu0
          %v2747 = vadd.f32 %v2643, %v2746
          %v2748 = vpop.f32.mrb[0].mxu0
          %2749 = vmatprep.mubr.f32.mxu0 0.0
          %2750 = vmatmul.mubr.f32.gmra.mrb[0].mxu0 %v2177
          %v2751 = vpop.f32.mrb[0].mxu0
          %v2752 = vadd.f32 %v2643, %v2751
          %v2753 = vpop.f32.mrb[0].mxu0
          %2754 = vmatprep.mubr.f32.mxu0 0.0
          %2755 = vmatmul.mubr.f32.gmra.mrb[0].mxu0 %v2180
          %v2756 = vpop.f32.mrb[0].mxu0
          %v2757 = vadd.f32 %v2643, %v2756
          %v2758 = vpop.f32.mrb[0].mxu0
          %2759 = vmatprep.mubr.f32.mxu0 0.0
          %2760 = vmatmul.mubr.f32.gmra.mrb[0].mxu0 %v2183
          %v2761 = vpop.f32.mrb[0].mxu0
          %v2762 = vadd.f32 %v2643, %v2761
          %v2763 = vpop.f32.mrb[0].mxu0
          %2764 = vmatprep.mubr.f32.mxu0 0.0
          %2765 = vmatmul.mubr.f32.gmra.mrb[0].mxu0 %v2186
          %v2766 = vpop.f32.mrb[0].mxu0
          %v2767 = vadd.f32 %v2643, %v2766
          %v2768 = vpop.f32.mrb[0].mxu0
          %2769 = vmatprep.mubr.f32.mxu0 0.0
          %2770 = vmatmul.mubr.f32.gmra.mrb[0].mxu0 %v2189
          %v2771 = vpop.f32.mrb[0].mxu0
          %v2772 = vadd.f32 %v2643, %v2771
          %v2773 = vpop.f32.mrb[0].mxu0
          %2774 = vmatprep.mubr.f32.mxu0 0.0
          %2775 = vmatmul.mubr.f32.gmra.mrb[0].mxu0 %v2192
          %v2776 = vpop.f32.mrb[0].mxu0
          %v2777 = vadd.f32 %v2643, %v2776
          %v2778 = vpop.f32.mrb[0].mxu0
          %2779 = vmatprep.mubr.f32.mxu0 0.0
          %2780 = vmatmul.mubr.f32.gmra.mrb[0].mxu0 %v2195
          %v2781 = vpop.f32.mrb[0].mxu0
          %v2782 = vadd.f32 %v2643, %v2781
          %v2783 = vpop.f32.mrb[0].mxu0
          %2784 = vmatprep.mubr.f32.mxu0 0.0
          %2785 = vmatmul.mubr.f32.gmra.mrb[0].mxu0 %v2198
          %v2786 = vpop.f32.mrb[0].mxu0
          %v2787 = vadd.f32 %v2643, %v2786
          %v2788 = vpop.f32.mrb[0].mxu0
          %2789 = vmatprep.mubr.f32.mxu0 0.0
          %2790 = vmatmul.mubr.f32.gmra.mrb[0].mxu0 %v2201
          %v2791 = vpop.f32.mrb[0].mxu0
          %v2792 = vadd.f32 %v2643, %v2791
          %v2793 = vpop.f32.mrb[0].mxu0
          %2794 = vmatprep.mubr.f32.mxu0 0.0
          %2795 = vmatmul.mubr.f32.gmra.mrb[0].mxu0 %v2204
          %v2796 = vpop.f32.mrb[0].mxu0
          %v2797 = vadd.f32 %v2643, %v2796
          %v2798 = vpop.f32.mrb[0].mxu0
          %2799 = vmatprep.mubr.f32.mxu0 0.0
          %2800 = vmatmul.mubr.f32.gmra.mrb[0].mxu0 %v2207
          %v2801 = vpop.f32.mrb[0].mxu0
          %v2802 = vadd.f32 %v2643, %v2801
          %v2803 = vpop.f32.mrb[0].mxu0
          %2804 = vmatprep.mubr.f32.mxu0 0.0
          %2805 = vmatmul.mubr.f32.gmra.mrb[0].mxu0 %v2210
          %v2806 = vpop.f32.mrb[0].mxu0
          %v2807 = vadd.f32 %v2643, %v2806
          %v2808 = vpop.f32.mrb[0].mxu0
          %2809 = vmatprep.mubr.f32.mxu0 0.0
          %2810 = vmatmul.mubr.f32.gmra.mrb[0].mxu0 %v2213
          %v2811 = vpop.f32.mrb[0].mxu0
          %v2812 = vadd.f32 %v2643, %v2811
          %v2813 = vpop.f32.mrb[0].mxu0
          %2814 = vmatprep.mubr.f32.mxu0 0.0
          %2815 = vmatmul.mubr.f32.gmra.mrb[0].mxu0 %v2216
          %v2816 = vpop.f32.mrb[0].mxu0
          %v2817 = vadd.f32 %v2643, %v2816
          %v2818 = vpop.f32.mrb[0].mxu0
          %2819 = vmatprep.mubr.f32.mxu0 0.0
          %2820 = vmatmul.mubr.f32.gmra.mrb[0].mxu0 %v2219
          %v2821 = vpop.f32.mrb[0].mxu0
          %v2822 = vadd.f32 %v2643, %v2821
          %v2823 = vpop.f32.mrb[0].mxu0
          %2824 = vmatprep.mubr.f32.mxu0 0.0
          %2825 = vmatmul.mubr.f32.gmra.mrb[0].mxu0 %v2222
          %v2826 = vpop.f32.mrb[0].mxu0
          %v2827 = vadd.f32 %v2643, %v2826
          %v2828 = vpop.f32.mrb[0].mxu0
          %2829 = vmatprep.mubr.f32.mxu0 0.0
          %2830 = vmatmul.mubr.f32.gmra.mrb[0].mxu0 %v2225
          %v2831 = vpop.f32.mrb[0].mxu0
          %v2832 = vadd.f32 %v2643, %v2831
          %v2833 = vpop.f32.mrb[0].mxu0
          %2834 = vmatprep.mubr.f32.mxu0 0.0
          %2835 = vmatmul.mubr.f32.gmra.mrb[0].mxu0 %v2228
          %v2836 = vpop.f32.mrb[0].mxu0
          %v2837 = vadd.f32 %v2643, %v2836
          %v2838 = vpop.f32.mrb[0].mxu0
          %2839 = vmatprep.mubr.f32.mxu0 0.0
          %2840 = vmatmul.mubr.f32.gmra.mrb[0].mxu0 %v2231
          %v2841 = vpop.f32.mrb[0].mxu0
          %v2842 = vadd.f32 %v2643, %v2841
          %v2843 = vpop.f32.mrb[0].mxu0
          %2844 = vmatprep.mubr.f32.mxu0 0.0
          %2845 = vmatmul.mubr.f32.gmra.mrb[0].mxu0 %v2234
          %v2846 = vpop.f32.mrb[0].mxu0
          %v2847 = vadd.f32 %v2643, %v2846
          %v2848 = vpop.f32.mrb[0].mxu0
          %2849 = vmatprep.mubr.f32.mxu0 0.0
          %2850 = vmatmul.mubr.f32.gmra.mrb[0].mxu0 %v2237
          %v2851 = vpop.f32.mrb[0].mxu0
          %v2852 = vadd.f32 %v2643, %v2851
          %v2853 = vpop.f32.mrb[0].mxu0
          %2854 = vmatprep.mubr.f32.mxu0 0.0
          %2855 = vmatmul.mubr.f32.gmra.mrb[0].mxu0 %v2240
          %v2856 = vpop.f32.mrb[0].mxu0
          %v2857 = vadd.f32 %v2643, %v2856
          %v2858 = vpop.f32.mrb[0].mxu0
          %2859 = vmatprep.mubr.f32.mxu0 0.0
          %2860 = vmatmul.mubr.f32.gmra.mrb[0].mxu0 %v2243
          %v2861 = vpop.f32.mrb[0].mxu0
          %v2862 = vadd.f32 %v2643, %v2861
          %v2863 = vpop.f32.mrb[0].mxu0
          %2864 = vmatprep.mubr.f32.mxu0 0.0
          %2865 = vmatmul.mubr.f32.gmra.mrb[0].mxu0 %v2246
          %v2866 = vpop.f32.mrb[0].mxu0
          %v2867 = vadd.f32 %v2643, %v2866
          %v2868 = vpop.f32.mrb[0].mxu0
          %2869 = vdwg.mxu0
          %vm2870 = vcmask 7168
          %2871 = vst.msk [vmem:[%s488] sm:$0xff] %vm2870, %v2712
          %2872 = vst.msk [vmem:[%s488 + $0x8] sm:$0xff] %vm2870, %v2717
          %2873 = vst.msk [vmem:[%s488 + $0x10] sm:$0xff] %vm2870, %v2722
          %2874 = vst.msk [vmem:[%s488 + $0x18] sm:$0xff] %vm2870, %v2727
          %2875 = vst.msk [vmem:[%s488 + $0x20] sm:$0xff] %vm2870, %v2732
          %2876 = vst.msk [vmem:[%s488 + $0x28] sm:$0xff] %vm2870, %v2737
          %2877 = vst.msk [vmem:[%s488 + $0x30] sm:$0xff] %vm2870, %v2742
          %2878 = vst.msk [vmem:[%s488 + $0x38] sm:$0xff] %vm2870, %v2747
          %2879 = vst.msk [vmem:[%s488 + $0x40] sm:$0xff] %vm2870, %v2752
          %2880 = vst.msk [vmem:[%s488 + $0x48] sm:$0xff] %vm2870, %v2757
          %2881 = vst.msk [vmem:[%s488 + $0x50] sm:$0xff] %vm2870, %v2762
          %2882 = vst.msk [vmem:[%s488 + $0x58] sm:$0xff] %vm2870, %v2767
          %2883 = vst.msk [vmem:[%s488 + $0x60] sm:$0xff] %vm2870, %v2772
          %2884 = vst.msk [vmem:[%s488 + $0x68] sm:$0xff] %vm2870, %v2777
          %2885 = vst.msk [vmem:[%s488 + $0x70] sm:$0xff] %vm2870, %v2782
          %2886 = vst.msk [vmem:[%s488 + $0x78] sm:$0xff] %vm2870, %v2787
          %2887 = vst.msk [vmem:[%s488 + $0x80] sm:$0xff] %vm2870, %v2792
          %2888 = vst.msk [vmem:[%s488 + $0x88] sm:$0xff] %vm2870, %v2797
          %2889 = vst.msk [vmem:[%s488 + $0x90] sm:$0xff] %vm2870, %v2802
          %2890 = vst.msk [vmem:[%s488 + $0x98] sm:$0xff] %vm2870, %v2807
          %2891 = vst.msk [vmem:[%s488 + $0xa0] sm:$0xff] %vm2870, %v2812
          %2892 = vst.msk [vmem:[%s488 + $0xa8] sm:$0xff] %vm2870, %v2817
          %2893 = vst.msk [vmem:[%s488 + $0xb0] sm:$0xff] %vm2870, %v2822
          %2894 = vst.msk [vmem:[%s488 + $0xb8] sm:$0xff] %vm2870, %v2827
          %2895 = vst.msk [vmem:[%s488 + $0xc0] sm:$0xff] %vm2870, %v2832
          %2896 = vst.msk [vmem:[%s488 + $0xc8] sm:$0xff] %vm2870, %v2837
          %2897 = vst.msk [vmem:[%s488 + $0xd0] sm:$0xff] %vm2870, %v2842
          %2898 = vst.msk [vmem:[%s488 + $0xd8] sm:$0xff] %vm2870, %v2847
          %2899 = vst.msk [vmem:[%s488 + $0xe0] sm:$0xff] %vm2870, %v2852
          %2900 = vst.msk [vmem:[%s488 + $0xe8] sm:$0xff] %vm2870, %v2857
          %2901 = vst.msk [vmem:[%s488 + $0xf0] sm:$0xff] %vm2870, %v2862
          %2902 = vst.msk [vmem:[%s488 + $0xf8] sm:$0xff] %vm2870, %v2867
        $region80: #{view_gnn_forward.8} parent=47 // pred_fallthru
          _
        %s2903 = sand.u32 %s218, 1
        %s2904 = scalar_lea.sflag [#allocation6], %s2903
        %s2905 = sand.u32 %s218, 1
        %s2906 = smul.addr %s2905, 128
        %s2907 = scalar_lea.vmem [#allocation14], %s2906
        %s2908 = sand.u32 %s34, 1
        %s2909 = scalar_lea.sflag [#allocation16], %s2908
        %s2910 = sand.u32 %s244, 1
        %s2911 = smul.addr %s2910, 128
        %s2912 = scalar_lea.vmem [#allocation15], %s2911
        %s2913 = sand.u32 %s34, 1
        %s2914 = scalar_lea.sflag [#allocation16], %s2913
        %s2915 = sand.u32 %s270, 1
        %s2916 = smul.addr %s2915, 256
        %s2917 = scalar_lea.vmem [#allocation17], %s2916
        // Predicated region
        $region81: #{view_gnn_forward.8} parent=47 // pred_check
          %p2918 = pneg %p228
        $region82: #{view_gnn_forward.8} parent=47 // pred_check_branch
          %2920 = sbr.rel (%p2918) target = $region84
        $region83: #{view_gnn_forward.8} parent=47 // pred_region
          %s2921 = smul.u32 32, %s38
          %s2923 = ssub.s32 2048, 2048
          %2924 = vsyncadd %s2904, %s2923
          %s2925 = smul.addr %s2921, 64
          %s2926 = scalar_lea.hbm %s7, %s2925
          %s2927 = sshll.u32 %s2907, 4
          %s2928 = int_to_ptr.vmem [resolvable:$true] %s2927
          %2933 = dma.vmem_to_hbm [thread:$0]  %s2928, 2048, %s2926, %s2904, 64, 64, 4
        $region84: #{view_gnn_forward.8} parent=47 // pred_fallthru
          _
        // Predicated region
        $region85: #{view_gnn_forward.8} parent=47 // pred_check
          %p2934 = pneg %p254
        $region86: #{view_gnn_forward.8} parent=47 // pred_check_branch
          %2936 = sbr.rel (%p2934) target = $region88
        $region87: #{view_gnn_forward.8} parent=47 // pred_region
          %s2937 = smul.u32 32, %s38
          %s2939 = ssub.s32 2048, 2048
          %2940 = vsyncadd %s2909, %s2939
          %s2941 = smul.addr %s2937, 64
          %s2942 = scalar_lea.hbm %s8, %s2941
          %s2943 = sshll.u32 %s2912, 4
          %s2944 = int_to_ptr.vmem [resolvable:$true] %s2943
          %2949 = dma.vmem_to_hbm [thread:$0]  %s2944, 2048, %s2942, %s2909, 64, 64, 4
        $region88: #{view_gnn_forward.8} parent=47 // pred_fallthru
          _
        // Predicated region
        $region89: #{view_gnn_forward.8} parent=47 // pred_check
          %p2950 = pneg %p280
        $region90: #{view_gnn_forward.8} parent=47 // pred_check_branch
          %2952 = sbr.rel (%p2950) target = $region92
        $region91: #{view_gnn_forward.8} parent=47 // pred_region
          %s2953 = smul.u32 32, %s38
          %s2955 = ssub.s32 4096, 4096
          %2956 = vsyncadd %s2914, %s2955
          %s2957 = smul.addr %s2953, 128
          %s2958 = scalar_lea.hbm %s9, %s2957
          %s2959 = sshll.u32 %s2917, 4
          %s2960 = int_to_ptr.vmem [resolvable:$true] %s2959
          %2965 = dma.vmem_to_hbm [thread:$0]  %s2960, 4096, %s2958, %s2914, 128, 128, 8
        $region92: #{view_gnn_forward.8} parent=47 // pred_fallthru
          _
      $region48: #{view_gnn_forward.8} parent=5 // pred_fallthru
        _
      %p2966 = scmp.le.s32.totalorder 2, %s29
      // Predicated region
      $region93: #{view_gnn_forward.8} parent=5 // pred_check
        %p2967 = pneg %p2966
      $region94: #{view_gnn_forward.8} parent=5 // pred_check_branch
        %2969 = sbr.rel (%p2967) target = $region96
      $region95: #{view_gnn_forward.8} parent=5 // pred_region
        %s2970 = ssub.s32 %s29, 2
        // Predicated region
        $region97: #{view_gnn_forward.8} parent=95 // pred_check
          %p2971 = pneg %p234
        $region98: #{view_gnn_forward.8} parent=95 // pred_check_branch
          %2973 = sbr.rel (%p2971) target = $region100
        $region99: #{view_gnn_forward.8} parent=95 // pred_region
          %s2974 = sand.u32 %s219, 1
          %s2975 = scalar_lea.sflag [#allocation6], %s2974
          %s2976 = sand.u32 %s219, 1
          %s2977 = smul.addr %s2976, 128
          %s2978 = scalar_lea.vmem [#allocation14], %s2977
          %2979 = dma.done %s2975, 2048
        $region100: #{view_gnn_forward.8} parent=95 // pred_fallthru
          _
        // Predicated region
        $region101: #{view_gnn_forward.8} parent=95 // pred_check
          %p2980 = pneg %p260
        $region102: #{view_gnn_forward.8} parent=95 // pred_check_branch
          %2982 = sbr.rel (%p2980) target = $region104
        $region103: #{view_gnn_forward.8} parent=95 // pred_region
          %s2983 = sand.u32 %s35, 1
          %s2984 = scalar_lea.sflag [#allocation16], %s2983
          %s2985 = sand.u32 %s245, 1
          %s2986 = smul.addr %s2985, 128
          %s2987 = scalar_lea.vmem [#allocation15], %s2986
          %2988 = dma.done %s2984, 2048
        $region104: #{view_gnn_forward.8} parent=95 // pred_fallthru
          _
        // Predicated region
        $region105: #{view_gnn_forward.8} parent=95 // pred_check
          %p2989 = pneg %p286
        $region106: #{view_gnn_forward.8} parent=95 // pred_check_branch
          %2991 = sbr.rel (%p2989) target = $region108
        $region107: #{view_gnn_forward.8} parent=95 // pred_region
          %s2992 = sand.u32 %s35, 1
          %s2993 = scalar_lea.sflag [#allocation16], %s2992
          %s2994 = sand.u32 %s271, 1
          %s2995 = smul.addr %s2994, 256
          %s2996 = scalar_lea.vmem [#allocation17], %s2995
          %2997 = dma.done %s2993, 4096
        $region108: #{view_gnn_forward.8} parent=95 // pred_fallthru
          _
      $region96: #{view_gnn_forward.8} parent=5 // pred_fallthru
        _
    $region6: #{view_gnn_forward.8} parent=1 // loop_footer
      %s33 = sadd.s32 1, %s29
    $region7: #{view_gnn_forward.8} parent=1 // loop_footer_branch
      %28 = sbr.rel target = $region3
    $region8: #{view_gnn_forward.8} parent=1 // loop_exit
      _
    %2998 = vsyncpa [#allocation5], 1
    %s2999 = scalar_lea.sflag [#allocation5], 1
    %3000 = vsyncpa %s2999, 1
    %3001 = vsyncpa [#allocation8], 1
    %3002 = vsyncpa [#allocation12], 1
    %3003 = vsyncpa [#allocation6], 1
    %s3004 = scalar_lea.sflag [#allocation6], 1
    %3005 = vsyncpa %s3004, 1
    %3006 = vsyncpa [#allocation16], 1
    %s3007 = scalar_lea.sflag [#allocation16], 1
    %3008 = vsyncpa %s3007, 1

// kernel: view_gnn_forward.9
$region0: #{view_gnn_forward.9}
  #allocation0 [shape = 'u32[]', space=smem, size = 0x4, offset = 0x4, fixed_abs, tag = 'smem constant byte address 0x4 - core index']
  #allocation1 [shape = 'u32[144,128]{1,0:T(1,128)}', space=vmem, size = 0x12000, scoped, tag = 'internal scratch']
  #allocation2 [shape = 'f32[256,8]{1,0:T(8,128)}', space=vmem, size = 0x20000, scoped, tag = 'scratch operand']
  %s0 = inlined_call_operand.hbm [shape: bf16[512,512], index: 0, kind: input, shape index: {}]
  %s1 = inlined_call_operand.hbm [shape: bf16[512,8], index: 1, kind: input, shape index: {}]
  %s2 = inlined_call_operand.hbm [shape: f32[512,1], index: 2, kind: input, shape index: {}]
  %s3 = inlined_call_operand.hbm [shape: f32[512,1], index: 3, kind: output, shape index: {}]
  %s4 = sld [smem:[#allocation0]]
  $region65: #{view_gnn_forward.9} parent=0
    _
  %s6 = ssub.s32 1, %s4
  %s7 = scalar_select 0, %s6, %s4
  $region1: #{view_gnn_forward.9} parent=0
    #allocation3 [shape = 'u8[524288]{0}', space=vmem, size = 0x80000, scoped, tag = 'input window, operand 0']
    #allocation4 [shape = 's32[2]{0}', space=sflag, size = 0x8, scoped, tag = 'scoped memory for view_gnn_forward.9']
    #allocation5 [shape = 's32[2]{0}', space=sflag, size = 0x8, scoped, tag = 'scoped memory for view_gnn_forward.9']
    #allocation6 [shape = 'u8[131072]{0}', space=vmem, size = 0x20000, scoped, tag = 'input window, operand 1, single buffered']
    #allocation7 [shape = 's32[1]{0}', space=sflag, size = 0x4, scoped, tag = 'scoped memory for view_gnn_forward.9']
    #allocation8 [shape = 'u8[262144]{0}', space=vmem, size = 0x40000, scoped, tag = 'input window, operand 2']
    #allocation9 [shape = 'u8[262144]{0}', space=vmem, size = 0x40000, scoped, tag = 'output window, operand 0']
    %8 = vsyncpa [#allocation4], 0
    %s9 = scalar_lea.sflag [#allocation4], 1
    %10 = vsyncpa %s9, 0
    %11 = vsyncpa [#allocation7], 0
    %12 = vsyncpa [#allocation5], 0
    %s13 = scalar_lea.sflag [#allocation5], 1
    %14 = vsyncpa %s13, 0
    loop: start=0, step=1, limit=4
    $region2: #{view_gnn_forward.9} parent=1 // loop_pre_header
      _
    $region3: #{view_gnn_forward.9} parent=1 // loop_header
      %s16 = sphi 0, %s20
      %p17 = scmp.ge.s32.totalorder %s16, 4
      %s23 = sphi 0, %s35
      %s24 = sphi 0, %s31
      %s25 = sphi 0, %s23
      %s26 = sphi 0, %s24
      %s27 = sphi 0, %s25
      %s28 = sphi 0, %s26
      %s40 = sphi 0, %s42
      %s43 = sphi 0, %s40
      %s44 = sphi 0, %s43
      %s60 = sphi 0, %s44
      %s66 = sphi 0, %s68
      %s69 = sphi 0, %s66
      %s70 = sphi 0, %s69
      %s86 = sphi 0, %s70
      %s92 = sphi 0, %s94
      %s95 = sphi 0, %s92
      %s96 = sphi 0, %s95
      %s112 = sphi 0, %s96
      %s118 = sphi 0, %s120
      %s121 = sphi 0, %s118
      %s122 = sphi 0, %s121
      %s138 = sphi 0, %s122
    $region4: #{view_gnn_forward.9} parent=1 // loop_header_branch
      %19 = sbr.rel (%p17) target = $region8
    $region5: #{view_gnn_forward.9} parent=1 // loop_body
      %s21 = ssub.s32 %s16, 1
      %s22 = ssub.s32 %s16, 2
      %s29 = sadd.s32 1, %s24
      %p30 = scmp.ge.s32.totalorder %s29, 1
      %s31 = scalar_select %p30, 0, %s29
      %s32 = sadd.s32 1, %s23
      %s33 = scalar_select %p30, %s32, %s23
      %p34 = scmp.ge.s32.totalorder %s33, 2
      %s35 = scalar_select %p34, 0, %s33
      %s36 = ssub.s32 %s23, %s35
      %s37 = ssub.s32 %s24, %s31
      %s38 = sor.u32 %s36, %s37
      %p39 = scmp.eq.s32.totalorder %s38, 0
      %s41 = sadd.s32 %s40, 1
      %s42 = scalar_select %p39, %s40, %s41
      %p45 = pneg %p39
      %p46 = scmp.eq.s32.totalorder %s16, 1
      %p47 = por %p45, %p46
      %p48 = scmp.ne.s32.totalorder %s40, %s43
      %p49 = scmp.eq.s32.totalorder %s16, 0
      %p50 = por %p48, %p49
      %p51 = scmp.ne.s32.totalorder %s40, %s43
      %p52 = scmp.eq.s32.totalorder %s21, 1
      %p53 = por %p51, %p52
      %p54 = scmp.ne.s32.totalorder %s43, %s44
      %p55 = scmp.eq.s32.totalorder %s21, 0
      %p56 = por %p54, %p55
      %p57 = scmp.ne.s32.totalorder %s43, %s44
      %p58 = scmp.eq.s32.totalorder %s22, 1
      %p59 = por %p57, %p58
      %p61 = scmp.ne.s32.totalorder %s44, %s60
      %p62 = scmp.eq.s32.totalorder %s22, 0
      %p63 = por %p61, %p62
      %s64 = ssub.s32 %s24, %s31
      %p65 = scmp.eq.s32.totalorder %s64, 0
      %s67 = sadd.s32 %s66, 1
      %s68 = scalar_select %p65, %s66, %s67
      %p71 = pneg %p65
      %p72 = scmp.eq.s32.totalorder %s16, 1
      %p73 = por %p71, %p72
      %p74 = scmp.ne.s32.totalorder %s66, %s69
      %p75 = scmp.eq.s32.totalorder %s16, 0
      %p76 = por %p74, %p75
      %p77 = scmp.ne.s32.totalorder %s66, %s69
      %p78 = scmp.eq.s32.totalorder %s21, 1
      %p79 = por %p77, %p78
      %p80 = scmp.ne.s32.totalorder %s69, %s70
      %p81 = scmp.eq.s32.totalorder %s21, 0
      %p82 = por %p80, %p81
      %p83 = scmp.ne.s32.totalorder %s69, %s70
      %p84 = scmp.eq.s32.totalorder %s22, 1
      %p85 = por %p83, %p84
      %p87 = scmp.ne.s32.totalorder %s70, %s86
      %p88 = scmp.eq.s32.totalorder %s22, 0
      %p89 = por %p87, %p88
      %s90 = ssub.s32 %s23, %s35
      %p91 = scmp.eq.s32.totalorder %s90, 0
      %s93 = sadd.s32 %s92, 1
      %s94 = scalar_select %p91, %s92, %s93
      %p97 = pneg %p91
      %p98 = scmp.eq.s32.totalorder %s16, 1
      %p99 = por %p97, %p98
      %p100 = scmp.ne.s32.totalorder %s92, %s95
      %p101 = scmp.eq.s32.totalorder %s16, 0
      %p102 = por %p100, %p101
      %p103 = scmp.ne.s32.totalorder %s92, %s95
      %p104 = scmp.eq.s32.totalorder %s21, 1
      %p105 = por %p103, %p104
      %p106 = scmp.ne.s32.totalorder %s95, %s96
      %p107 = scmp.eq.s32.totalorder %s21, 0
      %p108 = por %p106, %p107
      %p109 = scmp.ne.s32.totalorder %s95, %s96
      %p110 = scmp.eq.s32.totalorder %s22, 1
      %p111 = por %p109, %p110
      %p113 = scmp.ne.s32.totalorder %s96, %s112
      %p114 = scmp.eq.s32.totalorder %s22, 0
      %p115 = por %p113, %p114
      %s116 = ssub.s32 %s23, %s35
      %p117 = scmp.eq.s32.totalorder %s116, 0
      %s119 = sadd.s32 %s118, 1
      %s120 = scalar_select %p117, %s118, %s119
      %p123 = pneg %p117
      %p124 = scmp.eq.s32.totalorder %s16, 1
      %p125 = por %p123, %p124
      %p126 = scmp.ne.s32.totalorder %s118, %s121
      %p127 = scmp.eq.s32.totalorder %s16, 0
      %p128 = por %p126, %p127
      %p129 = scmp.ne.s32.totalorder %s118, %s121
      %p130 = scmp.eq.s32.totalorder %s21, 1
      %p131 = por %p129, %p130
      %p132 = scmp.ne.s32.totalorder %s121, %s122
      %p133 = scmp.eq.s32.totalorder %s21, 0
      %p134 = por %p132, %p133
      %p135 = scmp.ne.s32.totalorder %s121, %s122
      %p136 = scmp.eq.s32.totalorder %s22, 1
      %p137 = por %p135, %p136
      %p139 = scmp.ne.s32.totalorder %s122, %s138
      %p140 = scmp.eq.s32.totalorder %s22, 0
      %p141 = por %p139, %p140
      %p142 = scmp.le.s32.totalorder 1, %s16
      %p143 = scmp.lt.s32.totalorder %s16, 3
      %p144 = pnand %p142, %p143
      %p145 = pneg %p144
      // Predicated region
      $region9: #{view_gnn_forward.9} parent=5 // pred_check
        _
      $region10: #{view_gnn_forward.9} parent=5 // pred_check_branch
        %147 = sbr.rel (%p144) target = $region12
      $region11: #{view_gnn_forward.9} parent=5 // pred_region
        %s148 = ssub.s32 %s16, 1
        // Predicated region
        $region13: #{view_gnn_forward.9} parent=11 // pred_check
          %p149 = pneg %p82
        $region14: #{view_gnn_forward.9} parent=11 // pred_check_branch
          %151 = sbr.rel (%p149) target = $region16
        $region15: #{view_gnn_forward.9} parent=11 // pred_region
          %s152 = smul.u32 64, %s26
          %s154 = ssub.s32 4096, 4096
          %155 = vsyncadd [#allocation7], %s154
          %s156 = smul.addr %s152, 64
          %s157 = scalar_lea.hbm %s1, %s156
          %s158 = sshll.u32 [#allocation6], 4
          %s159 = int_to_ptr.vmem [resolvable:$true] %s158
          %164 = dma.hbm_to_vmem [thread:$0]  %s157, 4096, %s159, [#allocation7], 64, 64, 4
        $region16: #{view_gnn_forward.9} parent=11 // pred_fallthru
          _
      $region12: #{view_gnn_forward.9} parent=5 // pred_fallthru
        _
      %p165 = scmp.lt.s32.totalorder %s16, 2
      // Predicated region
      $region17: #{view_gnn_forward.9} parent=5 // pred_check
        %p166 = pneg %p165
      $region18: #{view_gnn_forward.9} parent=5 // pred_check_branch
        %168 = sbr.rel (%p166) target = $region20
      $region19: #{view_gnn_forward.9} parent=5 // pred_region
        // Predicated region
        $region21: #{view_gnn_forward.9} parent=19 // pred_check
          %p169 = pneg %p50
        $region22: #{view_gnn_forward.9} parent=19 // pred_check_branch
          %171 = sbr.rel (%p169) target = $region24
        $region23: #{view_gnn_forward.9} parent=19 // pred_region
          %s172 = sand.u32 %s16, 1
          %s173 = scalar_lea.sflag [#allocation4], %s172
          %s174 = sand.u32 %s40, 1
          %s175 = smul.addr %s174, 512
          %s176 = scalar_lea.vmem [#allocation3], %s175
          %s177 = smul.u32 32, %s23
          %s178 = smul.u32 4, %s24
          %s180 = ssub.s32 8192, 8192
          %181 = vsyncadd %s173, %s180
          %s182 = smul.addr %s177, 4
          %s183 = sadd.s32 %s178, %s182
          %s184 = smul.addr %s183, 64
          %s185 = scalar_lea.hbm %s0, %s184
          %s186 = sshll.u32 %s176, 4
          %s187 = int_to_ptr.vmem [resolvable:$true] %s186
          %192 = dma.hbm_to_vmem [thread:$0]  %s185, 8192, %s187, %s173, 256, 256, 16
        $region24: #{view_gnn_forward.9} parent=19 // pred_fallthru
          _
        // Predicated region
        $region25: #{view_gnn_forward.9} parent=19 // pred_check
          %p193 = pneg %p102
        $region26: #{view_gnn_forward.9} parent=19 // pred_check_branch
          %195 = sbr.rel (%p193) target = $region28
        $region27: #{view_gnn_forward.9} parent=19 // pred_region
          %s196 = sand.u32 %s16, 1
          %s197 = scalar_lea.sflag [#allocation4], %s196
          %s198 = sand.u32 %s92, 1
          %s199 = smul.addr %s198, 256
          %s200 = scalar_lea.vmem [#allocation8], %s199
          %s201 = smul.u32 32, %s23
          %s203 = ssub.s32 4096, 4096
          %204 = vsyncadd %s197, %s203
          %s205 = smul.addr %s201, 128
          %s206 = scalar_lea.hbm %s2, %s205
          %s207 = sshll.u32 %s200, 4
          %s208 = int_to_ptr.vmem [resolvable:$true] %s207
          %213 = dma.hbm_to_vmem [thread:$0]  %s206, 4096, %s208, %s197, 128, 128, 8
        $region28: #{view_gnn_forward.9} parent=19 // pred_fallthru
          _
      $region20: #{view_gnn_forward.9} parent=5 // pred_fallthru
        _
      %p214 = scmp.le.s32.totalorder 1, %s16
      %p215 = scmp.lt.s32.totalorder %s16, 3
      %p216 = pnand %p214, %p215
      %p217 = pneg %p216
      // Predicated region
      $region29: #{view_gnn_forward.9} parent=5 // pred_check
        _
      $region30: #{view_gnn_forward.9} parent=5 // pred_check_branch
        %219 = sbr.rel (%p216) target = $region32
      $region31: #{view_gnn_forward.9} parent=5 // pred_region
        %s220 = ssub.s32 %s16, 1
        %s221 = sand.u32 %s21, 1
        %s222 = scalar_lea.sflag [#allocation4], %s221
        %s223 = sand.u32 %s43, 1
        %s224 = smul.addr %s223, 512
        %s225 = scalar_lea.vmem [#allocation3], %s224
        // Predicated region
        $region33: #{view_gnn_forward.9} parent=31 // pred_check
          %p226 = pneg %p56
        $region34: #{view_gnn_forward.9} parent=31 // pred_check_branch
          %228 = sbr.rel (%p226) target = $region36
        $region35: #{view_gnn_forward.9} parent=31 // pred_region
          %229 = dma.done %s222, 8192
        $region36: #{view_gnn_forward.9} parent=31 // pred_fallthru
          _
        // Predicated region
        $region37: #{view_gnn_forward.9} parent=31 // pred_check
          %p230 = pneg %p82
        $region38: #{view_gnn_forward.9} parent=31 // pred_check_branch
          %232 = sbr.rel (%p230) target = $region40
        $region39: #{view_gnn_forward.9} parent=31 // pred_region
          %233 = dma.done [#allocation7], 4096
        $region40: #{view_gnn_forward.9} parent=31 // pred_fallthru
          _
        %s234 = sand.u32 %s21, 1
        %s235 = scalar_lea.sflag [#allocation4], %s234
        %s236 = sand.u32 %s95, 1
        %s237 = smul.addr %s236, 256
        %s238 = scalar_lea.vmem [#allocation8], %s237
        // Predicated region
        $region41: #{view_gnn_forward.9} parent=31 // pred_check
          %p239 = pneg %p108
        $region42: #{view_gnn_forward.9} parent=31 // pred_check_branch
          %241 = sbr.rel (%p239) target = $region44
        $region43: #{view_gnn_forward.9} parent=31 // pred_region
          %242 = dma.done %s235, 4096
        $region44: #{view_gnn_forward.9} parent=31 // pred_fallthru
          _
        %s243 = sand.u32 %s21, 1
        %s244 = scalar_lea.sflag [#allocation4], %s243
        %s245 = sand.u32 %s43, 1
        %s246 = smul.addr %s245, 512
        %s247 = scalar_lea.vmem [#allocation3], %s246
        %p248 = pneg %p56
        %p249 = pneg %p53
        %p250 = pneg %p82
        %p251 = pneg %p79
        %s252 = sand.u32 %s21, 1
        %s253 = scalar_lea.sflag [#allocation4], %s252
        %s254 = sand.u32 %s95, 1
        %s255 = smul.addr %s254, 256
        %s256 = scalar_lea.vmem [#allocation8], %s255
        %p257 = pneg %p108
        %p258 = pneg %p105
        %p259 = pneg %p134
        %p260 = pneg %p131
        %s261 = sand.u32 %s121, 1
        %s262 = scalar_lea.sflag [#allocation5], %s261
        %s263 = sand.u32 %s121, 1
        %s264 = smul.addr %s263, 256
        %s265 = scalar_lea.vmem [#allocation9], %s264
        %s266 = smul.u32 32, %s25
        %s267 = smul.u32 4, %s26
        %s268 = smul.u32 64, %s26
        %s269 = smul.u32 32, %s25
        %s270 = smul.u32 32, %s25
        %p272 = scmp.eq.s32.totalorder %s26, 0
        // Predicated region
        $region45: #{view_gnn_forward.9} parent=31 // pred_check
          %p273 = pneg %p272
        $region46: #{view_gnn_forward.9} parent=31 // pred_check_branch
          %275 = sbr.rel (%p273) target = $region48
        $region47: #{view_gnn_forward.9} parent=31 // pred_region
          %vm276 = vcmask 64512
          %277 = vst.msk [vmem:[#allocation2] sm:$0xff] %vm276, 0.0
          %278 = vst.msk [vmem:[#allocation2 + $0x8] sm:$0xff] %vm276, 0.0
          %279 = vst.msk [vmem:[#allocation2 + $0x10] sm:$0xff] %vm276, 0.0
          %280 = vst.msk [vmem:[#allocation2 + $0x18] sm:$0xff] %vm276, 0.0
          %281 = vst.msk [vmem:[#allocation2 + $0x20] sm:$0xff] %vm276, 0.0
          %282 = vst.msk [vmem:[#allocation2 + $0x28] sm:$0xff] %vm276, 0.0
          %283 = vst.msk [vmem:[#allocation2 + $0x30] sm:$0xff] %vm276, 0.0
          %284 = vst.msk [vmem:[#allocation2 + $0x38] sm:$0xff] %vm276, 0.0
          %285 = vst.msk [vmem:[#allocation2 + $0x40] sm:$0xff] %vm276, 0.0
          %286 = vst.msk [vmem:[#allocation2 + $0x48] sm:$0xff] %vm276, 0.0
          %287 = vst.msk [vmem:[#allocation2 + $0x50] sm:$0xff] %vm276, 0.0
          %288 = vst.msk [vmem:[#allocation2 + $0x58] sm:$0xff] %vm276, 0.0
          %289 = vst.msk [vmem:[#allocation2 + $0x60] sm:$0xff] %vm276, 0.0
          %290 = vst.msk [vmem:[#allocation2 + $0x68] sm:$0xff] %vm276, 0.0
          %291 = vst.msk [vmem:[#allocation2 + $0x70] sm:$0xff] %vm276, 0.0
          %292 = vst.msk [vmem:[#allocation2 + $0x78] sm:$0xff] %vm276, 0.0
          %293 = vst.msk [vmem:[#allocation2 + $0x80] sm:$0xff] %vm276, 0.0
          %294 = vst.msk [vmem:[#allocation2 + $0x88] sm:$0xff] %vm276, 0.0
          %295 = vst.msk [vmem:[#allocation2 + $0x90] sm:$0xff] %vm276, 0.0
          %296 = vst.msk [vmem:[#allocation2 + $0x98] sm:$0xff] %vm276, 0.0
          %297 = vst.msk [vmem:[#allocation2 + $0xa0] sm:$0xff] %vm276, 0.0
          %298 = vst.msk [vmem:[#allocation2 + $0xa8] sm:$0xff] %vm276, 0.0
          %299 = vst.msk [vmem:[#allocation2 + $0xb0] sm:$0xff] %vm276, 0.0
          %300 = vst.msk [vmem:[#allocation2 + $0xb8] sm:$0xff] %vm276, 0.0
          %301 = vst.msk [vmem:[#allocation2 + $0xc0] sm:$0xff] %vm276, 0.0
          %302 = vst.msk [vmem:[#allocation2 + $0xc8] sm:$0xff] %vm276, 0.0
          %303 = vst.msk [vmem:[#allocation2 + $0xd0] sm:$0xff] %vm276, 0.0
          %304 = vst.msk [vmem:[#allocation2 + $0xd8] sm:$0xff] %vm276, 0.0
          %305 = vst.msk [vmem:[#allocation2 + $0xe0] sm:$0xff] %vm276, 0.0
          %306 = vst.msk [vmem:[#allocation2 + $0xe8] sm:$0xff] %vm276, 0.0
          %307 = vst.msk [vmem:[#allocation2 + $0xf0] sm:$0xff] %vm276, 0.0
          %308 = vst.msk [vmem:[#allocation2 + $0xf8] sm:$0xff] %vm276, 0.0
        $region48: #{view_gnn_forward.9} parent=31 // pred_fallthru
          _
        %v309 = vld [vmem:[#allocation2] sm:$0xff]
        %v310 = vld [vmem:[#allocation2 + $0x8] sm:$0xff]
        %v311 = vld [vmem:[#allocation2 + $0x10] sm:$0xff]
        %v312 = vld [vmem:[#allocation2 + $0x18] sm:$0xff]
        %v313 = vld [vmem:[#allocation2 + $0x20] sm:$0xff]
        %v314 = vld [vmem:[#allocation2 + $0x28] sm:$0xff]
        %v315 = vld [vmem:[#allocation2 + $0x30] sm:$0xff]
        %v316 = vld [vmem:[#allocation2 + $0x38] sm:$0xff]
        %v317 = vld [vmem:[#allocation2 + $0x40] sm:$0xff]
        %v318 = vld [vmem:[#allocation2 + $0x48] sm:$0xff]
        %v319 = vld [vmem:[#allocation2 + $0x50] sm:$0xff]
        %v320 = vld [vmem:[#allocation2 + $0x58] sm:$0xff]
        %v321 = vld [vmem:[#allocation2 + $0x60] sm:$0xff]
        %v322 = vld [vmem:[#allocation2 + $0x68] sm:$0xff]
        %v323 = vld [vmem:[#allocation2 + $0x70] sm:$0xff]
        %v324 = vld [vmem:[#allocation2 + $0x78] sm:$0xff]
        %v325 = vld [vmem:[#allocation2 + $0x80] sm:$0xff]
        %v326 = vld [vmem:[#allocation2 + $0x88] sm:$0xff]
        %v327 = vld [vmem:[#allocation2 + $0x90] sm:$0xff]
        %v328 = vld [vmem:[#allocation2 + $0x98] sm:$0xff]
        %v329 = vld [vmem:[#allocation2 + $0xa0] sm:$0xff]
        %v330 = vld [vmem:[#allocation2 + $0xa8] sm:$0xff]
        %v331 = vld [vmem:[#allocation2 + $0xb0] sm:$0xff]
        %v332 = vld [vmem:[#allocation2 + $0xb8] sm:$0xff]
        %v333 = vld [vmem:[#allocation2 + $0xc0] sm:$0xff]
        %v334 = vld [vmem:[#allocation2 + $0xc8] sm:$0xff]
        %v335 = vld [vmem:[#allocation2 + $0xd0] sm:$0xff]
        %v336 = vld [vmem:[#allocation2 + $0xd8] sm:$0xff]
        %v337 = vld [vmem:[#allocation2 + $0xe0] sm:$0xff]
        %v338 = vld [vmem:[#allocation2 + $0xe8] sm:$0xff]
        %v339 = vld [vmem:[#allocation2 + $0xf0] sm:$0xff]
        %v340 = vld [vmem:[#allocation2 + $0xf8] sm:$0xff]
        %v341 = vld [vmem:[%s225] sm:$0xff]
        %v342 = vld [vmem:[%s225 + $0x8] sm:$0xff]
        %v343 = vld [vmem:[%s225 + $0x10] sm:$0xff]
        %v344 = vld [vmem:[%s225 + $0x18] sm:$0xff]
        %v345 = vld [vmem:[%s225 + $0x20] sm:$0xff]
        %v346 = vld [vmem:[%s225 + $0x28] sm:$0xff]
        %v347 = vld [vmem:[%s225 + $0x30] sm:$0xff]
        %v348 = vld [vmem:[%s225 + $0x38] sm:$0xff]
        %v349 = vld [vmem:[%s225 + $0x40] sm:$0xff]
        %v350 = vld [vmem:[%s225 + $0x48] sm:$0xff]
        %v351 = vld [vmem:[%s225 + $0x50] sm:$0xff]
        %v352 = vld [vmem:[%s225 + $0x58] sm:$0xff]
        %v353 = vld [vmem:[%s225 + $0x60] sm:$0xff]
        %v354 = vld [vmem:[%s225 + $0x68] sm:$0xff]
        %v355 = vld [vmem:[%s225 + $0x70] sm:$0xff]
        %v356 = vld [vmem:[%s225 + $0x78] sm:$0xff]
        %v357 = vld [vmem:[%s225 + $0x80] sm:$0xff]
        %v358 = vld [vmem:[%s225 + $0x88] sm:$0xff]
        %v359 = vld [vmem:[%s225 + $0x90] sm:$0xff]
        %v360 = vld [vmem:[%s225 + $0x98] sm:$0xff]
        %v361 = vld [vmem:[%s225 + $0xa0] sm:$0xff]
        %v362 = vld [vmem:[%s225 + $0xa8] sm:$0xff]
        %v363 = vld [vmem:[%s225 + $0xb0] sm:$0xff]
        %v364 = vld [vmem:[%s225 + $0xb8] sm:$0xff]
        %v365 = vld [vmem:[%s225 + $0xc0] sm:$0xff]
        %v366 = vld [vmem:[%s225 + $0xc8] sm:$0xff]
        %v367 = vld [vmem:[%s225 + $0xd0] sm:$0xff]
        %v368 = vld [vmem:[%s225 + $0xd8] sm:$0xff]
        %v369 = vld [vmem:[%s225 + $0xe0] sm:$0xff]
        %v370 = vld [vmem:[%s225 + $0xe8] sm:$0xff]
        %v371 = vld [vmem:[%s225 + $0xf0] sm:$0xff]
        %v372 = vld [vmem:[%s225 + $0xf8] sm:$0xff]
        %v373 = vld [vmem:[%s225 + $0x100] sm:$0xff]
        %v374 = vld [vmem:[%s225 + $0x108] sm:$0xff]
        %v375 = vld [vmem:[%s225 + $0x110] sm:$0xff]
        %v376 = vld [vmem:[%s225 + $0x118] sm:$0xff]
        %v377 = vld [vmem:[%s225 + $0x120] sm:$0xff]
        %v378 = vld [vmem:[%s225 + $0x128] sm:$0xff]
        %v379 = vld [vmem:[%s225 + $0x130] sm:$0xff]
        %v380 = vld [vmem:[%s225 + $0x138] sm:$0xff]
        %v381 = vld [vmem:[%s225 + $0x140] sm:$0xff]
        %v382 = vld [vmem:[%s225 + $0x148] sm:$0xff]
        %v383 = vld [vmem:[%s225 + $0x150] sm:$0xff]
        %v384 = vld [vmem:[%s225 + $0x158] sm:$0xff]
        %v385 = vld [vmem:[%s225 + $0x160] sm:$0xff]
        %v386 = vld [vmem:[%s225 + $0x168] sm:$0xff]
        %v387 = vld [vmem:[%s225 + $0x170] sm:$0xff]
        %v388 = vld [vmem:[%s225 + $0x178] sm:$0xff]
        %v389 = vld [vmem:[%s225 + $0x180] sm:$0xff]
        %v390 = vld [vmem:[%s225 + $0x188] sm:$0xff]
        %v391 = vld [vmem:[%s225 + $0x190] sm:$0xff]
        %v392 = vld [vmem:[%s225 + $0x198] sm:$0xff]
        %v393 = vld [vmem:[%s225 + $0x1a0] sm:$0xff]
        %v394 = vld [vmem:[%s225 + $0x1a8] sm:$0xff]
        %v395 = vld [vmem:[%s225 + $0x1b0] sm:$0xff]
        %v396 = vld [vmem:[%s225 + $0x1b8] sm:$0xff]
        %v397 = vld [vmem:[%s225 + $0x1c0] sm:$0xff]
        %v398 = vld [vmem:[%s225 + $0x1c8] sm:$0xff]
        %v399 = vld [vmem:[%s225 + $0x1d0] sm:$0xff]
        %v400 = vld [vmem:[%s225 + $0x1d8] sm:$0xff]
        %v401 = vld [vmem:[%s225 + $0x1e0] sm:$0xff]
        %v402 = vld [vmem:[%s225 + $0x1e8] sm:$0xff]
        %v403 = vld [vmem:[%s225 + $0x1f0] sm:$0xff]
        %v404 = vld [vmem:[%s225 + $0x1f8] sm:$0xff]
        %v405 = vld [vmem:[#allocation6] sm:$0xf]
        %v406 = vld [vmem:[#allocation6 + $0x4] sm:$0xf]
        %v407 = vld [vmem:[#allocation6 + $0x8] sm:$0xf]
        %v408 = vld [vmem:[#allocation6 + $0xc] sm:$0xf]
        %v409 = vld [vmem:[#allocation6 + $0x10] sm:$0xf]
        %v410 = vld [vmem:[#allocation6 + $0x14] sm:$0xf]
        %v411 = vld [vmem:[#allocation6 + $0x18] sm:$0xf]
        %v412 = vld [vmem:[#allocation6 + $0x1c] sm:$0xf]
        %v413 = vld [vmem:[#allocation6 + $0x20] sm:$0xf]
        %v414 = vld [vmem:[#allocation6 + $0x24] sm:$0xf]
        %v415 = vld [vmem:[#allocation6 + $0x28] sm:$0xf]
        %v416 = vld [vmem:[#allocation6 + $0x2c] sm:$0xf]
        %v417 = vld [vmem:[#allocation6 + $0x30] sm:$0xf]
        %v418 = vld [vmem:[#allocation6 + $0x34] sm:$0xf]
        %v419 = vld [vmem:[#allocation6 + $0x38] sm:$0xf]
        %v420 = vld [vmem:[#allocation6 + $0x3c] sm:$0xf]
        %v421 = vld [vmem:[#allocation6 + $0x40] sm:$0xf]
        %v422 = vld [vmem:[#allocation6 + $0x44] sm:$0xf]
        %v423 = vld [vmem:[#allocation6 + $0x48] sm:$0xf]
        %v424 = vld [vmem:[#allocation6 + $0x4c] sm:$0xf]
        %v425 = vld [vmem:[#allocation6 + $0x50] sm:$0xf]
        %v426 = vld [vmem:[#allocation6 + $0x54] sm:$0xf]
        %v427 = vld [vmem:[#allocation6 + $0x58] sm:$0xf]
        %v428 = vld [vmem:[#allocation6 + $0x5c] sm:$0xf]
        %v429 = vld [vmem:[#allocation6 + $0x60] sm:$0xf]
        %v430 = vld [vmem:[#allocation6 + $0x64] sm:$0xf]
        %v431 = vld [vmem:[#allocation6 + $0x68] sm:$0xf]
        %v432 = vld [vmem:[#allocation6 + $0x6c] sm:$0xf]
        %v433 = vld [vmem:[#allocation6 + $0x70] sm:$0xf]
        %v434 = vld [vmem:[#allocation6 + $0x74] sm:$0xf]
        %v435 = vld [vmem:[#allocation6 + $0x78] sm:$0xf]
        %v436 = vld [vmem:[#allocation6 + $0x7c] sm:$0xf]
        %v437 = vld [vmem:[#allocation6 + $0x80] sm:$0xf]
        %v438 = vld [vmem:[#allocation6 + $0x84] sm:$0xf]
        %v439 = vld [vmem:[#allocation6 + $0x88] sm:$0xf]
        %v440 = vld [vmem:[#allocation6 + $0x8c] sm:$0xf]
        %v441 = vld [vmem:[#allocation6 + $0x90] sm:$0xf]
        %v442 = vld [vmem:[#allocation6 + $0x94] sm:$0xf]
        %v443 = vld [vmem:[#allocation6 + $0x98] sm:$0xf]
        %v444 = vld [vmem:[#allocation6 + $0x9c] sm:$0xf]
        %v445 = vld [vmem:[#allocation6 + $0xa0] sm:$0xf]
        %v446 = vld [vmem:[#allocation6 + $0xa4] sm:$0xf]
        %v447 = vld [vmem:[#allocation6 + $0xa8] sm:$0xf]
        %v448 = vld [vmem:[#allocation6 + $0xac] sm:$0xf]
        %v449 = vld [vmem:[#allocation6 + $0xb0] sm:$0xf]
        %v450 = vld [vmem:[#allocation6 + $0xb4] sm:$0xf]
        %v451 = vld [vmem:[#allocation6 + $0xb8] sm:$0xf]
        %v452 = vld [vmem:[#allocation6 + $0xbc] sm:$0xf]
        %v453 = vld [vmem:[#allocation6 + $0xc0] sm:$0xf]
        %v454 = vld [vmem:[#allocation6 + $0xc4] sm:$0xf]
        %v455 = vld [vmem:[#allocation6 + $0xc8] sm:$0xf]
        %v456 = vld [vmem:[#allocation6 + $0xcc] sm:$0xf]
        %v457 = vld [vmem:[#allocation6 + $0xd0] sm:$0xf]
        %v458 = vld [vmem:[#allocation6 + $0xd4] sm:$0xf]
        %v459 = vld [vmem:[#allocation6 + $0xd8] sm:$0xf]
        %v460 = vld [vmem:[#allocation6 + $0xdc] sm:$0xf]
        %v461 = vld [vmem:[#allocation6 + $0xe0] sm:$0xf]
        %v462 = vld [vmem:[#allocation6 + $0xe4] sm:$0xf]
        %v463 = vld [vmem:[#allocation6 + $0xe8] sm:$0xf]
        %v464 = vld [vmem:[#allocation6 + $0xec] sm:$0xf]
        %v465 = vld [vmem:[#allocation6 + $0xf0] sm:$0xf]
        %v466 = vld [vmem:[#allocation6 + $0xf4] sm:$0xf]
        %v467 = vld [vmem:[#allocation6 + $0xf8] sm:$0xf]
        %v468 = vld [vmem:[#allocation6 + $0xfc] sm:$0xf]
        %v533 = vunpack.c.l.b16 %v341
        %v534 = vunpack.c.h.b16 %v341
        %v535 = vunpack.c.l.b16 %v342
        %v536 = vunpack.c.h.b16 %v342
        %v537 = vunpack.c.l.b16 %v343
        %v538 = vunpack.c.h.b16 %v343
        %v539 = vunpack.c.l.b16 %v344
        %v540 = vunpack.c.h.b16 %v344
        %v541 = vunpack.c.l.b16 %v345
        %v542 = vunpack.c.h.b16 %v345
        %v543 = vunpack.c.l.b16 %v346
        %v544 = vunpack.c.h.b16 %v346
        %v545 = vunpack.c.l.b16 %v347
        %v546 = vunpack.c.h.b16 %v347
        %v547 = vunpack.c.l.b16 %v348
        %v548 = vunpack.c.h.b16 %v348
        %v549 = vunpack.c.l.b16 %v349
        %v550 = vunpack.c.h.b16 %v349
        %v551 = vunpack.c.l.b16 %v350
        %v552 = vunpack.c.h.b16 %v350
        %v553 = vunpack.c.l.b16 %v351
        %v554 = vunpack.c.h.b16 %v351
        %v555 = vunpack.c.l.b16 %v352
        %v556 = vunpack.c.h.b16 %v352
        %v557 = vunpack.c.l.b16 %v353
        %v558 = vunpack.c.h.b16 %v353
        %v559 = vunpack.c.l.b16 %v354
        %v560 = vunpack.c.h.b16 %v354
        %v561 = vunpack.c.l.b16 %v355
        %v562 = vunpack.c.h.b16 %v355
        %v563 = vunpack.c.l.b16 %v356
        %v564 = vunpack.c.h.b16 %v356
        %v565 = vunpack.c.l.b16 %v357
        %v566 = vunpack.c.h.b16 %v357
        %v567 = vunpack.c.l.b16 %v358
        %v568 = vunpack.c.h.b16 %v358
        %v569 = vunpack.c.l.b16 %v359
        %v570 = vunpack.c.h.b16 %v359
        %v571 = vunpack.c.l.b16 %v360
        %v572 = vunpack.c.h.b16 %v360
        %v573 = vunpack.c.l.b16 %v361
        %v574 = vunpack.c.h.b16 %v361
        %v575 = vunpack.c.l.b16 %v362
        %v576 = vunpack.c.h.b16 %v362
        %v577 = vunpack.c.l.b16 %v363
        %v578 = vunpack.c.h.b16 %v363
        %v579 = vunpack.c.l.b16 %v364
        %v580 = vunpack.c.h.b16 %v364
        %v581 = vunpack.c.l.b16 %v365
        %v582 = vunpack.c.h.b16 %v365
        %v583 = vunpack.c.l.b16 %v366
        %v584 = vunpack.c.h.b16 %v366
        %v585 = vunpack.c.l.b16 %v367
        %v586 = vunpack.c.h.b16 %v367
        %v587 = vunpack.c.l.b16 %v368
        %v588 = vunpack.c.h.b16 %v368
        %v589 = vunpack.c.l.b16 %v369
        %v590 = vunpack.c.h.b16 %v369
        %v591 = vunpack.c.l.b16 %v370
        %v592 = vunpack.c.h.b16 %v370
        %v593 = vunpack.c.l.b16 %v371
        %v594 = vunpack.c.h.b16 %v371
        %v595 = vunpack.c.l.b16 %v372
        %v596 = vunpack.c.h.b16 %v372
        %v597 = vunpack.c.l.b16 %v373
        %v598 = vunpack.c.h.b16 %v373
        %v599 = vunpack.c.l.b16 %v374
        %v600 = vunpack.c.h.b16 %v374
        %v601 = vunpack.c.l.b16 %v375
        %v602 = vunpack.c.h.b16 %v375
        %v603 = vunpack.c.l.b16 %v376
        %v604 = vunpack.c.h.b16 %v376
        %v605 = vunpack.c.l.b16 %v377
        %v606 = vunpack.c.h.b16 %v377
        %v607 = vunpack.c.l.b16 %v378
        %v608 = vunpack.c.h.b16 %v378
        %v609 = vunpack.c.l.b16 %v379
        %v610 = vunpack.c.h.b16 %v379
        %v611 = vunpack.c.l.b16 %v380
        %v612 = vunpack.c.h.b16 %v380
        %v613 = vunpack.c.l.b16 %v381
        %v614 = vunpack.c.h.b16 %v381
        %v615 = vunpack.c.l.b16 %v382
        %v616 = vunpack.c.h.b16 %v382
        %v617 = vunpack.c.l.b16 %v383
        %v618 = vunpack.c.h.b16 %v383
        %v619 = vunpack.c.l.b16 %v384
        %v620 = vunpack.c.h.b16 %v384
        %v621 = vunpack.c.l.b16 %v385
        %v622 = vunpack.c.h.b16 %v385
        %v623 = vunpack.c.l.b16 %v386
        %v624 = vunpack.c.h.b16 %v386
        %v625 = vunpack.c.l.b16 %v387
        %v626 = vunpack.c.h.b16 %v387
        %v627 = vunpack.c.l.b16 %v388
        %v628 = vunpack.c.h.b16 %v388
        %v629 = vunpack.c.l.b16 %v389
        %v630 = vunpack.c.h.b16 %v389
        %v631 = vunpack.c.l.b16 %v390
        %v632 = vunpack.c.h.b16 %v390
        %v633 = vunpack.c.l.b16 %v391
        %v634 = vunpack.c.h.b16 %v391
        %v635 = vunpack.c.l.b16 %v392
        %v636 = vunpack.c.h.b16 %v392
        %v637 = vunpack.c.l.b16 %v393
        %v638 = vunpack.c.h.b16 %v393
        %v639 = vunpack.c.l.b16 %v394
        %v640 = vunpack.c.h.b16 %v394
        %v641 = vunpack.c.l.b16 %v395
        %v642 = vunpack.c.h.b16 %v395
        %v643 = vunpack.c.l.b16 %v396
        %v644 = vunpack.c.h.b16 %v396
        %v645 = vunpack.c.l.b16 %v397
        %v646 = vunpack.c.h.b16 %v397
        %v647 = vunpack.c.l.b16 %v398
        %v648 = vunpack.c.h.b16 %v398
        %v649 = vunpack.c.l.b16 %v399
        %v650 = vunpack.c.h.b16 %v399
        %v651 = vunpack.c.l.b16 %v400
        %v652 = vunpack.c.h.b16 %v400
        %v653 = vunpack.c.l.b16 %v401
        %v654 = vunpack.c.h.b16 %v401
        %v655 = vunpack.c.l.b16 %v402
        %v656 = vunpack.c.h.b16 %v402
        %v657 = vunpack.c.l.b16 %v403
        %v658 = vunpack.c.h.b16 %v403
        %v659 = vunpack.c.l.b16 %v404
        %v660 = vunpack.c.h.b16 %v404
        %v661 = vpack.c.b16 %v537, %v533
        %v662 = vpack.c.b16 %v538, %v534
        %v663 = vpack.c.b16 %v539, %v535
        %v664 = vpack.c.b16 %v540, %v536
        %v665 = vpack.c.b16 %v545, %v541
        %v666 = vpack.c.b16 %v546, %v542
        %v667 = vpack.c.b16 %v547, %v543
        %v668 = vpack.c.b16 %v548, %v544
        %v669 = vpack.c.b16 %v553, %v549
        %v670 = vpack.c.b16 %v554, %v550
        %v671 = vpack.c.b16 %v555, %v551
        %v672 = vpack.c.b16 %v556, %v552
        %v673 = vpack.c.b16 %v561, %v557
        %v674 = vpack.c.b16 %v562, %v558
        %v675 = vpack.c.b16 %v563, %v559
        %v676 = vpack.c.b16 %v564, %v560
        %v677 = vpack.c.b16 %v569, %v565
        %v678 = vpack.c.b16 %v570, %v566
        %v679 = vpack.c.b16 %v571, %v567
        %v680 = vpack.c.b16 %v572, %v568
        %v681 = vpack.c.b16 %v577, %v573
        %v682 = vpack.c.b16 %v578, %v574
        %v683 = vpack.c.b16 %v579, %v575
        %v684 = vpack.c.b16 %v580, %v576
        %v685 = vpack.c.b16 %v585, %v581
        %v686 = vpack.c.b16 %v586, %v582
        %v687 = vpack.c.b16 %v587, %v583
        %v688 = vpack.c.b16 %v588, %v584
        %v689 = vpack.c.b16 %v593, %v589
        %v690 = vpack.c.b16 %v594, %v590
        %v691 = vpack.c.b16 %v595, %v591
        %v692 = vpack.c.b16 %v596, %v592
        %v693 = vpack.c.b16 %v601, %v597
        %v694 = vpack.c.b16 %v602, %v598
        %v695 = vpack.c.b16 %v603, %v599
        %v696 = vpack.c.b16 %v604, %v600
        %v697 = vpack.c.b16 %v609, %v605
        %v698 = vpack.c.b16 %v610, %v606
        %v699 = vpack.c.b16 %v611, %v607
        %v700 = vpack.c.b16 %v612, %v608
        %v701 = vpack.c.b16 %v617, %v613
        %v702 = vpack.c.b16 %v618, %v614
        %v703 = vpack.c.b16 %v619, %v615
        %v704 = vpack.c.b16 %v620, %v616
        %v705 = vpack.c.b16 %v625, %v621
        %v706 = vpack.c.b16 %v626, %v622
        %v707 = vpack.c.b16 %v627, %v623
        %v708 = vpack.c.b16 %v628, %v624
        %v709 = vpack.c.b16 %v633, %v629
        %v710 = vpack.c.b16 %v634, %v630
        %v711 = vpack.c.b16 %v635, %v631
        %v712 = vpack.c.b16 %v636, %v632
        %v713 = vpack.c.b16 %v641, %v637
        %v714 = vpack.c.b16 %v642, %v638
        %v715 = vpack.c.b16 %v643, %v639
        %v716 = vpack.c.b16 %v644, %v640
        %v717 = vpack.c.b16 %v649, %v645
        %v718 = vpack.c.b16 %v650, %v646
        %v719 = vpack.c.b16 %v651, %v647
        %v720 = vpack.c.b16 %v652, %v648
        %v721 = vpack.c.b16 %v657, %v653
        %v722 = vpack.c.b16 %v658, %v654
        %v723 = vpack.c.b16 %v659, %v655
        %v724 = vpack.c.b16 %v660, %v656
        %v853 = vunpack.c.l.b16 %v405
        %v854 = vunpack.c.l.b16 %v406
        %v855 = vunpack.c.l.b16 %v407
        %v856 = vunpack.c.l.b16 %v408
        %v857 = vunpack.c.l.b16 %v409
        %v858 = vunpack.c.l.b16 %v410
        %v859 = vunpack.c.l.b16 %v411
        %v860 = vunpack.c.l.b16 %v412
        %v861 = vunpack.c.l.b16 %v413
        %v862 = vunpack.c.l.b16 %v414
        %v863 = vunpack.c.l.b16 %v415
        %v864 = vunpack.c.l.b16 %v416
        %v865 = vunpack.c.l.b16 %v417
        %v866 = vunpack.c.l.b16 %v418
        %v867 = vunpack.c.l.b16 %v419
        %v868 = vunpack.c.l.b16 %v420
        %v869 = vunpack.c.l.b16 %v421
        %v870 = vunpack.c.l.b16 %v422
        %v871 = vunpack.c.l.b16 %v423
        %v872 = vunpack.c.l.b16 %v424
        %v873 = vunpack.c.l.b16 %v425
        %v874 = vunpack.c.l.b16 %v426
        %v875 = vunpack.c.l.b16 %v427
        %v876 = vunpack.c.l.b16 %v428
        %v877 = vunpack.c.l.b16 %v429
        %v878 = vunpack.c.l.b16 %v430
        %v879 = vunpack.c.l.b16 %v431
        %v880 = vunpack.c.l.b16 %v432
        %v881 = vunpack.c.l.b16 %v433
        %v882 = vunpack.c.l.b16 %v434
        %v883 = vunpack.c.l.b16 %v435
        %v884 = vunpack.c.l.b16 %v436
        %v885 = vunpack.c.l.b16 %v437
        %v886 = vunpack.c.l.b16 %v438
        %v887 = vunpack.c.l.b16 %v439
        %v888 = vunpack.c.l.b16 %v440
        %v889 = vunpack.c.l.b16 %v441
        %v890 = vunpack.c.l.b16 %v442
        %v891 = vunpack.c.l.b16 %v443
        %v892 = vunpack.c.l.b16 %v444
        %v893 = vunpack.c.l.b16 %v445
        %v894 = vunpack.c.l.b16 %v446
        %v895 = vunpack.c.l.b16 %v447
        %v896 = vunpack.c.l.b16 %v448
        %v897 = vunpack.c.l.b16 %v449
        %v898 = vunpack.c.l.b16 %v450
        %v899 = vunpack.c.l.b16 %v451
        %v900 = vunpack.c.l.b16 %v452
        %v901 = vunpack.c.l.b16 %v453
        %v902 = vunpack.c.l.b16 %v454
        %v903 = vunpack.c.l.b16 %v455
        %v904 = vunpack.c.l.b16 %v456
        %v905 = vunpack.c.l.b16 %v457
        %v906 = vunpack.c.l.b16 %v458
        %v907 = vunpack.c.l.b16 %v459
        %v908 = vunpack.c.l.b16 %v460
        %v909 = vunpack.c.l.b16 %v461
        %v910 = vunpack.c.l.b16 %v462
        %v911 = vunpack.c.l.b16 %v463
        %v912 = vunpack.c.l.b16 %v464
        %v913 = vunpack.c.l.b16 %v465
        %v914 = vunpack.c.l.b16 %v466
        %v915 = vunpack.c.l.b16 %v467
        %v916 = vunpack.c.l.b16 %v468
        %v917 = vpack.c.b16 %v854, %v853
        %v918 = vpack.c.b16 %v856, %v855
        %v919 = vpack.c.b16 %v858, %v857
        %v920 = vpack.c.b16 %v860, %v859
        %v921 = vpack.c.b16 %v862, %v861
        %v922 = vpack.c.b16 %v864, %v863
        %v923 = vpack.c.b16 %v866, %v865
        %v924 = vpack.c.b16 %v868, %v867
        %v925 = vpack.c.b16 %v870, %v869
        %v926 = vpack.c.b16 %v872, %v871
        %v927 = vpack.c.b16 %v874, %v873
        %v928 = vpack.c.b16 %v876, %v875
        %v929 = vpack.c.b16 %v878, %v877
        %v930 = vpack.c.b16 %v880, %v879
        %v931 = vpack.c.b16 %v882, %v881
        %v932 = vpack.c.b16 %v884, %v883
        %v933 = vpack.c.b16 %v886, %v885
        %v934 = vpack.c.b16 %v888, %v887
        %v935 = vpack.c.b16 %v890, %v889
        %v936 = vpack.c.b16 %v892, %v891
        %v937 = vpack.c.b16 %v894, %v893
        %v938 = vpack.c.b16 %v896, %v895
        %v939 = vpack.c.b16 %v898, %v897
        %v940 = vpack.c.b16 %v900, %v899
        %v941 = vpack.c.b16 %v902, %v901
        %v942 = vpack.c.b16 %v904, %v903
        %v943 = vpack.c.b16 %v906, %v905
        %v944 = vpack.c.b16 %v908, %v907
        %v945 = vpack.c.b16 %v910, %v909
        %v946 = vpack.c.b16 %v912, %v911
        %v947 = vpack.c.b16 %v914, %v913
        %v948 = vpack.c.b16 %v916, %v915
        %981 = vmatprep.subr.bf16.mxu0 0
        %982 = vmatpush1.bf16.msra.mxu0 %v917
        %983 = vmatprep.subr.bf16.mxu0 0
        %984 = vmatpush1.bf16.msra.mxu0 %v918
        %985 = vmatprep.subr.bf16.mxu0 0
        %986 = vmatpush1.bf16.msra.mxu0 %v919
        %987 = vmatprep.subr.bf16.mxu0 0
        %988 = vmatpush1.bf16.msra.mxu0 %v920
        %989 = vmatprep.subr.bf16.mxu0 0
        %990 = vmatpush1.bf16.msra.mxu0 %v921
        %991 = vmatprep.subr.bf16.mxu0 0
        %992 = vmatpush1.bf16.msra.mxu0 %v922
        %993 = vmatprep.subr.bf16.mxu0 0
        %994 = vmatpush1.bf16.msra.mxu0 %v923
        %995 = vmatprep.subr.bf16.mxu0 0
        %996 = vmatpush1.bf16.msra.mxu0 %v924
        %997 = vmatprep.subr.bf16.mxu0 0
        %998 = vmatpush1.bf16.msra.mxu0 %v925
        %999 = vmatprep.subr.bf16.mxu0 0
        %1000 = vmatpush1.bf16.msra.mxu0 %v926
        %1001 = vmatprep.subr.bf16.mxu0 0
        %1002 = vmatpush1.bf16.msra.mxu0 %v927
        %1003 = vmatprep.subr.bf16.mxu0 0
        %1004 = vmatpush1.bf16.msra.mxu0 %v928
        %1005 = vmatprep.subr.bf16.mxu0 0
        %1006 = vmatpush1.bf16.msra.mxu0 %v929
        %1007 = vmatprep.subr.bf16.mxu0 0
        %1008 = vmatpush1.bf16.msra.mxu0 %v930
        %1009 = vmatprep.subr.bf16.mxu0 0
        %1010 = vmatpush1.bf16.msra.mxu0 %v931
        %1011 = vmatprep.subr.bf16.mxu0 0
        %1012 = vmatpush1.bf16.msra.mxu0 %v932
        %1013 = vmatprep.mubr.bf16.mxu0 %v662
        %1014 = vmatmul.mubr.bf16.gmra.mrb[0].mxu0 %v661
        %v1015 = vpop.f32.mrb[0].mxu0
        %v1016 = vadd.f32 0.0, %v1015
        %v1017 = vpop.f32.mrb[0].mxu0
        %v1018 = vpop.f32.mrb[0].mxu0
        %v1019 = vadd.f32 0.0, %v1018
        %v1020 = vpop.f32.mrb[0].mxu0
        %1021 = vmatprep.mubr.bf16.mxu0 %v666
        %1022 = vmatmul.mubr.bf16.gmra.mrb[0].mxu0 %v665
        %v1023 = vpop.f32.mrb[0].mxu0
        %v1024 = vadd.f32 0.0, %v1023
        %v1025 = vpop.f32.mrb[0].mxu0
        %v1026 = vpop.f32.mrb[0].mxu0
        %v1027 = vadd.f32 0.0, %v1026
        %v1028 = vpop.f32.mrb[0].mxu0
        %1029 = vmatprep.mubr.bf16.mxu0 %v670
        %1030 = vmatmul.mubr.bf16.gmra.mrb[0].mxu0 %v669
        %v1031 = vpop.f32.mrb[0].mxu0
        %v1032 = vadd.f32 0.0, %v1031
        %v1033 = vpop.f32.mrb[0].mxu0
        %v1034 = vpop.f32.mrb[0].mxu0
        %v1035 = vadd.f32 0.0, %v1034
        %v1036 = vpop.f32.mrb[0].mxu0
        %1037 = vmatprep.mubr.bf16.mxu0 %v674
        %1038 = vmatmul.mubr.bf16.gmra.mrb[0].mxu0 %v673
        %v1039 = vpop.f32.mrb[0].mxu0
        %v1040 = vadd.f32 0.0, %v1039
        %v1041 = vpop.f32.mrb[0].mxu0
        %v1042 = vpop.f32.mrb[0].mxu0
        %v1043 = vadd.f32 0.0, %v1042
        %v1044 = vpop.f32.mrb[0].mxu0
        %1045 = vmatprep.mubr.bf16.mxu0 %v678
        %1046 = vmatmul.mubr.bf16.gmra.mrb[0].mxu0 %v677
        %v1047 = vpop.f32.mrb[0].mxu0
        %v1048 = vadd.f32 0.0, %v1047
        %v1049 = vpop.f32.mrb[0].mxu0
        %v1050 = vpop.f32.mrb[0].mxu0
        %v1051 = vadd.f32 0.0, %v1050
        %v1052 = vpop.f32.mrb[0].mxu0
        %1053 = vmatprep.mubr.bf16.mxu0 %v682
        %1054 = vmatmul.mubr.bf16.gmra.mrb[0].mxu0 %v681
        %v1055 = vpop.f32.mrb[0].mxu0
        %v1056 = vadd.f32 0.0, %v1055
        %v1057 = vpop.f32.mrb[0].mxu0
        %v1058 = vpop.f32.mrb[0].mxu0
        %v1059 = vadd.f32 0.0, %v1058
        %v1060 = vpop.f32.mrb[0].mxu0
        %1061 = vmatprep.mubr.bf16.mxu0 %v686
        %1062 = vmatmul.mubr.bf16.gmra.mrb[0].mxu0 %v685
        %v1063 = vpop.f32.mrb[0].mxu0
        %v1064 = vadd.f32 0.0, %v1063
        %v1065 = vpop.f32.mrb[0].mxu0
        %v1066 = vpop.f32.mrb[0].mxu0
        %v1067 = vadd.f32 0.0, %v1066
        %v1068 = vpop.f32.mrb[0].mxu0
        %1069 = vmatprep.mubr.bf16.mxu0 %v690
        %1070 = vmatmul.mubr.bf16.gmra.mrb[0].mxu0 %v689
        %v1071 = vpop.f32.mrb[0].mxu0
        %v1072 = vadd.f32 0.0, %v1071
        %v1073 = vpop.f32.mrb[0].mxu0
        %v1074 = vpop.f32.mrb[0].mxu0
        %v1075 = vadd.f32 0.0, %v1074
        %v1076 = vpop.f32.mrb[0].mxu0
        %1077 = vmatprep.mubr.bf16.mxu0 %v694
        %1078 = vmatmul.mubr.bf16.gmra.mrb[0].mxu0 %v693
        %v1079 = vpop.f32.mrb[0].mxu0
        %v1080 = vadd.f32 0.0, %v1079
        %v1081 = vpop.f32.mrb[0].mxu0
        %v1082 = vpop.f32.mrb[0].mxu0
        %v1083 = vadd.f32 0.0, %v1082
        %v1084 = vpop.f32.mrb[0].mxu0
        %1085 = vmatprep.mubr.bf16.mxu0 %v698
        %1086 = vmatmul.mubr.bf16.gmra.mrb[0].mxu0 %v697
        %v1087 = vpop.f32.mrb[0].mxu0
        %v1088 = vadd.f32 0.0, %v1087
        %v1089 = vpop.f32.mrb[0].mxu0
        %v1090 = vpop.f32.mrb[0].mxu0
        %v1091 = vadd.f32 0.0, %v1090
        %v1092 = vpop.f32.mrb[0].mxu0
        %1093 = vmatprep.mubr.bf16.mxu0 %v702
        %1094 = vmatmul.mubr.bf16.gmra.mrb[0].mxu0 %v701
        %v1095 = vpop.f32.mrb[0].mxu0
        %v1096 = vadd.f32 0.0, %v1095
        %v1097 = vpop.f32.mrb[0].mxu0
        %v1098 = vpop.f32.mrb[0].mxu0
        %v1099 = vadd.f32 0.0, %v1098
        %v1100 = vpop.f32.mrb[0].mxu0
        %1101 = vmatprep.mubr.bf16.mxu0 %v706
        %1102 = vmatmul.mubr.bf16.gmra.mrb[0].mxu0 %v705
        %v1103 = vpop.f32.mrb[0].mxu0
        %v1104 = vadd.f32 0.0, %v1103
        %v1105 = vpop.f32.mrb[0].mxu0
        %v1106 = vpop.f32.mrb[0].mxu0
        %v1107 = vadd.f32 0.0, %v1106
        %v1108 = vpop.f32.mrb[0].mxu0
        %1109 = vmatprep.mubr.bf16.mxu0 %v710
        %1110 = vmatmul.mubr.bf16.gmra.mrb[0].mxu0 %v709
        %v1111 = vpop.f32.mrb[0].mxu0
        %v1112 = vadd.f32 0.0, %v1111
        %v1113 = vpop.f32.mrb[0].mxu0
        %v1114 = vpop.f32.mrb[0].mxu0
        %v1115 = vadd.f32 0.0, %v1114
        %v1116 = vpop.f32.mrb[0].mxu0
        %1117 = vmatprep.mubr.bf16.mxu0 %v714
        %1118 = vmatmul.mubr.bf16.gmra.mrb[0].mxu0 %v713
        %v1119 = vpop.f32.mrb[0].mxu0
        %v1120 = vadd.f32 0.0, %v1119
        %v1121 = vpop.f32.mrb[0].mxu0
        %v1122 = vpop.f32.mrb[0].mxu0
        %v1123 = vadd.f32 0.0, %v1122
        %v1124 = vpop.f32.mrb[0].mxu0
        %1125 = vmatprep.mubr.bf16.mxu0 %v718
        %1126 = vmatmul.mubr.bf16.gmra.mrb[0].mxu0 %v717
        %v1127 = vpop.f32.mrb[0].mxu0
        %v1128 = vadd.f32 0.0, %v1127
        %v1129 = vpop.f32.mrb[0].mxu0
        %v1130 = vpop.f32.mrb[0].mxu0
        %v1131 = vadd.f32 0.0, %v1130
        %v1132 = vpop.f32.mrb[0].mxu0
        %1133 = vmatprep.mubr.bf16.mxu0 %v722
        %1134 = vmatmul.mubr.bf16.gmra.mrb[0].mxu0 %v721
        %v1135 = vpop.f32.mrb[0].mxu0
        %v1136 = vadd.f32 0.0, %v1135
        %v1137 = vpop.f32.mrb[0].mxu0
        %v1138 = vpop.f32.mrb[0].mxu0
        %v1139 = vadd.f32 0.0, %v1138
        %v1140 = vpop.f32.mrb[0].mxu0
        %1141 = vdwg.mxu0
        %1142 = vmatprep.subr.bf16.mxu0 0
        %1143 = vmatpush1.bf16.msra.mxu0 %v933
        %1144 = vmatprep.subr.bf16.mxu0 0
        %1145 = vmatpush1.bf16.msra.mxu0 %v934
        %1146 = vmatprep.subr.bf16.mxu0 0
        %1147 = vmatpush1.bf16.msra.mxu0 %v935
        %1148 = vmatprep.subr.bf16.mxu0 0
        %1149 = vmatpush1.bf16.msra.mxu0 %v936
        %1150 = vmatprep.subr.bf16.mxu0 0
        %1151 = vmatpush1.bf16.msra.mxu0 %v937
        %1152 = vmatprep.subr.bf16.mxu0 0
        %1153 = vmatpush1.bf16.msra.mxu0 %v938
        %1154 = vmatprep.subr.bf16.mxu0 0
        %1155 = vmatpush1.bf16.msra.mxu0 %v939
        %1156 = vmatprep.subr.bf16.mxu0 0
        %1157 = vmatpush1.bf16.msra.mxu0 %v940
        %1158 = vmatprep.subr.bf16.mxu0 0
        %1159 = vmatpush1.bf16.msra.mxu0 %v941
        %1160 = vmatprep.subr.bf16.mxu0 0
        %1161 = vmatpush1.bf16.msra.mxu0 %v942
        %1162 = vmatprep.subr.bf16.mxu0 0
        %1163 = vmatpush1.bf16.msra.mxu0 %v943
        %1164 = vmatprep.subr.bf16.mxu0 0
        %1165 = vmatpush1.bf16.msra.mxu0 %v944
        %1166 = vmatprep.subr.bf16.mxu0 0
        %1167 = vmatpush1.bf16.msra.mxu0 %v945
        %1168 = vmatprep.subr.bf16.mxu0 0
        %1169 = vmatpush1.bf16.msra.mxu0 %v946
        %1170 = vmatprep.subr.bf16.mxu0 0
        %1171 = vmatpush1.bf16.msra.mxu0 %v947
        %1172 = vmatprep.subr.bf16.mxu0 0
        %1173 = vmatpush1.bf16.msra.mxu0 %v948
        %1174 = vmatprep.mubr.bf16.mxu0 %v664
        %1175 = vmatmul.mubr.bf16.gmra.mrb[0].mxu0 %v663
        %v1176 = vpop.f32.mrb[0].mxu0
        %v1177 = vadd.f32 %v1016, %v1176
        %v1178 = vpop.f32.mrb[0].mxu0
        %v1179 = vpop.f32.mrb[0].mxu0
        %v1180 = vadd.f32 %v1019, %v1179
        %v1181 = vpop.f32.mrb[0].mxu0
        %1182 = vmatprep.mubr.bf16.mxu0 %v668
        %1183 = vmatmul.mubr.bf16.gmra.mrb[0].mxu0 %v667
        %v1184 = vpop.f32.mrb[0].mxu0
        %v1185 = vadd.f32 %v1024, %v1184
        %v1186 = vpop.f32.mrb[0].mxu0
        %v1187 = vpop.f32.mrb[0].mxu0
        %v1188 = vadd.f32 %v1027, %v1187
        %v1189 = vpop.f32.mrb[0].mxu0
        %1190 = vmatprep.mubr.bf16.mxu0 %v672
        %1191 = vmatmul.mubr.bf16.gmra.mrb[0].mxu0 %v671
        %v1192 = vpop.f32.mrb[0].mxu0
        %v1193 = vadd.f32 %v1032, %v1192
        %v1194 = vpop.f32.mrb[0].mxu0
        %v1195 = vpop.f32.mrb[0].mxu0
        %v1196 = vadd.f32 %v1035, %v1195
        %v1197 = vpop.f32.mrb[0].mxu0
        %1198 = vmatprep.mubr.bf16.mxu0 %v676
        %1199 = vmatmul.mubr.bf16.gmra.mrb[0].mxu0 %v675
        %v1200 = vpop.f32.mrb[0].mxu0
        %v1201 = vadd.f32 %v1040, %v1200
        %v1202 = vpop.f32.mrb[0].mxu0
        %v1203 = vpop.f32.mrb[0].mxu0
        %v1204 = vadd.f32 %v1043, %v1203
        %v1205 = vpop.f32.mrb[0].mxu0
        %1206 = vmatprep.mubr.bf16.mxu0 %v680
        %1207 = vmatmul.mubr.bf16.gmra.mrb[0].mxu0 %v679
        %v1208 = vpop.f32.mrb[0].mxu0
        %v1209 = vadd.f32 %v1048, %v1208
        %v1210 = vpop.f32.mrb[0].mxu0
        %v1211 = vpop.f32.mrb[0].mxu0
        %v1212 = vadd.f32 %v1051, %v1211
        %v1213 = vpop.f32.mrb[0].mxu0
        %1214 = vmatprep.mubr.bf16.mxu0 %v684
        %1215 = vmatmul.mubr.bf16.gmra.mrb[0].mxu0 %v683
        %v1216 = vpop.f32.mrb[0].mxu0
        %v1217 = vadd.f32 %v1056, %v1216
        %v1218 = vpop.f32.mrb[0].mxu0
        %v1219 = vpop.f32.mrb[0].mxu0
        %v1220 = vadd.f32 %v1059, %v1219
        %v1221 = vpop.f32.mrb[0].mxu0
        %1222 = vmatprep.mubr.bf16.mxu0 %v688
        %1223 = vmatmul.mubr.bf16.gmra.mrb[0].mxu0 %v687
        %v1224 = vpop.f32.mrb[0].mxu0
        %v1225 = vadd.f32 %v1064, %v1224
        %v1226 = vpop.f32.mrb[0].mxu0
        %v1227 = vpop.f32.mrb[0].mxu0
        %v1228 = vadd.f32 %v1067, %v1227
        %v1229 = vpop.f32.mrb[0].mxu0
        %1230 = vmatprep.mubr.bf16.mxu0 %v692
        %1231 = vmatmul.mubr.bf16.gmra.mrb[0].mxu0 %v691
        %v1232 = vpop.f32.mrb[0].mxu0
        %v1233 = vadd.f32 %v1072, %v1232
        %v1234 = vpop.f32.mrb[0].mxu0
        %v1235 = vpop.f32.mrb[0].mxu0
        %v1236 = vadd.f32 %v1075, %v1235
        %v1237 = vpop.f32.mrb[0].mxu0
        %1238 = vmatprep.mubr.bf16.mxu0 %v696
        %1239 = vmatmul.mubr.bf16.gmra.mrb[0].mxu0 %v695
        %v1240 = vpop.f32.mrb[0].mxu0
        %v1241 = vadd.f32 %v1080, %v1240
        %v1242 = vpop.f32.mrb[0].mxu0
        %v1243 = vpop.f32.mrb[0].mxu0
        %v1244 = vadd.f32 %v1083, %v1243
        %v1245 = vpop.f32.mrb[0].mxu0
        %1246 = vmatprep.mubr.bf16.mxu0 %v700
        %1247 = vmatmul.mubr.bf16.gmra.mrb[0].mxu0 %v699
        %v1248 = vpop.f32.mrb[0].mxu0
        %v1249 = vadd.f32 %v1088, %v1248
        %v1250 = vpop.f32.mrb[0].mxu0
        %v1251 = vpop.f32.mrb[0].mxu0
        %v1252 = vadd.f32 %v1091, %v1251
        %v1253 = vpop.f32.mrb[0].mxu0
        %1254 = vmatprep.mubr.bf16.mxu0 %v704
        %1255 = vmatmul.mubr.bf16.gmra.mrb[0].mxu0 %v703
        %v1256 = vpop.f32.mrb[0].mxu0
        %v1257 = vadd.f32 %v1096, %v1256
        %v1258 = vpop.f32.mrb[0].mxu0
        %v1259 = vpop.f32.mrb[0].mxu0
        %v1260 = vadd.f32 %v1099, %v1259
        %v1261 = vpop.f32.mrb[0].mxu0
        %1262 = vmatprep.mubr.bf16.mxu0 %v708
        %1263 = vmatmul.mubr.bf16.gmra.mrb[0].mxu0 %v707
        %v1264 = vpop.f32.mrb[0].mxu0
        %v1265 = vadd.f32 %v1104, %v1264
        %v1266 = vpop.f32.mrb[0].mxu0
        %v1267 = vpop.f32.mrb[0].mxu0
        %v1268 = vadd.f32 %v1107, %v1267
        %v1269 = vpop.f32.mrb[0].mxu0
        %1270 = vmatprep.mubr.bf16.mxu0 %v712
        %1271 = vmatmul.mubr.bf16.gmra.mrb[0].mxu0 %v711
        %v1272 = vpop.f32.mrb[0].mxu0
        %v1273 = vadd.f32 %v1112, %v1272
        %v1274 = vpop.f32.mrb[0].mxu0
        %v1275 = vpop.f32.mrb[0].mxu0
        %v1276 = vadd.f32 %v1115, %v1275
        %v1277 = vpop.f32.mrb[0].mxu0
        %1278 = vmatprep.mubr.bf16.mxu0 %v716
        %1279 = vmatmul.mubr.bf16.gmra.mrb[0].mxu0 %v715
        %v1280 = vpop.f32.mrb[0].mxu0
        %v1281 = vadd.f32 %v1120, %v1280
        %v1282 = vpop.f32.mrb[0].mxu0
        %v1283 = vpop.f32.mrb[0].mxu0
        %v1284 = vadd.f32 %v1123, %v1283
        %v1285 = vpop.f32.mrb[0].mxu0
        %1286 = vmatprep.mubr.bf16.mxu0 %v720
        %1287 = vmatmul.mubr.bf16.gmra.mrb[0].mxu0 %v719
        %v1288 = vpop.f32.mrb[0].mxu0
        %v1289 = vadd.f32 %v1128, %v1288
        %v1290 = vpop.f32.mrb[0].mxu0
        %v1291 = vpop.f32.mrb[0].mxu0
        %v1292 = vadd.f32 %v1131, %v1291
        %v1293 = vpop.f32.mrb[0].mxu0
        %1294 = vmatprep.mubr.bf16.mxu0 %v724
        %1295 = vmatmul.mubr.bf16.gmra.mrb[0].mxu0 %v723
        %v1296 = vpop.f32.mrb[0].mxu0
        %v1297 = vadd.f32 %v1136, %v1296
        %v1298 = vpop.f32.mrb[0].mxu0
        %v1299 = vpop.f32.mrb[0].mxu0
        %v1300 = vadd.f32 %v1139, %v1299
        %v1301 = vpop.f32.mrb[0].mxu0
        %1302 = vdwg.mxu0
        %v1303 = vadd.f32 %v309, %v1177
        %v1304 = vadd.f32 %v310, %v1180
        %v1305 = vadd.f32 %v311, %v1185
        %v1306 = vadd.f32 %v312, %v1188
        %v1307 = vadd.f32 %v313, %v1193
        %v1308 = vadd.f32 %v314, %v1196
        %v1309 = vadd.f32 %v315, %v1201
        %v1310 = vadd.f32 %v316, %v1204
        %v1311 = vadd.f32 %v317, %v1209
        %v1312 = vadd.f32 %v318, %v1212
        %v1313 = vadd.f32 %v319, %v1217
        %v1314 = vadd.f32 %v320, %v1220
        %v1315 = vadd.f32 %v321, %v1225
        %v1316 = vadd.f32 %v322, %v1228
        %v1317 = vadd.f32 %v323, %v1233
        %v1318 = vadd.f32 %v324, %v1236
        %v1319 = vadd.f32 %v325, %v1241
        %v1320 = vadd.f32 %v326, %v1244
        %v1321 = vadd.f32 %v327, %v1249
        %v1322 = vadd.f32 %v328, %v1252
        %v1323 = vadd.f32 %v329, %v1257
        %v1324 = vadd.f32 %v330, %v1260
        %v1325 = vadd.f32 %v331, %v1265
        %v1326 = vadd.f32 %v332, %v1268
        %v1327 = vadd.f32 %v333, %v1273
        %v1328 = vadd.f32 %v334, %v1276
        %v1329 = vadd.f32 %v335, %v1281
        %v1330 = vadd.f32 %v336, %v1284
        %v1331 = vadd.f32 %v337, %v1289
        %v1332 = vadd.f32 %v338, %v1292
        %v1333 = vadd.f32 %v339, %v1297
        %v1334 = vadd.f32 %v340, %v1300
        %vm1335 = vcmask 64512
        %1336 = vst.msk [vmem:[#allocation2] sm:$0xff] %vm1335, %v1303
        %1337 = vst.msk [vmem:[#allocation2 + $0x8] sm:$0xff] %vm1335, %v1304
        %1338 = vst.msk [vmem:[#allocation2 + $0x10] sm:$0xff] %vm1335, %v1305
        %1339 = vst.msk [vmem:[#allocation2 + $0x18] sm:$0xff] %vm1335, %v1306
        %1340 = vst.msk [vmem:[#allocation2 + $0x20] sm:$0xff] %vm1335, %v1307
        %1341 = vst.msk [vmem:[#allocation2 + $0x28] sm:$0xff] %vm1335, %v1308
        %1342 = vst.msk [vmem:[#allocation2 + $0x30] sm:$0xff] %vm1335, %v1309
        %1343 = vst.msk [vmem:[#allocation2 + $0x38] sm:$0xff] %vm1335, %v1310
        %1344 = vst.msk [vmem:[#allocation2 + $0x40] sm:$0xff] %vm1335, %v1311
        %1345 = vst.msk [vmem:[#allocation2 + $0x48] sm:$0xff] %vm1335, %v1312
        %1346 = vst.msk [vmem:[#allocation2 + $0x50] sm:$0xff] %vm1335, %v1313
        %1347 = vst.msk [vmem:[#allocation2 + $0x58] sm:$0xff] %vm1335, %v1314
        %1348 = vst.msk [vmem:[#allocation2 + $0x60] sm:$0xff] %vm1335, %v1315
        %1349 = vst.msk [vmem:[#allocation2 + $0x68] sm:$0xff] %vm1335, %v1316
        %1350 = vst.msk [vmem:[#allocation2 + $0x70] sm:$0xff] %vm1335, %v1317
        %1351 = vst.msk [vmem:[#allocation2 + $0x78] sm:$0xff] %vm1335, %v1318
        %1352 = vst.msk [vmem:[#allocation2 + $0x80] sm:$0xff] %vm1335, %v1319
        %1353 = vst.msk [vmem:[#allocation2 + $0x88] sm:$0xff] %vm1335, %v1320
        %1354 = vst.msk [vmem:[#allocation2 + $0x90] sm:$0xff] %vm1335, %v1321
        %1355 = vst.msk [vmem:[#allocation2 + $0x98] sm:$0xff] %vm1335, %v1322
        %1356 = vst.msk [vmem:[#allocation2 + $0xa0] sm:$0xff] %vm1335, %v1323
        %1357 = vst.msk [vmem:[#allocation2 + $0xa8] sm:$0xff] %vm1335, %v1324
        %1358 = vst.msk [vmem:[#allocation2 + $0xb0] sm:$0xff] %vm1335, %v1325
        %1359 = vst.msk [vmem:[#allocation2 + $0xb8] sm:$0xff] %vm1335, %v1326
        %1360 = vst.msk [vmem:[#allocation2 + $0xc0] sm:$0xff] %vm1335, %v1327
        %1361 = vst.msk [vmem:[#allocation2 + $0xc8] sm:$0xff] %vm1335, %v1328
        %1362 = vst.msk [vmem:[#allocation2 + $0xd0] sm:$0xff] %vm1335, %v1329
        %1363 = vst.msk [vmem:[#allocation2 + $0xd8] sm:$0xff] %vm1335, %v1330
        %1364 = vst.msk [vmem:[#allocation2 + $0xe0] sm:$0xff] %vm1335, %v1331
        %1365 = vst.msk [vmem:[#allocation2 + $0xe8] sm:$0xff] %vm1335, %v1332
        %1366 = vst.msk [vmem:[#allocation2 + $0xf0] sm:$0xff] %vm1335, %v1333
        %1367 = vst.msk [vmem:[#allocation2 + $0xf8] sm:$0xff] %vm1335, %v1334
        // Predicated region
        $region49: #{view_gnn_forward.9} parent=31 // pred_check
          %p1368 = pneg %p272
        $region50: #{view_gnn_forward.9} parent=31 // pred_check_branch
          %1370 = sbr.rel (%p1368) target = $region52
        $region51: #{view_gnn_forward.9} parent=31 // pred_region
          %v1371 = vld [vmem:[#allocation2] sm:$0xff]
          %v1372 = vld [vmem:[#allocation2 + $0x8] sm:$0xff]
          %v1373 = vld [vmem:[#allocation2 + $0x10] sm:$0xff]
          %v1374 = vld [vmem:[#allocation2 + $0x18] sm:$0xff]
          %v1375 = vld [vmem:[#allocation2 + $0x20] sm:$0xff]
          %v1376 = vld [vmem:[#allocation2 + $0x28] sm:$0xff]
          %v1377 = vld [vmem:[#allocation2 + $0x30] sm:$0xff]
          %v1378 = vld [vmem:[#allocation2 + $0x38] sm:$0xff]
          %v1379 = vld [vmem:[#allocation2 + $0x40] sm:$0xff]
          %v1380 = vld [vmem:[#allocation2 + $0x48] sm:$0xff]
          %v1381 = vld [vmem:[#allocation2 + $0x50] sm:$0xff]
          %v1382 = vld [vmem:[#allocation2 + $0x58] sm:$0xff]
          %v1383 = vld [vmem:[#allocation2 + $0x60] sm:$0xff]
          %v1384 = vld [vmem:[#allocation2 + $0x68] sm:$0xff]
          %v1385 = vld [vmem:[#allocation2 + $0x70] sm:$0xff]
          %v1386 = vld [vmem:[#allocation2 + $0x78] sm:$0xff]
          %v1387 = vld [vmem:[#allocation2 + $0x80] sm:$0xff]
          %v1388 = vld [vmem:[#allocation2 + $0x88] sm:$0xff]
          %v1389 = vld [vmem:[#allocation2 + $0x90] sm:$0xff]
          %v1390 = vld [vmem:[#allocation2 + $0x98] sm:$0xff]
          %v1391 = vld [vmem:[#allocation2 + $0xa0] sm:$0xff]
          %v1392 = vld [vmem:[#allocation2 + $0xa8] sm:$0xff]
          %v1393 = vld [vmem:[#allocation2 + $0xb0] sm:$0xff]
          %v1394 = vld [vmem:[#allocation2 + $0xb8] sm:$0xff]
          %v1395 = vld [vmem:[#allocation2 + $0xc0] sm:$0xff]
          %v1396 = vld [vmem:[#allocation2 + $0xc8] sm:$0xff]
          %v1397 = vld [vmem:[#allocation2 + $0xd0] sm:$0xff]
          %v1398 = vld [vmem:[#allocation2 + $0xd8] sm:$0xff]
          %v1399 = vld [vmem:[#allocation2 + $0xe0] sm:$0xff]
          %v1400 = vld [vmem:[#allocation2 + $0xe8] sm:$0xff]
          %v1401 = vld [vmem:[#allocation2 + $0xf0] sm:$0xff]
          %v1402 = vld [vmem:[#allocation2 + $0xf8] sm:$0xff]
          %v1403 = vld [vmem:[%s238] sm:$0xff]
          %v1404 = vld [vmem:[%s238 + $0x8] sm:$0xff]
          %v1405 = vld [vmem:[%s238 + $0x10] sm:$0xff]
          %v1406 = vld [vmem:[%s238 + $0x18] sm:$0xff]
          %v1407 = vld [vmem:[%s238 + $0x20] sm:$0xff]
          %v1408 = vld [vmem:[%s238 + $0x28] sm:$0xff]
          %v1409 = vld [vmem:[%s238 + $0x30] sm:$0xff]
          %v1410 = vld [vmem:[%s238 + $0x38] sm:$0xff]
          %v1411 = vld [vmem:[%s238 + $0x40] sm:$0xff]
          %v1412 = vld [vmem:[%s238 + $0x48] sm:$0xff]
          %v1413 = vld [vmem:[%s238 + $0x50] sm:$0xff]
          %v1414 = vld [vmem:[%s238 + $0x58] sm:$0xff]
          %v1415 = vld [vmem:[%s238 + $0x60] sm:$0xff]
          %v1416 = vld [vmem:[%s238 + $0x68] sm:$0xff]
          %v1417 = vld [vmem:[%s238 + $0x70] sm:$0xff]
          %v1418 = vld [vmem:[%s238 + $0x78] sm:$0xff]
          %v1419 = vld [vmem:[%s238 + $0x80] sm:$0xff]
          %v1420 = vld [vmem:[%s238 + $0x88] sm:$0xff]
          %v1421 = vld [vmem:[%s238 + $0x90] sm:$0xff]
          %v1422 = vld [vmem:[%s238 + $0x98] sm:$0xff]
          %v1423 = vld [vmem:[%s238 + $0xa0] sm:$0xff]
          %v1424 = vld [vmem:[%s238 + $0xa8] sm:$0xff]
          %v1425 = vld [vmem:[%s238 + $0xb0] sm:$0xff]
          %v1426 = vld [vmem:[%s238 + $0xb8] sm:$0xff]
          %v1427 = vld [vmem:[%s238 + $0xc0] sm:$0xff]
          %v1428 = vld [vmem:[%s238 + $0xc8] sm:$0xff]
          %v1429 = vld [vmem:[%s238 + $0xd0] sm:$0xff]
          %v1430 = vld [vmem:[%s238 + $0xd8] sm:$0xff]
          %v1431 = vld [vmem:[%s238 + $0xe0] sm:$0xff]
          %v1432 = vld [vmem:[%s238 + $0xe8] sm:$0xff]
          %v1433 = vld [vmem:[%s238 + $0xf0] sm:$0xff]
          %v1434 = vld [vmem:[%s238 + $0xf8] sm:$0xff]
          %v1435 = vadd.f32 %v1371, %v1403
          %v1436 = vadd.f32 %v1372, %v1404
          %v1437 = vadd.f32 %v1373, %v1405
          %v1438 = vadd.f32 %v1374, %v1406
          %v1439 = vadd.f32 %v1375, %v1407
          %v1440 = vadd.f32 %v1376, %v1408
          %v1441 = vadd.f32 %v1377, %v1409
          %v1442 = vadd.f32 %v1378, %v1410
          %v1443 = vadd.f32 %v1379, %v1411
          %v1444 = vadd.f32 %v1380, %v1412
          %v1445 = vadd.f32 %v1381, %v1413
          %v1446 = vadd.f32 %v1382, %v1414
          %v1447 = vadd.f32 %v1383, %v1415
          %v1448 = vadd.f32 %v1384, %v1416
          %v1449 = vadd.f32 %v1385, %v1417
          %v1450 = vadd.f32 %v1386, %v1418
          %v1451 = vadd.f32 %v1387, %v1419
          %v1452 = vadd.f32 %v1388, %v1420
          %v1453 = vadd.f32 %v1389, %v1421
          %v1454 = vadd.f32 %v1390, %v1422
          %v1455 = vadd.f32 %v1391, %v1423
          %v1456 = vadd.f32 %v1392, %v1424
          %v1457 = vadd.f32 %v1393, %v1425
          %v1458 = vadd.f32 %v1394, %v1426
          %v1459 = vadd.f32 %v1395, %v1427
          %v1460 = vadd.f32 %v1396, %v1428
          %v1461 = vadd.f32 %v1397, %v1429
          %v1462 = vadd.f32 %v1398, %v1430
          %v1463 = vadd.f32 %v1399, %v1431
          %v1464 = vadd.f32 %v1400, %v1432
          %v1465 = vadd.f32 %v1401, %v1433
          %v1466 = vadd.f32 %v1402, %v1434
          %v1467 = vtanh.pop %v1435
          %v1468 = vtanh.pop %v1436
          %v1469 = vtanh.pop %v1437
          %v1470 = vtanh.pop %v1438
          %v1471 = vtanh.pop %v1439
          %v1472 = vtanh.pop %v1440
          %v1473 = vtanh.pop %v1441
          %v1474 = vtanh.pop %v1442
          %v1475 = vtanh.pop %v1443
          %v1476 = vtanh.pop %v1444
          %v1477 = vtanh.pop %v1445
          %v1478 = vtanh.pop %v1446
          %v1479 = vtanh.pop %v1447
          %v1480 = vtanh.pop %v1448
          %v1481 = vtanh.pop %v1449
          %v1482 = vtanh.pop %v1450
          %v1483 = vtanh.pop %v1451
          %v1484 = vtanh.pop %v1452
          %v1485 = vtanh.pop %v1453
          %v1486 = vtanh.pop %v1454
          %v1487 = vtanh.pop %v1455
          %v1488 = vtanh.pop %v1456
          %v1489 = vtanh.pop %v1457
          %v1490 = vtanh.pop %v1458
          %v1491 = vtanh.pop %v1459
          %v1492 = vtanh.pop %v1460
          %v1493 = vtanh.pop %v1461
          %v1494 = vtanh.pop %v1462
          %v1495 = vtanh.pop %v1463
          %v1496 = vtanh.pop %v1464
          %v1497 = vtanh.pop %v1465
          %v1498 = vtanh.pop %v1466
          %vm1499 = vcmask 7168
          %1500 = vst.msk [vmem:[%s265] sm:$0xff] %vm1499, %v1467
          %1501 = vst.msk [vmem:[%s265 + $0x8] sm:$0xff] %vm1499, %v1468
          %1502 = vst.msk [vmem:[%s265 + $0x10] sm:$0xff] %vm1499, %v1469
          %1503 = vst.msk [vmem:[%s265 + $0x18] sm:$0xff] %vm1499, %v1470
          %1504 = vst.msk [vmem:[%s265 + $0x20] sm:$0xff] %vm1499, %v1471
          %1505 = vst.msk [vmem:[%s265 + $0x28] sm:$0xff] %vm1499, %v1472
          %1506 = vst.msk [vmem:[%s265 + $0x30] sm:$0xff] %vm1499, %v1473
          %1507 = vst.msk [vmem:[%s265 + $0x38] sm:$0xff] %vm1499, %v1474
          %1508 = vst.msk [vmem:[%s265 + $0x40] sm:$0xff] %vm1499, %v1475
          %1509 = vst.msk [vmem:[%s265 + $0x48] sm:$0xff] %vm1499, %v1476
          %1510 = vst.msk [vmem:[%s265 + $0x50] sm:$0xff] %vm1499, %v1477
          %1511 = vst.msk [vmem:[%s265 + $0x58] sm:$0xff] %vm1499, %v1478
          %1512 = vst.msk [vmem:[%s265 + $0x60] sm:$0xff] %vm1499, %v1479
          %1513 = vst.msk [vmem:[%s265 + $0x68] sm:$0xff] %vm1499, %v1480
          %1514 = vst.msk [vmem:[%s265 + $0x70] sm:$0xff] %vm1499, %v1481
          %1515 = vst.msk [vmem:[%s265 + $0x78] sm:$0xff] %vm1499, %v1482
          %1516 = vst.msk [vmem:[%s265 + $0x80] sm:$0xff] %vm1499, %v1483
          %1517 = vst.msk [vmem:[%s265 + $0x88] sm:$0xff] %vm1499, %v1484
          %1518 = vst.msk [vmem:[%s265 + $0x90] sm:$0xff] %vm1499, %v1485
          %1519 = vst.msk [vmem:[%s265 + $0x98] sm:$0xff] %vm1499, %v1486
          %1520 = vst.msk [vmem:[%s265 + $0xa0] sm:$0xff] %vm1499, %v1487
          %1521 = vst.msk [vmem:[%s265 + $0xa8] sm:$0xff] %vm1499, %v1488
          %1522 = vst.msk [vmem:[%s265 + $0xb0] sm:$0xff] %vm1499, %v1489
          %1523 = vst.msk [vmem:[%s265 + $0xb8] sm:$0xff] %vm1499, %v1490
          %1524 = vst.msk [vmem:[%s265 + $0xc0] sm:$0xff] %vm1499, %v1491
          %1525 = vst.msk [vmem:[%s265 + $0xc8] sm:$0xff] %vm1499, %v1492
          %1526 = vst.msk [vmem:[%s265 + $0xd0] sm:$0xff] %vm1499, %v1493
          %1527 = vst.msk [vmem:[%s265 + $0xd8] sm:$0xff] %vm1499, %v1494
          %1528 = vst.msk [vmem:[%s265 + $0xe0] sm:$0xff] %vm1499, %v1495
          %1529 = vst.msk [vmem:[%s265 + $0xe8] sm:$0xff] %vm1499, %v1496
          %1530 = vst.msk [vmem:[%s265 + $0xf0] sm:$0xff] %vm1499, %v1497
          %1531 = vst.msk [vmem:[%s265 + $0xf8] sm:$0xff] %vm1499, %v1498
        $region52: #{view_gnn_forward.9} parent=31 // pred_fallthru
          _
        %s1532 = sand.u32 %s121, 1
        %s1533 = scalar_lea.sflag [#allocation5], %s1532
        %s1534 = sand.u32 %s121, 1
        %s1535 = smul.addr %s1534, 256
        %s1536 = scalar_lea.vmem [#allocation9], %s1535
        // Predicated region
        $region53: #{view_gnn_forward.9} parent=31 // pred_check
          %p1537 = pneg %p131
        $region54: #{view_gnn_forward.9} parent=31 // pred_check_branch
          %1539 = sbr.rel (%p1537) target = $region56
        $region55: #{view_gnn_forward.9} parent=31 // pred_region
          %s1540 = smul.u32 32, %s25
          %s1542 = ssub.s32 4096, 4096
          %1543 = vsyncadd %s1533, %s1542
          %s1544 = smul.addr %s1540, 128
          %s1545 = scalar_lea.hbm %s3, %s1544
          %s1546 = sshll.u32 %s1536, 4
          %s1547 = int_to_ptr.vmem [resolvable:$true] %s1546
          %1552 = dma.vmem_to_hbm [thread:$0]  %s1547, 4096, %s1545, %s1533, 128, 128, 8
        $region56: #{view_gnn_forward.9} parent=31 // pred_fallthru
          _
      $region32: #{view_gnn_forward.9} parent=5 // pred_fallthru
        _
      %p1553 = scmp.le.s32.totalorder 2, %s16
      // Predicated region
      $region57: #{view_gnn_forward.9} parent=5 // pred_check
        %p1554 = pneg %p1553
      $region58: #{view_gnn_forward.9} parent=5 // pred_check_branch
        %1556 = sbr.rel (%p1554) target = $region60
      $region59: #{view_gnn_forward.9} parent=5 // pred_region
        %s1557 = ssub.s32 %s16, 2
        // Predicated region
        $region61: #{view_gnn_forward.9} parent=59 // pred_check
          %p1558 = pneg %p137
        $region62: #{view_gnn_forward.9} parent=59 // pred_check_branch
          %1560 = sbr.rel (%p1558) target = $region64
        $region63: #{view_gnn_forward.9} parent=59 // pred_region
          %s1561 = sand.u32 %s122, 1
          %s1562 = scalar_lea.sflag [#allocation5], %s1561
          %s1563 = sand.u32 %s122, 1
          %s1564 = smul.addr %s1563, 256
          %s1565 = scalar_lea.vmem [#allocation9], %s1564
          %1566 = dma.done %s1562, 4096
        $region64: #{view_gnn_forward.9} parent=59 // pred_fallthru
          _
      $region60: #{view_gnn_forward.9} parent=5 // pred_fallthru
        _
    $region6: #{view_gnn_forward.9} parent=1 // loop_footer
      %s20 = sadd.s32 1, %s16
    $region7: #{view_gnn_forward.9} parent=1 // loop_footer_branch
      %15 = sbr.rel target = $region3
    $region8: #{view_gnn_forward.9} parent=1 // loop_exit
      _
    %1567 = vsyncpa [#allocation4], 1
    %s1568 = scalar_lea.sflag [#allocation4], 1
    %1569 = vsyncpa %s1568, 1
    %1570 = vsyncpa [#allocation7], 1
    %1571 = vsyncpa [#allocation5], 1
    %s1572 = scalar_lea.sflag [#allocation5], 1
    %1573 = vsyncpa %s1572, 1

// kernel: neg.3
$region0: #{neg.3}
  #allocation0 [shape = 's32[1]{0}', space=sflag, size = 0x4, scoped, tag = 'scoped memory for neg.3']
  %s0 = inlined_call_operand.vmem [shape: f32[8], index: 0, kind: input, shape index: {}]
  %s1 = inlined_call_operand.vmem [shape: f32[8], index: 1, kind: output, shape index: {}]
  %v2 = vld [vmem:[%s0] sm:$0x1]
  %3 = xla_tuple %v2
  %4 = xla_tuple %3
  %v5 = vxor.u32 %v2, 2147483648
  %6 = xla_tuple %v5
  %7 = vst [vmem:[%s1] sm:$0x1] %v5

// kernel: view_gnn_forward.10
$region0: #{view_gnn_forward.10}
  #allocation0 [shape = 'u32[]', space=smem, size = 0x4, offset = 0x4, fixed_abs, tag = 'smem constant byte address 0x4 - core index']
  #allocation1 [shape = 'u32[144,128]{1,0:T(1,128)}', space=vmem, size = 0x12000, scoped, tag = 'internal scratch']
  %s0 = inlined_call_operand.hbm [shape: f32[512,32], index: 0, kind: input, shape index: {}]
  %s1 = inlined_call_operand.hbm [shape: f32[32,32], index: 1, kind: input, shape index: {}]
  %s2 = inlined_call_operand.hbm [shape: f32[512,1], index: 2, kind: input, shape index: {}]
  %s3 = inlined_call_operand.hbm [shape: bf16[512,32], index: 3, kind: output, shape index: {}]
  %s4 = sld [smem:[#allocation0]]
  $region34: #{view_gnn_forward.10} parent=0
    _
  %s6 = ssub.s32 1, %s4
  %s7 = scalar_select 0, %s6, %s4
  $region1: #{view_gnn_forward.10} parent=0
    #allocation2 [shape = 'u8[262144]{0}', space=vmem, size = 0x40000, scoped, tag = 'input window, operand 0, single buffered']
    #allocation3 [shape = 's32[1]{0}', space=sflag, size = 0x4, scoped, tag = 'scoped memory for view_gnn_forward.10']
    #allocation4 [shape = 's32[1]{0}', space=sflag, size = 0x4, scoped, tag = 'scoped memory for view_gnn_forward.10']
    #allocation5 [shape = 'u8[16384]{0}', space=vmem, size = 0x4000, scoped, tag = 'input window, operand 1, single buffered']
    #allocation6 [shape = 's32[1]{0}', space=sflag, size = 0x4, scoped, tag = 'scoped memory for view_gnn_forward.10']
    #allocation7 [shape = 'u8[262144]{0}', space=vmem, size = 0x40000, scoped, tag = 'input window, operand 2, single buffered']
    #allocation8 [shape = 'u8[131072]{0}', space=vmem, size = 0x20000, scoped, tag = 'output window, operand 0, single buffered']
    %8 = vsyncpa [#allocation3], 0
    %9 = vsyncpa [#allocation6], 0
    %10 = vsyncpa [#allocation4], 0
    // Predicated region
    $region2: #{view_gnn_forward.10} parent=1 // pred_check
      _
    $region3: #{view_gnn_forward.10} parent=1 // pred_check_branch
      %12 = sbr.rel (0) target = $region5
    $region4: #{view_gnn_forward.10} parent=1 // pred_region
      %s14 = ssub.s32 8192, 8192
      %15 = vsyncadd [#allocation3], %s14
      %s16 = sshll.u32 [#allocation2], 4
      %s17 = int_to_ptr.vmem [resolvable:$true] %s16
      %22 = dma.hbm_to_vmem [thread:$0]  %s0, 8192, %s17, [#allocation3], 128, 128, 8
    $region5: #{view_gnn_forward.10} parent=1 // pred_fallthru
      _
    // Predicated region
    $region6: #{view_gnn_forward.10} parent=1 // pred_check
      _
    $region7: #{view_gnn_forward.10} parent=1 // pred_check_branch
      %24 = sbr.rel (0) target = $region9
    $region8: #{view_gnn_forward.10} parent=1 // pred_region
      %s26 = ssub.s32 512, 512
      %27 = vsyncadd [#allocation6], %s26
      %s28 = sshll.u32 [#allocation5], 4
      %s29 = int_to_ptr.vmem [resolvable:$true] %s28
      %34 = dma.hbm_to_vmem [thread:$0]  %s1, 512, %s29, [#allocation6], 128, 128, 8
    $region9: #{view_gnn_forward.10} parent=1 // pred_fallthru
      _
    // Predicated region
    $region10: #{view_gnn_forward.10} parent=1 // pred_check
      _
    $region11: #{view_gnn_forward.10} parent=1 // pred_check_branch
      %36 = sbr.rel (0) target = $region13
    $region12: #{view_gnn_forward.10} parent=1 // pred_region
      %s38 = ssub.s32 8192, 8192
      %39 = vsyncadd [#allocation6], %s38
      %s40 = sshll.u32 [#allocation7], 4
      %s41 = int_to_ptr.vmem [resolvable:$true] %s40
      %46 = dma.hbm_to_vmem [thread:$0]  %s2, 8192, %s41, [#allocation6], 128, 128, 8
    $region13: #{view_gnn_forward.10} parent=1 // pred_fallthru
      _
    // Predicated region
    $region14: #{view_gnn_forward.10} parent=1 // pred_check
      _
    $region15: #{view_gnn_forward.10} parent=1 // pred_check_branch
      %48 = sbr.rel (0) target = $region17
    $region16: #{view_gnn_forward.10} parent=1 // pred_region
      %49 = dma.done [#allocation3], 8192
    $region17: #{view_gnn_forward.10} parent=1 // pred_fallthru
      _
    // Predicated region
    $region18: #{view_gnn_forward.10} parent=1 // pred_check
      _
    $region19: #{view_gnn_forward.10} parent=1 // pred_check_branch
      %51 = sbr.rel (0) target = $region21
    $region20: #{view_gnn_forward.10} parent=1 // pred_region
      %52 = dma.done [#allocation6], 512
    $region21: #{view_gnn_forward.10} parent=1 // pred_fallthru
      _
    // Predicated region
    $region22: #{view_gnn_forward.10} parent=1 // pred_check
      _
    $region23: #{view_gnn_forward.10} parent=1 // pred_check_branch
      %54 = sbr.rel (0) target = $region25
    $region24: #{view_gnn_forward.10} parent=1 // pred_region
      %55 = dma.done [#allocation6], 8192
    $region25: #{view_gnn_forward.10} parent=1 // pred_fallthru
      _
    %v56 = vld [vmem:[#allocation2] sm:$0xff]
    %v57 = vld [vmem:[#allocation2 + $0x8] sm:$0xff]
    %v58 = vld [vmem:[#allocation2 + $0x10] sm:$0xff]
    %v59 = vld [vmem:[#allocation2 + $0x18] sm:$0xff]
    %v60 = vld [vmem:[#allocation2 + $0x20] sm:$0xff]
    %v61 = vld [vmem:[#allocation2 + $0x28] sm:$0xff]
    %v62 = vld [vmem:[#allocation2 + $0x30] sm:$0xff]
    %v63 = vld [vmem:[#allocation2 + $0x38] sm:$0xff]
    %v64 = vld [vmem:[#allocation2 + $0x40] sm:$0xff]
    %v65 = vld [vmem:[#allocation2 + $0x48] sm:$0xff]
    %v66 = vld [vmem:[#allocation2 + $0x50] sm:$0xff]
    %v67 = vld [vmem:[#allocation2 + $0x58] sm:$0xff]
    %v68 = vld [vmem:[#allocation2 + $0x60] sm:$0xff]
    %v69 = vld [vmem:[#allocation2 + $0x68] sm:$0xff]
    %v70 = vld [vmem:[#allocation2 + $0x70] sm:$0xff]
    %v71 = vld [vmem:[#allocation2 + $0x78] sm:$0xff]
    %v72 = vld [vmem:[#allocation2 + $0x80] sm:$0xff]
    %v73 = vld [vmem:[#allocation2 + $0x88] sm:$0xff]
    %v74 = vld [vmem:[#allocation2 + $0x90] sm:$0xff]
    %v75 = vld [vmem:[#allocation2 + $0x98] sm:$0xff]
    %v76 = vld [vmem:[#allocation2 + $0xa0] sm:$0xff]
    %v77 = vld [vmem:[#allocation2 + $0xa8] sm:$0xff]
    %v78 = vld [vmem:[#allocation2 + $0xb0] sm:$0xff]
    %v79 = vld [vmem:[#allocation2 + $0xb8] sm:$0xff]
    %v80 = vld [vmem:[#allocation2 + $0xc0] sm:$0xff]
    %v81 = vld [vmem:[#allocation2 + $0xc8] sm:$0xff]
    %v82 = vld [vmem:[#allocation2 + $0xd0] sm:$0xff]
    %v83 = vld [vmem:[#allocation2 + $0xd8] sm:$0xff]
    %v84 = vld [vmem:[#allocation2 + $0xe0] sm:$0xff]
    %v85 = vld [vmem:[#allocation2 + $0xe8] sm:$0xff]
    %v86 = vld [vmem:[#allocation2 + $0xf0] sm:$0xff]
    %v87 = vld [vmem:[#allocation2 + $0xf8] sm:$0xff]
    %v88 = vld [vmem:[#allocation2 + $0x100] sm:$0xff]
    %v89 = vld [vmem:[#allocation2 + $0x108] sm:$0xff]
    %v90 = vld [vmem:[#allocation2 + $0x110] sm:$0xff]
    %v91 = vld [vmem:[#allocation2 + $0x118] sm:$0xff]
    %v92 = vld [vmem:[#allocation2 + $0x120] sm:$0xff]
    %v93 = vld [vmem:[#allocation2 + $0x128] sm:$0xff]
    %v94 = vld [vmem:[#allocation2 + $0x130] sm:$0xff]
    %v95 = vld [vmem:[#allocation2 + $0x138] sm:$0xff]
    %v96 = vld [vmem:[#allocation2 + $0x140] sm:$0xff]
    %v97 = vld [vmem:[#allocation2 + $0x148] sm:$0xff]
    %v98 = vld [vmem:[#allocation2 + $0x150] sm:$0xff]
    %v99 = vld [vmem:[#allocation2 + $0x158] sm:$0xff]
    %v100 = vld [vmem:[#allocation2 + $0x160] sm:$0xff]
    %v101 = vld [vmem:[#allocation2 + $0x168] sm:$0xff]
    %v102 = vld [vmem:[#allocation2 + $0x170] sm:$0xff]
    %v103 = vld [vmem:[#allocation2 + $0x178] sm:$0xff]
    %v104 = vld [vmem:[#allocation2 + $0x180] sm:$0xff]
    %v105 = vld [vmem:[#allocation2 + $0x188] sm:$0xff]
    %v106 = vld [vmem:[#allocation2 + $0x190] sm:$0xff]
    %v107 = vld [vmem:[#allocation2 + $0x198] sm:$0xff]
    %v108 = vld [vmem:[#allocation2 + $0x1a0] sm:$0xff]
    %v109 = vld [vmem:[#allocation2 + $0x1a8] sm:$0xff]
    %v110 = vld [vmem:[#allocation2 + $0x1b0] sm:$0xff]
    %v111 = vld [vmem:[#allocation2 + $0x1b8] sm:$0xff]
    %v112 = vld [vmem:[#allocation2 + $0x1c0] sm:$0xff]
    %v113 = vld [vmem:[#allocation2 + $0x1c8] sm:$0xff]
    %v114 = vld [vmem:[#allocation2 + $0x1d0] sm:$0xff]
    %v115 = vld [vmem:[#allocation2 + $0x1d8] sm:$0xff]
    %v116 = vld [vmem:[#allocation2 + $0x1e0] sm:$0xff]
    %v117 = vld [vmem:[#allocation2 + $0x1e8] sm:$0xff]
    %v118 = vld [vmem:[#allocation2 + $0x1f0] sm:$0xff]
    %v119 = vld [vmem:[#allocation2 + $0x1f8] sm:$0xff]
    %v120 = vld [vmem:[#allocation5] sm:$0xff]
    %v121 = vld [vmem:[#allocation5 + $0x8] sm:$0xff]
    %v122 = vld [vmem:[#allocation5 + $0x10] sm:$0xff]
    %v123 = vld [vmem:[#allocation5 + $0x18] sm:$0xff]
    %vm124 = vcmask 261120
    %v126 = vsel %vm124, %v56, 0
    %v129 = vsel %vm124, %v57, 0
    %v132 = vsel %vm124, %v58, 0
    %v135 = vsel %vm124, %v59, 0
    %v138 = vsel %vm124, %v60, 0
    %v141 = vsel %vm124, %v61, 0
    %v144 = vsel %vm124, %v62, 0
    %v147 = vsel %vm124, %v63, 0
    %v150 = vsel %vm124, %v64, 0
    %v153 = vsel %vm124, %v65, 0
    %v156 = vsel %vm124, %v66, 0
    %v159 = vsel %vm124, %v67, 0
    %v162 = vsel %vm124, %v68, 0
    %v165 = vsel %vm124, %v69, 0
    %v168 = vsel %vm124, %v70, 0
    %v171 = vsel %vm124, %v71, 0
    %v174 = vsel %vm124, %v72, 0
    %v177 = vsel %vm124, %v73, 0
    %v180 = vsel %vm124, %v74, 0
    %v183 = vsel %vm124, %v75, 0
    %v186 = vsel %vm124, %v76, 0
    %v189 = vsel %vm124, %v77, 0
    %v192 = vsel %vm124, %v78, 0
    %v195 = vsel %vm124, %v79, 0
    %v198 = vsel %vm124, %v80, 0
    %v201 = vsel %vm124, %v81, 0
    %v204 = vsel %vm124, %v82, 0
    %v207 = vsel %vm124, %v83, 0
    %v210 = vsel %vm124, %v84, 0
    %v213 = vsel %vm124, %v85, 0
    %v216 = vsel %vm124, %v86, 0
    %v219 = vsel %vm124, %v87, 0
    %v222 = vsel %vm124, %v88, 0
    %v225 = vsel %vm124, %v89, 0
    %v228 = vsel %vm124, %v90, 0
    %v231 = vsel %vm124, %v91, 0
    %v234 = vsel %vm124, %v92, 0
    %v237 = vsel %vm124, %v93, 0
    %v240 = vsel %vm124, %v94, 0
    %v243 = vsel %vm124, %v95, 0
    %v246 = vsel %vm124, %v96, 0
    %v249 = vsel %vm124, %v97, 0
    %v252 = vsel %vm124, %v98, 0
    %v255 = vsel %vm124, %v99, 0
    %v258 = vsel %vm124, %v100, 0
    %v261 = vsel %vm124, %v101, 0
    %v264 = vsel %vm124, %v102, 0
    %v267 = vsel %vm124, %v103, 0
    %v270 = vsel %vm124, %v104, 0
    %v273 = vsel %vm124, %v105, 0
    %v276 = vsel %vm124, %v106, 0
    %v279 = vsel %vm124, %v107, 0
    %v282 = vsel %vm124, %v108, 0
    %v285 = vsel %vm124, %v109, 0
    %v288 = vsel %vm124, %v110, 0
    %v291 = vsel %vm124, %v111, 0
    %v294 = vsel %vm124, %v112, 0
    %v297 = vsel %vm124, %v113, 0
    %v300 = vsel %vm124, %v114, 0
    %v303 = vsel %vm124, %v115, 0
    %v306 = vsel %vm124, %v116, 0
    %v309 = vsel %vm124, %v117, 0
    %v312 = vsel %vm124, %v118, 0
    %v315 = vsel %vm124, %v119, 0
    %317 = vmatprep.subr.mxu0 0.0
    %318 = vmatpush1.msra.mxu0 %v120
    %319 = vmatprep.subr.mxu0 0.0
    %320 = vmatpush1.msra.mxu0 %v121
    %321 = vmatprep.subr.mxu0 0.0
    %322 = vmatpush1.msra.mxu0 %v122
    %323 = vmatprep.subr.mxu0 0.0
    %324 = vmatpush1.msra.mxu0 %v123
    %325 = vmatprep.subr.mxu0 0.0
    %326 = vmatpush1.msra.mxu0 0.0
    %327 = vmatprep.subr.mxu0 0.0
    %328 = vmatpush1.msra.mxu0 0.0
    %329 = vmatprep.subr.mxu0 0.0
    %330 = vmatpush1.msra.mxu0 0.0
    %331 = vmatprep.subr.mxu0 0.0
    %332 = vmatpush1.msra.mxu0 0.0
    %333 = vmatprep.subr.mxu0 0.0
    %334 = vmatpush1.msra.mxu0 0.0
    %335 = vmatprep.subr.mxu0 0.0
    %336 = vmatpush1.msra.mxu0 0.0
    %337 = vmatprep.subr.mxu0 0.0
    %338 = vmatpush1.msra.mxu0 0.0
    %339 = vmatprep.subr.mxu0 0.0
    %340 = vmatpush1.msra.mxu0 0.0
    %341 = vmatprep.subr.mxu0 0.0
    %342 = vmatpush1.msra.mxu0 0.0
    %343 = vmatprep.subr.mxu0 0.0
    %344 = vmatpush1.msra.mxu0 0.0
    %345 = vmatprep.subr.mxu0 0.0
    %346 = vmatpush1.msra.mxu0 0.0
    %347 = vmatprep.subr.mxu0 0.0
    %348 = vmatpush1.msra.mxu0 0.0
    %349 = vmatprep.subr.mxu0 0.0
    %350 = vmatpush1.msra.mxu0 0.0
    %351 = vmatprep.subr.mxu0 0.0
    %352 = vmatpush1.msra.mxu0 0.0
    %353 = vmatprep.subr.mxu0 0.0
    %354 = vmatpush1.msra.mxu0 0.0
    %355 = vmatprep.subr.mxu0 0.0
    %356 = vmatpush1.msra.mxu0 0.0
    %357 = vmatprep.subr.mxu0 0.0
    %358 = vmatpush1.msra.mxu0 0.0
    %359 = vmatprep.subr.mxu0 0.0
    %360 = vmatpush1.msra.mxu0 0.0
    %361 = vmatprep.subr.mxu0 0.0
    %362 = vmatpush1.msra.mxu0 0.0
    %363 = vmatprep.subr.mxu0 0.0
    %364 = vmatpush1.msra.mxu0 0.0
    %365 = vmatprep.subr.mxu0 0.0
    %366 = vmatpush1.msra.mxu0 0.0
    %367 = vmatprep.subr.mxu0 0.0
    %368 = vmatpush1.msra.mxu0 0.0
    %369 = vmatprep.subr.mxu0 0.0
    %370 = vmatpush1.msra.mxu0 0.0
    %371 = vmatprep.subr.mxu0 0.0
    %372 = vmatpush1.msra.mxu0 0.0
    %373 = vmatprep.subr.mxu0 0.0
    %374 = vmatpush1.msra.mxu0 0.0
    %375 = vmatprep.subr.mxu0 0.0
    %376 = vmatpush1.msra.mxu0 0.0
    %377 = vmatprep.subr.mxu0 0.0
    %378 = vmatpush1.msra.mxu0 0.0
    %379 = vmatprep.subr.mxu0 0.0
    %380 = vmatpush1.msra.mxu0 0.0
    %381 = vmatprep.mubr.f32.mxu0 0.0
    %382 = vmatmul.mubr.f32.gmra.mrb[0].mxu0 %v126
    %v383 = vpop.f32.mrb[0].mxu0
    %v384 = vadd.f32 0.0, %v383
    %v385 = vpop.f32.mrb[0].mxu0
    %386 = vmatprep.mubr.f32.mxu0 0.0
    %387 = vmatmul.mubr.f32.gmra.mrb[0].mxu0 %v129
    %v388 = vpop.f32.mrb[0].mxu0
    %v389 = vadd.f32 0.0, %v388
    %v390 = vpop.f32.mrb[0].mxu0
    %391 = vmatprep.mubr.f32.mxu0 0.0
    %392 = vmatmul.mubr.f32.gmra.mrb[0].mxu0 %v132
    %v393 = vpop.f32.mrb[0].mxu0
    %v394 = vadd.f32 0.0, %v393
    %v395 = vpop.f32.mrb[0].mxu0
    %396 = vmatprep.mubr.f32.mxu0 0.0
    %397 = vmatmul.mubr.f32.gmra.mrb[0].mxu0 %v135
    %v398 = vpop.f32.mrb[0].mxu0
    %v399 = vadd.f32 0.0, %v398
    %v400 = vpop.f32.mrb[0].mxu0
    %401 = vmatprep.mubr.f32.mxu0 0.0
    %402 = vmatmul.mubr.f32.gmra.mrb[0].mxu0 %v138
    %v403 = vpop.f32.mrb[0].mxu0
    %v404 = vadd.f32 0.0, %v403
    %v405 = vpop.f32.mrb[0].mxu0
    %406 = vmatprep.mubr.f32.mxu0 0.0
    %407 = vmatmul.mubr.f32.gmra.mrb[0].mxu0 %v141
    %v408 = vpop.f32.mrb[0].mxu0
    %v409 = vadd.f32 0.0, %v408
    %v410 = vpop.f32.mrb[0].mxu0
    %411 = vmatprep.mubr.f32.mxu0 0.0
    %412 = vmatmul.mubr.f32.gmra.mrb[0].mxu0 %v144
    %v413 = vpop.f32.mrb[0].mxu0
    %v414 = vadd.f32 0.0, %v413
    %v415 = vpop.f32.mrb[0].mxu0
    %416 = vmatprep.mubr.f32.mxu0 0.0
    %417 = vmatmul.mubr.f32.gmra.mrb[0].mxu0 %v147
    %v418 = vpop.f32.mrb[0].mxu0
    %v419 = vadd.f32 0.0, %v418
    %v420 = vpop.f32.mrb[0].mxu0
    %421 = vmatprep.mubr.f32.mxu0 0.0
    %422 = vmatmul.mubr.f32.gmra.mrb[0].mxu0 %v150
    %v423 = vpop.f32.mrb[0].mxu0
    %v424 = vadd.f32 0.0, %v423
    %v425 = vpop.f32.mrb[0].mxu0
    %426 = vmatprep.mubr.f32.mxu0 0.0
    %427 = vmatmul.mubr.f32.gmra.mrb[0].mxu0 %v153
    %v428 = vpop.f32.mrb[0].mxu0
    %v429 = vadd.f32 0.0, %v428
    %v430 = vpop.f32.mrb[0].mxu0
    %431 = vmatprep.mubr.f32.mxu0 0.0
    %432 = vmatmul.mubr.f32.gmra.mrb[0].mxu0 %v156
    %v433 = vpop.f32.mrb[0].mxu0
    %v434 = vadd.f32 0.0, %v433
    %v435 = vpop.f32.mrb[0].mxu0
    %436 = vmatprep.mubr.f32.mxu0 0.0
    %437 = vmatmul.mubr.f32.gmra.mrb[0].mxu0 %v159
    %v438 = vpop.f32.mrb[0].mxu0
    %v439 = vadd.f32 0.0, %v438
    %v440 = vpop.f32.mrb[0].mxu0
    %441 = vmatprep.mubr.f32.mxu0 0.0
    %442 = vmatmul.mubr.f32.gmra.mrb[0].mxu0 %v162
    %v443 = vpop.f32.mrb[0].mxu0
    %v444 = vadd.f32 0.0, %v443
    %v445 = vpop.f32.mrb[0].mxu0
    %446 = vmatprep.mubr.f32.mxu0 0.0
    %447 = vmatmul.mubr.f32.gmra.mrb[0].mxu0 %v165
    %v448 = vpop.f32.mrb[0].mxu0
    %v449 = vadd.f32 0.0, %v448
    %v450 = vpop.f32.mrb[0].mxu0
    %451 = vmatprep.mubr.f32.mxu0 0.0
    %452 = vmatmul.mubr.f32.gmra.mrb[0].mxu0 %v168
    %v453 = vpop.f32.mrb[0].mxu0
    %v454 = vadd.f32 0.0, %v453
    %v455 = vpop.f32.mrb[0].mxu0
    %456 = vmatprep.mubr.f32.mxu0 0.0
    %457 = vmatmul.mubr.f32.gmra.mrb[0].mxu0 %v171
    %v458 = vpop.f32.mrb[0].mxu0
    %v459 = vadd.f32 0.0, %v458
    %v460 = vpop.f32.mrb[0].mxu0
    %461 = vmatprep.mubr.f32.mxu0 0.0
    %462 = vmatmul.mubr.f32.gmra.mrb[0].mxu0 %v174
    %v463 = vpop.f32.mrb[0].mxu0
    %v464 = vadd.f32 0.0, %v463
    %v465 = vpop.f32.mrb[0].mxu0
    %466 = vmatprep.mubr.f32.mxu0 0.0
    %467 = vmatmul.mubr.f32.gmra.mrb[0].mxu0 %v177
    %v468 = vpop.f32.mrb[0].mxu0
    %v469 = vadd.f32 0.0, %v468
    %v470 = vpop.f32.mrb[0].mxu0
    %471 = vmatprep.mubr.f32.mxu0 0.0
    %472 = vmatmul.mubr.f32.gmra.mrb[0].mxu0 %v180
    %v473 = vpop.f32.mrb[0].mxu0
    %v474 = vadd.f32 0.0, %v473
    %v475 = vpop.f32.mrb[0].mxu0
    %476 = vmatprep.mubr.f32.mxu0 0.0
    %477 = vmatmul.mubr.f32.gmra.mrb[0].mxu0 %v183
    %v478 = vpop.f32.mrb[0].mxu0
    %v479 = vadd.f32 0.0, %v478
    %v480 = vpop.f32.mrb[0].mxu0
    %481 = vmatprep.mubr.f32.mxu0 0.0
    %482 = vmatmul.mubr.f32.gmra.mrb[0].mxu0 %v186
    %v483 = vpop.f32.mrb[0].mxu0
    %v484 = vadd.f32 0.0, %v483
    %v485 = vpop.f32.mrb[0].mxu0
    %486 = vmatprep.mubr.f32.mxu0 0.0
    %487 = vmatmul.mubr.f32.gmra.mrb[0].mxu0 %v189
    %v488 = vpop.f32.mrb[0].mxu0
    %v489 = vadd.f32 0.0, %v488
    %v490 = vpop.f32.mrb[0].mxu0
    %491 = vmatprep.mubr.f32.mxu0 0.0
    %492 = vmatmul.mubr.f32.gmra.mrb[0].mxu0 %v192
    %v493 = vpop.f32.mrb[0].mxu0
    %v494 = vadd.f32 0.0, %v493
    %v495 = vpop.f32.mrb[0].mxu0
    %496 = vmatprep.mubr.f32.mxu0 0.0
    %497 = vmatmul.mubr.f32.gmra.mrb[0].mxu0 %v195
    %v498 = vpop.f32.mrb[0].mxu0
    %v499 = vadd.f32 0.0, %v498
    %v500 = vpop.f32.mrb[0].mxu0
    %501 = vmatprep.mubr.f32.mxu0 0.0
    %502 = vmatmul.mubr.f32.gmra.mrb[0].mxu0 %v198
    %v503 = vpop.f32.mrb[0].mxu0
    %v504 = vadd.f32 0.0, %v503
    %v505 = vpop.f32.mrb[0].mxu0
    %506 = vmatprep.mubr.f32.mxu0 0.0
    %507 = vmatmul.mubr.f32.gmra.mrb[0].mxu0 %v201
    %v508 = vpop.f32.mrb[0].mxu0
    %v509 = vadd.f32 0.0, %v508
    %v510 = vpop.f32.mrb[0].mxu0
    %511 = vmatprep.mubr.f32.mxu0 0.0
    %512 = vmatmul.mubr.f32.gmra.mrb[0].mxu0 %v204
    %v513 = vpop.f32.mrb[0].mxu0
    %v514 = vadd.f32 0.0, %v513
    %v515 = vpop.f32.mrb[0].mxu0
    %516 = vmatprep.mubr.f32.mxu0 0.0
    %517 = vmatmul.mubr.f32.gmra.mrb[0].mxu0 %v207
    %v518 = vpop.f32.mrb[0].mxu0
    %v519 = vadd.f32 0.0, %v518
    %v520 = vpop.f32.mrb[0].mxu0
    %521 = vmatprep.mubr.f32.mxu0 0.0
    %522 = vmatmul.mubr.f32.gmra.mrb[0].mxu0 %v210
    %v523 = vpop.f32.mrb[0].mxu0
    %v524 = vadd.f32 0.0, %v523
    %v525 = vpop.f32.mrb[0].mxu0
    %526 = vmatprep.mubr.f32.mxu0 0.0
    %527 = vmatmul.mubr.f32.gmra.mrb[0].mxu0 %v213
    %v528 = vpop.f32.mrb[0].mxu0
    %v529 = vadd.f32 0.0, %v528
    %v530 = vpop.f32.mrb[0].mxu0
    %531 = vmatprep.mubr.f32.mxu0 0.0
    %532 = vmatmul.mubr.f32.gmra.mrb[0].mxu0 %v216
    %v533 = vpop.f32.mrb[0].mxu0
    %v534 = vadd.f32 0.0, %v533
    %v535 = vpop.f32.mrb[0].mxu0
    %536 = vmatprep.mubr.f32.mxu0 0.0
    %537 = vmatmul.mubr.f32.gmra.mrb[0].mxu0 %v219
    %v538 = vpop.f32.mrb[0].mxu0
    %v539 = vadd.f32 0.0, %v538
    %v540 = vpop.f32.mrb[0].mxu0
    %541 = vmatprep.mubr.f32.mxu0 0.0
    %542 = vmatmul.mubr.f32.gmra.mrb[0].mxu0 %v222
    %v543 = vpop.f32.mrb[0].mxu0
    %v544 = vadd.f32 0.0, %v543
    %v545 = vpop.f32.mrb[0].mxu0
    %546 = vmatprep.mubr.f32.mxu0 0.0
    %547 = vmatmul.mubr.f32.gmra.mrb[0].mxu0 %v225
    %v548 = vpop.f32.mrb[0].mxu0
    %v549 = vadd.f32 0.0, %v548
    %v550 = vpop.f32.mrb[0].mxu0
    %551 = vmatprep.mubr.f32.mxu0 0.0
    %552 = vmatmul.mubr.f32.gmra.mrb[0].mxu0 %v228
    %v553 = vpop.f32.mrb[0].mxu0
    %v554 = vadd.f32 0.0, %v553
    %v555 = vpop.f32.mrb[0].mxu0
    %556 = vmatprep.mubr.f32.mxu0 0.0
    %557 = vmatmul.mubr.f32.gmra.mrb[0].mxu0 %v231
    %v558 = vpop.f32.mrb[0].mxu0
    %v559 = vadd.f32 0.0, %v558
    %v560 = vpop.f32.mrb[0].mxu0
    %561 = vmatprep.mubr.f32.mxu0 0.0
    %562 = vmatmul.mubr.f32.gmra.mrb[0].mxu0 %v234
    %v563 = vpop.f32.mrb[0].mxu0
    %v564 = vadd.f32 0.0, %v563
    %v565 = vpop.f32.mrb[0].mxu0
    %566 = vmatprep.mubr.f32.mxu0 0.0
    %567 = vmatmul.mubr.f32.gmra.mrb[0].mxu0 %v237
    %v568 = vpop.f32.mrb[0].mxu0
    %v569 = vadd.f32 0.0, %v568
    %v570 = vpop.f32.mrb[0].mxu0
    %571 = vmatprep.mubr.f32.mxu0 0.0
    %572 = vmatmul.mubr.f32.gmra.mrb[0].mxu0 %v240
    %v573 = vpop.f32.mrb[0].mxu0
    %v574 = vadd.f32 0.0, %v573
    %v575 = vpop.f32.mrb[0].mxu0
    %576 = vmatprep.mubr.f32.mxu0 0.0
    %577 = vmatmul.mubr.f32.gmra.mrb[0].mxu0 %v243
    %v578 = vpop.f32.mrb[0].mxu0
    %v579 = vadd.f32 0.0, %v578
    %v580 = vpop.f32.mrb[0].mxu0
    %581 = vmatprep.mubr.f32.mxu0 0.0
    %582 = vmatmul.mubr.f32.gmra.mrb[0].mxu0 %v246
    %v583 = vpop.f32.mrb[0].mxu0
    %v584 = vadd.f32 0.0, %v583
    %v585 = vpop.f32.mrb[0].mxu0
    %586 = vmatprep.mubr.f32.mxu0 0.0
    %587 = vmatmul.mubr.f32.gmra.mrb[0].mxu0 %v249
    %v588 = vpop.f32.mrb[0].mxu0
    %v589 = vadd.f32 0.0, %v588
    %v590 = vpop.f32.mrb[0].mxu0
    %591 = vmatprep.mubr.f32.mxu0 0.0
    %592 = vmatmul.mubr.f32.gmra.mrb[0].mxu0 %v252
    %v593 = vpop.f32.mrb[0].mxu0
    %v594 = vadd.f32 0.0, %v593
    %v595 = vpop.f32.mrb[0].mxu0
    %596 = vmatprep.mubr.f32.mxu0 0.0
    %597 = vmatmul.mubr.f32.gmra.mrb[0].mxu0 %v255
    %v598 = vpop.f32.mrb[0].mxu0
    %v599 = vadd.f32 0.0, %v598
    %v600 = vpop.f32.mrb[0].mxu0
    %601 = vmatprep.mubr.f32.mxu0 0.0
    %602 = vmatmul.mubr.f32.gmra.mrb[0].mxu0 %v258
    %v603 = vpop.f32.mrb[0].mxu0
    %v604 = vadd.f32 0.0, %v603
    %v605 = vpop.f32.mrb[0].mxu0
    %606 = vmatprep.mubr.f32.mxu0 0.0
    %607 = vmatmul.mubr.f32.gmra.mrb[0].mxu0 %v261
    %v608 = vpop.f32.mrb[0].mxu0
    %v609 = vadd.f32 0.0, %v608
    %v610 = vpop.f32.mrb[0].mxu0
    %611 = vmatprep.mubr.f32.mxu0 0.0
    %612 = vmatmul.mubr.f32.gmra.mrb[0].mxu0 %v264
    %v613 = vpop.f32.mrb[0].mxu0
    %v614 = vadd.f32 0.0, %v613
    %v615 = vpop.f32.mrb[0].mxu0
    %616 = vmatprep.mubr.f32.mxu0 0.0
    %617 = vmatmul.mubr.f32.gmra.mrb[0].mxu0 %v267
    %v618 = vpop.f32.mrb[0].mxu0
    %v619 = vadd.f32 0.0, %v618
    %v620 = vpop.f32.mrb[0].mxu0
    %621 = vmatprep.mubr.f32.mxu0 0.0
    %622 = vmatmul.mubr.f32.gmra.mrb[0].mxu0 %v270
    %v623 = vpop.f32.mrb[0].mxu0
    %v624 = vadd.f32 0.0, %v623
    %v625 = vpop.f32.mrb[0].mxu0
    %626 = vmatprep.mubr.f32.mxu0 0.0
    %627 = vmatmul.mubr.f32.gmra.mrb[0].mxu0 %v273
    %v628 = vpop.f32.mrb[0].mxu0
    %v629 = vadd.f32 0.0, %v628
    %v630 = vpop.f32.mrb[0].mxu0
    %631 = vmatprep.mubr.f32.mxu0 0.0
    %632 = vmatmul.mubr.f32.gmra.mrb[0].mxu0 %v276
    %v633 = vpop.f32.mrb[0].mxu0
    %v634 = vadd.f32 0.0, %v633
    %v635 = vpop.f32.mrb[0].mxu0
    %636 = vmatprep.mubr.f32.mxu0 0.0
    %637 = vmatmul.mubr.f32.gmra.mrb[0].mxu0 %v279
    %v638 = vpop.f32.mrb[0].mxu0
    %v639 = vadd.f32 0.0, %v638
    %v640 = vpop.f32.mrb[0].mxu0
    %641 = vmatprep.mubr.f32.mxu0 0.0
    %642 = vmatmul.mubr.f32.gmra.mrb[0].mxu0 %v282
    %v643 = vpop.f32.mrb[0].mxu0
    %v644 = vadd.f32 0.0, %v643
    %v645 = vpop.f32.mrb[0].mxu0
    %646 = vmatprep.mubr.f32.mxu0 0.0
    %647 = vmatmul.mubr.f32.gmra.mrb[0].mxu0 %v285
    %v648 = vpop.f32.mrb[0].mxu0
    %v649 = vadd.f32 0.0, %v648
    %v650 = vpop.f32.mrb[0].mxu0
    %651 = vmatprep.mubr.f32.mxu0 0.0
    %652 = vmatmul.mubr.f32.gmra.mrb[0].mxu0 %v288
    %v653 = vpop.f32.mrb[0].mxu0
    %v654 = vadd.f32 0.0, %v653
    %v655 = vpop.f32.mrb[0].mxu0
    %656 = vmatprep.mubr.f32.mxu0 0.0
    %657 = vmatmul.mubr.f32.gmra.mrb[0].mxu0 %v291
    %v658 = vpop.f32.mrb[0].mxu0
    %v659 = vadd.f32 0.0, %v658
    %v660 = vpop.f32.mrb[0].mxu0
    %661 = vmatprep.mubr.f32.mxu0 0.0
    %662 = vmatmul.mubr.f32.gmra.mrb[0].mxu0 %v294
    %v663 = vpop.f32.mrb[0].mxu0
    %v664 = vadd.f32 0.0, %v663
    %v665 = vpop.f32.mrb[0].mxu0
    %666 = vmatprep.mubr.f32.mxu0 0.0
    %667 = vmatmul.mubr.f32.gmra.mrb[0].mxu0 %v297
    %v668 = vpop.f32.mrb[0].mxu0
    %v669 = vadd.f32 0.0, %v668
    %v670 = vpop.f32.mrb[0].mxu0
    %671 = vmatprep.mubr.f32.mxu0 0.0
    %672 = vmatmul.mubr.f32.gmra.mrb[0].mxu0 %v300
    %v673 = vpop.f32.mrb[0].mxu0
    %v674 = vadd.f32 0.0, %v673
    %v675 = vpop.f32.mrb[0].mxu0
    %676 = vmatprep.mubr.f32.mxu0 0.0
    %677 = vmatmul.mubr.f32.gmra.mrb[0].mxu0 %v303
    %v678 = vpop.f32.mrb[0].mxu0
    %v679 = vadd.f32 0.0, %v678
    %v680 = vpop.f32.mrb[0].mxu0
    %681 = vmatprep.mubr.f32.mxu0 0.0
    %682 = vmatmul.mubr.f32.gmra.mrb[0].mxu0 %v306
    %v683 = vpop.f32.mrb[0].mxu0
    %v684 = vadd.f32 0.0, %v683
    %v685 = vpop.f32.mrb[0].mxu0
    %686 = vmatprep.mubr.f32.mxu0 0.0
    %687 = vmatmul.mubr.f32.gmra.mrb[0].mxu0 %v309
    %v688 = vpop.f32.mrb[0].mxu0
    %v689 = vadd.f32 0.0, %v688
    %v690 = vpop.f32.mrb[0].mxu0
    %691 = vmatprep.mubr.f32.mxu0 0.0
    %692 = vmatmul.mubr.f32.gmra.mrb[0].mxu0 %v312
    %v693 = vpop.f32.mrb[0].mxu0
    %v694 = vadd.f32 0.0, %v693
    %v695 = vpop.f32.mrb[0].mxu0
    %696 = vmatprep.mubr.f32.mxu0 0.0
    %697 = vmatmul.mubr.f32.gmra.mrb[0].mxu0 %v315
    %v698 = vpop.f32.mrb[0].mxu0
    %v699 = vadd.f32 0.0, %v698
    %v700 = vpop.f32.mrb[0].mxu0
    %701 = vdwg.mxu0
    %v702 = vld [vmem:[#allocation7] sm:$0xff]
    %v703 = vld [vmem:[#allocation7 + $0x8] sm:$0xff]
    %v704 = vld [vmem:[#allocation7 + $0x10] sm:$0xff]
    %v705 = vld [vmem:[#allocation7 + $0x18] sm:$0xff]
    %v706 = vld [vmem:[#allocation7 + $0x20] sm:$0xff]
    %v707 = vld [vmem:[#allocation7 + $0x28] sm:$0xff]
    %v708 = vld [vmem:[#allocation7 + $0x30] sm:$0xff]
    %v709 = vld [vmem:[#allocation7 + $0x38] sm:$0xff]
    %v710 = vld [vmem:[#allocation7 + $0x40] sm:$0xff]
    %v711 = vld [vmem:[#allocation7 + $0x48] sm:$0xff]
    %v712 = vld [vmem:[#allocation7 + $0x50] sm:$0xff]
    %v713 = vld [vmem:[#allocation7 + $0x58] sm:$0xff]
    %v714 = vld [vmem:[#allocation7 + $0x60] sm:$0xff]
    %v715 = vld [vmem:[#allocation7 + $0x68] sm:$0xff]
    %v716 = vld [vmem:[#allocation7 + $0x70] sm:$0xff]
    %v717 = vld [vmem:[#allocation7 + $0x78] sm:$0xff]
    %v718 = vld [vmem:[#allocation7 + $0x80] sm:$0xff]
    %v719 = vld [vmem:[#allocation7 + $0x88] sm:$0xff]
    %v720 = vld [vmem:[#allocation7 + $0x90] sm:$0xff]
    %v721 = vld [vmem:[#allocation7 + $0x98] sm:$0xff]
    %v722 = vld [vmem:[#allocation7 + $0xa0] sm:$0xff]
    %v723 = vld [vmem:[#allocation7 + $0xa8] sm:$0xff]
    %v724 = vld [vmem:[#allocation7 + $0xb0] sm:$0xff]
    %v725 = vld [vmem:[#allocation7 + $0xb8] sm:$0xff]
    %v726 = vld [vmem:[#allocation7 + $0xc0] sm:$0xff]
    %v727 = vld [vmem:[#allocation7 + $0xc8] sm:$0xff]
    %v728 = vld [vmem:[#allocation7 + $0xd0] sm:$0xff]
    %v729 = vld [vmem:[#allocation7 + $0xd8] sm:$0xff]
    %v730 = vld [vmem:[#allocation7 + $0xe0] sm:$0xff]
    %v731 = vld [vmem:[#allocation7 + $0xe8] sm:$0xff]
    %v732 = vld [vmem:[#allocation7 + $0xf0] sm:$0xff]
    %v733 = vld [vmem:[#allocation7 + $0xf8] sm:$0xff]
    %v734 = vld [vmem:[#allocation7 + $0x100] sm:$0xff]
    %v735 = vld [vmem:[#allocation7 + $0x108] sm:$0xff]
    %v736 = vld [vmem:[#allocation7 + $0x110] sm:$0xff]
    %v737 = vld [vmem:[#allocation7 + $0x118] sm:$0xff]
    %v738 = vld [vmem:[#allocation7 + $0x120] sm:$0xff]
    %v739 = vld [vmem:[#allocation7 + $0x128] sm:$0xff]
    %v740 = vld [vmem:[#allocation7 + $0x130] sm:$0xff]
    %v741 = vld [vmem:[#allocation7 + $0x138] sm:$0xff]
    %v742 = vld [vmem:[#allocation7 + $0x140] sm:$0xff]
    %v743 = vld [vmem:[#allocation7 + $0x148] sm:$0xff]
    %v744 = vld [vmem:[#allocation7 + $0x150] sm:$0xff]
    %v745 = vld [vmem:[#allocation7 + $0x158] sm:$0xff]
    %v746 = vld [vmem:[#allocation7 + $0x160] sm:$0xff]
    %v747 = vld [vmem:[#allocation7 + $0x168] sm:$0xff]
    %v748 = vld [vmem:[#allocation7 + $0x170] sm:$0xff]
    %v749 = vld [vmem:[#allocation7 + $0x178] sm:$0xff]
    %v750 = vld [vmem:[#allocation7 + $0x180] sm:$0xff]
    %v751 = vld [vmem:[#allocation7 + $0x188] sm:$0xff]
    %v752 = vld [vmem:[#allocation7 + $0x190] sm:$0xff]
    %v753 = vld [vmem:[#allocation7 + $0x198] sm:$0xff]
    %v754 = vld [vmem:[#allocation7 + $0x1a0] sm:$0xff]
    %v755 = vld [vmem:[#allocation7 + $0x1a8] sm:$0xff]
    %v756 = vld [vmem:[#allocation7 + $0x1b0] sm:$0xff]
    %v757 = vld [vmem:[#allocation7 + $0x1b8] sm:$0xff]
    %v758 = vld [vmem:[#allocation7 + $0x1c0] sm:$0xff]
    %v759 = vld [vmem:[#allocation7 + $0x1c8] sm:$0xff]
    %v760 = vld [vmem:[#allocation7 + $0x1d0] sm:$0xff]
    %v761 = vld [vmem:[#allocation7 + $0x1d8] sm:$0xff]
    %v762 = vld [vmem:[#allocation7 + $0x1e0] sm:$0xff]
    %v763 = vld [vmem:[#allocation7 + $0x1e8] sm:$0xff]
    %v764 = vld [vmem:[#allocation7 + $0x1f0] sm:$0xff]
    %v765 = vld [vmem:[#allocation7 + $0x1f8] sm:$0xff]
    %767 = vset.pattern.permute.xlu0 0
    %768 = vperm.xlu0 %767, %v702
    %v769 = vpop.permute.xlu0 %768
    %772 = vset.pattern.permute.xlu0 0
    %773 = vperm.xlu0 %772, %v703
    %v774 = vpop.permute.xlu0 %773
    %777 = vset.pattern.permute.xlu0 0
    %778 = vperm.xlu0 %777, %v704
    %v779 = vpop.permute.xlu0 %778
    %782 = vset.pattern.permute.xlu0 0
    %783 = vperm.xlu0 %782, %v705
    %v784 = vpop.permute.xlu0 %783
    %787 = vset.pattern.permute.xlu0 0
    %788 = vperm.xlu0 %787, %v706
    %v789 = vpop.permute.xlu0 %788
    %792 = vset.pattern.permute.xlu0 0
    %793 = vperm.xlu0 %792, %v707
    %v794 = vpop.permute.xlu0 %793
    %797 = vset.pattern.permute.xlu0 0
    %798 = vperm.xlu0 %797, %v708
    %v799 = vpop.permute.xlu0 %798
    %802 = vset.pattern.permute.xlu0 0
    %803 = vperm.xlu0 %802, %v709
    %v804 = vpop.permute.xlu0 %803
    %807 = vset.pattern.permute.xlu0 0
    %808 = vperm.xlu0 %807, %v710
    %v809 = vpop.permute.xlu0 %808
    %812 = vset.pattern.permute.xlu0 0
    %813 = vperm.xlu0 %812, %v711
    %v814 = vpop.permute.xlu0 %813
    %817 = vset.pattern.permute.xlu0 0
    %818 = vperm.xlu0 %817, %v712
    %v819 = vpop.permute.xlu0 %818
    %822 = vset.pattern.permute.xlu0 0
    %823 = vperm.xlu0 %822, %v713
    %v824 = vpop.permute.xlu0 %823
    %827 = vset.pattern.permute.xlu0 0
    %828 = vperm.xlu0 %827, %v714
    %v829 = vpop.permute.xlu0 %828
    %832 = vset.pattern.permute.xlu0 0
    %833 = vperm.xlu0 %832, %v715
    %v834 = vpop.permute.xlu0 %833
    %837 = vset.pattern.permute.xlu0 0
    %838 = vperm.xlu0 %837, %v716
    %v839 = vpop.permute.xlu0 %838
    %842 = vset.pattern.permute.xlu0 0
    %843 = vperm.xlu0 %842, %v717
    %v844 = vpop.permute.xlu0 %843
    %847 = vset.pattern.permute.xlu0 0
    %848 = vperm.xlu0 %847, %v718
    %v849 = vpop.permute.xlu0 %848
    %852 = vset.pattern.permute.xlu0 0
    %853 = vperm.xlu0 %852, %v719
    %v854 = vpop.permute.xlu0 %853
    %857 = vset.pattern.permute.xlu0 0
    %858 = vperm.xlu0 %857, %v720
    %v859 = vpop.permute.xlu0 %858
    %862 = vset.pattern.permute.xlu0 0
    %863 = vperm.xlu0 %862, %v721
    %v864 = vpop.permute.xlu0 %863
    %867 = vset.pattern.permute.xlu0 0
    %868 = vperm.xlu0 %867, %v722
    %v869 = vpop.permute.xlu0 %868
    %872 = vset.pattern.permute.xlu0 0
    %873 = vperm.xlu0 %872, %v723
    %v874 = vpop.permute.xlu0 %873
    %877 = vset.pattern.permute.xlu0 0
    %878 = vperm.xlu0 %877, %v724
    %v879 = vpop.permute.xlu0 %878
    %882 = vset.pattern.permute.xlu0 0
    %883 = vperm.xlu0 %882, %v725
    %v884 = vpop.permute.xlu0 %883
    %887 = vset.pattern.permute.xlu0 0
    %888 = vperm.xlu0 %887, %v726
    %v889 = vpop.permute.xlu0 %888
    %892 = vset.pattern.permute.xlu0 0
    %893 = vperm.xlu0 %892, %v727
    %v894 = vpop.permute.xlu0 %893
    %897 = vset.pattern.permute.xlu0 0
    %898 = vperm.xlu0 %897, %v728
    %v899 = vpop.permute.xlu0 %898
    %902 = vset.pattern.permute.xlu0 0
    %903 = vperm.xlu0 %902, %v729
    %v904 = vpop.permute.xlu0 %903
    %907 = vset.pattern.permute.xlu0 0
    %908 = vperm.xlu0 %907, %v730
    %v909 = vpop.permute.xlu0 %908
    %912 = vset.pattern.permute.xlu0 0
    %913 = vperm.xlu0 %912, %v731
    %v914 = vpop.permute.xlu0 %913
    %917 = vset.pattern.permute.xlu0 0
    %918 = vperm.xlu0 %917, %v732
    %v919 = vpop.permute.xlu0 %918
    %922 = vset.pattern.permute.xlu0 0
    %923 = vperm.xlu0 %922, %v733
    %v924 = vpop.permute.xlu0 %923
    %927 = vset.pattern.permute.xlu0 0
    %928 = vperm.xlu0 %927, %v734
    %v929 = vpop.permute.xlu0 %928
    %932 = vset.pattern.permute.xlu0 0
    %933 = vperm.xlu0 %932, %v735
    %v934 = vpop.permute.xlu0 %933
    %937 = vset.pattern.permute.xlu0 0
    %938 = vperm.xlu0 %937, %v736
    %v939 = vpop.permute.xlu0 %938
    %942 = vset.pattern.permute.xlu0 0
    %943 = vperm.xlu0 %942, %v737
    %v944 = vpop.permute.xlu0 %943
    %947 = vset.pattern.permute.xlu0 0
    %948 = vperm.xlu0 %947, %v738
    %v949 = vpop.permute.xlu0 %948
    %952 = vset.pattern.permute.xlu0 0
    %953 = vperm.xlu0 %952, %v739
    %v954 = vpop.permute.xlu0 %953
    %957 = vset.pattern.permute.xlu0 0
    %958 = vperm.xlu0 %957, %v740
    %v959 = vpop.permute.xlu0 %958
    %962 = vset.pattern.permute.xlu0 0
    %963 = vperm.xlu0 %962, %v741
    %v964 = vpop.permute.xlu0 %963
    %967 = vset.pattern.permute.xlu0 0
    %968 = vperm.xlu0 %967, %v742
    %v969 = vpop.permute.xlu0 %968
    %972 = vset.pattern.permute.xlu0 0
    %973 = vperm.xlu0 %972, %v743
    %v974 = vpop.permute.xlu0 %973
    %977 = vset.pattern.permute.xlu0 0
    %978 = vperm.xlu0 %977, %v744
    %v979 = vpop.permute.xlu0 %978
    %982 = vset.pattern.permute.xlu0 0
    %983 = vperm.xlu0 %982, %v745
    %v984 = vpop.permute.xlu0 %983
    %987 = vset.pattern.permute.xlu0 0
    %988 = vperm.xlu0 %987, %v746
    %v989 = vpop.permute.xlu0 %988
    %992 = vset.pattern.permute.xlu0 0
    %993 = vperm.xlu0 %992, %v747
    %v994 = vpop.permute.xlu0 %993
    %997 = vset.pattern.permute.xlu0 0
    %998 = vperm.xlu0 %997, %v748
    %v999 = vpop.permute.xlu0 %998
    %1002 = vset.pattern.permute.xlu0 0
    %1003 = vperm.xlu0 %1002, %v749
    %v1004 = vpop.permute.xlu0 %1003
    %1007 = vset.pattern.permute.xlu0 0
    %1008 = vperm.xlu0 %1007, %v750
    %v1009 = vpop.permute.xlu0 %1008
    %1012 = vset.pattern.permute.xlu0 0
    %1013 = vperm.xlu0 %1012, %v751
    %v1014 = vpop.permute.xlu0 %1013
    %1017 = vset.pattern.permute.xlu0 0
    %1018 = vperm.xlu0 %1017, %v752
    %v1019 = vpop.permute.xlu0 %1018
    %1022 = vset.pattern.permute.xlu0 0
    %1023 = vperm.xlu0 %1022, %v753
    %v1024 = vpop.permute.xlu0 %1023
    %1027 = vset.pattern.permute.xlu0 0
    %1028 = vperm.xlu0 %1027, %v754
    %v1029 = vpop.permute.xlu0 %1028
    %1032 = vset.pattern.permute.xlu0 0
    %1033 = vperm.xlu0 %1032, %v755
    %v1034 = vpop.permute.xlu0 %1033
    %1037 = vset.pattern.permute.xlu0 0
    %1038 = vperm.xlu0 %1037, %v756
    %v1039 = vpop.permute.xlu0 %1038
    %1042 = vset.pattern.permute.xlu0 0
    %1043 = vperm.xlu0 %1042, %v757
    %v1044 = vpop.permute.xlu0 %1043
    %1047 = vset.pattern.permute.xlu0 0
    %1048 = vperm.xlu0 %1047, %v758
    %v1049 = vpop.permute.xlu0 %1048
    %1052 = vset.pattern.permute.xlu0 0
    %1053 = vperm.xlu0 %1052, %v759
    %v1054 = vpop.permute.xlu0 %1053
    %1057 = vset.pattern.permute.xlu0 0
    %1058 = vperm.xlu0 %1057, %v760
    %v1059 = vpop.permute.xlu0 %1058
    %1062 = vset.pattern.permute.xlu0 0
    %1063 = vperm.xlu0 %1062, %v761
    %v1064 = vpop.permute.xlu0 %1063
    %1067 = vset.pattern.permute.xlu0 0
    %1068 = vperm.xlu0 %1067, %v762
    %v1069 = vpop.permute.xlu0 %1068
    %1072 = vset.pattern.permute.xlu0 0
    %1073 = vperm.xlu0 %1072, %v763
    %v1074 = vpop.permute.xlu0 %1073
    %1077 = vset.pattern.permute.xlu0 0
    %1078 = vperm.xlu0 %1077, %v764
    %v1079 = vpop.permute.xlu0 %1078
    %1082 = vset.pattern.permute.xlu0 0
    %1083 = vperm.xlu0 %1082, %v765
    %v1084 = vpop.permute.xlu0 %1083
    %v1086 = vmul.f32 %v769, %v384
    %v1087 = vmul.f32 %v774, %v389
    %v1088 = vmul.f32 %v779, %v394
    %v1089 = vmul.f32 %v784, %v399
    %v1090 = vmul.f32 %v789, %v404
    %v1091 = vmul.f32 %v794, %v409
    %v1092 = vmul.f32 %v799, %v414
    %v1093 = vmul.f32 %v804, %v419
    %v1094 = vmul.f32 %v809, %v424
    %v1095 = vmul.f32 %v814, %v429
    %v1096 = vmul.f32 %v819, %v434
    %v1097 = vmul.f32 %v824, %v439
    %v1098 = vmul.f32 %v829, %v444
    %v1099 = vmul.f32 %v834, %v449
    %v1100 = vmul.f32 %v839, %v454
    %v1101 = vmul.f32 %v844, %v459
    %v1102 = vmul.f32 %v849, %v464
    %v1103 = vmul.f32 %v854, %v469
    %v1104 = vmul.f32 %v859, %v474
    %v1105 = vmul.f32 %v864, %v479
    %v1106 = vmul.f32 %v869, %v484
    %v1107 = vmul.f32 %v874, %v489
    %v1108 = vmul.f32 %v879, %v494
    %v1109 = vmul.f32 %v884, %v499
    %v1110 = vmul.f32 %v889, %v504
    %v1111 = vmul.f32 %v894, %v509
    %v1112 = vmul.f32 %v899, %v514
    %v1113 = vmul.f32 %v904, %v519
    %v1114 = vmul.f32 %v909, %v524
    %v1115 = vmul.f32 %v914, %v529
    %v1116 = vmul.f32 %v919, %v534
    %v1117 = vmul.f32 %v924, %v539
    %v1118 = vmul.f32 %v929, %v544
    %v1119 = vmul.f32 %v934, %v549
    %v1120 = vmul.f32 %v939, %v554
    %v1121 = vmul.f32 %v944, %v559
    %v1122 = vmul.f32 %v949, %v564
    %v1123 = vmul.f32 %v954, %v569
    %v1124 = vmul.f32 %v959, %v574
    %v1125 = vmul.f32 %v964, %v579
    %v1126 = vmul.f32 %v969, %v584
    %v1127 = vmul.f32 %v974, %v589
    %v1128 = vmul.f32 %v979, %v594
    %v1129 = vmul.f32 %v984, %v599
    %v1130 = vmul.f32 %v989, %v604
    %v1131 = vmul.f32 %v994, %v609
    %v1132 = vmul.f32 %v999, %v614
    %v1133 = vmul.f32 %v1004, %v619
    %v1134 = vmul.f32 %v1009, %v624
    %v1135 = vmul.f32 %v1014, %v629
    %v1136 = vmul.f32 %v1019, %v634
    %v1137 = vmul.f32 %v1024, %v639
    %v1138 = vmul.f32 %v1029, %v644
    %v1139 = vmul.f32 %v1034, %v649
    %v1140 = vmul.f32 %v1039, %v654
    %v1141 = vmul.f32 %v1044, %v659
    %v1142 = vmul.f32 %v1049, %v664
    %v1143 = vmul.f32 %v1054, %v669
    %v1144 = vmul.f32 %v1059, %v674
    %v1145 = vmul.f32 %v1064, %v679
    %v1146 = vmul.f32 %v1069, %v684
    %v1147 = vmul.f32 %v1074, %v689
    %v1148 = vmul.f32 %v1079, %v694
    %v1149 = vmul.f32 %v1084, %v699
    %v1150 = vpack.c.bf16 %v1087, %v1086
    %v1151 = vpack.c.bf16 %v1089, %v1088
    %v1152 = vpack.c.bf16 %v1091, %v1090
    %v1153 = vpack.c.bf16 %v1093, %v1092
    %v1154 = vpack.c.bf16 %v1095, %v1094
    %v1155 = vpack.c.bf16 %v1097, %v1096
    %v1156 = vpack.c.bf16 %v1099, %v1098
    %v1157 = vpack.c.bf16 %v1101, %v1100
    %v1158 = vpack.c.bf16 %v1103, %v1102
    %v1159 = vpack.c.bf16 %v1105, %v1104
    %v1160 = vpack.c.bf16 %v1107, %v1106
    %v1161 = vpack.c.bf16 %v1109, %v1108
    %v1162 = vpack.c.bf16 %v1111, %v1110
    %v1163 = vpack.c.bf16 %v1113, %v1112
    %v1164 = vpack.c.bf16 %v1115, %v1114
    %v1165 = vpack.c.bf16 %v1117, %v1116
    %v1166 = vpack.c.bf16 %v1119, %v1118
    %v1167 = vpack.c.bf16 %v1121, %v1120
    %v1168 = vpack.c.bf16 %v1123, %v1122
    %v1169 = vpack.c.bf16 %v1125, %v1124
    %v1170 = vpack.c.bf16 %v1127, %v1126
    %v1171 = vpack.c.bf16 %v1129, %v1128
    %v1172 = vpack.c.bf16 %v1131, %v1130
    %v1173 = vpack.c.bf16 %v1133, %v1132
    %v1174 = vpack.c.bf16 %v1135, %v1134
    %v1175 = vpack.c.bf16 %v1137, %v1136
    %v1176 = vpack.c.bf16 %v1139, %v1138
    %v1177 = vpack.c.bf16 %v1141, %v1140
    %v1178 = vpack.c.bf16 %v1143, %v1142
    %v1179 = vpack.c.bf16 %v1145, %v1144
    %v1180 = vpack.c.bf16 %v1147, %v1146
    %v1181 = vpack.c.bf16 %v1149, %v1148
    %v1214 = vunpack.c.l.b16 %v1150
    %v1215 = vunpack.c.h.b16 %v1150
    %v1216 = vunpack.c.l.b16 %v1151
    %v1217 = vunpack.c.h.b16 %v1151
    %v1218 = vunpack.c.l.b16 %v1152
    %v1219 = vunpack.c.h.b16 %v1152
    %v1220 = vunpack.c.l.b16 %v1153
    %v1221 = vunpack.c.h.b16 %v1153
    %v1222 = vunpack.c.l.b16 %v1154
    %v1223 = vunpack.c.h.b16 %v1154
    %v1224 = vunpack.c.l.b16 %v1155
    %v1225 = vunpack.c.h.b16 %v1155
    %v1226 = vunpack.c.l.b16 %v1156
    %v1227 = vunpack.c.h.b16 %v1156
    %v1228 = vunpack.c.l.b16 %v1157
    %v1229 = vunpack.c.h.b16 %v1157
    %v1230 = vunpack.c.l.b16 %v1158
    %v1231 = vunpack.c.h.b16 %v1158
    %v1232 = vunpack.c.l.b16 %v1159
    %v1233 = vunpack.c.h.b16 %v1159
    %v1234 = vunpack.c.l.b16 %v1160
    %v1235 = vunpack.c.h.b16 %v1160
    %v1236 = vunpack.c.l.b16 %v1161
    %v1237 = vunpack.c.h.b16 %v1161
    %v1238 = vunpack.c.l.b16 %v1162
    %v1239 = vunpack.c.h.b16 %v1162
    %v1240 = vunpack.c.l.b16 %v1163
    %v1241 = vunpack.c.h.b16 %v1163
    %v1242 = vunpack.c.l.b16 %v1164
    %v1243 = vunpack.c.h.b16 %v1164
    %v1244 = vunpack.c.l.b16 %v1165
    %v1245 = vunpack.c.h.b16 %v1165
    %v1246 = vunpack.c.l.b16 %v1166
    %v1247 = vunpack.c.h.b16 %v1166
    %v1248 = vunpack.c.l.b16 %v1167
    %v1249 = vunpack.c.h.b16 %v1167
    %v1250 = vunpack.c.l.b16 %v1168
    %v1251 = vunpack.c.h.b16 %v1168
    %v1252 = vunpack.c.l.b16 %v1169
    %v1253 = vunpack.c.h.b16 %v1169
    %v1254 = vunpack.c.l.b16 %v1170
    %v1255 = vunpack.c.h.b16 %v1170
    %v1256 = vunpack.c.l.b16 %v1171
    %v1257 = vunpack.c.h.b16 %v1171
    %v1258 = vunpack.c.l.b16 %v1172
    %v1259 = vunpack.c.h.b16 %v1172
    %v1260 = vunpack.c.l.b16 %v1173
    %v1261 = vunpack.c.h.b16 %v1173
    %v1262 = vunpack.c.l.b16 %v1174
    %v1263 = vunpack.c.h.b16 %v1174
    %v1264 = vunpack.c.l.b16 %v1175
    %v1265 = vunpack.c.h.b16 %v1175
    %v1266 = vunpack.c.l.b16 %v1176
    %v1267 = vunpack.c.h.b16 %v1176
    %v1268 = vunpack.c.l.b16 %v1177
    %v1269 = vunpack.c.h.b16 %v1177
    %v1270 = vunpack.c.l.b16 %v1178
    %v1271 = vunpack.c.h.b16 %v1178
    %v1272 = vunpack.c.l.b16 %v1179
    %v1273 = vunpack.c.h.b16 %v1179
    %v1274 = vunpack.c.l.b16 %v1180
    %v1275 = vunpack.c.h.b16 %v1180
    %v1276 = vunpack.c.l.b16 %v1181
    %v1277 = vunpack.c.h.b16 %v1181
    %v1278 = vpack.c.b16 %v1214, %v1214
    %v1279 = vpack.c.b16 %v1215, %v1215
    %v1280 = vpack.c.b16 %v1216, %v1216
    %v1281 = vpack.c.b16 %v1217, %v1217
    %v1282 = vpack.c.b16 %v1218, %v1218
    %v1283 = vpack.c.b16 %v1219, %v1219
    %v1284 = vpack.c.b16 %v1220, %v1220
    %v1285 = vpack.c.b16 %v1221, %v1221
    %v1286 = vpack.c.b16 %v1222, %v1222
    %v1287 = vpack.c.b16 %v1223, %v1223
    %v1288 = vpack.c.b16 %v1224, %v1224
    %v1289 = vpack.c.b16 %v1225, %v1225
    %v1290 = vpack.c.b16 %v1226, %v1226
    %v1291 = vpack.c.b16 %v1227, %v1227
    %v1292 = vpack.c.b16 %v1228, %v1228
    %v1293 = vpack.c.b16 %v1229, %v1229
    %v1294 = vpack.c.b16 %v1230, %v1230
    %v1295 = vpack.c.b16 %v1231, %v1231
    %v1296 = vpack.c.b16 %v1232, %v1232
    %v1297 = vpack.c.b16 %v1233, %v1233
    %v1298 = vpack.c.b16 %v1234, %v1234
    %v1299 = vpack.c.b16 %v1235, %v1235
    %v1300 = vpack.c.b16 %v1236, %v1236
    %v1301 = vpack.c.b16 %v1237, %v1237
    %v1302 = vpack.c.b16 %v1238, %v1238
    %v1303 = vpack.c.b16 %v1239, %v1239
    %v1304 = vpack.c.b16 %v1240, %v1240
    %v1305 = vpack.c.b16 %v1241, %v1241
    %v1306 = vpack.c.b16 %v1242, %v1242
    %v1307 = vpack.c.b16 %v1243, %v1243
    %v1308 = vpack.c.b16 %v1244, %v1244
    %v1309 = vpack.c.b16 %v1245, %v1245
    %v1310 = vpack.c.b16 %v1246, %v1246
    %v1311 = vpack.c.b16 %v1247, %v1247
    %v1312 = vpack.c.b16 %v1248, %v1248
    %v1313 = vpack.c.b16 %v1249, %v1249
    %v1314 = vpack.c.b16 %v1250, %v1250
    %v1315 = vpack.c.b16 %v1251, %v1251
    %v1316 = vpack.c.b16 %v1252, %v1252
    %v1317 = vpack.c.b16 %v1253, %v1253
    %v1318 = vpack.c.b16 %v1254, %v1254
    %v1319 = vpack.c.b16 %v1255, %v1255
    %v1320 = vpack.c.b16 %v1256, %v1256
    %v1321 = vpack.c.b16 %v1257, %v1257
    %v1322 = vpack.c.b16 %v1258, %v1258
    %v1323 = vpack.c.b16 %v1259, %v1259
    %v1324 = vpack.c.b16 %v1260, %v1260
    %v1325 = vpack.c.b16 %v1261, %v1261
    %v1326 = vpack.c.b16 %v1262, %v1262
    %v1327 = vpack.c.b16 %v1263, %v1263
    %v1328 = vpack.c.b16 %v1264, %v1264
    %v1329 = vpack.c.b16 %v1265, %v1265
    %v1330 = vpack.c.b16 %v1266, %v1266
    %v1331 = vpack.c.b16 %v1267, %v1267
    %v1332 = vpack.c.b16 %v1268, %v1268
    %v1333 = vpack.c.b16 %v1269, %v1269
    %v1334 = vpack.c.b16 %v1270, %v1270
    %v1335 = vpack.c.b16 %v1271, %v1271
    %v1336 = vpack.c.b16 %v1272, %v1272
    %v1337 = vpack.c.b16 %v1273, %v1273
    %v1338 = vpack.c.b16 %v1274, %v1274
    %v1339 = vpack.c.b16 %v1275, %v1275
    %v1340 = vpack.c.b16 %v1276, %v1276
    %v1341 = vpack.c.b16 %v1277, %v1277
    %vm1406 = vcmask 257024
    %1407 = vst.msk [vmem:[#allocation8] sm:$0xf] %vm1406, %v1278
    %1408 = vst.msk [vmem:[#allocation8 + $0x4] sm:$0xf] %vm1406, %v1279
    %1409 = vst.msk [vmem:[#allocation8 + $0x8] sm:$0xf] %vm1406, %v1280
    %1410 = vst.msk [vmem:[#allocation8 + $0xc] sm:$0xf] %vm1406, %v1281
    %1411 = vst.msk [vmem:[#allocation8 + $0x10] sm:$0xf] %vm1406, %v1282
    %1412 = vst.msk [vmem:[#allocation8 + $0x14] sm:$0xf] %vm1406, %v1283
    %1413 = vst.msk [vmem:[#allocation8 + $0x18] sm:$0xf] %vm1406, %v1284
    %1414 = vst.msk [vmem:[#allocation8 + $0x1c] sm:$0xf] %vm1406, %v1285
    %1415 = vst.msk [vmem:[#allocation8 + $0x20] sm:$0xf] %vm1406, %v1286
    %1416 = vst.msk [vmem:[#allocation8 + $0x24] sm:$0xf] %vm1406, %v1287
    %1417 = vst.msk [vmem:[#allocation8 + $0x28] sm:$0xf] %vm1406, %v1288
    %1418 = vst.msk [vmem:[#allocation8 + $0x2c] sm:$0xf] %vm1406, %v1289
    %1419 = vst.msk [vmem:[#allocation8 + $0x30] sm:$0xf] %vm1406, %v1290
    %1420 = vst.msk [vmem:[#allocation8 + $0x34] sm:$0xf] %vm1406, %v1291
    %1421 = vst.msk [vmem:[#allocation8 + $0x38] sm:$0xf] %vm1406, %v1292
    %1422 = vst.msk [vmem:[#allocation8 + $0x3c] sm:$0xf] %vm1406, %v1293
    %1423 = vst.msk [vmem:[#allocation8 + $0x40] sm:$0xf] %vm1406, %v1294
    %1424 = vst.msk [vmem:[#allocation8 + $0x44] sm:$0xf] %vm1406, %v1295
    %1425 = vst.msk [vmem:[#allocation8 + $0x48] sm:$0xf] %vm1406, %v1296
    %1426 = vst.msk [vmem:[#allocation8 + $0x4c] sm:$0xf] %vm1406, %v1297
    %1427 = vst.msk [vmem:[#allocation8 + $0x50] sm:$0xf] %vm1406, %v1298
    %1428 = vst.msk [vmem:[#allocation8 + $0x54] sm:$0xf] %vm1406, %v1299
    %1429 = vst.msk [vmem:[#allocation8 + $0x58] sm:$0xf] %vm1406, %v1300
    %1430 = vst.msk [vmem:[#allocation8 + $0x5c] sm:$0xf] %vm1406, %v1301
    %1431 = vst.msk [vmem:[#allocation8 + $0x60] sm:$0xf] %vm1406, %v1302
    %1432 = vst.msk [vmem:[#allocation8 + $0x64] sm:$0xf] %vm1406, %v1303
    %1433 = vst.msk [vmem:[#allocation8 + $0x68] sm:$0xf] %vm1406, %v1304
    %1434 = vst.msk [vmem:[#allocation8 + $0x6c] sm:$0xf] %vm1406, %v1305
    %1435 = vst.msk [vmem:[#allocation8 + $0x70] sm:$0xf] %vm1406, %v1306
    %1436 = vst.msk [vmem:[#allocation8 + $0x74] sm:$0xf] %vm1406, %v1307
    %1437 = vst.msk [vmem:[#allocation8 + $0x78] sm:$0xf] %vm1406, %v1308
    %1438 = vst.msk [vmem:[#allocation8 + $0x7c] sm:$0xf] %vm1406, %v1309
    %1439 = vst.msk [vmem:[#allocation8 + $0x80] sm:$0xf] %vm1406, %v1310
    %1440 = vst.msk [vmem:[#allocation8 + $0x84] sm:$0xf] %vm1406, %v1311
    %1441 = vst.msk [vmem:[#allocation8 + $0x88] sm:$0xf] %vm1406, %v1312
    %1442 = vst.msk [vmem:[#allocation8 + $0x8c] sm:$0xf] %vm1406, %v1313
    %1443 = vst.msk [vmem:[#allocation8 + $0x90] sm:$0xf] %vm1406, %v1314
    %1444 = vst.msk [vmem:[#allocation8 + $0x94] sm:$0xf] %vm1406, %v1315
    %1445 = vst.msk [vmem:[#allocation8 + $0x98] sm:$0xf] %vm1406, %v1316
    %1446 = vst.msk [vmem:[#allocation8 + $0x9c] sm:$0xf] %vm1406, %v1317
    %1447 = vst.msk [vmem:[#allocation8 + $0xa0] sm:$0xf] %vm1406, %v1318
    %1448 = vst.msk [vmem:[#allocation8 + $0xa4] sm:$0xf] %vm1406, %v1319
    %1449 = vst.msk [vmem:[#allocation8 + $0xa8] sm:$0xf] %vm1406, %v1320
    %1450 = vst.msk [vmem:[#allocation8 + $0xac] sm:$0xf] %vm1406, %v1321
    %1451 = vst.msk [vmem:[#allocation8 + $0xb0] sm:$0xf] %vm1406, %v1322
    %1452 = vst.msk [vmem:[#allocation8 + $0xb4] sm:$0xf] %vm1406, %v1323
    %1453 = vst.msk [vmem:[#allocation8 + $0xb8] sm:$0xf] %vm1406, %v1324
    %1454 = vst.msk [vmem:[#allocation8 + $0xbc] sm:$0xf] %vm1406, %v1325
    %1455 = vst.msk [vmem:[#allocation8 + $0xc0] sm:$0xf] %vm1406, %v1326
    %1456 = vst.msk [vmem:[#allocation8 + $0xc4] sm:$0xf] %vm1406, %v1327
    %1457 = vst.msk [vmem:[#allocation8 + $0xc8] sm:$0xf] %vm1406, %v1328
    %1458 = vst.msk [vmem:[#allocation8 + $0xcc] sm:$0xf] %vm1406, %v1329
    %1459 = vst.msk [vmem:[#allocation8 + $0xd0] sm:$0xf] %vm1406, %v1330
    %1460 = vst.msk [vmem:[#allocation8 + $0xd4] sm:$0xf] %vm1406, %v1331
    %1461 = vst.msk [vmem:[#allocation8 + $0xd8] sm:$0xf] %vm1406, %v1332
    %1462 = vst.msk [vmem:[#allocation8 + $0xdc] sm:$0xf] %vm1406, %v1333
    %1463 = vst.msk [vmem:[#allocation8 + $0xe0] sm:$0xf] %vm1406, %v1334
    %1464 = vst.msk [vmem:[#allocation8 + $0xe4] sm:$0xf] %vm1406, %v1335
    %1465 = vst.msk [vmem:[#allocation8 + $0xe8] sm:$0xf] %vm1406, %v1336
    %1466 = vst.msk [vmem:[#allocation8 + $0xec] sm:$0xf] %vm1406, %v1337
    %1467 = vst.msk [vmem:[#allocation8 + $0xf0] sm:$0xf] %vm1406, %v1338
    %1468 = vst.msk [vmem:[#allocation8 + $0xf4] sm:$0xf] %vm1406, %v1339
    %1469 = vst.msk [vmem:[#allocation8 + $0xf8] sm:$0xf] %vm1406, %v1340
    %1470 = vst.msk [vmem:[#allocation8 + $0xfc] sm:$0xf] %vm1406, %v1341
    // Predicated region
    $region26: #{view_gnn_forward.10} parent=1 // pred_check
      _
    $region27: #{view_gnn_forward.10} parent=1 // pred_check_branch
      %1472 = sbr.rel (0) target = $region29
    $region28: #{view_gnn_forward.10} parent=1 // pred_region
      %s1474 = ssub.s32 4096, 4096
      %1475 = vsyncadd [#allocation4], %s1474
      %s1476 = sshll.u32 [#allocation8], 4
      %s1477 = int_to_ptr.vmem [resolvable:$true] %s1476
      %1482 = dma.vmem_to_hbm [thread:$0]  %s1477, 4096, %s3, [#allocation4], 64, 64, 4
    $region29: #{view_gnn_forward.10} parent=1 // pred_fallthru
      _
    // Predicated region
    $region30: #{view_gnn_forward.10} parent=1 // pred_check
      _
    $region31: #{view_gnn_forward.10} parent=1 // pred_check_branch
      %1484 = sbr.rel (0) target = $region33
    $region32: #{view_gnn_forward.10} parent=1 // pred_region
      %1485 = dma.done [#allocation4], 4096
    $region33: #{view_gnn_forward.10} parent=1 // pred_fallthru
      _
    %1486 = vsyncpa [#allocation3], 1
    %1487 = vsyncpa [#allocation6], 1
    %1488 = vsyncpa [#allocation4], 1

// kernel: view_gnn_forward.13
$region0: #{view_gnn_forward.13}
  #allocation0 [shape = 'u32[]', space=smem, size = 0x4, offset = 0x4, fixed_abs, tag = 'smem constant byte address 0x4 - core index']
  #allocation1 [shape = 'u32[144,128]{1,0:T(1,128)}', space=vmem, size = 0x12000, scoped, tag = 'internal scratch']
  %s0 = inlined_call_operand.hbm [shape: f32[2,32], index: 0, kind: input, shape index: {}]
  %s1 = inlined_call_operand.hbm [shape: f32[2,64], index: 1, kind: input, shape index: {}]
  %s2 = inlined_call_operand.hbm [shape: f32[1,32], index: 2, kind: input, shape index: {}]
  %s3 = inlined_call_operand.hbm [shape: f32[1,32], index: 3, kind: input, shape index: {}]
  %s4 = inlined_call_operand.hbm [shape: f32[32,32], index: 4, kind: input, shape index: {}]
  %s5 = inlined_call_operand.hbm [shape: f32[1,32], index: 5, kind: input, shape index: {}]
  %s6 = inlined_call_operand.hbm [shape: f32[32,32], index: 6, kind: input, shape index: {}]
  %s7 = inlined_call_operand.hbm [shape: f32[1,32], index: 7, kind: input, shape index: {}]
  %s8 = inlined_call_operand.hbm [shape: f32[32,8], index: 8, kind: input, shape index: {}]
  %s9 = inlined_call_operand.hbm [shape: f32[1,8], index: 9, kind: input, shape index: {}]
  %s10 = inlined_call_operand.hbm [shape: f32[8,2], index: 10, kind: input, shape index: {}]
  %s11 = inlined_call_operand.hbm [shape: f32[1,2], index: 11, kind: input, shape index: {}]
  %s12 = inlined_call_operand.hbm [shape: f32[64,8], index: 12, kind: input, shape index: {}]
  %s13 = inlined_call_operand.hbm [shape: f32[1,8], index: 13, kind: input, shape index: {}]
  %s14 = inlined_call_operand.hbm [shape: f32[8,2], index: 14, kind: input, shape index: {}]
  %s15 = inlined_call_operand.hbm [shape: f32[1,2], index: 15, kind: input, shape index: {}]
  %s16 = inlined_call_operand.hbm [shape: f32[64,8], index: 16, kind: input, shape index: {}]
  %s17 = inlined_call_operand.hbm [shape: f32[1,8], index: 17, kind: input, shape index: {}]
  %s18 = inlined_call_operand.hbm [shape: f32[8,2], index: 18, kind: input, shape index: {}]
  %s19 = inlined_call_operand.hbm [shape: f32[1,2], index: 19, kind: input, shape index: {}]
  %s20 = inlined_call_operand.hbm [shape: f32[2,2], index: 20, kind: output, shape index: {0}]
  %s21 = inlined_call_operand.hbm [shape: f32[2,2], index: 21, kind: output, shape index: {1}]
  %s22 = inlined_call_operand.hbm [shape: f32[2,2], index: 22, kind: output, shape index: {2}]
  %23 = xla_tuple %s20, %s21, %s22
  %s24 = sld [smem:[#allocation0]]
  $region186: #{view_gnn_forward.13} parent=0
    _
  %s26 = ssub.s32 1, %s24
  %s27 = scalar_select 0, %s26, %s24
  $region1: #{view_gnn_forward.13} parent=0
    #allocation2 [shape = 'u8[1024]{0}', space=vmem, size = 0x400, scoped, tag = 'input window, operand 0, single buffered']
    #allocation3 [shape = 's32[1]{0}', space=sflag, size = 0x4, scoped, tag = 'scoped memory for view_gnn_forward.13']
    #allocation4 [shape = 's32[1]{0}', space=sflag, size = 0x4, scoped, tag = 'scoped memory for view_gnn_forward.13']
    #allocation5 [shape = 'u8[1024]{0}', space=vmem, size = 0x400, scoped, tag = 'input window, operand 1, single buffered']
    #allocation6 [shape = 's32[1]{0}', space=sflag, size = 0x4, scoped, tag = 'scoped memory for view_gnn_forward.13']
    #allocation7 [shape = 'u8[512]{0}', space=vmem, size = 0x400, scoped, tag = 'input window, operand 2, single buffered']
    #allocation8 [shape = 'u8[512]{0}', space=vmem, size = 0x400, scoped, tag = 'input window, operand 3, single buffered']
    #allocation9 [shape = 's32[1]{0}', space=sflag, size = 0x4, scoped, tag = 'scoped memory for view_gnn_forward.13']
    #allocation10 [shape = 'u8[16384]{0}', space=vmem, size = 0x4000, scoped, tag = 'input window, operand 4, single buffered']
    #allocation11 [shape = 'u8[512]{0}', space=vmem, size = 0x400, scoped, tag = 'input window, operand 5, single buffered']
    #allocation12 [shape = 's32[1]{0}', space=sflag, size = 0x4, scoped, tag = 'scoped memory for view_gnn_forward.13']
    #allocation13 [shape = 'u8[16384]{0}', space=vmem, size = 0x4000, scoped, tag = 'input window, operand 6, single buffered']
    #allocation14 [shape = 'u8[512]{0}', space=vmem, size = 0x400, scoped, tag = 'input window, operand 7, single buffered']
    #allocation15 [shape = 's32[1]{0}', space=sflag, size = 0x4, scoped, tag = 'scoped memory for view_gnn_forward.13']
    #allocation16 [shape = 'u8[16384]{0}', space=vmem, size = 0x4000, scoped, tag = 'input window, operand 8, single buffered']
    #allocation17 [shape = 'u8[512]{0}', space=vmem, size = 0x400, scoped, tag = 'input window, operand 9, single buffered']
    #allocation18 [shape = 's32[1]{0}', space=sflag, size = 0x4, scoped, tag = 'scoped memory for view_gnn_forward.13']
    #allocation19 [shape = 'u8[4096]{0}', space=vmem, size = 0x1000, scoped, tag = 'input window, operand 10, single buffered']
    #allocation20 [shape = 'u8[512]{0}', space=vmem, size = 0x400, scoped, tag = 'input window, operand 11, single buffered']
    #allocation21 [shape = 's32[1]{0}', space=sflag, size = 0x4, scoped, tag = 'scoped memory for view_gnn_forward.13']
    #allocation22 [shape = 'u8[32768]{0}', space=vmem, size = 0x8000, scoped, tag = 'input window, operand 12, single buffered']
    #allocation23 [shape = 'u8[512]{0}', space=vmem, size = 0x400, scoped, tag = 'input window, operand 13, single buffered']
    #allocation24 [shape = 's32[1]{0}', space=sflag, size = 0x4, scoped, tag = 'scoped memory for view_gnn_forward.13']
    #allocation25 [shape = 'u8[4096]{0}', space=vmem, size = 0x1000, scoped, tag = 'input window, operand 14, single buffered']
    #allocation26 [shape = 'u8[512]{0}', space=vmem, size = 0x400, scoped, tag = 'input window, operand 15, single buffered']
    #allocation27 [shape = 's32[1]{0}', space=sflag, size = 0x4, scoped, tag = 'scoped memory for view_gnn_forward.13']
    #allocation28 [shape = 'u8[32768]{0}', space=vmem, size = 0x8000, scoped, tag = 'input window, operand 16, single buffered']
    #allocation29 [shape = 'u8[512]{0}', space=vmem, size = 0x400, scoped, tag = 'input window, operand 17, single buffered']
    #allocation30 [shape = 's32[1]{0}', space=sflag, size = 0x4, scoped, tag = 'scoped memory for view_gnn_forward.13']
    #allocation31 [shape = 'u8[4096]{0}', space=vmem, size = 0x1000, scoped, tag = 'input window, operand 18, single buffered']
    #allocation32 [shape = 'u8[512]{0}', space=vmem, size = 0x400, scoped, tag = 'input window, operand 19, single buffered']
    #allocation33 [shape = 's32[1]{0}', space=sflag, size = 0x4, scoped, tag = 'scoped memory for view_gnn_forward.13']
    #allocation34 [shape = 'u8[1024]{0}', space=vmem, size = 0x400, scoped, tag = 'output window, operand 0, single buffered']
    #allocation35 [shape = 'u8[1024]{0}', space=vmem, size = 0x400, scoped, tag = 'output window, operand 1, single buffered']
    #allocation36 [shape = 's32[1]{0}', space=sflag, size = 0x4, scoped, tag = 'scoped memory for view_gnn_forward.13']
    #allocation37 [shape = 'u8[1024]{0}', space=vmem, size = 0x400, scoped, tag = 'output window, operand 2, single buffered']
    %28 = vsyncpa [#allocation3], 0
    %29 = vsyncpa [#allocation6], 0
    %30 = vsyncpa [#allocation9], 0
    %31 = vsyncpa [#allocation12], 0
    %32 = vsyncpa [#allocation15], 0
    %33 = vsyncpa [#allocation18], 0
    %34 = vsyncpa [#allocation21], 0
    %35 = vsyncpa [#allocation24], 0
    %36 = vsyncpa [#allocation27], 0
    %37 = vsyncpa [#allocation30], 0
    %38 = vsyncpa [#allocation33], 0
    %39 = vsyncpa [#allocation4], 0
    %40 = vsyncpa [#allocation36], 0
    // Predicated region
    $region2: #{view_gnn_forward.13} parent=1 // pred_check
      _
    $region3: #{view_gnn_forward.13} parent=1 // pred_check_branch
      %42 = sbr.rel (0) target = $region5
    $region4: #{view_gnn_forward.13} parent=1 // pred_region
      %s44 = ssub.s32 32, 32
      %45 = vsyncadd [#allocation3], %s44
      %s47 = sshll.u32 [#allocation2], 4
      %s48 = int_to_ptr.vmem [resolvable:$true] %s47
      %50 = dma.hbm_to_vmem [thread:$0]  %s0, 32, %s48, [#allocation3]
    $region5: #{view_gnn_forward.13} parent=1 // pred_fallthru
      _
    // Predicated region
    $region6: #{view_gnn_forward.13} parent=1 // pred_check
      _
    $region7: #{view_gnn_forward.13} parent=1 // pred_check_branch
      %52 = sbr.rel (0) target = $region9
    $region8: #{view_gnn_forward.13} parent=1 // pred_region
      %s54 = ssub.s32 32, 32
      %55 = vsyncadd [#allocation6], %s54
      %s57 = sshll.u32 [#allocation5], 4
      %s58 = int_to_ptr.vmem [resolvable:$true] %s57
      %60 = dma.hbm_to_vmem [thread:$0]  %s1, 32, %s58, [#allocation6]
    $region9: #{view_gnn_forward.13} parent=1 // pred_fallthru
      _
    // Predicated region
    $region10: #{view_gnn_forward.13} parent=1 // pred_check
      _
    $region11: #{view_gnn_forward.13} parent=1 // pred_check_branch
      %62 = sbr.rel (0) target = $region13
    $region12: #{view_gnn_forward.13} parent=1 // pred_region
      %s64 = ssub.s32 16, 16
      %65 = vsyncadd [#allocation6], %s64
      %s67 = sshll.u32 [#allocation7], 4
      %s68 = int_to_ptr.vmem [resolvable:$true] %s67
      %70 = dma.hbm_to_vmem [thread:$0]  %s2, 16, %s68, [#allocation6]
    $region13: #{view_gnn_forward.13} parent=1 // pred_fallthru
      _
    // Predicated region
    $region14: #{view_gnn_forward.13} parent=1 // pred_check
      _
    $region15: #{view_gnn_forward.13} parent=1 // pred_check_branch
      %72 = sbr.rel (0) target = $region17
    $region16: #{view_gnn_forward.13} parent=1 // pred_region
      %s74 = ssub.s32 16, 16
      %75 = vsyncadd [#allocation9], %s74
      %s77 = sshll.u32 [#allocation8], 4
      %s78 = int_to_ptr.vmem [resolvable:$true] %s77
      %80 = dma.hbm_to_vmem [thread:$0]  %s3, 16, %s78, [#allocation9]
    $region17: #{view_gnn_forward.13} parent=1 // pred_fallthru
      _
    // Predicated region
    $region18: #{view_gnn_forward.13} parent=1 // pred_check
      _
    $region19: #{view_gnn_forward.13} parent=1 // pred_check_branch
      %82 = sbr.rel (0) target = $region21
    $region20: #{view_gnn_forward.13} parent=1 // pred_region
      %s84 = ssub.s32 512, 512
      %85 = vsyncadd [#allocation9], %s84
      %s86 = sshll.u32 [#allocation10], 4
      %s87 = int_to_ptr.vmem [resolvable:$true] %s86
      %92 = dma.hbm_to_vmem [thread:$0]  %s4, 512, %s87, [#allocation9], 128, 128, 8
    $region21: #{view_gnn_forward.13} parent=1 // pred_fallthru
      _
    // Predicated region
    $region22: #{view_gnn_forward.13} parent=1 // pred_check
      _
    $region23: #{view_gnn_forward.13} parent=1 // pred_check_branch
      %94 = sbr.rel (0) target = $region25
    $region24: #{view_gnn_forward.13} parent=1 // pred_region
      %s96 = ssub.s32 16, 16
      %97 = vsyncadd [#allocation12], %s96
      %s99 = sshll.u32 [#allocation11], 4
      %s100 = int_to_ptr.vmem [resolvable:$true] %s99
      %102 = dma.hbm_to_vmem [thread:$0]  %s5, 16, %s100, [#allocation12]
    $region25: #{view_gnn_forward.13} parent=1 // pred_fallthru
      _
    // Predicated region
    $region26: #{view_gnn_forward.13} parent=1 // pred_check
      _
    $region27: #{view_gnn_forward.13} parent=1 // pred_check_branch
      %104 = sbr.rel (0) target = $region29
    $region28: #{view_gnn_forward.13} parent=1 // pred_region
      %s106 = ssub.s32 512, 512
      %107 = vsyncadd [#allocation12], %s106
      %s108 = sshll.u32 [#allocation13], 4
      %s109 = int_to_ptr.vmem [resolvable:$true] %s108
      %114 = dma.hbm_to_vmem [thread:$0]  %s6, 512, %s109, [#allocation12], 128, 128, 8
    $region29: #{view_gnn_forward.13} parent=1 // pred_fallthru
      _
    // Predicated region
    $region30: #{view_gnn_forward.13} parent=1 // pred_check
      _
    $region31: #{view_gnn_forward.13} parent=1 // pred_check_branch
      %116 = sbr.rel (0) target = $region33
    $region32: #{view_gnn_forward.13} parent=1 // pred_region
      %s118 = ssub.s32 16, 16
      %119 = vsyncadd [#allocation15], %s118
      %s121 = sshll.u32 [#allocation14], 4
      %s122 = int_to_ptr.vmem [resolvable:$true] %s121
      %124 = dma.hbm_to_vmem [thread:$0]  %s7, 16, %s122, [#allocation15]
    $region33: #{view_gnn_forward.13} parent=1 // pred_fallthru
      _
    // Predicated region
    $region34: #{view_gnn_forward.13} parent=1 // pred_check
      _
    $region35: #{view_gnn_forward.13} parent=1 // pred_check_branch
      %126 = sbr.rel (0) target = $region37
    $region36: #{view_gnn_forward.13} parent=1 // pred_region
      %s128 = ssub.s32 512, 512
      %129 = vsyncadd [#allocation15], %s128
      %s130 = sshll.u32 [#allocation16], 4
      %s131 = int_to_ptr.vmem [resolvable:$true] %s130
      %136 = dma.hbm_to_vmem [thread:$0]  %s8, 512, %s131, [#allocation15], 128, 128, 8
    $region37: #{view_gnn_forward.13} parent=1 // pred_fallthru
      _
    // Predicated region
    $region38: #{view_gnn_forward.13} parent=1 // pred_check
      _
    $region39: #{view_gnn_forward.13} parent=1 // pred_check_branch
      %138 = sbr.rel (0) target = $region41
    $region40: #{view_gnn_forward.13} parent=1 // pred_region
      %s140 = ssub.s32 16, 16
      %141 = vsyncadd [#allocation18], %s140
      %s143 = sshll.u32 [#allocation17], 4
      %s144 = int_to_ptr.vmem [resolvable:$true] %s143
      %146 = dma.hbm_to_vmem [thread:$0]  %s9, 16, %s144, [#allocation18]
    $region41: #{view_gnn_forward.13} parent=1 // pred_fallthru
      _
    // Predicated region
    $region42: #{view_gnn_forward.13} parent=1 // pred_check
      _
    $region43: #{view_gnn_forward.13} parent=1 // pred_check_branch
      %148 = sbr.rel (0) target = $region45
    $region44: #{view_gnn_forward.13} parent=1 // pred_region
      %s150 = ssub.s32 128, 128
      %151 = vsyncadd [#allocation18], %s150
      %s153 = sshll.u32 [#allocation19], 4
      %s154 = int_to_ptr.vmem [resolvable:$true] %s153
      %156 = dma.hbm_to_vmem [thread:$0]  %s10, 128, %s154, [#allocation18]
    $region45: #{view_gnn_forward.13} parent=1 // pred_fallthru
      _
    // Predicated region
    $region46: #{view_gnn_forward.13} parent=1 // pred_check
      _
    $region47: #{view_gnn_forward.13} parent=1 // pred_check_branch
      %158 = sbr.rel (0) target = $region49
    $region48: #{view_gnn_forward.13} parent=1 // pred_region
      %s160 = ssub.s32 16, 16
      %161 = vsyncadd [#allocation21], %s160
      %s163 = sshll.u32 [#allocation20], 4
      %s164 = int_to_ptr.vmem [resolvable:$true] %s163
      %166 = dma.hbm_to_vmem [thread:$0]  %s11, 16, %s164, [#allocation21]
    $region49: #{view_gnn_forward.13} parent=1 // pred_fallthru
      _
    // Predicated region
    $region50: #{view_gnn_forward.13} parent=1 // pred_check
      _
    $region51: #{view_gnn_forward.13} parent=1 // pred_check_branch
      %168 = sbr.rel (0) target = $region53
    $region52: #{view_gnn_forward.13} parent=1 // pred_region
      %s170 = ssub.s32 1024, 1024
      %171 = vsyncadd [#allocation21], %s170
      %s172 = sshll.u32 [#allocation22], 4
      %s173 = int_to_ptr.vmem [resolvable:$true] %s172
      %178 = dma.hbm_to_vmem [thread:$0]  %s12, 1024, %s173, [#allocation21], 128, 128, 8
    $region53: #{view_gnn_forward.13} parent=1 // pred_fallthru
      _
    // Predicated region
    $region54: #{view_gnn_forward.13} parent=1 // pred_check
      _
    $region55: #{view_gnn_forward.13} parent=1 // pred_check_branch
      %180 = sbr.rel (0) target = $region57
    $region56: #{view_gnn_forward.13} parent=1 // pred_region
      %s182 = ssub.s32 16, 16
      %183 = vsyncadd [#allocation24], %s182
      %s185 = sshll.u32 [#allocation23], 4
      %s186 = int_to_ptr.vmem [resolvable:$true] %s185
      %188 = dma.hbm_to_vmem [thread:$0]  %s13, 16, %s186, [#allocation24]
    $region57: #{view_gnn_forward.13} parent=1 // pred_fallthru
      _
    // Predicated region
    $region58: #{view_gnn_forward.13} parent=1 // pred_check
      _
    $region59: #{view_gnn_forward.13} parent=1 // pred_check_branch
      %190 = sbr.rel (0) target = $region61
    $region60: #{view_gnn_forward.13} parent=1 // pred_region
      %s192 = ssub.s32 128, 128
      %193 = vsyncadd [#allocation24], %s192
      %s195 = sshll.u32 [#allocation25], 4
      %s196 = int_to_ptr.vmem [resolvable:$true] %s195
      %198 = dma.hbm_to_vmem [thread:$0]  %s14, 128, %s196, [#allocation24]
    $region61: #{view_gnn_forward.13} parent=1 // pred_fallthru
      _
    // Predicated region
    $region62: #{view_gnn_forward.13} parent=1 // pred_check
      _
    $region63: #{view_gnn_forward.13} parent=1 // pred_check_branch
      %200 = sbr.rel (0) target = $region65
    $region64: #{view_gnn_forward.13} parent=1 // pred_region
      %s202 = ssub.s32 16, 16
      %203 = vsyncadd [#allocation27], %s202
      %s205 = sshll.u32 [#allocation26], 4
      %s206 = int_to_ptr.vmem [resolvable:$true] %s205
      %208 = dma.hbm_to_vmem [thread:$0]  %s15, 16, %s206, [#allocation27]
    $region65: #{view_gnn_forward.13} parent=1 // pred_fallthru
      _
    // Predicated region
    $region66: #{view_gnn_forward.13} parent=1 // pred_check
      _
    $region67: #{view_gnn_forward.13} parent=1 // pred_check_branch
      %210 = sbr.rel (0) target = $region69
    $region68: #{view_gnn_forward.13} parent=1 // pred_region
      %s212 = ssub.s32 1024, 1024
      %213 = vsyncadd [#allocation27], %s212
      %s214 = sshll.u32 [#allocation28], 4
      %s215 = int_to_ptr.vmem [resolvable:$true] %s214
      %220 = dma.hbm_to_vmem [thread:$0]  %s16, 1024, %s215, [#allocation27], 128, 128, 8
    $region69: #{view_gnn_forward.13} parent=1 // pred_fallthru
      _
    // Predicated region
    $region70: #{view_gnn_forward.13} parent=1 // pred_check
      _
    $region71: #{view_gnn_forward.13} parent=1 // pred_check_branch
      %222 = sbr.rel (0) target = $region73
    $region72: #{view_gnn_forward.13} parent=1 // pred_region
      %s224 = ssub.s32 16, 16
      %225 = vsyncadd [#allocation30], %s224
      %s227 = sshll.u32 [#allocation29], 4
      %s228 = int_to_ptr.vmem [resolvable:$true] %s227
      %230 = dma.hbm_to_vmem [thread:$0]  %s17, 16, %s228, [#allocation30]
    $region73: #{view_gnn_forward.13} parent=1 // pred_fallthru
      _
    // Predicated region
    $region74: #{view_gnn_forward.13} parent=1 // pred_check
      _
    $region75: #{view_gnn_forward.13} parent=1 // pred_check_branch
      %232 = sbr.rel (0) target = $region77
    $region76: #{view_gnn_forward.13} parent=1 // pred_region
      %s234 = ssub.s32 128, 128
      %235 = vsyncadd [#allocation30], %s234
      %s237 = sshll.u32 [#allocation31], 4
      %s238 = int_to_ptr.vmem [resolvable:$true] %s237
      %240 = dma.hbm_to_vmem [thread:$0]  %s18, 128, %s238, [#allocation30]
    $region77: #{view_gnn_forward.13} parent=1 // pred_fallthru
      _
    // Predicated region
    $region78: #{view_gnn_forward.13} parent=1 // pred_check
      _
    $region79: #{view_gnn_forward.13} parent=1 // pred_check_branch
      %242 = sbr.rel (0) target = $region81
    $region80: #{view_gnn_forward.13} parent=1 // pred_region
      %s244 = ssub.s32 16, 16
      %245 = vsyncadd [#allocation33], %s244
      %s247 = sshll.u32 [#allocation32], 4
      %s248 = int_to_ptr.vmem [resolvable:$true] %s247
      %250 = dma.hbm_to_vmem [thread:$0]  %s19, 16, %s248, [#allocation33]
    $region81: #{view_gnn_forward.13} parent=1 // pred_fallthru
      _
    // Predicated region
    $region82: #{view_gnn_forward.13} parent=1 // pred_check
      _
    $region83: #{view_gnn_forward.13} parent=1 // pred_check_branch
      %252 = sbr.rel (0) target = $region85
    $region84: #{view_gnn_forward.13} parent=1 // pred_region
      %253 = dma.done [#allocation3], 32
    $region85: #{view_gnn_forward.13} parent=1 // pred_fallthru
      _
    // Predicated region
    $region86: #{view_gnn_forward.13} parent=1 // pred_check
      _
    $region87: #{view_gnn_forward.13} parent=1 // pred_check_branch
      %255 = sbr.rel (0) target = $region89
    $region88: #{view_gnn_forward.13} parent=1 // pred_region
      %256 = dma.done [#allocation6], 32
    $region89: #{view_gnn_forward.13} parent=1 // pred_fallthru
      _
    // Predicated region
    $region90: #{view_gnn_forward.13} parent=1 // pred_check
      _
    $region91: #{view_gnn_forward.13} parent=1 // pred_check_branch
      %258 = sbr.rel (0) target = $region93
    $region92: #{view_gnn_forward.13} parent=1 // pred_region
      %259 = dma.done [#allocation6], 16
    $region93: #{view_gnn_forward.13} parent=1 // pred_fallthru
      _
    // Predicated region
    $region94: #{view_gnn_forward.13} parent=1 // pred_check
      _
    $region95: #{view_gnn_forward.13} parent=1 // pred_check_branch
      %261 = sbr.rel (0) target = $region97
    $region96: #{view_gnn_forward.13} parent=1 // pred_region
      %262 = dma.done [#allocation9], 16
    $region97: #{view_gnn_forward.13} parent=1 // pred_fallthru
      _
    // Predicated region
    $region98: #{view_gnn_forward.13} parent=1 // pred_check
      _
    $region99: #{view_gnn_forward.13} parent=1 // pred_check_branch
      %264 = sbr.rel (0) target = $region101
    $region100: #{view_gnn_forward.13} parent=1 // pred_region
      %265 = dma.done [#allocation9], 512
    $region101: #{view_gnn_forward.13} parent=1 // pred_fallthru
      _
    // Predicated region
    $region102: #{view_gnn_forward.13} parent=1 // pred_check
      _
    $region103: #{view_gnn_forward.13} parent=1 // pred_check_branch
      %267 = sbr.rel (0) target = $region105
    $region104: #{view_gnn_forward.13} parent=1 // pred_region
      %268 = dma.done [#allocation12], 16
    $region105: #{view_gnn_forward.13} parent=1 // pred_fallthru
      _
    // Predicated region
    $region106: #{view_gnn_forward.13} parent=1 // pred_check
      _
    $region107: #{view_gnn_forward.13} parent=1 // pred_check_branch
      %270 = sbr.rel (0) target = $region109
    $region108: #{view_gnn_forward.13} parent=1 // pred_region
      %271 = dma.done [#allocation12], 512
    $region109: #{view_gnn_forward.13} parent=1 // pred_fallthru
      _
    // Predicated region
    $region110: #{view_gnn_forward.13} parent=1 // pred_check
      _
    $region111: #{view_gnn_forward.13} parent=1 // pred_check_branch
      %273 = sbr.rel (0) target = $region113
    $region112: #{view_gnn_forward.13} parent=1 // pred_region
      %274 = dma.done [#allocation15], 16
    $region113: #{view_gnn_forward.13} parent=1 // pred_fallthru
      _
    // Predicated region
    $region114: #{view_gnn_forward.13} parent=1 // pred_check
      _
    $region115: #{view_gnn_forward.13} parent=1 // pred_check_branch
      %276 = sbr.rel (0) target = $region117
    $region116: #{view_gnn_forward.13} parent=1 // pred_region
      %277 = dma.done [#allocation15], 512
    $region117: #{view_gnn_forward.13} parent=1 // pred_fallthru
      _
    // Predicated region
    $region118: #{view_gnn_forward.13} parent=1 // pred_check
      _
    $region119: #{view_gnn_forward.13} parent=1 // pred_check_branch
      %279 = sbr.rel (0) target = $region121
    $region120: #{view_gnn_forward.13} parent=1 // pred_region
      %280 = dma.done [#allocation18], 16
    $region121: #{view_gnn_forward.13} parent=1 // pred_fallthru
      _
    // Predicated region
    $region122: #{view_gnn_forward.13} parent=1 // pred_check
      _
    $region123: #{view_gnn_forward.13} parent=1 // pred_check_branch
      %282 = sbr.rel (0) target = $region125
    $region124: #{view_gnn_forward.13} parent=1 // pred_region
      %283 = dma.done [#allocation18], 128
    $region125: #{view_gnn_forward.13} parent=1 // pred_fallthru
      _
    // Predicated region
    $region126: #{view_gnn_forward.13} parent=1 // pred_check
      _
    $region127: #{view_gnn_forward.13} parent=1 // pred_check_branch
      %285 = sbr.rel (0) target = $region129
    $region128: #{view_gnn_forward.13} parent=1 // pred_region
      %286 = dma.done [#allocation21], 16
    $region129: #{view_gnn_forward.13} parent=1 // pred_fallthru
      _
    // Predicated region
    $region130: #{view_gnn_forward.13} parent=1 // pred_check
      _
    $region131: #{view_gnn_forward.13} parent=1 // pred_check_branch
      %288 = sbr.rel (0) target = $region133
    $region132: #{view_gnn_forward.13} parent=1 // pred_region
      %289 = dma.done [#allocation21], 1024
    $region133: #{view_gnn_forward.13} parent=1 // pred_fallthru
      _
    // Predicated region
    $region134: #{view_gnn_forward.13} parent=1 // pred_check
      _
    $region135: #{view_gnn_forward.13} parent=1 // pred_check_branch
      %291 = sbr.rel (0) target = $region137
    $region136: #{view_gnn_forward.13} parent=1 // pred_region
      %292 = dma.done [#allocation24], 16
    $region137: #{view_gnn_forward.13} parent=1 // pred_fallthru
      _
    // Predicated region
    $region138: #{view_gnn_forward.13} parent=1 // pred_check
      _
    $region139: #{view_gnn_forward.13} parent=1 // pred_check_branch
      %294 = sbr.rel (0) target = $region141
    $region140: #{view_gnn_forward.13} parent=1 // pred_region
      %295 = dma.done [#allocation24], 128
    $region141: #{view_gnn_forward.13} parent=1 // pred_fallthru
      _
    // Predicated region
    $region142: #{view_gnn_forward.13} parent=1 // pred_check
      _
    $region143: #{view_gnn_forward.13} parent=1 // pred_check_branch
      %297 = sbr.rel (0) target = $region145
    $region144: #{view_gnn_forward.13} parent=1 // pred_region
      %298 = dma.done [#allocation27], 16
    $region145: #{view_gnn_forward.13} parent=1 // pred_fallthru
      _
    // Predicated region
    $region146: #{view_gnn_forward.13} parent=1 // pred_check
      _
    $region147: #{view_gnn_forward.13} parent=1 // pred_check_branch
      %300 = sbr.rel (0) target = $region149
    $region148: #{view_gnn_forward.13} parent=1 // pred_region
      %301 = dma.done [#allocation27], 1024
    $region149: #{view_gnn_forward.13} parent=1 // pred_fallthru
      _
    // Predicated region
    $region150: #{view_gnn_forward.13} parent=1 // pred_check
      _
    $region151: #{view_gnn_forward.13} parent=1 // pred_check_branch
      %303 = sbr.rel (0) target = $region153
    $region152: #{view_gnn_forward.13} parent=1 // pred_region
      %304 = dma.done [#allocation30], 16
    $region153: #{view_gnn_forward.13} parent=1 // pred_fallthru
      _
    // Predicated region
    $region154: #{view_gnn_forward.13} parent=1 // pred_check
      _
    $region155: #{view_gnn_forward.13} parent=1 // pred_check_branch
      %306 = sbr.rel (0) target = $region157
    $region156: #{view_gnn_forward.13} parent=1 // pred_region
      %307 = dma.done [#allocation30], 128
    $region157: #{view_gnn_forward.13} parent=1 // pred_fallthru
      _
    // Predicated region
    $region158: #{view_gnn_forward.13} parent=1 // pred_check
      _
    $region159: #{view_gnn_forward.13} parent=1 // pred_check_branch
      %309 = sbr.rel (0) target = $region161
    $region160: #{view_gnn_forward.13} parent=1 // pred_region
      %310 = dma.done [#allocation33], 16
    $region161: #{view_gnn_forward.13} parent=1 // pred_fallthru
      _
    %v311 = vld [vmem:[#allocation7] sm:$0x1]
    %v312 = vld [vmem:[#allocation10] sm:$0xff]
    %v313 = vld [vmem:[#allocation10 + $0x8] sm:$0xff]
    %v314 = vld [vmem:[#allocation10 + $0x10] sm:$0xff]
    %v315 = vld [vmem:[#allocation10 + $0x18] sm:$0xff]
    %v316 = vld [vmem:[#allocation11] sm:$0x1]
    %vm317 = vcmask 261120
    %v319 = vsel %vm317, %v311, 0
    %321 = vmatprep.subr.mxu0 0.0
    %322 = vmatpush1.msra.mxu0 %v312
    %323 = vmatprep.subr.mxu0 0.0
    %324 = vmatpush1.msra.mxu0 %v313
    %325 = vmatprep.subr.mxu0 0.0
    %326 = vmatpush1.msra.mxu0 %v314
    %327 = vmatprep.subr.mxu0 0.0
    %328 = vmatpush1.msra.mxu0 %v315
    %329 = vmatprep.subr.mxu0 0.0
    %330 = vmatpush1.msra.mxu0 0.0
    %331 = vmatprep.subr.mxu0 0.0
    %332 = vmatpush1.msra.mxu0 0.0
    %333 = vmatprep.subr.mxu0 0.0
    %334 = vmatpush1.msra.mxu0 0.0
    %335 = vmatprep.subr.mxu0 0.0
    %336 = vmatpush1.msra.mxu0 0.0
    %337 = vmatprep.subr.mxu0 0.0
    %338 = vmatpush1.msra.mxu0 0.0
    %339 = vmatprep.subr.mxu0 0.0
    %340 = vmatpush1.msra.mxu0 0.0
    %341 = vmatprep.subr.mxu0 0.0
    %342 = vmatpush1.msra.mxu0 0.0
    %343 = vmatprep.subr.mxu0 0.0
    %344 = vmatpush1.msra.mxu0 0.0
    %345 = vmatprep.subr.mxu0 0.0
    %346 = vmatpush1.msra.mxu0 0.0
    %347 = vmatprep.subr.mxu0 0.0
    %348 = vmatpush1.msra.mxu0 0.0
    %349 = vmatprep.subr.mxu0 0.0
    %350 = vmatpush1.msra.mxu0 0.0
    %351 = vmatprep.subr.mxu0 0.0
    %352 = vmatpush1.msra.mxu0 0.0
    %353 = vmatprep.subr.mxu0 0.0
    %354 = vmatpush1.msra.mxu0 0.0
    %355 = vmatprep.subr.mxu0 0.0
    %356 = vmatpush1.msra.mxu0 0.0
    %357 = vmatprep.subr.mxu0 0.0
    %358 = vmatpush1.msra.mxu0 0.0
    %359 = vmatprep.subr.mxu0 0.0
    %360 = vmatpush1.msra.mxu0 0.0
    %361 = vmatprep.subr.mxu0 0.0
    %362 = vmatpush1.msra.mxu0 0.0
    %363 = vmatprep.subr.mxu0 0.0
    %364 = vmatpush1.msra.mxu0 0.0
    %365 = vmatprep.subr.mxu0 0.0
    %366 = vmatpush1.msra.mxu0 0.0
    %367 = vmatprep.subr.mxu0 0.0
    %368 = vmatpush1.msra.mxu0 0.0
    %369 = vmatprep.subr.mxu0 0.0
    %370 = vmatpush1.msra.mxu0 0.0
    %371 = vmatprep.subr.mxu0 0.0
    %372 = vmatpush1.msra.mxu0 0.0
    %373 = vmatprep.subr.mxu0 0.0
    %374 = vmatpush1.msra.mxu0 0.0
    %375 = vmatprep.subr.mxu0 0.0
    %376 = vmatpush1.msra.mxu0 0.0
    %377 = vmatprep.subr.mxu0 0.0
    %378 = vmatpush1.msra.mxu0 0.0
    %379 = vmatprep.subr.mxu0 0.0
    %380 = vmatpush1.msra.mxu0 0.0
    %381 = vmatprep.subr.mxu0 0.0
    %382 = vmatpush1.msra.mxu0 0.0
    %383 = vmatprep.subr.mxu0 0.0
    %384 = vmatpush1.msra.mxu0 0.0
    %385 = vmatprep.mubr.f32.mxu0 0.0
    %386 = vmatmul.mubr.f32.gmra.mrb[0].mxu0 %v319
    %v387 = vpop.f32.mrb[0].mxu0
    %v388 = vadd.f32 %v316, %v387
    %v389 = vpop.f32.mrb[0].mxu0
    %390 = vdwg.mxu0
    %vm391 = vcmp.ge.f32.partialorder %v388, 0.0
    %v392 = vmul.f32 %v388, 0.2
    %v393 = vsel %vm391, %v388, %v392
    %v394 = vld [vmem:[#allocation8] sm:$0x1]
    %v395 = vld [vmem:[#allocation13] sm:$0xff]
    %v396 = vld [vmem:[#allocation13 + $0x8] sm:$0xff]
    %v397 = vld [vmem:[#allocation13 + $0x10] sm:$0xff]
    %v398 = vld [vmem:[#allocation13 + $0x18] sm:$0xff]
    %v399 = vld [vmem:[#allocation14] sm:$0x1]
    %v401 = vsel %vm317, %v394, 0
    %403 = vmatprep.subr.mxu0 0.0
    %404 = vmatpush1.msra.mxu0 %v395
    %405 = vmatprep.subr.mxu0 0.0
    %406 = vmatpush1.msra.mxu0 %v396
    %407 = vmatprep.subr.mxu0 0.0
    %408 = vmatpush1.msra.mxu0 %v397
    %409 = vmatprep.subr.mxu0 0.0
    %410 = vmatpush1.msra.mxu0 %v398
    %411 = vmatprep.subr.mxu0 0.0
    %412 = vmatpush1.msra.mxu0 0.0
    %413 = vmatprep.subr.mxu0 0.0
    %414 = vmatpush1.msra.mxu0 0.0
    %415 = vmatprep.subr.mxu0 0.0
    %416 = vmatpush1.msra.mxu0 0.0
    %417 = vmatprep.subr.mxu0 0.0
    %418 = vmatpush1.msra.mxu0 0.0
    %419 = vmatprep.subr.mxu0 0.0
    %420 = vmatpush1.msra.mxu0 0.0
    %421 = vmatprep.subr.mxu0 0.0
    %422 = vmatpush1.msra.mxu0 0.0
    %423 = vmatprep.subr.mxu0 0.0
    %424 = vmatpush1.msra.mxu0 0.0
    %425 = vmatprep.subr.mxu0 0.0
    %426 = vmatpush1.msra.mxu0 0.0
    %427 = vmatprep.subr.mxu0 0.0
    %428 = vmatpush1.msra.mxu0 0.0
    %429 = vmatprep.subr.mxu0 0.0
    %430 = vmatpush1.msra.mxu0 0.0
    %431 = vmatprep.subr.mxu0 0.0
    %432 = vmatpush1.msra.mxu0 0.0
    %433 = vmatprep.subr.mxu0 0.0
    %434 = vmatpush1.msra.mxu0 0.0
    %435 = vmatprep.subr.mxu0 0.0
    %436 = vmatpush1.msra.mxu0 0.0
    %437 = vmatprep.subr.mxu0 0.0
    %438 = vmatpush1.msra.mxu0 0.0
    %439 = vmatprep.subr.mxu0 0.0
    %440 = vmatpush1.msra.mxu0 0.0
    %441 = vmatprep.subr.mxu0 0.0
    %442 = vmatpush1.msra.mxu0 0.0
    %443 = vmatprep.subr.mxu0 0.0
    %444 = vmatpush1.msra.mxu0 0.0
    %445 = vmatprep.subr.mxu0 0.0
    %446 = vmatpush1.msra.mxu0 0.0
    %447 = vmatprep.subr.mxu0 0.0
    %448 = vmatpush1.msra.mxu0 0.0
    %449 = vmatprep.subr.mxu0 0.0
    %450 = vmatpush1.msra.mxu0 0.0
    %451 = vmatprep.subr.mxu0 0.0
    %452 = vmatpush1.msra.mxu0 0.0
    %453 = vmatprep.subr.mxu0 0.0
    %454 = vmatpush1.msra.mxu0 0.0
    %455 = vmatprep.subr.mxu0 0.0
    %456 = vmatpush1.msra.mxu0 0.0
    %457 = vmatprep.subr.mxu0 0.0
    %458 = vmatpush1.msra.mxu0 0.0
    %459 = vmatprep.subr.mxu0 0.0
    %460 = vmatpush1.msra.mxu0 0.0
    %461 = vmatprep.subr.mxu0 0.0
    %462 = vmatpush1.msra.mxu0 0.0
    %463 = vmatprep.subr.mxu0 0.0
    %464 = vmatpush1.msra.mxu0 0.0
    %465 = vmatprep.subr.mxu0 0.0
    %466 = vmatpush1.msra.mxu0 0.0
    %467 = vmatprep.mubr.f32.mxu0 0.0
    %468 = vmatmul.mubr.f32.gmra.mrb[0].mxu0 %v401
    %v469 = vpop.f32.mrb[0].mxu0
    %v470 = vadd.f32 %v399, %v469
    %v471 = vpop.f32.mrb[0].mxu0
    %472 = vdwg.mxu0
    %vm473 = vcmp.ge.f32.partialorder %v470, 0.0
    %v474 = vmul.f32 %v470, 0.2
    %v475 = vsel %vm473, %v470, %v474
    %vm476 = vcmp.ge.f32.partialorder %v316, 0.0
    %v477 = vmul.f32 %v316, 0.2
    %v478 = vsel %vm476, %v316, %v477
    %vm479 = vcmp.ge.f32.partialorder %v399, 0.0
    %v480 = vmul.f32 %v399, 0.2
    %v481 = vsel %vm479, %v399, %v480
    %v482 = vlaneseq
    %v483 = vshrl.u32 %v482, 7
    %vm484 = vcmp.eq.s32.totalorder %v483, 0
    %v485 = vlaneseq
    %v486 = vshrl.u32 %v485, 7
    %v487 = vsub.s32 0, %v486
    %v488 = vrot.slane %v393, %v487
    %v490 = vlaneseq
    %v491 = vshrl.u32 %v490, 7
    %v492 = vsub.s32 0, %v491
    %v493 = vrot.slane %v478, %v492
    %v495 = vsel %vm484, %v488, %v493
    %v496 = vlaneseq
    %v497 = vshrl.u32 %v496, 7
    %v498 = vsub.s32 0, %v497
    %v499 = vrot.slane %v475, %v498
    %v501 = vlaneseq
    %v502 = vshrl.u32 %v501, 7
    %v503 = vsub.s32 0, %v502
    %v504 = vrot.slane %v481, %v503
    %v506 = vsel %vm484, %v499, %v504
    %v507 = vld [vmem:[#allocation2] sm:$0x3]
    %v508 = vld [vmem:[#allocation16] sm:$0xff]
    %v509 = vld [vmem:[#allocation16 + $0x8] sm:$0xff]
    %v510 = vld [vmem:[#allocation16 + $0x10] sm:$0xff]
    %v511 = vld [vmem:[#allocation16 + $0x18] sm:$0xff]
    %v512 = vld [vmem:[#allocation17] sm:$0x1]
    %v513 = vld [vmem:[#allocation19] sm:$0xff]
    %v514 = vld [vmem:[#allocation20] sm:$0x1]
    %v516 = vlaneseq
    %v517 = vshrl.u32 %v516, 7
    %v518 = vsub.s32 0, %v517
    %v519 = vrot.slane %v512, %v518
    %v522 = vsel %vm317, %v507, 0
    %524 = vmatprep.subr.mxu0 0.0
    %525 = vmatpush1.msra.mxu0 %v508
    %526 = vmatprep.subr.mxu0 0.0
    %527 = vmatpush1.msra.mxu0 %v509
    %528 = vmatprep.subr.mxu0 0.0
    %529 = vmatpush1.msra.mxu0 %v510
    %530 = vmatprep.subr.mxu0 0.0
    %531 = vmatpush1.msra.mxu0 %v511
    %532 = vmatprep.subr.mxu0 0.0
    %533 = vmatpush1.msra.mxu0 0.0
    %534 = vmatprep.subr.mxu0 0.0
    %535 = vmatpush1.msra.mxu0 0.0
    %536 = vmatprep.subr.mxu0 0.0
    %537 = vmatpush1.msra.mxu0 0.0
    %538 = vmatprep.subr.mxu0 0.0
    %539 = vmatpush1.msra.mxu0 0.0
    %540 = vmatprep.subr.mxu0 0.0
    %541 = vmatpush1.msra.mxu0 0.0
    %542 = vmatprep.subr.mxu0 0.0
    %543 = vmatpush1.msra.mxu0 0.0
    %544 = vmatprep.subr.mxu0 0.0
    %545 = vmatpush1.msra.mxu0 0.0
    %546 = vmatprep.subr.mxu0 0.0
    %547 = vmatpush1.msra.mxu0 0.0
    %548 = vmatprep.subr.mxu0 0.0
    %549 = vmatpush1.msra.mxu0 0.0
    %550 = vmatprep.subr.mxu0 0.0
    %551 = vmatpush1.msra.mxu0 0.0
    %552 = vmatprep.subr.mxu0 0.0
    %553 = vmatpush1.msra.mxu0 0.0
    %554 = vmatprep.subr.mxu0 0.0
    %555 = vmatpush1.msra.mxu0 0.0
    %556 = vmatprep.subr.mxu0 0.0
    %557 = vmatpush1.msra.mxu0 0.0
    %558 = vmatprep.subr.mxu0 0.0
    %559 = vmatpush1.msra.mxu0 0.0
    %560 = vmatprep.subr.mxu0 0.0
    %561 = vmatpush1.msra.mxu0 0.0
    %562 = vmatprep.subr.mxu0 0.0
    %563 = vmatpush1.msra.mxu0 0.0
    %564 = vmatprep.subr.mxu0 0.0
    %565 = vmatpush1.msra.mxu0 0.0
    %566 = vmatprep.subr.mxu0 0.0
    %567 = vmatpush1.msra.mxu0 0.0
    %568 = vmatprep.subr.mxu0 0.0
    %569 = vmatpush1.msra.mxu0 0.0
    %570 = vmatprep.subr.mxu0 0.0
    %571 = vmatpush1.msra.mxu0 0.0
    %572 = vmatprep.subr.mxu0 0.0
    %573 = vmatpush1.msra.mxu0 0.0
    %574 = vmatprep.subr.mxu0 0.0
    %575 = vmatpush1.msra.mxu0 0.0
    %576 = vmatprep.subr.mxu0 0.0
    %577 = vmatpush1.msra.mxu0 0.0
    %578 = vmatprep.subr.mxu0 0.0
    %579 = vmatpush1.msra.mxu0 0.0
    %580 = vmatprep.subr.mxu0 0.0
    %581 = vmatpush1.msra.mxu0 0.0
    %582 = vmatprep.subr.mxu0 0.0
    %583 = vmatpush1.msra.mxu0 0.0
    %584 = vmatprep.subr.mxu0 0.0
    %585 = vmatpush1.msra.mxu0 0.0
    %586 = vmatprep.subr.mxu0 0.0
    %587 = vmatpush1.msra.mxu0 0.0
    %588 = vmatprep.mubr.f32.mxu0 0.0
    %589 = vmatmul.mubr.f32.gmra.mrb[0].mxu0 %v522
    %v590 = vpop.f32.mrb[0].mxu0
    %v591 = vadd.f32 %v519, %v590
    %v592 = vpop.f32.mrb[0].mxu0
    %593 = vdwg.mxu0
    %vm594 = vcmp.ge.f32.partialorder %v591, 0.0
    %v595 = vmul.f32 %v591, 0.2
    %v596 = vsel %vm594, %v591, %v595
    %v598 = vlaneseq
    %v599 = vshrl.u32 %v598, 7
    %v600 = vsub.s32 0, %v599
    %v601 = vrot.slane %v514, %v600
    %vm603 = vcmask 64512
    %v605 = vsel %vm603, %v596, 0
    %607 = vmatprep.subr.mxu0 0.0
    %608 = vmatpush1.msra.mxu0 %v513
    %609 = vmatprep.subr.mxu0 0.0
    %610 = vmatpush1.msra.mxu0 0.0
    %611 = vmatprep.subr.mxu0 0.0
    %612 = vmatpush1.msra.mxu0 0.0
    %613 = vmatprep.subr.mxu0 0.0
    %614 = vmatpush1.msra.mxu0 0.0
    %615 = vmatprep.subr.mxu0 0.0
    %616 = vmatpush1.msra.mxu0 0.0
    %617 = vmatprep.subr.mxu0 0.0
    %618 = vmatpush1.msra.mxu0 0.0
    %619 = vmatprep.subr.mxu0 0.0
    %620 = vmatpush1.msra.mxu0 0.0
    %621 = vmatprep.subr.mxu0 0.0
    %622 = vmatpush1.msra.mxu0 0.0
    %623 = vmatprep.subr.mxu0 0.0
    %624 = vmatpush1.msra.mxu0 0.0
    %625 = vmatprep.subr.mxu0 0.0
    %626 = vmatpush1.msra.mxu0 0.0
    %627 = vmatprep.subr.mxu0 0.0
    %628 = vmatpush1.msra.mxu0 0.0
    %629 = vmatprep.subr.mxu0 0.0
    %630 = vmatpush1.msra.mxu0 0.0
    %631 = vmatprep.subr.mxu0 0.0
    %632 = vmatpush1.msra.mxu0 0.0
    %633 = vmatprep.subr.mxu0 0.0
    %634 = vmatpush1.msra.mxu0 0.0
    %635 = vmatprep.subr.mxu0 0.0
    %636 = vmatpush1.msra.mxu0 0.0
    %637 = vmatprep.subr.mxu0 0.0
    %638 = vmatpush1.msra.mxu0 0.0
    %639 = vmatprep.subr.mxu0 0.0
    %640 = vmatpush1.msra.mxu0 0.0
    %641 = vmatprep.subr.mxu0 0.0
    %642 = vmatpush1.msra.mxu0 0.0
    %643 = vmatprep.subr.mxu0 0.0
    %644 = vmatpush1.msra.mxu0 0.0
    %645 = vmatprep.subr.mxu0 0.0
    %646 = vmatpush1.msra.mxu0 0.0
    %647 = vmatprep.subr.mxu0 0.0
    %648 = vmatpush1.msra.mxu0 0.0
    %649 = vmatprep.subr.mxu0 0.0
    %650 = vmatpush1.msra.mxu0 0.0
    %651 = vmatprep.subr.mxu0 0.0
    %652 = vmatpush1.msra.mxu0 0.0
    %653 = vmatprep.subr.mxu0 0.0
    %654 = vmatpush1.msra.mxu0 0.0
    %655 = vmatprep.subr.mxu0 0.0
    %656 = vmatpush1.msra.mxu0 0.0
    %657 = vmatprep.subr.mxu0 0.0
    %658 = vmatpush1.msra.mxu0 0.0
    %659 = vmatprep.subr.mxu0 0.0
    %660 = vmatpush1.msra.mxu0 0.0
    %661 = vmatprep.subr.mxu0 0.0
    %662 = vmatpush1.msra.mxu0 0.0
    %663 = vmatprep.subr.mxu0 0.0
    %664 = vmatpush1.msra.mxu0 0.0
    %665 = vmatprep.subr.mxu0 0.0
    %666 = vmatpush1.msra.mxu0 0.0
    %667 = vmatprep.subr.mxu0 0.0
    %668 = vmatpush1.msra.mxu0 0.0
    %669 = vmatprep.subr.mxu0 0.0
    %670 = vmatpush1.msra.mxu0 0.0
    %671 = vmatprep.mubr.f32.mxu0 0.0
    %672 = vmatmul.mubr.f32.gmra.mrb[0].mxu0 %v605
    %v673 = vpop.f32.mrb[0].mxu0
    %v674 = vadd.f32 %v601, %v673
    %v675 = vpop.f32.mrb[0].mxu0
    %676 = vdwg.mxu0
    %vm677 = vcmask 9216
    %678 = vst.msk [vmem:[#allocation34] sm:$0x3] %vm677, %v674
    %v679 = vld [vmem:[#allocation5] sm:$0x3]
    %v680 = vld [vmem:[#allocation22] sm:$0xff]
    %v681 = vld [vmem:[#allocation22 + $0x8] sm:$0xff]
    %v682 = vld [vmem:[#allocation22 + $0x10] sm:$0xff]
    %v683 = vld [vmem:[#allocation22 + $0x18] sm:$0xff]
    %v684 = vld [vmem:[#allocation22 + $0x20] sm:$0xff]
    %v685 = vld [vmem:[#allocation22 + $0x28] sm:$0xff]
    %v686 = vld [vmem:[#allocation22 + $0x30] sm:$0xff]
    %v687 = vld [vmem:[#allocation22 + $0x38] sm:$0xff]
    %v688 = vld [vmem:[#allocation23] sm:$0x1]
    %v689 = vld [vmem:[#allocation25] sm:$0xff]
    %v690 = vld [vmem:[#allocation26] sm:$0x1]
    %v692 = vlaneseq
    %v693 = vshrl.u32 %v692, 7
    %v694 = vsub.s32 0, %v693
    %v695 = vrot.slane %v688, %v694
    %vm697 = vcmask 523264
    %v699 = vsel %vm697, %v679, 0
    %701 = vmatprep.subr.mxu0 0.0
    %702 = vmatpush1.msra.mxu0 %v680
    %703 = vmatprep.subr.mxu0 0.0
    %704 = vmatpush1.msra.mxu0 %v681
    %705 = vmatprep.subr.mxu0 0.0
    %706 = vmatpush1.msra.mxu0 %v682
    %707 = vmatprep.subr.mxu0 0.0
    %708 = vmatpush1.msra.mxu0 %v683
    %709 = vmatprep.subr.mxu0 0.0
    %710 = vmatpush1.msra.mxu0 %v684
    %711 = vmatprep.subr.mxu0 0.0
    %712 = vmatpush1.msra.mxu0 %v685
    %713 = vmatprep.subr.mxu0 0.0
    %714 = vmatpush1.msra.mxu0 %v686
    %715 = vmatprep.subr.mxu0 0.0
    %716 = vmatpush1.msra.mxu0 %v687
    %717 = vmatprep.subr.mxu0 0.0
    %718 = vmatpush1.msra.mxu0 0.0
    %719 = vmatprep.subr.mxu0 0.0
    %720 = vmatpush1.msra.mxu0 0.0
    %721 = vmatprep.subr.mxu0 0.0
    %722 = vmatpush1.msra.mxu0 0.0
    %723 = vmatprep.subr.mxu0 0.0
    %724 = vmatpush1.msra.mxu0 0.0
    %725 = vmatprep.subr.mxu0 0.0
    %726 = vmatpush1.msra.mxu0 0.0
    %727 = vmatprep.subr.mxu0 0.0
    %728 = vmatpush1.msra.mxu0 0.0
    %729 = vmatprep.subr.mxu0 0.0
    %730 = vmatpush1.msra.mxu0 0.0
    %731 = vmatprep.subr.mxu0 0.0
    %732 = vmatpush1.msra.mxu0 0.0
    %733 = vmatprep.subr.mxu0 0.0
    %734 = vmatpush1.msra.mxu0 0.0
    %735 = vmatprep.subr.mxu0 0.0
    %736 = vmatpush1.msra.mxu0 0.0
    %737 = vmatprep.subr.mxu0 0.0
    %738 = vmatpush1.msra.mxu0 0.0
    %739 = vmatprep.subr.mxu0 0.0
    %740 = vmatpush1.msra.mxu0 0.0
    %741 = vmatprep.subr.mxu0 0.0
    %742 = vmatpush1.msra.mxu0 0.0
    %743 = vmatprep.subr.mxu0 0.0
    %744 = vmatpush1.msra.mxu0 0.0
    %745 = vmatprep.subr.mxu0 0.0
    %746 = vmatpush1.msra.mxu0 0.0
    %747 = vmatprep.subr.mxu0 0.0
    %748 = vmatpush1.msra.mxu0 0.0
    %749 = vmatprep.subr.mxu0 0.0
    %750 = vmatpush1.msra.mxu0 0.0
    %751 = vmatprep.subr.mxu0 0.0
    %752 = vmatpush1.msra.mxu0 0.0
    %753 = vmatprep.subr.mxu0 0.0
    %754 = vmatpush1.msra.mxu0 0.0
    %755 = vmatprep.subr.mxu0 0.0
    %756 = vmatpush1.msra.mxu0 0.0
    %757 = vmatprep.subr.mxu0 0.0
    %758 = vmatpush1.msra.mxu0 0.0
    %759 = vmatprep.subr.mxu0 0.0
    %760 = vmatpush1.msra.mxu0 0.0
    %761 = vmatprep.subr.mxu0 0.0
    %762 = vmatpush1.msra.mxu0 0.0
    %763 = vmatprep.subr.mxu0 0.0
    %764 = vmatpush1.msra.mxu0 0.0
    %765 = vmatprep.mubr.f32.mxu0 0.0
    %766 = vmatmul.mubr.f32.gmra.mrb[0].mxu0 %v699
    %v767 = vpop.f32.mrb[0].mxu0
    %v768 = vadd.f32 %v695, %v767
    %v769 = vpop.f32.mrb[0].mxu0
    %770 = vdwg.mxu0
    %vm771 = vcmp.ge.f32.partialorder %v768, 0.0
    %v772 = vmul.f32 %v768, 0.2
    %v773 = vsel %vm771, %v768, %v772
    %v775 = vlaneseq
    %v776 = vshrl.u32 %v775, 7
    %v777 = vsub.s32 0, %v776
    %v778 = vrot.slane %v690, %v777
    %v781 = vsel %vm603, %v773, 0
    %783 = vmatprep.subr.mxu0 0.0
    %784 = vmatpush1.msra.mxu0 %v689
    %785 = vmatprep.subr.mxu0 0.0
    %786 = vmatpush1.msra.mxu0 0.0
    %787 = vmatprep.subr.mxu0 0.0
    %788 = vmatpush1.msra.mxu0 0.0
    %789 = vmatprep.subr.mxu0 0.0
    %790 = vmatpush1.msra.mxu0 0.0
    %791 = vmatprep.subr.mxu0 0.0
    %792 = vmatpush1.msra.mxu0 0.0
    %793 = vmatprep.subr.mxu0 0.0
    %794 = vmatpush1.msra.mxu0 0.0
    %795 = vmatprep.subr.mxu0 0.0
    %796 = vmatpush1.msra.mxu0 0.0
    %797 = vmatprep.subr.mxu0 0.0
    %798 = vmatpush1.msra.mxu0 0.0
    %799 = vmatprep.subr.mxu0 0.0
    %800 = vmatpush1.msra.mxu0 0.0
    %801 = vmatprep.subr.mxu0 0.0
    %802 = vmatpush1.msra.mxu0 0.0
    %803 = vmatprep.subr.mxu0 0.0
    %804 = vmatpush1.msra.mxu0 0.0
    %805 = vmatprep.subr.mxu0 0.0
    %806 = vmatpush1.msra.mxu0 0.0
    %807 = vmatprep.subr.mxu0 0.0
    %808 = vmatpush1.msra.mxu0 0.0
    %809 = vmatprep.subr.mxu0 0.0
    %810 = vmatpush1.msra.mxu0 0.0
    %811 = vmatprep.subr.mxu0 0.0
    %812 = vmatpush1.msra.mxu0 0.0
    %813 = vmatprep.subr.mxu0 0.0
    %814 = vmatpush1.msra.mxu0 0.0
    %815 = vmatprep.subr.mxu0 0.0
    %816 = vmatpush1.msra.mxu0 0.0
    %817 = vmatprep.subr.mxu0 0.0
    %818 = vmatpush1.msra.mxu0 0.0
    %819 = vmatprep.subr.mxu0 0.0
    %820 = vmatpush1.msra.mxu0 0.0
    %821 = vmatprep.subr.mxu0 0.0
    %822 = vmatpush1.msra.mxu0 0.0
    %823 = vmatprep.subr.mxu0 0.0
    %824 = vmatpush1.msra.mxu0 0.0
    %825 = vmatprep.subr.mxu0 0.0
    %826 = vmatpush1.msra.mxu0 0.0
    %827 = vmatprep.subr.mxu0 0.0
    %828 = vmatpush1.msra.mxu0 0.0
    %829 = vmatprep.subr.mxu0 0.0
    %830 = vmatpush1.msra.mxu0 0.0
    %831 = vmatprep.subr.mxu0 0.0
    %832 = vmatpush1.msra.mxu0 0.0
    %833 = vmatprep.subr.mxu0 0.0
    %834 = vmatpush1.msra.mxu0 0.0
    %835 = vmatprep.subr.mxu0 0.0
    %836 = vmatpush1.msra.mxu0 0.0
    %837 = vmatprep.subr.mxu0 0.0
    %838 = vmatpush1.msra.mxu0 0.0
    %839 = vmatprep.subr.mxu0 0.0
    %840 = vmatpush1.msra.mxu0 0.0
    %841 = vmatprep.subr.mxu0 0.0
    %842 = vmatpush1.msra.mxu0 0.0
    %843 = vmatprep.subr.mxu0 0.0
    %844 = vmatpush1.msra.mxu0 0.0
    %845 = vmatprep.subr.mxu0 0.0
    %846 = vmatpush1.msra.mxu0 0.0
    %847 = vmatprep.mubr.f32.mxu0 0.0
    %848 = vmatmul.mubr.f32.gmra.mrb[0].mxu0 %v781
    %v849 = vpop.f32.mrb[0].mxu0
    %v850 = vadd.f32 %v778, %v849
    %v851 = vpop.f32.mrb[0].mxu0
    %852 = vdwg.mxu0
    %853 = vst.msk [vmem:[#allocation35] sm:$0x3] %vm677, %v850
    %v854 = vld [vmem:[#allocation28] sm:$0xff]
    %v855 = vld [vmem:[#allocation28 + $0x8] sm:$0xff]
    %v856 = vld [vmem:[#allocation28 + $0x10] sm:$0xff]
    %v857 = vld [vmem:[#allocation28 + $0x18] sm:$0xff]
    %v858 = vld [vmem:[#allocation28 + $0x20] sm:$0xff]
    %v859 = vld [vmem:[#allocation28 + $0x28] sm:$0xff]
    %v860 = vld [vmem:[#allocation28 + $0x30] sm:$0xff]
    %v861 = vld [vmem:[#allocation28 + $0x38] sm:$0xff]
    %v863 = vsel %vm317, %v506, 0
    %865 = vmatprep.subr.mxu0 0.0
    %866 = vmatpush1.msra.mxu0 %v858
    %867 = vmatprep.subr.mxu0 0.0
    %868 = vmatpush1.msra.mxu0 %v859
    %869 = vmatprep.subr.mxu0 0.0
    %870 = vmatpush1.msra.mxu0 %v860
    %871 = vmatprep.subr.mxu0 0.0
    %872 = vmatpush1.msra.mxu0 %v861
    %873 = vmatprep.subr.mxu0 0.0
    %874 = vmatpush1.msra.mxu0 0.0
    %875 = vmatprep.subr.mxu0 0.0
    %876 = vmatpush1.msra.mxu0 0.0
    %877 = vmatprep.subr.mxu0 0.0
    %878 = vmatpush1.msra.mxu0 0.0
    %879 = vmatprep.subr.mxu0 0.0
    %880 = vmatpush1.msra.mxu0 0.0
    %881 = vmatprep.subr.mxu0 0.0
    %882 = vmatpush1.msra.mxu0 0.0
    %883 = vmatprep.subr.mxu0 0.0
    %884 = vmatpush1.msra.mxu0 0.0
    %885 = vmatprep.subr.mxu0 0.0
    %886 = vmatpush1.msra.mxu0 0.0
    %887 = vmatprep.subr.mxu0 0.0
    %888 = vmatpush1.msra.mxu0 0.0
    %889 = vmatprep.subr.mxu0 0.0
    %890 = vmatpush1.msra.mxu0 0.0
    %891 = vmatprep.subr.mxu0 0.0
    %892 = vmatpush1.msra.mxu0 0.0
    %893 = vmatprep.subr.mxu0 0.0
    %894 = vmatpush1.msra.mxu0 0.0
    %895 = vmatprep.subr.mxu0 0.0
    %896 = vmatpush1.msra.mxu0 0.0
    %897 = vmatprep.subr.mxu0 0.0
    %898 = vmatpush1.msra.mxu0 0.0
    %899 = vmatprep.subr.mxu0 0.0
    %900 = vmatpush1.msra.mxu0 0.0
    %901 = vmatprep.subr.mxu0 0.0
    %902 = vmatpush1.msra.mxu0 0.0
    %903 = vmatprep.subr.mxu0 0.0
    %904 = vmatpush1.msra.mxu0 0.0
    %905 = vmatprep.subr.mxu0 0.0
    %906 = vmatpush1.msra.mxu0 0.0
    %907 = vmatprep.subr.mxu0 0.0
    %908 = vmatpush1.msra.mxu0 0.0
    %909 = vmatprep.subr.mxu0 0.0
    %910 = vmatpush1.msra.mxu0 0.0
    %911 = vmatprep.subr.mxu0 0.0
    %912 = vmatpush1.msra.mxu0 0.0
    %913 = vmatprep.subr.mxu0 0.0
    %914 = vmatpush1.msra.mxu0 0.0
    %915 = vmatprep.subr.mxu0 0.0
    %916 = vmatpush1.msra.mxu0 0.0
    %917 = vmatprep.subr.mxu0 0.0
    %918 = vmatpush1.msra.mxu0 0.0
    %919 = vmatprep.subr.mxu0 0.0
    %920 = vmatpush1.msra.mxu0 0.0
    %921 = vmatprep.subr.mxu0 0.0
    %922 = vmatpush1.msra.mxu0 0.0
    %923 = vmatprep.subr.mxu0 0.0
    %924 = vmatpush1.msra.mxu0 0.0
    %925 = vmatprep.subr.mxu0 0.0
    %926 = vmatpush1.msra.mxu0 0.0
    %927 = vmatprep.subr.mxu0 0.0
    %928 = vmatpush1.msra.mxu0 0.0
    %929 = vmatprep.mubr.f32.mxu0 0.0
    %930 = vmatmul.mubr.f32.gmra.mrb[0].mxu0 %v863
    %v931 = vpop.f32.mrb[0].mxu0
    %v932 = vadd.f32 0.0, %v931
    %v933 = vpop.f32.mrb[0].mxu0
    %934 = vdwg.mxu0
    %v936 = vsel %vm317, %v495, 0
    %938 = vmatprep.subr.mxu0 0.0
    %939 = vmatpush1.msra.mxu0 %v854
    %940 = vmatprep.subr.mxu0 0.0
    %941 = vmatpush1.msra.mxu0 %v855
    %942 = vmatprep.subr.mxu0 0.0
    %943 = vmatpush1.msra.mxu0 %v856
    %944 = vmatprep.subr.mxu0 0.0
    %945 = vmatpush1.msra.mxu0 %v857
    %946 = vmatprep.subr.mxu0 0.0
    %947 = vmatpush1.msra.mxu0 0.0
    %948 = vmatprep.subr.mxu0 0.0
    %949 = vmatpush1.msra.mxu0 0.0
    %950 = vmatprep.subr.mxu0 0.0
    %951 = vmatpush1.msra.mxu0 0.0
    %952 = vmatprep.subr.mxu0 0.0
    %953 = vmatpush1.msra.mxu0 0.0
    %954 = vmatprep.subr.mxu0 0.0
    %955 = vmatpush1.msra.mxu0 0.0
    %956 = vmatprep.subr.mxu0 0.0
    %957 = vmatpush1.msra.mxu0 0.0
    %958 = vmatprep.subr.mxu0 0.0
    %959 = vmatpush1.msra.mxu0 0.0
    %960 = vmatprep.subr.mxu0 0.0
    %961 = vmatpush1.msra.mxu0 0.0
    %962 = vmatprep.subr.mxu0 0.0
    %963 = vmatpush1.msra.mxu0 0.0
    %964 = vmatprep.subr.mxu0 0.0
    %965 = vmatpush1.msra.mxu0 0.0
    %966 = vmatprep.subr.mxu0 0.0
    %967 = vmatpush1.msra.mxu0 0.0
    %968 = vmatprep.subr.mxu0 0.0
    %969 = vmatpush1.msra.mxu0 0.0
    %970 = vmatprep.subr.mxu0 0.0
    %971 = vmatpush1.msra.mxu0 0.0
    %972 = vmatprep.subr.mxu0 0.0
    %973 = vmatpush1.msra.mxu0 0.0
    %974 = vmatprep.subr.mxu0 0.0
    %975 = vmatpush1.msra.mxu0 0.0
    %976 = vmatprep.subr.mxu0 0.0
    %977 = vmatpush1.msra.mxu0 0.0
    %978 = vmatprep.subr.mxu0 0.0
    %979 = vmatpush1.msra.mxu0 0.0
    %980 = vmatprep.subr.mxu0 0.0
    %981 = vmatpush1.msra.mxu0 0.0
    %982 = vmatprep.subr.mxu0 0.0
    %983 = vmatpush1.msra.mxu0 0.0
    %984 = vmatprep.subr.mxu0 0.0
    %985 = vmatpush1.msra.mxu0 0.0
    %986 = vmatprep.subr.mxu0 0.0
    %987 = vmatpush1.msra.mxu0 0.0
    %988 = vmatprep.subr.mxu0 0.0
    %989 = vmatpush1.msra.mxu0 0.0
    %990 = vmatprep.subr.mxu0 0.0
    %991 = vmatpush1.msra.mxu0 0.0
    %992 = vmatprep.subr.mxu0 0.0
    %993 = vmatpush1.msra.mxu0 0.0
    %994 = vmatprep.subr.mxu0 0.0
    %995 = vmatpush1.msra.mxu0 0.0
    %996 = vmatprep.subr.mxu0 0.0
    %997 = vmatpush1.msra.mxu0 0.0
    %998 = vmatprep.subr.mxu0 0.0
    %999 = vmatpush1.msra.mxu0 0.0
    %1000 = vmatprep.subr.mxu0 0.0
    %1001 = vmatpush1.msra.mxu0 0.0
    %1002 = vmatprep.mubr.f32.mxu0 0.0
    %1003 = vmatmul.mubr.f32.gmra.mrb[0].mxu0 %v936
    %v1004 = vpop.f32.mrb[0].mxu0
    %v1005 = vadd.f32 %v932, %v1004
    %v1006 = vpop.f32.mrb[0].mxu0
    %1007 = vdwg.mxu0
    %v1008 = vld [vmem:[#allocation29] sm:$0x1]
    %v1010 = vlaneseq
    %v1011 = vshrl.u32 %v1010, 7
    %v1012 = vsub.s32 0, %v1011
    %v1013 = vrot.slane %v1008, %v1012
    %v1015 = vadd.f32 %v1005, %v1013
    %vm1016 = vcmp.ge.f32.partialorder %v1015, 0.0
    %v1017 = vmul.f32 %v1015, 0.2
    %v1018 = vsel %vm1016, %v1015, %v1017
    %v1019 = vld [vmem:[#allocation31] sm:$0xff]
    %v1020 = vld [vmem:[#allocation32] sm:$0x1]
    %v1022 = vlaneseq
    %v1023 = vshrl.u32 %v1022, 7
    %v1024 = vsub.s32 0, %v1023
    %v1025 = vrot.slane %v1020, %v1024
    %v1028 = vsel %vm603, %v1018, 0
    %1030 = vmatprep.subr.mxu0 0.0
    %1031 = vmatpush1.msra.mxu0 %v1019
    %1032 = vmatprep.subr.mxu0 0.0
    %1033 = vmatpush1.msra.mxu0 0.0
    %1034 = vmatprep.subr.mxu0 0.0
    %1035 = vmatpush1.msra.mxu0 0.0
    %1036 = vmatprep.subr.mxu0 0.0
    %1037 = vmatpush1.msra.mxu0 0.0
    %1038 = vmatprep.subr.mxu0 0.0
    %1039 = vmatpush1.msra.mxu0 0.0
    %1040 = vmatprep.subr.mxu0 0.0
    %1041 = vmatpush1.msra.mxu0 0.0
    %1042 = vmatprep.subr.mxu0 0.0
    %1043 = vmatpush1.msra.mxu0 0.0
    %1044 = vmatprep.subr.mxu0 0.0
    %1045 = vmatpush1.msra.mxu0 0.0
    %1046 = vmatprep.subr.mxu0 0.0
    %1047 = vmatpush1.msra.mxu0 0.0
    %1048 = vmatprep.subr.mxu0 0.0
    %1049 = vmatpush1.msra.mxu0 0.0
    %1050 = vmatprep.subr.mxu0 0.0
    %1051 = vmatpush1.msra.mxu0 0.0
    %1052 = vmatprep.subr.mxu0 0.0
    %1053 = vmatpush1.msra.mxu0 0.0
    %1054 = vmatprep.subr.mxu0 0.0
    %1055 = vmatpush1.msra.mxu0 0.0
    %1056 = vmatprep.subr.mxu0 0.0
    %1057 = vmatpush1.msra.mxu0 0.0
    %1058 = vmatprep.subr.mxu0 0.0
    %1059 = vmatpush1.msra.mxu0 0.0
    %1060 = vmatprep.subr.mxu0 0.0
    %1061 = vmatpush1.msra.mxu0 0.0
    %1062 = vmatprep.subr.mxu0 0.0
    %1063 = vmatpush1.msra.mxu0 0.0
    %1064 = vmatprep.subr.mxu0 0.0
    %1065 = vmatpush1.msra.mxu0 0.0
    %1066 = vmatprep.subr.mxu0 0.0
    %1067 = vmatpush1.msra.mxu0 0.0
    %1068 = vmatprep.subr.mxu0 0.0
    %1069 = vmatpush1.msra.mxu0 0.0
    %1070 = vmatprep.subr.mxu0 0.0
    %1071 = vmatpush1.msra.mxu0 0.0
    %1072 = vmatprep.subr.mxu0 0.0
    %1073 = vmatpush1.msra.mxu0 0.0
    %1074 = vmatprep.subr.mxu0 0.0
    %1075 = vmatpush1.msra.mxu0 0.0
    %1076 = vmatprep.subr.mxu0 0.0
    %1077 = vmatpush1.msra.mxu0 0.0
    %1078 = vmatprep.subr.mxu0 0.0
    %1079 = vmatpush1.msra.mxu0 0.0
    %1080 = vmatprep.subr.mxu0 0.0
    %1081 = vmatpush1.msra.mxu0 0.0
    %1082 = vmatprep.subr.mxu0 0.0
    %1083 = vmatpush1.msra.mxu0 0.0
    %1084 = vmatprep.subr.mxu0 0.0
    %1085 = vmatpush1.msra.mxu0 0.0
    %1086 = vmatprep.subr.mxu0 0.0
    %1087 = vmatpush1.msra.mxu0 0.0
    %1088 = vmatprep.subr.mxu0 0.0
    %1089 = vmatpush1.msra.mxu0 0.0
    %1090 = vmatprep.subr.mxu0 0.0
    %1091 = vmatpush1.msra.mxu0 0.0
    %1092 = vmatprep.subr.mxu0 0.0
    %1093 = vmatpush1.msra.mxu0 0.0
    %1094 = vmatprep.mubr.f32.mxu0 0.0
    %1095 = vmatmul.mubr.f32.gmra.mrb[0].mxu0 %v1028
    %v1096 = vpop.f32.mrb[0].mxu0
    %v1097 = vadd.f32 %v1025, %v1096
    %v1098 = vpop.f32.mrb[0].mxu0
    %1099 = vdwg.mxu0
    %1100 = vst.msk [vmem:[#allocation37] sm:$0x3] %vm677, %v1097
    // Predicated region
    $region162: #{view_gnn_forward.13} parent=1 // pred_check
      _
    $region163: #{view_gnn_forward.13} parent=1 // pred_check_branch
      %1102 = sbr.rel (0) target = $region165
    $region164: #{view_gnn_forward.13} parent=1 // pred_region
      %s1104 = ssub.s32 32, 32
      %1105 = vsyncadd [#allocation4], %s1104
      %s1107 = sshll.u32 [#allocation34], 4
      %s1108 = int_to_ptr.vmem [resolvable:$true] %s1107
      %1110 = dma.vmem_to_hbm [thread:$0]  %s1108, 32, %s20, [#allocation4]
    $region165: #{view_gnn_forward.13} parent=1 // pred_fallthru
      _
    // Predicated region
    $region166: #{view_gnn_forward.13} parent=1 // pred_check
      _
    $region167: #{view_gnn_forward.13} parent=1 // pred_check_branch
      %1112 = sbr.rel (0) target = $region169
    $region168: #{view_gnn_forward.13} parent=1 // pred_region
      %s1114 = ssub.s32 32, 32
      %1115 = vsyncadd [#allocation36], %s1114
      %s1117 = sshll.u32 [#allocation35], 4
      %s1118 = int_to_ptr.vmem [resolvable:$true] %s1117
      %1120 = dma.vmem_to_hbm [thread:$0]  %s1118, 32, %s21, [#allocation36]
    $region169: #{view_gnn_forward.13} parent=1 // pred_fallthru
      _
    // Predicated region
    $region170: #{view_gnn_forward.13} parent=1 // pred_check
      _
    $region171: #{view_gnn_forward.13} parent=1 // pred_check_branch
      %1122 = sbr.rel (0) target = $region173
    $region172: #{view_gnn_forward.13} parent=1 // pred_region
      %s1124 = ssub.s32 32, 32
      %1125 = vsyncadd [#allocation36], %s1124
      %s1127 = sshll.u32 [#allocation37], 4
      %s1128 = int_to_ptr.vmem [resolvable:$true] %s1127
      %1130 = dma.vmem_to_hbm [thread:$0]  %s1128, 32, %s22, [#allocation36]
    $region173: #{view_gnn_forward.13} parent=1 // pred_fallthru
      _
    // Predicated region
    $region174: #{view_gnn_forward.13} parent=1 // pred_check
      _
    $region175: #{view_gnn_forward.13} parent=1 // pred_check_branch
      %1132 = sbr.rel (0) target = $region177
    $region176: #{view_gnn_forward.13} parent=1 // pred_region
      %1133 = dma.done [#allocation4], 32
    $region177: #{view_gnn_forward.13} parent=1 // pred_fallthru
      _
    // Predicated region
    $region178: #{view_gnn_forward.13} parent=1 // pred_check
      _
    $region179: #{view_gnn_forward.13} parent=1 // pred_check_branch
      %1135 = sbr.rel (0) target = $region181
    $region180: #{view_gnn_forward.13} parent=1 // pred_region
      %1136 = dma.done [#allocation36], 32
    $region181: #{view_gnn_forward.13} parent=1 // pred_fallthru
      _
    // Predicated region
    $region182: #{view_gnn_forward.13} parent=1 // pred_check
      _
    $region183: #{view_gnn_forward.13} parent=1 // pred_check_branch
      %1138 = sbr.rel (0) target = $region185
    $region184: #{view_gnn_forward.13} parent=1 // pred_region
      %1139 = dma.done [#allocation36], 32
    $region185: #{view_gnn_forward.13} parent=1 // pred_fallthru
      _
    %1140 = vsyncpa [#allocation3], 1
    %1141 = vsyncpa [#allocation6], 1
    %1142 = vsyncpa [#allocation9], 1
    %1143 = vsyncpa [#allocation12], 1
    %1144 = vsyncpa [#allocation15], 1
    %1145 = vsyncpa [#allocation18], 1
    %1146 = vsyncpa [#allocation21], 1
    %1147 = vsyncpa [#allocation24], 1
    %1148 = vsyncpa [#allocation27], 1
    %1149 = vsyncpa [#allocation30], 1
    %1150 = vsyncpa [#allocation33], 1
    %1151 = vsyncpa [#allocation4], 1
    %1152 = vsyncpa [#allocation36], 1

</llo_original>
